<compile_context>
chip_gen: v5e
topology: v5e:2x2
jax: 0.10.0
libtpu: 0.0.40
codegen_flags: <defaults>
</compile_context>

<pallas_src>
import functools

import jax
import jax.numpy as jnp
from jax import lax
from jax.experimental import pallas as pl
from jax.experimental.pallas import tpu as pltpu


# MXU operands + inter-kernel activations in bf16 (MXU-native on v5e/v6e/v7x,
# half the HBM/VMEM traffic).  Element-wise math and accumulation stay f32.
MXU_DTYPE = jnp.bfloat16
ACT_DTYPE = jnp.bfloat16

# tanh-GELU keeps the transcendental on the EUP slot; set False for exact
# erf (torch.nn.GELU()) parity (~1e-3 relative difference).
_GELU_TANH_APPROX = True

# Conv halo (kernel_size=7 -> pad=3), staged as 8 sublane-aligned rows.
_HALO = 8


def _round_up(x, m):
    return (x + m - 1) // m * m


def _default_vmem_limit():
    # ~3/4 of physical VMEM: ~96 MiB on v5e/v6e (128 MiB), ~48 MiB on v7x (64 MiB).
    cap = 64 * 1024 * 1024
    try:
        cap = int(getattr(pltpu.get_tpu_info(), "vmem_capacity_bytes", cap))
    except Exception:
        pass
    return int(min(cap * 3 // 4, 100 * 1024 * 1024))


_VMEM_LIMIT = _default_vmem_limit()


def _compiler_params(semantics):
    return pltpu.CompilerParams(dimension_semantics=semantics,
                                vmem_limit_bytes=_VMEM_LIMIT)


def _dot(a, b):
    return jnp.dot(a.astype(MXU_DTYPE), b.astype(MXU_DTYPE),
                   preferred_element_type=jnp.float32)


def _dot_tA(a, b):
    # (K, M) x (K, N) -> (M, N): transposed-LHS contraction on the MXU.
    return lax.dot_general(a.astype(MXU_DTYPE), b.astype(MXU_DTYPE),
                           (((0,), (0,)), ((), ())),
                           preferred_element_type=jnp.float32)


# ----------------------------- in-kernel math ------------------------------

def _erf_f32(x):
    # Abramowitz & Stegun 7.1.26, |err| < 1.5e-7; exp goes to the EUP slot.
    a1, a2, a3, a4, a5 = 0.254829592, -0.284496736, 1.421413741, -1.453152027, 1.061405429
    p = 0.3275911
    s = jnp.where(x < 0.0, -1.0, 1.0)
    z = jnp.abs(x)
    t = 1.0 / (1.0 + p * z)
    poly = ((((a5 * t + a4) * t + a3) * t + a2) * t + a1) * t
    return s * (1.0 - poly * jnp.exp(-z * z))


def _gelu(x):
    if _GELU_TANH_APPROX:
        # tanh approximation: ~half the VALU ops, tanh lands on the EUP slot.
        c = 0.7978845608028654  # sqrt(2/pi)
        return 0.5 * x * (1.0 + jnp.tanh(c * (x + 0.044715 * (x * x * x))))
    return 0.5 * x * (1.0 + _erf_f32(x * 0.7071067811865476))


def _zero_tail(val, q0, t_true):
    # Force rows with global index >= t_true to zero: keeps the zero-padding
    # invariant needed for exact "same"-conv behaviour at the sequence end.
    rows = q0 + jax.lax.broadcasted_iota(jnp.int32, (val.shape[0], 1), 0)
    return jnp.where(rows < t_true, val, 0.0)


def _stage_halo_tile(x_ref, ext_ref, q0, tT, Tr):
    """Stage tile rows [q0, q0+tT) of the full-length resident activation plus
    an 8-row halo on each side (zeros outside the sequence) into `ext_ref`
    ((tT + 16, C) VMEM scratch, same dtype as x; all stores sublane-aligned)."""
    t = pl.program_id(1)
    nT = pl.num_programs(1)
    xt = x_ref[0, pl.ds(q0, tT), :]
    ls = pl.multiple_of(jnp.maximum(q0 - _HALO, 0), 8)
    lh = x_ref[0, pl.ds(ls, _HALO), :]
    lh = jnp.where(t > 0, lh, jnp.zeros_like(lh))        # zeros left of sequence
    rs = pl.multiple_of(jnp.minimum(q0 + tT, Tr - _HALO), 8)
    rh = x_ref[0, pl.ds(rs, _HALO), :]
    rh = jnp.where(t < nT - 1, rh, jnp.zeros_like(rh))   # zeros right of sequence
    ext_ref[0:_HALO, :] = lh
    ext_ref[_HALO:_HALO + tT, :] = xt
    ext_ref[_HALO + tT:2 * _HALO + tT, :] = rh


# ------------------------------ Pallas kernels -----------------------------

def _frontend_kernel(feat_ref, f0_ref, wf_ref, pew_ref, b_ref, o_ref,
                     *, t_true, tT):
    # One matmul: svcin, pitch_embed_svc (rank-1 -> VPU broadcast) and
    # mixecn.inl/outl are all folded into (front_w, front_pew, front_b).
    featT = feat_ref[0]                                          # (Cf, tT)
    f0m = jnp.log(1.0 + f0_ref[0].astype(jnp.float32) / 700.0)   # (tT, 1)
    h = _dot_tA(featT, wf_ref[...]) + f0m * pew_ref[...] + b_ref[...]
    if t_true is not None:
        h = _zero_tail(h, pl.program_id(1) * tT, t_true)
    o_ref[0] = h.astype(o_ref.dtype)


def frontend_svc(feat_ncw, f0r, p, *, tT, Tr, t_true):
    """feat_ncw: (B, Cf, Tr) (PyTorch NCW, no host transpose); f0r: (B, Tr, 1)
    -> condition (B, Tr, H) in ACT_DTYPE."""
    B, Cf, _ = feat_ncw.shape
    H = p['front_w'].shape[1]
    nT = Tr // tT
    const2 = lambda b, t: (0, 0)
    kern = functools.partial(_frontend_kernel, t_true=t_true, tT=tT)
    return pl.pallas_call(
        kern,
        grid=(B, nT),
        in_specs=[
            pl.BlockSpec((1, Cf, tT), lambda b, t: (b, 0, t)),
            pl.BlockSpec((1, tT, 1), lambda b, t: (b, t, 0)),
            pl.BlockSpec((Cf, H), const2),
            pl.BlockSpec((1, H), const2),
            pl.BlockSpec((1, H), const2),
        ],
        out_specs=pl.BlockSpec((1, tT, H), lambda b, t: (b, t, 0)),
        out_shape=jax.ShapeDtypeStruct((B, Tr, H), ACT_DTYPE),
        compiler_params=_compiler_params(("parallel", "parallel")),
    )(feat_ncw, f0r, p['front_w'], p['front_pew'], p['front_b'])


def _conv1d_kernel(x_ref, w_ref, b_ref, *rest, t_true, tT, Tr, K, with_mask):
    if with_mask:
        m_ref, o_ref, ext_ref = rest
    else:
        o_ref, ext_ref = rest
        m_ref = None
    t = pl.program_id(1)
    q0 = pl.multiple_of(t * tT, 8)
    pad = (K - 1) // 2
    _stage_halo_tile(x_ref, ext_ref, q0, tT, Tr)
    Cout = o_ref.shape[2]
    acc = jnp.broadcast_to(b_ref[...].astype(jnp.float32), (tT, Cout))
    base = _HALO - pad
    for k in range(K):                                  # static unroll (K=7)
        acc = acc + _dot(ext_ref[base + k:base + k + tT, :], w_ref[k])
    if with_mask:
        acc = acc * m_ref[0].astype(jnp.float32)
    if t_true is not None:
        acc = _zero_tail(acc, q0, t_true)
    o_ref[0] = acc.astype(o_ref.dtype)


def conv1d_same(x, w, b, *, tT, t_true=None, mask=None, out_dtype=None):
    """x: (B, Tr, Cin); w: (K, Cin, Cout) bf16; b: (1, Cout); mask: (B,Tr,1)|None."""
    B, Tr, Cin = x.shape
    K, _, Cout = w.shape
    nT = Tr // tT
    out_dtype = x.dtype if out_dtype is None else out_dtype
    in_specs = [
        pl.BlockSpec((1, Tr, Cin), lambda b_, t_: (b_, 0, 0)),  # resident / batch
        pl.BlockSpec((K, Cin, Cout), lambda b_, t_: (0, 0, 0)),
        pl.BlockSpec((1, Cout), lambda b_, t_: (0, 0)),
    ]
    args = [x, w, b]
    if mask is not None:
        in_specs.append(pl.BlockSpec((1, tT, 1), lambda b_, t_: (b_, t_, 0)))
        args.append(mask)
    kern = functools.partial(_conv1d_kernel, t_true=t_true, tT=tT, Tr=Tr, K=K,
                             with_mask=mask is not None)
    return pl.pallas_call(
        kern,
        grid=(B, nT),
        in_specs=in_specs,
        out_specs=pl.BlockSpec((1, tT, Cout), lambda b_, t_: (b_, t_, 0)),
        out_shape=jax.ShapeDtypeStruct((B, Tr, Cout), out_dtype),
        scratch_shapes=[pltpu.VMEM((tT + 2 * _HALO, Cin), x.dtype)],
        compiler_params=_compiler_params(("parallel", "parallel")),
    )(*args)


def _convnext_block_kernel(x_ref, dww_ref, dwb_ref, lnw_ref, lnb_ref,
                           w1_ref, b1_ref, w2_ref, b2_ref, g_ref,
                           o_ref, ext_ref, *, t_true, tT, Tr, K):
    t = pl.program_id(1)
    q0 = pl.multiple_of(t * tT, 8)
    pad = (K - 1) // 2
    _stage_halo_tile(x_ref, ext_ref, q0, tT, Tr)
    C = x_ref.shape[2]
    # depthwise conv (VPU, f32 math), halo read from the staged scratch
    d = jnp.broadcast_to(dwb_ref[...].astype(jnp.float32), (tT, C))
    base = _HALO - pad
    for k in range(K):                                     # static unroll (K=7)
        d = d + (ext_ref[base + k:base + k + tT, :].astype(jnp.float32)
                 * dww_ref[k:k + 1, :].astype(jnp.float32))
    # LayerNorm over channels (biased variance, eps=1e-6 -> matches torch)
    mu = jnp.mean(d, axis=-1, keepdims=True)
    dc = d - mu
    var = jnp.mean(dc * dc, axis=-1, keepdims=True)
    h = dc * jax.lax.rsqrt(var + 1e-6)
    h = h * lnw_ref[...].astype(jnp.float32) + lnb_ref[...].astype(jnp.float32)
    # pwconv1 -> GELU -> pwconv2 (bf16 MXU + EUP), gamma scale + residual add
    h1 = _gelu(_dot(h, w1_ref[...]) + b1_ref[...].astype(jnp.float32))
    h2 = _dot(h1, w2_ref[...]) + b2_ref[...].astype(jnp.float32)
    # residual re-read from the staged scratch (not kept live across matmuls)
    out = (ext_ref[_HALO:_HALO + tT, :].astype(jnp.float32)
           + g_ref[...].astype(jnp.float32) * h2)
    if t_true is not None:
        out = _zero_tail(out, q0, t_true)
    o_ref[0] = out.astype(o_ref.dtype)


def convnext_block(x, blk, *, tT, t_true=None):
    B, Tr, C = x.shape
    K = blk['dw_w'].shape[0]
    I = blk['w1'].shape[1]
    nT = Tr // tT
    const2 = lambda b, t: (0, 0)
    kern = functools.partial(_convnext_block_kernel, t_true=t_true, tT=tT,
                             Tr=Tr, K=K)
    return pl.pallas_call(
        kern,
        grid=(B, nT),
        in_specs=[
            pl.BlockSpec((1, Tr, C), lambda b, t: (b, 0, 0)),   # resident / batch
            pl.BlockSpec((K, C), const2),
            pl.BlockSpec((1, C), const2),
            pl.BlockSpec((1, C), const2),
            pl.BlockSpec((1, C), const2),
            pl.BlockSpec((C, I), const2),
            pl.BlockSpec((1, I), const2),
            pl.BlockSpec((I, C), const2),
            pl.BlockSpec((1, C), const2),
            pl.BlockSpec((1, C), const2),
        ],
        out_specs=pl.BlockSpec((1, tT, C), lambda b, t: (b, t, 0)),
        out_shape=jax.ShapeDtypeStruct((B, Tr, C), x.dtype),
        scratch_shapes=[pltpu.VMEM((tT + 2 * _HALO, C), x.dtype)],
        compiler_params=_compiler_params(("parallel", "parallel")),
    )(x, blk['dw_w'], blk['dw_b'], blk['ln_w'], blk['ln_b'],
      blk['w1'], blk['b1'], blk['w2'], blk['b2'], blk['gamma'])


# ------------------------------- parameters --------------------------------

def _init_linear(key, in_dim, out_dim, scale=0.02):
    kw, kb = jax.random.split(key)
    w = scale * jax.random.normal(kw, (in_dim, out_dim), jnp.float32)
    b = scale * jax.random.normal(kb, (1, out_dim), jnp.float32)
    return w, b


def _init_conv1d(key, in_ch, out_ch, k, scale=0.02):
    kw, kb = jax.random.split(key)
    w = scale * jax.random.normal(kw, (k, in_ch, out_ch), jnp.float32)
    b = scale * jax.random.normal(kb, (1, out_ch), jnp.float32)
    return w, b


def _init_dwconv(key, ch, k, scale=0.02):
    kw, kb = jax.random.split(key)
    w = scale * jax.random.normal(kw, (k, ch), jnp.float32)
    b = scale * jax.random.normal(kb, (1, ch), jnp.float32)
    return w, b


def init_ssvm_params(key, config):
    """f32 parameters in kernel layout (a torch checkpoint would be re-laid
    out ONCE at load time: Linear w.T; Conv1d (Cout,Cin,K)->(K,Cin,Cout);
    depthwise (C,1,K)->(K,C))."""
    H = config['fs2_hidden_size']            # 256 (== wnd encoder_hidden)
    D = config['mixenvc_hidden_size']        # mixecn internal dim
    n_chans, inter, out_dims, K, n_layers = 384, int(384 * 2.5), 128, 7, 5

    keys = jax.random.split(key, 7)
    p = {}
    p['svcin_w'], p['svcin_b'] = _init_linear(keys[0], 768, H)
    p['pe_svc_w'], p['pe_svc_b'] = _init_linear(keys[1], 1, H)
    p['mix_inl_w'], p['mix_inl_b'] = _init_linear(keys[2], H, D)
    p['mix_outl_w'], p['mix_outl_b'] = _init_linear(keys[3], D, H)
    p['inconv_w'], p['inconv_b'] = _init_conv1d(keys[4], H, n_chans, K)
    p['outconv_w'], p['outconv_b'] = _init_conv1d(keys[5], n_chans, out_dims, K)

    blocks = []
    for bk in jax.random.split(keys[6], n_layers):
        k1, k2, k3 = jax.random.split(bk, 3)
        dw_w, dw_b = _init_dwconv(k1, n_chans, K)
        w1, b1 = _init_linear(k2, n_chans, inter)
        w2, b2 = _init_linear(k3, inter, n_chans)
        blocks.append(dict(
            dw_w=dw_w, dw_b=dw_b,
            ln_w=jnp.ones((1, n_chans), jnp.float32),
            ln_b=jnp.zeros((1, n_chans), jnp.float32),
            w1=w1, b1=b1, w2=w2, b2=b2,
            gamma=1e-6 * jnp.ones((1, n_chans), jnp.float32),
        ))
    p['blocks'] = blocks
    return p


def prepare_inference_params(p):
    """ONE-TIME weight prep: fold svcin/pitch_embed/mixecn.inl/outl into a
    single frontend matmul (valid while the mixecn attention stack is
    identity) and cast all MXU weights to bf16; VPU-side params stay f32."""
    f32 = jnp.float32
    w_io = p['mix_inl_w'] @ p['mix_outl_w']                        # (H, H)
    b_io = p['mix_inl_b'] @ p['mix_outl_w'] + p['mix_outl_b']      # (1, H)
    q = {}
    q['front_w'] = (p['svcin_w'] @ w_io).astype(MXU_DTYPE)         # (768, H)
    q['front_pew'] = (p['pe_svc_w'] @ w_io).astype(f32)            # (1, H)
    q['front_b'] = ((p['svcin_b'] + p['pe_svc_b']) @ w_io + b_io).astype(f32)
    q['inconv_w'] = p['inconv_w'].astype(MXU_DTYPE)
    q['inconv_b'] = p['inconv_b'].astype(f32)
    q['outconv_w'] = p['outconv_w'].astype(MXU_DTYPE)
    q['outconv_b'] = p['outconv_b'].astype(f32)
    blocks = []
    for blk in p['blocks']:
        blocks.append(dict(
            dw_w=blk['dw_w'].astype(f32), dw_b=blk['dw_b'].astype(f32),
            ln_w=blk['ln_w'].astype(f32), ln_b=blk['ln_b'].astype(f32),
            w1=blk['w1'].astype(MXU_DTYPE), b1=blk['b1'].astype(f32),
            w2=blk['w2'].astype(MXU_DTYPE), b2=blk['b2'].astype(f32),
            gamma=blk['gamma'].astype(f32),
        ))
    q['blocks'] = blocks
    return q


# ------------------------------ ssvm forward -------------------------------

def ssvm_forward_svc_infer(params, cvec_feature, f0, svcmask, *, tile_t=1024):
    """SVC + infer=True path of ssvm.forward.

    cvec_feature: (B, 768, T)  (PyTorch NCW);  f0, svcmask: (B, T)
    returns mel:  (B, T, 128) float32
    """
    B, Cf, T = cvec_feature.shape
    tT = min(tile_t, _round_up(T, 8))          # T tile (multiple of 8 / 128)
    Tr = _round_up(T, tT)                      # padded sequence length
    t_true = None if Tr == T else T            # mask only if padding exists

    if Tr != T:
        # Pad to the tile grid ONCE in HBM so no BlockSpec block reads past
        # the true array end; padded rows are re-zeroed inside each kernel so
        # the "same"-conv semantics at the true end stay exact.
        cvec_feature = jnp.pad(cvec_feature, ((0, 0), (0, 0), (0, Tr - T)))
        f0 = jnp.pad(f0, ((0, 0), (0, Tr - T)))
        svcmask = jnp.pad(svcmask, ((0, 0), (0, Tr - T)))
    f0r = f0.reshape(B, Tr, 1)
    maskp = svcmask.astype(jnp.float32).reshape(B, Tr, 1)

    # ---- forwardsvc + mixecn (attn_lay treated as identity, folded) ----
    condition = frontend_svc(cvec_feature, f0r, params,
                             tT=tT, Tr=Tr, t_true=t_true)          # (B, Tr, 256) bf16

    # ---- wnd.tforward(condition)[0]  (fs2_decode, all-Pallas) ----
    x = conv1d_same(condition, params['inconv_w'], params['inconv_b'],
                    tT=tT, t_true=t_true, out_dtype=ACT_DTYPE)     # (B, Tr, 384)
    for blk in params['blocks']:
        x = convnext_block(x, blk, tT=tT, t_true=t_true)
    mel = conv1d_same(x, params['outconv_w'], params['outconv_b'],
                      tT=tT, mask=maskp, out_dtype=jnp.float32)    # (B, Tr, 128)
    return mel[:, :T, :]


# ----------------------------------- main -----------------------------------

if __name__ == "__main__":
    config = dict(fs2_hidden_size=256, mixenvc_hidden_size=128,
                  mixenvc_lays=2, mixenvc_heads=4, mixenvc_dim_head=32,
                  mixenvc_latent_dim=None)
    B, T = 2, 16

    key = jax.random.PRNGKey(0)
    kparams, kfeat, kf0, kmask = jax.random.split(key, 4)

    raw_params = init_ssvm_params(kparams, config)
    params = prepare_inference_params(raw_params)

    cvec_feature = jax.random.normal(kfeat, (B, 768, T), jnp.float32)
    f0 = 200.0 + 100.0 * jax.random.uniform(kf0, (B, T), dtype=jnp.float32)
    tasktype = jnp.array([1, 1], jnp.int32)   # all-SVC -> svc branch
    svcmask = (jax.random.uniform(kmask, (B, T)) > 0.1).astype(jnp.float32)

    assert bool(jnp.all(tasktype == 1)), "only the SVC inference path is implemented"

    fwd = jax.jit(ssvm_forward_svc_infer)
    mel = fwd(params, cvec_feature, f0, svcmask)
    jax.block_until_ready(mel)
    assert mel.shape == (B, T, 128) and mel.dtype == jnp.float32
    assert bool(jnp.all(jnp.isfinite(mel)))
    print("KERNEL_OK")
</pallas_src>

<mosaic_0001>
module attributes {stable_mosaic.version = 11 : i64} {
  func.func @_frontend_kernel(%arg0: i32, %arg1: i32, %arg2: memref<1x768x16xf32, #tpu.memory_space<vmem>>, %arg3: memref<1x16x1xf32, #tpu.memory_space<vmem>>, %arg4: memref<768x256xbf16, #tpu.memory_space<vmem>>, %arg5: memref<1x256xf32, #tpu.memory_space<vmem>>, %arg6: memref<1x256xf32, #tpu.memory_space<vmem>>, %arg7: memref<1x16x256xbf16, #tpu.memory_space<vmem>>) attributes {dimension_semantics = [#tpu.dimension_semantics<parallel>, #tpu.dimension_semantics<parallel>], iteration_bounds = array<i64: 2, 1>, scalar_prefetch = 0 : i64, scratch_operands = 0 : i64, tpu.core_type = #tpu.core_type<tc>, window_params = [{transform_indices = @transform_0, window_bounds = array<i64: 1, 768, 16>}, {transform_indices = @transform_1, window_bounds = array<i64: 1, 16, 1>}, {pipeline_mode = #tpu.pipeline_mode<synchronous>, transform_indices = @transform_2, window_bounds = array<i64: 768, 256>}, {pipeline_mode = #tpu.pipeline_mode<synchronous>, transform_indices = @transform_3, window_bounds = array<i64: 1, 256>}, {pipeline_mode = #tpu.pipeline_mode<synchronous>, transform_indices = @transform_4, window_bounds = array<i64: 1, 256>}, {transform_indices = @transform_5, window_bounds = array<i64: 1, 16, 256>}]} {
    %c0 = arith.constant 0 : index
    %c0_0 = arith.constant 0 : index
    %c0_1 = arith.constant 0 : index
    %0 = vector.load %arg2[%c0, %c0_0, %c0_1] : memref<1x768x16xf32, #tpu.memory_space<vmem>>, vector<1x768x16xf32>
    %1 = vector.shape_cast %0 : vector<1x768x16xf32> to vector<768x16xf32>
    %c0_2 = arith.constant 0 : index
    %c0_3 = arith.constant 0 : index
    %c0_4 = arith.constant 0 : index
    %2 = vector.load %arg3[%c0_2, %c0_3, %c0_4] : memref<1x16x1xf32, #tpu.memory_space<vmem>>, vector<1x16x1xf32>
    %3 = vector.shape_cast %2 : vector<1x16x1xf32> to vector<16x1xf32>
    %cst = arith.constant 7.000000e+02 : f32
    %4 = vector.broadcast %cst : f32 to vector<16x1xf32>
    %5 = arith.divf %3, %4 : vector<16x1xf32>
    %cst_5 = arith.constant 1.000000e+00 : f32
    %6 = vector.broadcast %cst_5 : f32 to vector<16x1xf32>
    %7 = arith.addf %6, %5 : vector<16x1xf32>
    %8 = math.log %7 : vector<16x1xf32>
    %c0_6 = arith.constant 0 : index
    %c0_7 = arith.constant 0 : index
    %9 = vector.load %arg4[%c0_6, %c0_7] : memref<768x256xbf16, #tpu.memory_space<vmem>>, vector<768x256xbf16>
    %10 = arith.truncf %1 : vector<768x16xf32> to vector<768x16xbf16>
    %cst_8 = arith.constant dense<0.000000e+00> : vector<16x256xf32>
    %11 = tpu.matmul %10, %9, %cst_8 {dimension_numbers = #tpu.dot_dimension_numbers<[0], [0], [1], [1], [0, 1, 1, 1], [], []>} : vector<768x16xbf16>, vector<768x256xbf16>, vector<16x256xf32> -> vector<16x256xf32>
    %c0_9 = arith.constant 0 : index
    %c0_10 = arith.constant 0 : index
    %12 = vector.load %arg5[%c0_9, %c0_10] : memref<1x256xf32, #tpu.memory_space<vmem>>, vector<1x256xf32>
    %13 = vector.broadcast %8 : vector<16x1xf32> to vector<16x256xf32>
    %14 = vector.broadcast %12 : vector<1x256xf32> to vector<16x256xf32>
    %15 = arith.mulf %13, %14 : vector<16x256xf32>
    %16 = arith.addf %11, %15 : vector<16x256xf32>
    %c0_11 = arith.constant 0 : index
    %c0_12 = arith.constant 0 : index
    %17 = vector.load %arg6[%c0_11, %c0_12] : memref<1x256xf32, #tpu.memory_space<vmem>>, vector<1x256xf32>
    %18 = vector.broadcast %17 : vector<1x256xf32> to vector<16x256xf32>
    %19 = arith.addf %16, %18 : vector<16x256xf32>
    %20 = arith.truncf %19 : vector<16x256xf32> to vector<16x256xbf16>
    %c0_13 = arith.constant 0 : index
    %c0_14 = arith.constant 0 : index
    %c0_15 = arith.constant 0 : index
    %21 = vector.load %arg7[%c0_13, %c0_14, %c0_15] : memref<1x16x256xbf16, #tpu.memory_space<vmem>>, vector<1x16x256xbf16>
    %22 = vector.shape_cast %21 : vector<1x16x256xbf16> to vector<16x256xbf16>
    %23 = vector.shape_cast %20 : vector<16x256xbf16> to vector<1x16x256xbf16>
    tpu.vector_store %arg7[%c0_13, %c0_14, %c0_15], %23 {strides = array<i32>} : memref<1x16x256xbf16, #tpu.memory_space<vmem>>, vector<1x16x256xbf16>,
    return
  }
  func.func @transform_0(%arg0: i32, %arg1: i32) -> (i32, i32, i32) {
    %c0_i32 = arith.constant 0 : i32
    %c0_i32_0 = arith.constant 0 : i32
    return %arg0, %c0_i32, %arg1 : i32, i32, i32
  }
  func.func @transform_1(%arg0: i32, %arg1: i32) -> (i32, i32, i32) {
    %c0_i32 = arith.constant 0 : i32
    %c0_i32_0 = arith.constant 0 : i32
    return %arg0, %arg1, %c0_i32 : i32, i32, i32
  }
  func.func @transform_2(%arg0: i32, %arg1: i32) -> (i32, i32) {
    %c0_i32 = arith.constant 0 : i32
    %c0_i32_0 = arith.constant 0 : i32
    %c0_i32_1 = arith.constant 0 : i32
    return %c0_i32, %c0_i32_0 : i32, i32
  }
  func.func @transform_3(%arg0: i32, %arg1: i32) -> (i32, i32) {
    %c0_i32 = arith.constant 0 : i32
    %c0_i32_0 = arith.constant 0 : i32
    %c0_i32_1 = arith.constant 0 : i32
    return %c0_i32, %c0_i32_0 : i32, i32
  }
  func.func @transform_4(%arg0: i32, %arg1: i32) -> (i32, i32) {
    %c0_i32 = arith.constant 0 : i32
    %c0_i32_0 = arith.constant 0 : i32
    %c0_i32_1 = arith.constant 0 : i32
    return %c0_i32, %c0_i32_0 : i32, i32
  }
  func.func @transform_5(%arg0: i32, %arg1: i32) -> (i32, i32, i32) {
    %c0_i32 = arith.constant 0 : i32
    %c0_i32_0 = arith.constant 0 : i32
    return %arg0, %arg1, %c0_i32 : i32, i32, i32
  }
}

module attributes {stable_mosaic.version = 11 : i64} {
  func.func @_conv1d_kernel(%arg0: i32, %arg1: i32, %arg2: memref<1x16x256xbf16, #tpu.memory_space<vmem>>, %arg3: memref<7x256x384xbf16, #tpu.memory_space<vmem>>, %arg4: memref<1x384xf32, #tpu.memory_space<vmem>>, %arg5: memref<1x16x384xbf16, #tpu.memory_space<vmem>>, %arg6: memref<32x256xbf16, #tpu.memory_space<vmem>>) attributes {dimension_semantics = [#tpu.dimension_semantics<parallel>, #tpu.dimension_semantics<parallel>], iteration_bounds = array<i64: 2, 1>, scalar_prefetch = 0 : i64, scratch_operands = 1 : i64, tpu.core_type = #tpu.core_type<tc>, window_params = [{transform_indices = @transform_0, window_bounds = array<i64: 1, 16, 256>}, {pipeline_mode = #tpu.pipeline_mode<synchronous>, transform_indices = @transform_1, window_bounds = array<i64: 7, 256, 384>}, {pipeline_mode = #tpu.pipeline_mode<synchronous>, transform_indices = @transform_2, window_bounds = array<i64: 1, 384>}, {transform_indices = @transform_3, window_bounds = array<i64: 1, 16, 384>}]} {
    %c16_i32 = arith.constant 16 : i32
    %0 = arith.muli %arg1, %c16_i32 : i32
    %1 = tpu.assume_multiple %0, 8 : i32
    %c0 = arith.constant 0 : index
    %2 = arith.index_cast %1 : i32 to index
    %c0_0 = arith.constant 0 : index
    %3 = vector.load %arg2[%c0, %2, %c0_0] : memref<1x16x256xbf16, #tpu.memory_space<vmem>>, vector<1x16x256xbf16>
    %4 = vector.shape_cast %3 : vector<1x16x256xbf16> to vector<16x256xbf16>
    %c8_i32 = arith.constant 8 : i32
    %5 = arith.subi %1, %c8_i32 : i32
    %c0_i32 = arith.constant 0 : i32
    %6 = arith.maxsi %5, %c0_i32 : i32
    %7 = tpu.assume_multiple %6, 8 : i32
    %c0_1 = arith.constant 0 : index
    %8 = arith.index_cast %7 : i32 to index
    %c0_2 = arith.constant 0 : index
    %9 = vector.load %arg2[%c0_1, %8, %c0_2] : memref<1x16x256xbf16, #tpu.memory_space<vmem>>, vector<1x8x256xbf16>
    %10 = vector.shape_cast %9 : vector<1x8x256xbf16> to vector<8x256xbf16>
    %c0_i32_3 = arith.constant 0 : i32
    %11 = arith.cmpi sgt, %arg1, %c0_i32_3 : i32
    %cst = arith.constant 0.000000e+00 : bf16
    %12 = vector.broadcast %cst : bf16 to vector<8x256xbf16>
    %13 = arith.select %11, %10, %12 : vector<8x256xbf16>
    %c16_i32_4 = arith.constant 16 : i32
    %14 = arith.addi %1, %c16_i32_4 : i32
    %c8_i32_5 = arith.constant 8 : i32
    %15 = arith.minsi %14, %c8_i32_5 : i32
    %16 = tpu.assume_multiple %15, 8 : i32
    %c0_6 = arith.constant 0 : index
    %17 = arith.index_cast %16 : i32 to index
    %c0_7 = arith.constant 0 : index
    %18 = vector.load %arg2[%c0_6, %17, %c0_7] : memref<1x16x256xbf16, #tpu.memory_space<vmem>>, vector<1x8x256xbf16>
    %19 = vector.shape_cast %18 : vector<1x8x256xbf16> to vector<8x256xbf16>
    %c0_i32_8 = arith.constant 0 : i32
    %20 = arith.cmpi slt, %arg1, %c0_i32_8 : i32
    %cst_9 = arith.constant 0.000000e+00 : bf16
    %21 = vector.broadcast %cst_9 : bf16 to vector<8x256xbf16>
    %22 = arith.select %20, %19, %21 : vector<8x256xbf16>
    %c0_10 = arith.constant 0 : index
    %c0_11 = arith.constant 0 : index
    %23 = vector.load %arg6[%c0_10, %c0_11] : memref<32x256xbf16, #tpu.memory_space<vmem>>, vector<8x256xbf16>
    tpu.vector_store %arg6[%c0_10, %c0_11], %13 {strides = array<i32>} : memref<32x256xbf16, #tpu.memory_space<vmem>>, vector<8x256xbf16>,
    %c8 = arith.constant 8 : index
    %c0_12 = arith.constant 0 : index
    %24 = vector.load %arg6[%c8, %c0_12] : memref<32x256xbf16, #tpu.memory_space<vmem>>, vector<16x256xbf16>
    tpu.vector_store %arg6[%c8, %c0_12], %4 {strides = array<i32>} : memref<32x256xbf16, #tpu.memory_space<vmem>>, vector<16x256xbf16>,
    %c24 = arith.constant 24 : index
    %c0_13 = arith.constant 0 : index
    %25 = vector.load %arg6[%c24, %c0_13] : memref<32x256xbf16, #tpu.memory_space<vmem>>, vector<8x256xbf16>
    tpu.vector_store %arg6[%c24, %c0_13], %22 {strides = array<i32>} : memref<32x256xbf16, #tpu.memory_space<vmem>>, vector<8x256xbf16>,
    %c0_14 = arith.constant 0 : index
    %c0_15 = arith.constant 0 : index
    %26 = vector.load %arg4[%c0_14, %c0_15] : memref<1x384xf32, #tpu.memory_space<vmem>>, vector<1x384xf32>
    %27 = vector.shape_cast %26 : vector<1x384xf32> to vector<1x384xf32>
    %28 = vector.broadcast %27 : vector<1x384xf32> to vector<16x384xf32>
    %c5 = arith.constant 5 : index
    %c0_16 = arith.constant 0 : index
    %29 = vector.load %arg6[%c5, %c0_16] : memref<32x256xbf16, #tpu.memory_space<vmem>>, vector<16x256xbf16>
    %c0_17 = arith.constant 0 : index
    %c0_18 = arith.constant 0 : index
    %c0_19 = arith.constant 0 : index
    %30 = vector.load %arg3[%c0_17, %c0_18, %c0_19] : memref<7x256x384xbf16, #tpu.memory_space<vmem>>, vector<1x256x384xbf16>
    %31 = vector.shape_cast %30 : vector<1x256x384xbf16> to vector<256x384xbf16>
    %cst_20 = arith.constant dense<0.000000e+00> : vector<16x384xf32>
    %32 = tpu.matmul %29, %31, %cst_20 {dimension_numbers = #tpu.dot_dimension_numbers<[1], [0], [0], [1], [0, 0, 1, 1], [], []>} : vector<16x256xbf16>, vector<256x384xbf16>, vector<16x384xf32> -> vector<16x384xf32>
    %33 = arith.addf %28, %32 : vector<16x384xf32>
    %c6 = arith.constant 6 : index
    %c0_21 = arith.constant 0 : index
    %34 = vector.load %arg6[%c6, %c0_21] : memref<32x256xbf16, #tpu.memory_space<vmem>>, vector<16x256xbf16>
    %c1 = arith.constant 1 : index
    %c0_22 = arith.constant 0 : index
    %c0_23 = arith.constant 0 : index
    %35 = vector.load %arg3[%c1, %c0_22, %c0_23] : memref<7x256x384xbf16, #tpu.memory_space<vmem>>, vector<1x256x384xbf16>
    %36 = vector.shape_cast %35 : vector<1x256x384xbf16> to vector<256x384xbf16>
    %cst_24 = arith.constant dense<0.000000e+00> : vector<16x384xf32>
    %37 = tpu.matmul %34, %36, %cst_24 {dimension_numbers = #tpu.dot_dimension_numbers<[1], [0], [0], [1], [0, 0, 1, 1], [], []>} : vector<16x256xbf16>, vector<256x384xbf16>, vector<16x384xf32> -> vector<16x384xf32>
    %38 = arith.addf %33, %37 : vector<16x384xf32>
    %c7 = arith.constant 7 : index
    %c0_25 = arith.constant 0 : index
    %39 = vector.load %arg6[%c7, %c0_25] : memref<32x256xbf16, #tpu.memory_space<vmem>>, vector<16x256xbf16>
    %c2 = arith.constant 2 : index
    %c0_26 = arith.constant 0 : index
    %c0_27 = arith.constant 0 : index
    %40 = vector.load %arg3[%c2, %c0_26, %c0_27] : memref<7x256x384xbf16, #tpu.memory_space<vmem>>, vector<1x256x384xbf16>
    %41 = vector.shape_cast %40 : vector<1x256x384xbf16> to vector<256x384xbf16>
    %cst_28 = arith.constant dense<0.000000e+00> : vector<16x384xf32>
    %42 = tpu.matmul %39, %41, %cst_28 {dimension_numbers = #tpu.dot_dimension_numbers<[1], [0], [0], [1], [0, 0, 1, 1], [], []>} : vector<16x256xbf16>, vector<256x384xbf16>, vector<16x384xf32> -> vector<16x384xf32>
    %43 = arith.addf %38, %42 : vector<16x384xf32>
    %c8_29 = arith.constant 8 : index
    %c0_30 = arith.constant 0 : index
    %44 = vector.load %arg6[%c8_29, %c0_30] : memref<32x256xbf16, #tpu.memory_space<vmem>>, vector<16x256xbf16>
    %c3 = arith.constant 3 : index
    %c0_31 = arith.constant 0 : index
    %c0_32 = arith.constant 0 : index
    %45 = vector.load %arg3[%c3, %c0_31, %c0_32] : memref<7x256x384xbf16, #tpu.memory_space<vmem>>, vector<1x256x384xbf16>
    %46 = vector.shape_cast %45 : vector<1x256x384xbf16> to vector<256x384xbf16>
    %cst_33 = arith.constant dense<0.000000e+00> : vector<16x384xf32>
    %47 = tpu.matmul %44, %46, %cst_33 {dimension_numbers = #tpu.dot_dimension_numbers<[1], [0], [0], [1], [0, 0, 1, 1], [], []>} : vector<16x256xbf16>, vector<256x384xbf16>, vector<16x384xf32> -> vector<16x384xf32>
    %48 = arith.addf %43, %47 : vector<16x384xf32>
    %c9 = arith.constant 9 : index
    %c0_34 = arith.constant 0 : index
    %49 = vector.load %arg6[%c9, %c0_34] : memref<32x256xbf16, #tpu.memory_space<vmem>>, vector<16x256xbf16>
    %c4 = arith.constant 4 : index
    %c0_35 = arith.constant 0 : index
    %c0_36 = arith.constant 0 : index
    %50 = vector.load %arg3[%c4, %c0_35, %c0_36] : memref<7x256x384xbf16, #tpu.memory_space<vmem>>, vector<1x256x384xbf16>
    %51 = vector.shape_cast %50 : vector<1x256x384xbf16> to vector<256x384xbf16>
    %cst_37 = arith.constant dense<0.000000e+00> : vector<16x384xf32>
    %52 = tpu.matmul %49, %51, %cst_37 {dimension_numbers = #tpu.dot_dimension_numbers<[1], [0], [0], [1], [0, 0, 1, 1], [], []>} : vector<16x256xbf16>, vector<256x384xbf16>, vector<16x384xf32> -> vector<16x384xf32>
    %53 = arith.addf %48, %52 : vector<16x384xf32>
    %c10 = arith.constant 10 : index
    %c0_38 = arith.constant 0 : index
    %54 = vector.load %arg6[%c10, %c0_38] : memref<32x256xbf16, #tpu.memory_space<vmem>>, vector<16x256xbf16>
    %c5_39 = arith.constant 5 : index
    %c0_40 = arith.constant 0 : index
    %c0_41 = arith.constant 0 : index
    %55 = vector.load %arg3[%c5_39, %c0_40, %c0_41] : memref<7x256x384xbf16, #tpu.memory_space<vmem>>, vector<1x256x384xbf16>
    %56 = vector.shape_cast %55 : vector<1x256x384xbf16> to vector<256x384xbf16>
    %cst_42 = arith.constant dense<0.000000e+00> : vector<16x384xf32>
    %57 = tpu.matmul %54, %56, %cst_42 {dimension_numbers = #tpu.dot_dimension_numbers<[1], [0], [0], [1], [0, 0, 1, 1], [], []>} : vector<16x256xbf16>, vector<256x384xbf16>, vector<16x384xf32> -> vector<16x384xf32>
    %58 = arith.addf %53, %57 : vector<16x384xf32>
    %c11 = arith.constant 11 : index
    %c0_43 = arith.constant 0 : index
    %59 = vector.load %arg6[%c11, %c0_43] : memref<32x256xbf16, #tpu.memory_space<vmem>>, vector<16x256xbf16>
    %c6_44 = arith.constant 6 : index
    %c0_45 = arith.constant 0 : index
    %c0_46 = arith.constant 0 : index
    %60 = vector.load %arg3[%c6_44, %c0_45, %c0_46] : memref<7x256x384xbf16, #tpu.memory_space<vmem>>, vector<1x256x384xbf16>
    %61 = vector.shape_cast %60 : vector<1x256x384xbf16> to vector<256x384xbf16>
    %cst_47 = arith.constant dense<0.000000e+00> : vector<16x384xf32>
    %62 = tpu.matmul %59, %61, %cst_47 {dimension_numbers = #tpu.dot_dimension_numbers<[1], [0], [0], [1], [0, 0, 1, 1], [], []>} : vector<16x256xbf16>, vector<256x384xbf16>, vector<16x384xf32> -> vector<16x384xf32>
    %63 = arith.addf %58, %62 : vector<16x384xf32>
    %64 = arith.truncf %63 : vector<16x384xf32> to vector<16x384xbf16>
    %c0_48 = arith.constant 0 : index
    %c0_49 = arith.constant 0 : index
    %c0_50 = arith.constant 0 : index
    %65 = vector.load %arg5[%c0_48, %c0_49, %c0_50] : memref<1x16x384xbf16, #tpu.memory_space<vmem>>, vector<1x16x384xbf16>
    %66 = vector.shape_cast %65 : vector<1x16x384xbf16> to vector<16x384xbf16>
    %67 = vector.shape_cast %64 : vector<16x384xbf16> to vector<1x16x384xbf16>
    tpu.vector_store %arg5[%c0_48, %c0_49, %c0_50], %67 {strides = array<i32>} : memref<1x16x384xbf16, #tpu.memory_space<vmem>>, vector<1x16x384xbf16>,
    return
  }
  func.func @transform_0(%arg0: i32, %arg1: i32) -> (i32, i32, i32) {
    %c0_i32 = arith.constant 0 : i32
    %c0_i32_0 = arith.constant 0 : i32
    %c0_i32_1 = arith.constant 0 : i32
    return %arg0, %c0_i32, %c0_i32_0 : i32, i32, i32
  }
  func.func @transform_1(%arg0: i32, %arg1: i32) -> (i32, i32, i32) {
    %c0_i32 = arith.constant 0 : i32
    %c0_i32_0 = arith.constant 0 : i32
    %c0_i32_1 = arith.constant 0 : i32
    %c0_i32_2 = arith.constant 0 : i32
    return %c0_i32, %c0_i32_0, %c0_i32_1 : i32, i32, i32
  }
  func.func @transform_2(%arg0: i32, %arg1: i32) -> (i32, i32) {
    %c0_i32 = arith.constant 0 : i32
    %c0_i32_0 = arith.constant 0 : i32
    %c0_i32_1 = arith.constant 0 : i32
    return %c0_i32, %c0_i32_0 : i32, i32
  }
  func.func @transform_3(%arg0: i32, %arg1: i32) -> (i32, i32, i32) {
    %c0_i32 = arith.constant 0 : i32
    %c0_i32_0 = arith.constant 0 : i32
    return %arg0, %arg1, %c0_i32 : i32, i32, i32
  }
}

module attributes {stable_mosaic.version = 11 : i64} {
  func.func @_convnext_block_kernel(%arg0: i32, %arg1: i32, %arg2: memref<1x16x384xbf16, #tpu.memory_space<vmem>>, %arg3: memref<7x384xf32, #tpu.memory_space<vmem>>, %arg4: memref<1x384xf32, #tpu.memory_space<vmem>>, %arg5: memref<1x384xf32, #tpu.memory_space<vmem>>, %arg6: memref<1x384xf32, #tpu.memory_space<vmem>>, %arg7: memref<384x960xbf16, #tpu.memory_space<vmem>>, %arg8: memref<1x960xf32, #tpu.memory_space<vmem>>, %arg9: memref<960x384xbf16, #tpu.memory_space<vmem>>, %arg10: memref<1x384xf32, #tpu.memory_space<vmem>>, %arg11: memref<1x384xf32, #tpu.memory_space<vmem>>, %arg12: memref<1x16x384xbf16, #tpu.memory_space<vmem>>, %arg13: memref<32x384xbf16, #tpu.memory_space<vmem>>) attributes {dimension_semantics = [#tpu.dimension_semantics<parallel>, #tpu.dimension_semantics<parallel>], iteration_bounds = array<i64: 2, 1>, scalar_prefetch = 0 : i64, scratch_operands = 1 : i64, tpu.core_type = #tpu.core_type<tc>, window_params = [{transform_indices = @transform_0, window_bounds = array<i64: 1, 16, 384>}, {pipeline_mode = #tpu.pipeline_mode<synchronous>, transform_indices = @transform_1, window_bounds = array<i64: 7, 384>}, {pipeline_mode = #tpu.pipeline_mode<synchronous>, transform_indices = @transform_2, window_bounds = array<i64: 1, 384>}, {pipeline_mode = #tpu.pipeline_mode<synchronous>, transform_indices = @transform_3, window_bounds = array<i64: 1, 384>}, {pipeline_mode = #tpu.pipeline_mode<synchronous>, transform_indices = @transform_4, window_bounds = array<i64: 1, 384>}, {pipeline_mode = #tpu.pipeline_mode<synchronous>, transform_indices = @transform_5, window_bounds = array<i64: 384, 960>}, {pipeline_mode = #tpu.pipeline_mode<synchronous>, transform_indices = @transform_6, window_bounds = array<i64: 1, 960>}, {pipeline_mode = #tpu.pipeline_mode<synchronous>, transform_indices = @transform_7, window_bounds = array<i64: 960, 384>}, {pipeline_mode = #tpu.pipeline_mode<synchronous>, transform_indices = @transform_8, window_bounds = array<i64: 1, 384>}, {pipeline_mode = #tpu.pipeline_mode<synchronous>, transform_indices = @transform_9, window_bounds = array<i64: 1, 384>}, {transform_indices = @transform_10, window_bounds = array<i64: 1, 16, 384>}]} {
    %c16_i32 = arith.constant 16 : i32
    %0 = arith.muli %arg1, %c16_i32 : i32
    %1 = tpu.assume_multiple %0, 8 : i32
    %c0 = arith.constant 0 : index
    %2 = arith.index_cast %1 : i32 to index
    %c0_0 = arith.constant 0 : index
    %3 = vector.load %arg2[%c0, %2, %c0_0] : memref<1x16x384xbf16, #tpu.memory_space<vmem>>, vector<1x16x384xbf16>
    %4 = vector.shape_cast %3 : vector<1x16x384xbf16> to vector<16x384xbf16>
    %c8_i32 = arith.constant 8 : i32
    %5 = arith.subi %1, %c8_i32 : i32
    %c0_i32 = arith.constant 0 : i32
    %6 = arith.maxsi %5, %c0_i32 : i32
    %7 = tpu.assume_multiple %6, 8 : i32
    %c0_1 = arith.constant 0 : index
    %8 = arith.index_cast %7 : i32 to index
    %c0_2 = arith.constant 0 : index
    %9 = vector.load %arg2[%c0_1, %8, %c0_2] : memref<1x16x384xbf16, #tpu.memory_space<vmem>>, vector<1x8x384xbf16>
    %10 = vector.shape_cast %9 : vector<1x8x384xbf16> to vector<8x384xbf16>
    %c0_i32_3 = arith.constant 0 : i32
    %11 = arith.cmpi sgt, %arg1, %c0_i32_3 : i32
    %cst = arith.constant 0.000000e+00 : bf16
    %12 = vector.broadcast %cst : bf16 to vector<8x384xbf16>
    %13 = arith.select %11, %10, %12 : vector<8x384xbf16>
    %c16_i32_4 = arith.constant 16 : i32
    %14 = arith.addi %1, %c16_i32_4 : i32
    %c8_i32_5 = arith.constant 8 : i32
    %15 = arith.minsi %14, %c8_i32_5 : i32
    %16 = tpu.assume_multiple %15, 8 : i32
    %c0_6 = arith.constant 0 : index
    %17 = arith.index_cast %16 : i32 to index
    %c0_7 = arith.constant 0 : index
    %18 = vector.load %arg2[%c0_6, %17, %c0_7] : memref<1x16x384xbf16, #tpu.memory_space<vmem>>, vector<1x8x384xbf16>
    %19 = vector.shape_cast %18 : vector<1x8x384xbf16> to vector<8x384xbf16>
    %c0_i32_8 = arith.constant 0 : i32
    %20 = arith.cmpi slt, %arg1, %c0_i32_8 : i32
    %cst_9 = arith.constant 0.000000e+00 : bf16
    %21 = vector.broadcast %cst_9 : bf16 to vector<8x384xbf16>
    %22 = arith.select %20, %19, %21 : vector<8x384xbf16>
    %c0_10 = arith.constant 0 : index
    %c0_11 = arith.constant 0 : index
    %23 = vector.load %arg13[%c0_10, %c0_11] : memref<32x384xbf16, #tpu.memory_space<vmem>>, vector<8x384xbf16>
    tpu.vector_store %arg13[%c0_10, %c0_11], %13 {strides = array<i32>} : memref<32x384xbf16, #tpu.memory_space<vmem>>, vector<8x384xbf16>,
    %c8 = arith.constant 8 : index
    %c0_12 = arith.constant 0 : index
    %24 = vector.load %arg13[%c8, %c0_12] : memref<32x384xbf16, #tpu.memory_space<vmem>>, vector<16x384xbf16>
    tpu.vector_store %arg13[%c8, %c0_12], %4 {strides = array<i32>} : memref<32x384xbf16, #tpu.memory_space<vmem>>, vector<16x384xbf16>,
    %c24 = arith.constant 24 : index
    %c0_13 = arith.constant 0 : index
    %25 = vector.load %arg13[%c24, %c0_13] : memref<32x384xbf16, #tpu.memory_space<vmem>>, vector<8x384xbf16>
    tpu.vector_store %arg13[%c24, %c0_13], %22 {strides = array<i32>} : memref<32x384xbf16, #tpu.memory_space<vmem>>, vector<8x384xbf16>,
    %c0_14 = arith.constant 0 : index
    %c0_15 = arith.constant 0 : index
    %26 = vector.load %arg4[%c0_14, %c0_15] : memref<1x384xf32, #tpu.memory_space<vmem>>, vector<1x384xf32>
    %27 = vector.shape_cast %26 : vector<1x384xf32> to vector<1x384xf32>
    %28 = vector.broadcast %27 : vector<1x384xf32> to vector<16x384xf32>
    %c5 = arith.constant 5 : index
    %c0_16 = arith.constant 0 : index
    %29 = vector.load %arg13[%c5, %c0_16] : memref<32x384xbf16, #tpu.memory_space<vmem>>, vector<16x384xbf16>
    %30 = arith.extf %29 : vector<16x384xbf16> to vector<16x384xf32>
    %c0_17 = arith.constant 0 : index
    %c0_18 = arith.constant 0 : index
    %31 = vector.load %arg3[%c0_17, %c0_18] : memref<7x384xf32, #tpu.memory_space<vmem>>, vector<1x384xf32>
    %32 = vector.broadcast %31 : vector<1x384xf32> to vector<16x384xf32>
    %33 = arith.mulf %30, %32 : vector<16x384xf32>
    %34 = arith.addf %28, %33 : vector<16x384xf32>
    %c6 = arith.constant 6 : index
    %c0_19 = arith.constant 0 : index
    %35 = vector.load %arg13[%c6, %c0_19] : memref<32x384xbf16, #tpu.memory_space<vmem>>, vector<16x384xbf16>
    %36 = arith.extf %35 : vector<16x384xbf16> to vector<16x384xf32>
    %c1 = arith.constant 1 : index
    %c0_20 = arith.constant 0 : index
    %37 = vector.load %arg3[%c1, %c0_20] : memref<7x384xf32, #tpu.memory_space<vmem>>, vector<1x384xf32>
    %38 = vector.broadcast %37 : vector<1x384xf32> to vector<16x384xf32>
    %39 = arith.mulf %36, %38 : vector<16x384xf32>
    %40 = arith.addf %34, %39 : vector<16x384xf32>
    %c7 = arith.constant 7 : index
    %c0_21 = arith.constant 0 : index
    %41 = vector.load %arg13[%c7, %c0_21] : memref<32x384xbf16, #tpu.memory_space<vmem>>, vector<16x384xbf16>
    %42 = arith.extf %41 : vector<16x384xbf16> to vector<16x384xf32>
    %c2 = arith.constant 2 : index
    %c0_22 = arith.constant 0 : index
    %43 = vector.load %arg3[%c2, %c0_22] : memref<7x384xf32, #tpu.memory_space<vmem>>, vector<1x384xf32>
    %44 = vector.broadcast %43 : vector<1x384xf32> to vector<16x384xf32>
    %45 = arith.mulf %42, %44 : vector<16x384xf32>
    %46 = arith.addf %40, %45 : vector<16x384xf32>
    %c8_23 = arith.constant 8 : index
    %c0_24 = arith.constant 0 : index
    %47 = vector.load %arg13[%c8_23, %c0_24] : memref<32x384xbf16, #tpu.memory_space<vmem>>, vector<16x384xbf16>
    %48 = arith.extf %47 : vector<16x384xbf16> to vector<16x384xf32>
    %c3 = arith.constant 3 : index
    %c0_25 = arith.constant 0 : index
    %49 = vector.load %arg3[%c3, %c0_25] : memref<7x384xf32, #tpu.memory_space<vmem>>, vector<1x384xf32>
    %50 = vector.broadcast %49 : vector<1x384xf32> to vector<16x384xf32>
    %51 = arith.mulf %48, %50 : vector<16x384xf32>
    %52 = arith.addf %46, %51 : vector<16x384xf32>
    %c9 = arith.constant 9 : index
    %c0_26 = arith.constant 0 : index
    %53 = vector.load %arg13[%c9, %c0_26] : memref<32x384xbf16, #tpu.memory_space<vmem>>, vector<16x384xbf16>
    %54 = arith.extf %53 : vector<16x384xbf16> to vector<16x384xf32>
    %c4 = arith.constant 4 : index
    %c0_27 = arith.constant 0 : index
    %55 = vector.load %arg3[%c4, %c0_27] : memref<7x384xf32, #tpu.memory_space<vmem>>, vector<1x384xf32>
    %56 = vector.broadcast %55 : vector<1x384xf32> to vector<16x384xf32>
    %57 = arith.mulf %54, %56 : vector<16x384xf32>
    %58 = arith.addf %52, %57 : vector<16x384xf32>
    %c10 = arith.constant 10 : index
    %c0_28 = arith.constant 0 : index
    %59 = vector.load %arg13[%c10, %c0_28] : memref<32x384xbf16, #tpu.memory_space<vmem>>, vector<16x384xbf16>
    %60 = arith.extf %59 : vector<16x384xbf16> to vector<16x384xf32>
    %c5_29 = arith.constant 5 : index
    %c0_30 = arith.constant 0 : index
    %61 = vector.load %arg3[%c5_29, %c0_30] : memref<7x384xf32, #tpu.memory_space<vmem>>, vector<1x384xf32>
    %62 = vector.broadcast %61 : vector<1x384xf32> to vector<16x384xf32>
    %63 = arith.mulf %60, %62 : vector<16x384xf32>
    %64 = arith.addf %58, %63 : vector<16x384xf32>
    %c11 = arith.constant 11 : index
    %c0_31 = arith.constant 0 : index
    %65 = vector.load %arg13[%c11, %c0_31] : memref<32x384xbf16, #tpu.memory_space<vmem>>, vector<16x384xbf16>
    %66 = arith.extf %65 : vector<16x384xbf16> to vector<16x384xf32>
    %c6_32 = arith.constant 6 : index
    %c0_33 = arith.constant 0 : index
    %67 = vector.load %arg3[%c6_32, %c0_33] : memref<7x384xf32, #tpu.memory_space<vmem>>, vector<1x384xf32>
    %68 = vector.broadcast %67 : vector<1x384xf32> to vector<16x384xf32>
    %69 = arith.mulf %66, %68 : vector<16x384xf32>
    %70 = arith.addf %64, %69 : vector<16x384xf32>
    %cst_34 = arith.constant dense<0.000000e+00> : vector<16xf32>
    %71 = vector.multi_reduction <add>, %70, %cst_34 [1] : vector<16x384xf32> to vector<16xf32>
    %72 = vector.shape_cast %71 : vector<16xf32> to vector<16x1xf32>
    %cst_35 = arith.constant 3.840000e+02 : f32
    %73 = vector.broadcast %cst_35 : f32 to vector<16x1xf32>
    %74 = arith.divf %72, %73 : vector<16x1xf32>
    %75 = vector.broadcast %74 : vector<16x1xf32> to vector<16x384xf32>
    %76 = arith.subf %70, %75 : vector<16x384xf32>
    %77 = arith.mulf %76, %76 : vector<16x384xf32>
    %cst_36 = arith.constant dense<0.000000e+00> : vector<16xf32>
    %78 = vector.multi_reduction <add>, %77, %cst_36 [1] : vector<16x384xf32> to vector<16xf32>
    %79 = vector.shape_cast %78 : vector<16xf32> to vector<16x1xf32>
    %cst_37 = arith.constant 3.840000e+02 : f32
    %80 = vector.broadcast %cst_37 : f32 to vector<16x1xf32>
    %81 = arith.divf %79, %80 : vector<16x1xf32>
    %cst_38 = arith.constant 9.99999997E-7 : f32
    %82 = vector.broadcast %cst_38 : f32 to vector<16x1xf32>
    %83 = arith.addf %81, %82 : vector<16x1xf32>
    %84 = math.rsqrt %83 : vector<16x1xf32>
    %85 = vector.broadcast %84 : vector<16x1xf32> to vector<16x384xf32>
    %86 = arith.mulf %76, %85 : vector<16x384xf32>
    %c0_39 = arith.constant 0 : index
    %c0_40 = arith.constant 0 : index
    %87 = vector.load %arg5[%c0_39, %c0_40] : memref<1x384xf32, #tpu.memory_space<vmem>>, vector<1x384xf32>
    %88 = vector.broadcast %87 : vector<1x384xf32> to vector<16x384xf32>
    %89 = arith.mulf %86, %88 : vector<16x384xf32>
    %c0_41 = arith.constant 0 : index
    %c0_42 = arith.constant 0 : index
    %90 = vector.load %arg6[%c0_41, %c0_42] : memref<1x384xf32, #tpu.memory_space<vmem>>, vector<1x384xf32>
    %91 = vector.broadcast %90 : vector<1x384xf32> to vector<16x384xf32>
    %92 = arith.addf %89, %91 : vector<16x384xf32>
    %c0_43 = arith.constant 0 : index
    %c0_44 = arith.constant 0 : index
    %93 = vector.load %arg7[%c0_43, %c0_44] : memref<384x960xbf16, #tpu.memory_space<vmem>>, vector<384x960xbf16>
    %94 = arith.truncf %92 : vector<16x384xf32> to vector<16x384xbf16>
    %cst_45 = arith.constant dense<0.000000e+00> : vector<16x960xf32>
    %95 = tpu.matmul %94, %93, %cst_45 {dimension_numbers = #tpu.dot_dimension_numbers<[1], [0], [0], [1], [0, 0, 1, 1], [], []>} : vector<16x384xbf16>, vector<384x960xbf16>, vector<16x960xf32> -> vector<16x960xf32>
    %c0_46 = arith.constant 0 : index
    %c0_47 = arith.constant 0 : index
    %96 = vector.load %arg8[%c0_46, %c0_47] : memref<1x960xf32, #tpu.memory_space<vmem>>, vector<1x960xf32>
    %97 = vector.broadcast %96 : vector<1x960xf32> to vector<16x960xf32>
    %98 = arith.addf %95, %97 : vector<16x960xf32>
    %cst_48 = arith.constant 5.000000e-01 : f32
    %99 = vector.broadcast %cst_48 : f32 to vector<16x960xf32>
    %100 = arith.mulf %99, %98 : vector<16x960xf32>
    %101 = arith.mulf %98, %98 : vector<16x960xf32>
    %102 = arith.mulf %101, %98 : vector<16x960xf32>
    %cst_49 = arith.constant 4.471500e-02 : f32
    %103 = vector.broadcast %cst_49 : f32 to vector<16x960xf32>
    %104 = arith.mulf %103, %102 : vector<16x960xf32>
    %105 = arith.addf %98, %104 : vector<16x960xf32>
    %cst_50 = arith.constant 0.797884583 : f32
    %106 = vector.broadcast %cst_50 : f32 to vector<16x960xf32>
    %107 = arith.mulf %106, %105 : vector<16x960xf32>
    %108 = math.tanh %107 : vector<16x960xf32>
    %cst_51 = arith.constant 1.000000e+00 : f32
    %109 = vector.broadcast %cst_51 : f32 to vector<16x960xf32>
    %110 = arith.addf %109, %108 : vector<16x960xf32>
    %111 = arith.mulf %100, %110 : vector<16x960xf32>
    %c0_52 = arith.constant 0 : index
    %c0_53 = arith.constant 0 : index
    %112 = vector.load %arg9[%c0_52, %c0_53] : memref<960x384xbf16, #tpu.memory_space<vmem>>, vector<960x384xbf16>
    %113 = arith.truncf %111 : vector<16x960xf32> to vector<16x960xbf16>
    %cst_54 = arith.constant dense<0.000000e+00> : vector<16x384xf32>
    %114 = tpu.matmul %113, %112, %cst_54 {dimension_numbers = #tpu.dot_dimension_numbers<[1], [0], [0], [1], [0, 0, 1, 1], [], []>} : vector<16x960xbf16>, vector<960x384xbf16>, vector<16x384xf32> -> vector<16x384xf32>
    %c0_55 = arith.constant 0 : index
    %c0_56 = arith.constant 0 : index
    %115 = vector.load %arg10[%c0_55, %c0_56] : memref<1x384xf32, #tpu.memory_space<vmem>>, vector<1x384xf32>
    %116 = vector.broadcast %115 : vector<1x384xf32> to vector<16x384xf32>
    %117 = arith.addf %114, %116 : vector<16x384xf32>
    %c8_57 = arith.constant 8 : index
    %c0_58 = arith.constant 0 : index
    %118 = vector.load %arg13[%c8_57, %c0_58] : memref<32x384xbf16, #tpu.memory_space<vmem>>, vector<16x384xbf16>
    %119 = arith.extf %118 : vector<16x384xbf16> to vector<16x384xf32>
    %c0_59 = arith.constant 0 : index
    %c0_60 = arith.constant 0 : index
    %120 = vector.load %arg11[%c0_59, %c0_60] : memref<1x384xf32, #tpu.memory_space<vmem>>, vector<1x384xf32>
    %121 = vector.broadcast %120 : vector<1x384xf32> to vector<16x384xf32>
    %122 = arith.mulf %121, %117 : vector<16x384xf32>
    %123 = arith.addf %119, %122 : vector<16x384xf32>
    %124 = arith.truncf %123 : vector<16x384xf32> to vector<16x384xbf16>
    %c0_61 = arith.constant 0 : index
    %c0_62 = arith.constant 0 : index
    %c0_63 = arith.constant 0 : index
    %125 = vector.load %arg12[%c0_61, %c0_62, %c0_63] : memref<1x16x384xbf16, #tpu.memory_space<vmem>>, vector<1x16x384xbf16>
    %126 = vector.shape_cast %125 : vector<1x16x384xbf16> to vector<16x384xbf16>
    %127 = vector.shape_cast %124 : vector<16x384xbf16> to vector<1x16x384xbf16>
    tpu.vector_store %arg12[%c0_61, %c0_62, %c0_63], %127 {strides = array<i32>} : memref<1x16x384xbf16, #tpu.memory_space<vmem>>, vector<1x16x384xbf16>,
    return
  }
  func.func @transform_0(%arg0: i32, %arg1: i32) -> (i32, i32, i32) {
    %c0_i32 = arith.constant 0 : i32
    %c0_i32_0 = arith.constant 0 : i32
    %c0_i32_1 = arith.constant 0 : i32
    return %arg0, %c0_i32, %c0_i32_0 : i32, i32, i32
  }
  func.func @transform_1(%arg0: i32, %arg1: i32) -> (i32, i32) {
    %c0_i32 = arith.constant 0 : i32
    %c0_i32_0 = arith.constant 0 : i32
    %c0_i32_1 = arith.constant 0 : i32
    return %c0_i32, %c0_i32_0 : i32, i32
  }
  func.func @transform_2(%arg0: i32, %arg1: i32) -> (i32, i32) {
    %c0_i32 = arith.constant 0 : i32
    %c0_i32_0 = arith.constant 0 : i32
    %c0_i32_1 = arith.constant 0 : i32
    return %c0_i32, %c0_i32_0 : i32, i32
  }
  func.func @transform_3(%arg0: i32, %arg1: i32) -> (i32, i32) {
    %c0_i32 = arith.constant 0 : i32
    %c0_i32_0 = arith.constant 0 : i32
    %c0_i32_1 = arith.constant 0 : i32
    return %c0_i32, %c0_i32_0 : i32, i32
  }
  func.func @transform_4(%arg0: i32, %arg1: i32) -> (i32, i32) {
    %c0_i32 = arith.constant 0 : i32
    %c0_i32_0 = arith.constant 0 : i32
    %c0_i32_1 = arith.constant 0 : i32
    return %c0_i32, %c0_i32_0 : i32, i32
  }
  func.func @transform_5(%arg0: i32, %arg1: i32) -> (i32, i32) {
    %c0_i32 = arith.constant 0 : i32
    %c0_i32_0 = arith.constant 0 : i32
    %c0_i32_1 = arith.constant 0 : i32
    return %c0_i32, %c0_i32_0 : i32, i32
  }
  func.func @transform_6(%arg0: i32, %arg1: i32) -> (i32, i32) {
    %c0_i32 = arith.constant 0 : i32
    %c0_i32_0 = arith.constant 0 : i32
    %c0_i32_1 = arith.constant 0 : i32
    return %c0_i32, %c0_i32_0 : i32, i32
  }
  func.func @transform_7(%arg0: i32, %arg1: i32) -> (i32, i32) {
    %c0_i32 = arith.constant 0 : i32
    %c0_i32_0 = arith.constant 0 : i32
    %c0_i32_1 = arith.constant 0 : i32
    return %c0_i32, %c0_i32_0 : i32, i32
  }
  func.func @transform_8(%arg0: i32, %arg1: i32) -> (i32, i32) {
    %c0_i32 = arith.constant 0 : i32
    %c0_i32_0 = arith.constant 0 : i32
    %c0_i32_1 = arith.constant 0 : i32
    return %c0_i32, %c0_i32_0 : i32, i32
  }
  func.func @transform_9(%arg0: i32, %arg1: i32) -> (i32, i32) {
    %c0_i32 = arith.constant 0 : i32
    %c0_i32_0 = arith.constant 0 : i32
    %c0_i32_1 = arith.constant 0 : i32
    return %c0_i32, %c0_i32_0 : i32, i32
  }
  func.func @transform_10(%arg0: i32, %arg1: i32) -> (i32, i32, i32) {
    %c0_i32 = arith.constant 0 : i32
    %c0_i32_0 = arith.constant 0 : i32
    return %arg0, %arg1, %c0_i32 : i32, i32, i32
  }
}

module attributes {stable_mosaic.version = 11 : i64} {
  func.func @_conv1d_kernel(%arg0: i32, %arg1: i32, %arg2: memref<1x16x384xbf16, #tpu.memory_space<vmem>>, %arg3: memref<7x384x128xbf16, #tpu.memory_space<vmem>>, %arg4: memref<1x128xf32, #tpu.memory_space<vmem>>, %arg5: memref<1x16x1xf32, #tpu.memory_space<vmem>>, %arg6: memref<1x16x128xf32, #tpu.memory_space<vmem>>, %arg7: memref<32x384xbf16, #tpu.memory_space<vmem>>) attributes {dimension_semantics = [#tpu.dimension_semantics<parallel>, #tpu.dimension_semantics<parallel>], iteration_bounds = array<i64: 2, 1>, scalar_prefetch = 0 : i64, scratch_operands = 1 : i64, tpu.core_type = #tpu.core_type<tc>, window_params = [{transform_indices = @transform_0, window_bounds = array<i64: 1, 16, 384>}, {pipeline_mode = #tpu.pipeline_mode<synchronous>, transform_indices = @transform_1, window_bounds = array<i64: 7, 384, 128>}, {pipeline_mode = #tpu.pipeline_mode<synchronous>, transform_indices = @transform_2, window_bounds = array<i64: 1, 128>}, {transform_indices = @transform_3, window_bounds = array<i64: 1, 16, 1>}, {transform_indices = @transform_4, window_bounds = array<i64: 1, 16, 128>}]} {
    %c16_i32 = arith.constant 16 : i32
    %0 = arith.muli %arg1, %c16_i32 : i32
    %1 = tpu.assume_multiple %0, 8 : i32
    %c0 = arith.constant 0 : index
    %2 = arith.index_cast %1 : i32 to index
    %c0_0 = arith.constant 0 : index
    %3 = vector.load %arg2[%c0, %2, %c0_0] : memref<1x16x384xbf16, #tpu.memory_space<vmem>>, vector<1x16x384xbf16>
    %4 = vector.shape_cast %3 : vector<1x16x384xbf16> to vector<16x384xbf16>
    %c8_i32 = arith.constant 8 : i32
    %5 = arith.subi %1, %c8_i32 : i32
    %c0_i32 = arith.constant 0 : i32
    %6 = arith.maxsi %5, %c0_i32 : i32
    %7 = tpu.assume_multiple %6, 8 : i32
    %c0_1 = arith.constant 0 : index
    %8 = arith.index_cast %7 : i32 to index
    %c0_2 = arith.constant 0 : index
    %9 = vector.load %arg2[%c0_1, %8, %c0_2] : memref<1x16x384xbf16, #tpu.memory_space<vmem>>, vector<1x8x384xbf16>
    %10 = vector.shape_cast %9 : vector<1x8x384xbf16> to vector<8x384xbf16>
    %c0_i32_3 = arith.constant 0 : i32
    %11 = arith.cmpi sgt, %arg1, %c0_i32_3 : i32
    %cst = arith.constant 0.000000e+00 : bf16
    %12 = vector.broadcast %cst : bf16 to vector<8x384xbf16>
    %13 = arith.select %11, %10, %12 : vector<8x384xbf16>
    %c16_i32_4 = arith.constant 16 : i32
    %14 = arith.addi %1, %c16_i32_4 : i32
    %c8_i32_5 = arith.constant 8 : i32
    %15 = arith.minsi %14, %c8_i32_5 : i32
    %16 = tpu.assume_multiple %15, 8 : i32
    %c0_6 = arith.constant 0 : index
    %17 = arith.index_cast %16 : i32 to index
    %c0_7 = arith.constant 0 : index
    %18 = vector.load %arg2[%c0_6, %17, %c0_7] : memref<1x16x384xbf16, #tpu.memory_space<vmem>>, vector<1x8x384xbf16>
    %19 = vector.shape_cast %18 : vector<1x8x384xbf16> to vector<8x384xbf16>
    %c0_i32_8 = arith.constant 0 : i32
    %20 = arith.cmpi slt, %arg1, %c0_i32_8 : i32
    %cst_9 = arith.constant 0.000000e+00 : bf16
    %21 = vector.broadcast %cst_9 : bf16 to vector<8x384xbf16>
    %22 = arith.select %20, %19, %21 : vector<8x384xbf16>
    %c0_10 = arith.constant 0 : index
    %c0_11 = arith.constant 0 : index
    %23 = vector.load %arg7[%c0_10, %c0_11] : memref<32x384xbf16, #tpu.memory_space<vmem>>, vector<8x384xbf16>
    tpu.vector_store %arg7[%c0_10, %c0_11], %13 {strides = array<i32>} : memref<32x384xbf16, #tpu.memory_space<vmem>>, vector<8x384xbf16>,
    %c8 = arith.constant 8 : index
    %c0_12 = arith.constant 0 : index
    %24 = vector.load %arg7[%c8, %c0_12] : memref<32x384xbf16, #tpu.memory_space<vmem>>, vector<16x384xbf16>
    tpu.vector_store %arg7[%c8, %c0_12], %4 {strides = array<i32>} : memref<32x384xbf16, #tpu.memory_space<vmem>>, vector<16x384xbf16>,
    %c24 = arith.constant 24 : index
    %c0_13 = arith.constant 0 : index
    %25 = vector.load %arg7[%c24, %c0_13] : memref<32x384xbf16, #tpu.memory_space<vmem>>, vector<8x384xbf16>
    tpu.vector_store %arg7[%c24, %c0_13], %22 {strides = array<i32>} : memref<32x384xbf16, #tpu.memory_space<vmem>>, vector<8x384xbf16>,
    %c0_14 = arith.constant 0 : index
    %c0_15 = arith.constant 0 : index
    %26 = vector.load %arg4[%c0_14, %c0_15] : memref<1x128xf32, #tpu.memory_space<vmem>>, vector<1x128xf32>
    %27 = vector.shape_cast %26 : vector<1x128xf32> to vector<1x128xf32>
    %28 = vector.broadcast %27 : vector<1x128xf32> to vector<16x128xf32>
    %c5 = arith.constant 5 : index
    %c0_16 = arith.constant 0 : index
    %29 = vector.load %arg7[%c5, %c0_16] : memref<32x384xbf16, #tpu.memory_space<vmem>>, vector<16x384xbf16>
    %c0_17 = arith.constant 0 : index
    %c0_18 = arith.constant 0 : index
    %c0_19 = arith.constant 0 : index
    %30 = vector.load %arg3[%c0_17, %c0_18, %c0_19] : memref<7x384x128xbf16, #tpu.memory_space<vmem>>, vector<1x384x128xbf16>
    %31 = vector.shape_cast %30 : vector<1x384x128xbf16> to vector<384x128xbf16>
    %cst_20 = arith.constant dense<0.000000e+00> : vector<16x128xf32>
    %32 = tpu.matmul %29, %31, %cst_20 {dimension_numbers = #tpu.dot_dimension_numbers<[1], [0], [0], [1], [0, 0, 1, 1], [], []>} : vector<16x384xbf16>, vector<384x128xbf16>, vector<16x128xf32> -> vector<16x128xf32>
    %33 = arith.addf %28, %32 : vector<16x128xf32>
    %c6 = arith.constant 6 : index
    %c0_21 = arith.constant 0 : index
    %34 = vector.load %arg7[%c6, %c0_21] : memref<32x384xbf16, #tpu.memory_space<vmem>>, vector<16x384xbf16>
    %c1 = arith.constant 1 : index
    %c0_22 = arith.constant 0 : index
    %c0_23 = arith.constant 0 : index
    %35 = vector.load %arg3[%c1, %c0_22, %c0_23] : memref<7x384x128xbf16, #tpu.memory_space<vmem>>, vector<1x384x128xbf16>
    %36 = vector.shape_cast %35 : vector<1x384x128xbf16> to vector<384x128xbf16>
    %cst_24 = arith.constant dense<0.000000e+00> : vector<16x128xf32>
    %37 = tpu.matmul %34, %36, %cst_24 {dimension_numbers = #tpu.dot_dimension_numbers<[1], [0], [0], [1], [0, 0, 1, 1], [], []>} : vector<16x384xbf16>, vector<384x128xbf16>, vector<16x128xf32> -> vector<16x128xf32>
    %38 = arith.addf %33, %37 : vector<16x128xf32>
    %c7 = arith.constant 7 : index
    %c0_25 = arith.constant 0 : index
    %39 = vector.load %arg7[%c7, %c0_25] : memref<32x384xbf16, #tpu.memory_space<vmem>>, vector<16x384xbf16>
    %c2 = arith.constant 2 : index
    %c0_26 = arith.constant 0 : index
    %c0_27 = arith.constant 0 : index
    %40 = vector.load %arg3[%c2, %c0_26, %c0_27] : memref<7x384x128xbf16, #tpu.memory_space<vmem>>, vector<1x384x128xbf16>
    %41 = vector.shape_cast %40 : vector<1x384x128xbf16> to vector<384x128xbf16>
    %cst_28 = arith.constant dense<0.000000e+00> : vector<16x128xf32>
    %42 = tpu.matmul %39, %41, %cst_28 {dimension_numbers = #tpu.dot_dimension_numbers<[1], [0], [0], [1], [0, 0, 1, 1], [], []>} : vector<16x384xbf16>, vector<384x128xbf16>, vector<16x128xf32> -> vector<16x128xf32>
    %43 = arith.addf %38, %42 : vector<16x128xf32>
    %c8_29 = arith.constant 8 : index
    %c0_30 = arith.constant 0 : index
    %44 = vector.load %arg7[%c8_29, %c0_30] : memref<32x384xbf16, #tpu.memory_space<vmem>>, vector<16x384xbf16>
    %c3 = arith.constant 3 : index
    %c0_31 = arith.constant 0 : index
    %c0_32 = arith.constant 0 : index
    %45 = vector.load %arg3[%c3, %c0_31, %c0_32] : memref<7x384x128xbf16, #tpu.memory_space<vmem>>, vector<1x384x128xbf16>
    %46 = vector.shape_cast %45 : vector<1x384x128xbf16> to vector<384x128xbf16>
    %cst_33 = arith.constant dense<0.000000e+00> : vector<16x128xf32>
    %47 = tpu.matmul %44, %46, %cst_33 {dimension_numbers = #tpu.dot_dimension_numbers<[1], [0], [0], [1], [0, 0, 1, 1], [], []>} : vector<16x384xbf16>, vector<384x128xbf16>, vector<16x128xf32> -> vector<16x128xf32>
    %48 = arith.addf %43, %47 : vector<16x128xf32>
    %c9 = arith.constant 9 : index
    %c0_34 = arith.constant 0 : index
    %49 = vector.load %arg7[%c9, %c0_34] : memref<32x384xbf16, #tpu.memory_space<vmem>>, vector<16x384xbf16>
    %c4 = arith.constant 4 : index
    %c0_35 = arith.constant 0 : index
    %c0_36 = arith.constant 0 : index
    %50 = vector.load %arg3[%c4, %c0_35, %c0_36] : memref<7x384x128xbf16, #tpu.memory_space<vmem>>, vector<1x384x128xbf16>
    %51 = vector.shape_cast %50 : vector<1x384x128xbf16> to vector<384x128xbf16>
    %cst_37 = arith.constant dense<0.000000e+00> : vector<16x128xf32>
    %52 = tpu.matmul %49, %51, %cst_37 {dimension_numbers = #tpu.dot_dimension_numbers<[1], [0], [0], [1], [0, 0, 1, 1], [], []>} : vector<16x384xbf16>, vector<384x128xbf16>, vector<16x128xf32> -> vector<16x128xf32>
    %53 = arith.addf %48, %52 : vector<16x128xf32>
    %c10 = arith.constant 10 : index
    %c0_38 = arith.constant 0 : index
    %54 = vector.load %arg7[%c10, %c0_38] : memref<32x384xbf16, #tpu.memory_space<vmem>>, vector<16x384xbf16>
    %c5_39 = arith.constant 5 : index
    %c0_40 = arith.constant 0 : index
    %c0_41 = arith.constant 0 : index
    %55 = vector.load %arg3[%c5_39, %c0_40, %c0_41] : memref<7x384x128xbf16, #tpu.memory_space<vmem>>, vector<1x384x128xbf16>
    %56 = vector.shape_cast %55 : vector<1x384x128xbf16> to vector<384x128xbf16>
    %cst_42 = arith.constant dense<0.000000e+00> : vector<16x128xf32>
    %57 = tpu.matmul %54, %56, %cst_42 {dimension_numbers = #tpu.dot_dimension_numbers<[1], [0], [0], [1], [0, 0, 1, 1], [], []>} : vector<16x384xbf16>, vector<384x128xbf16>, vector<16x128xf32> -> vector<16x128xf32>
    %58 = arith.addf %53, %57 : vector<16x128xf32>
    %c11 = arith.constant 11 : index
    %c0_43 = arith.constant 0 : index
    %59 = vector.load %arg7[%c11, %c0_43] : memref<32x384xbf16, #tpu.memory_space<vmem>>, vector<16x384xbf16>
    %c6_44 = arith.constant 6 : index
    %c0_45 = arith.constant 0 : index
    %c0_46 = arith.constant 0 : index
    %60 = vector.load %arg3[%c6_44, %c0_45, %c0_46] : memref<7x384x128xbf16, #tpu.memory_space<vmem>>, vector<1x384x128xbf16>
    %61 = vector.shape_cast %60 : vector<1x384x128xbf16> to vector<384x128xbf16>
    %cst_47 = arith.constant dense<0.000000e+00> : vector<16x128xf32>
    %62 = tpu.matmul %59, %61, %cst_47 {dimension_numbers = #tpu.dot_dimension_numbers<[1], [0], [0], [1], [0, 0, 1, 1], [], []>} : vector<16x384xbf16>, vector<384x128xbf16>, vector<16x128xf32> -> vector<16x128xf32>
    %63 = arith.addf %58, %62 : vector<16x128xf32>
    %c0_48 = arith.constant 0 : index
    %c0_49 = arith.constant 0 : index
    %c0_50 = arith.constant 0 : index
    %64 = vector.load %arg5[%c0_48, %c0_49, %c0_50] : memref<1x16x1xf32, #tpu.memory_space<vmem>>, vector<1x16x1xf32>
    %65 = vector.shape_cast %64 : vector<1x16x1xf32> to vector<16x1xf32>
    %66 = vector.broadcast %65 : vector<16x1xf32> to vector<16x128xf32>
    %67 = arith.mulf %63, %66 : vector<16x128xf32>
    %c0_51 = arith.constant 0 : index
    %c0_52 = arith.constant 0 : index
    %c0_53 = arith.constant 0 : index
    %68 = vector.load %arg6[%c0_51, %c0_52, %c0_53] : memref<1x16x128xf32, #tpu.memory_space<vmem>>, vector<1x16x128xf32>
    %69 = vector.shape_cast %68 : vector<1x16x128xf32> to vector<16x128xf32>
    %70 = vector.shape_cast %67 : vector<16x128xf32> to vector<1x16x128xf32>
    tpu.vector_store %arg6[%c0_51, %c0_52, %c0_53], %70 {strides = array<i32>} : memref<1x16x128xf32, #tpu.memory_space<vmem>>, vector<1x16x128xf32>,
    return
  }
  func.func @transform_0(%arg0: i32, %arg1: i32) -> (i32, i32, i32) {
    %c0_i32 = arith.constant 0 : i32
    %c0_i32_0 = arith.constant 0 : i32
    %c0_i32_1 = arith.constant 0 : i32
    return %arg0, %c0_i32, %c0_i32_0 : i32, i32, i32
  }
  func.func @transform_1(%arg0: i32, %arg1: i32) -> (i32, i32, i32) {
    %c0_i32 = arith.constant 0 : i32
    %c0_i32_0 = arith.constant 0 : i32
    %c0_i32_1 = arith.constant 0 : i32
    %c0_i32_2 = arith.constant 0 : i32
    return %c0_i32, %c0_i32_0, %c0_i32_1 : i32, i32, i32
  }
  func.func @transform_2(%arg0: i32, %arg1: i32) -> (i32, i32) {
    %c0_i32 = arith.constant 0 : i32
    %c0_i32_0 = arith.constant 0 : i32
    %c0_i32_1 = arith.constant 0 : i32
    return %c0_i32, %c0_i32_0 : i32, i32
  }
  func.func @transform_3(%arg0: i32, %arg1: i32) -> (i32, i32, i32) {
    %c0_i32 = arith.constant 0 : i32
    %c0_i32_0 = arith.constant 0 : i32
    return %arg0, %arg1, %c0_i32 : i32, i32, i32
  }
  func.func @transform_4(%arg0: i32, %arg1: i32) -> (i32, i32, i32) {
    %c0_i32 = arith.constant 0 : i32
    %c0_i32_0 = arith.constant 0 : i32
    return %arg0, %arg1, %c0_i32 : i32, i32, i32
  }
}

</mosaic_0001>

<llo_original>
// kernel: ssvm_forward_svc_infer.8
$region0: #{ssvm_forward_svc_infer.8}
  #allocation0 [shape = 'u32[]', space=smem, size = 0x4, offset = 0x4, fixed_abs, tag = 'smem constant byte address 0x4 - core index']
  #allocation1 [shape = 'u32[72,128]{1,0:T(1,128)}', space=vmem, size = 0x9000, scoped, tag = 'internal scratch']
  %s0 = inlined_call_operand.vmem [shape: f32[2,768,16], index: 0, kind: input, shape index: {}]
  %s1 = inlined_call_operand.vmem [shape: f32[2,16,1], index: 1, kind: input, shape index: {}]
  %s2 = inlined_call_operand.hbm [shape: bf16[768,256], index: 2, kind: input, shape index: {}]
  %s3 = inlined_call_operand.hbm [shape: f32[1,256], index: 3, kind: input, shape index: {}]
  %s4 = inlined_call_operand.hbm [shape: f32[1,256], index: 4, kind: input, shape index: {}]
  %s5 = inlined_call_operand.vmem [shape: bf16[2,16,256], index: 5, kind: output, shape index: {}]
  %s6 = sld [smem:[#allocation0]]
  $region65: #{ssvm_forward_svc_infer.8} parent=0
    _
  %s8 = ssub.s32 1, %s6
  %s9 = scalar_select 0, %s8, %s6
  $region1: #{ssvm_forward_svc_infer.8} parent=0
    #allocation2 [shape = 'u8[393216]{0}', space=vmem, size = 0x60000, scoped, tag = 'input window, operand 2, single buffered']
    #allocation3 [shape = 's32[2]{0}', space=sflag, size = 0x8, scoped, tag = 'scoped memory for ssvm_forward_svc_infer.8']
    #allocation4 [shape = 'u8[1024]{0}', space=vmem, size = 0x400, scoped, tag = 'input window, operand 3, single buffered']
    #allocation5 [shape = 's32[1]{0}', space=sflag, size = 0x4, scoped, tag = 'scoped memory for ssvm_forward_svc_infer.8']
    #allocation6 [shape = 'u8[1024]{0}', space=vmem, size = 0x400, scoped, tag = 'input window, operand 4, single buffered']
    %10 = vsyncpa [#allocation3], 0
    %11 = vsyncpa [#allocation5], 0
    loop: start=0, step=1, limit=4
    $region2: #{ssvm_forward_svc_infer.8} parent=1 // loop_pre_header
      _
    $region3: #{ssvm_forward_svc_infer.8} parent=1 // loop_header
      %s13 = sphi 0, %s17
      %p14 = scmp.ge.s32.totalorder %s13, 4
      %s20 = sphi 0, %s32
      %s21 = sphi 0, %s28
      %s22 = sphi 0, %s20
      %s23 = sphi 0, %s21
      %s24 = sphi 0, %s22
      %s25 = sphi 0, %s23
      %s37 = sphi 0, %s39
      %s40 = sphi 0, %s37
      %s41 = sphi 0, %s40
      %s57 = sphi 0, %s41
      %s65 = sphi 0, %s67
      %s68 = sphi 0, %s65
      %s69 = sphi 0, %s68
      %s85 = sphi 0, %s69
      %s89 = sphi 0, %s89
      %s91 = sphi 0, %s89
      %s92 = sphi 0, %s91
      %s106 = sphi 0, %s92
      %s110 = sphi 0, %s110
      %s112 = sphi 0, %s110
      %s113 = sphi 0, %s112
      %s127 = sphi 0, %s113
      %s131 = sphi 0, %s131
      %s133 = sphi 0, %s131
      %s134 = sphi 0, %s133
      %s148 = sphi 0, %s134
      %s156 = sphi 0, %s158
      %s159 = sphi 0, %s156
      %s160 = sphi 0, %s159
      %s176 = sphi 0, %s160
    $region4: #{ssvm_forward_svc_infer.8} parent=1 // loop_header_branch
      %16 = sbr.rel (%p14) target = $region8
    $region5: #{ssvm_forward_svc_infer.8} parent=1 // loop_body
      %s18 = ssub.s32 %s13, 1
      %s19 = ssub.s32 %s13, 2
      %s26 = sadd.s32 1, %s21
      %p27 = scmp.ge.s32.totalorder %s26, 1
      %s28 = scalar_select %p27, 0, %s26
      %s29 = sadd.s32 1, %s20
      %s30 = scalar_select %p27, %s29, %s20
      %p31 = scmp.ge.s32.totalorder %s30, 2
      %s32 = scalar_select %p31, 0, %s30
      %s33 = ssub.s32 %s20, %s32
      %s34 = ssub.s32 %s21, %s28
      %s35 = sor.u32 %s33, %s34
      %p36 = scmp.eq.s32.totalorder %s35, 0
      %s38 = sadd.s32 %s37, 1
      %s39 = scalar_select %p36, %s37, %s38
      %p42 = pneg %p36
      %p43 = scmp.eq.s32.totalorder %s13, 1
      %p44 = por %p42, %p43
      %p45 = scmp.ne.s32.totalorder %s37, %s40
      %p46 = scmp.eq.s32.totalorder %s13, 0
      %p47 = por %p45, %p46
      %p48 = scmp.ne.s32.totalorder %s37, %s40
      %p49 = scmp.eq.s32.totalorder %s18, 1
      %p50 = por %p48, %p49
      %p51 = scmp.ne.s32.totalorder %s40, %s41
      %p52 = scmp.eq.s32.totalorder %s18, 0
      %p53 = por %p51, %p52
      %p54 = scmp.ne.s32.totalorder %s40, %s41
      %p55 = scmp.eq.s32.totalorder %s19, 1
      %p56 = por %p54, %p55
      %p58 = scmp.ne.s32.totalorder %s41, %s57
      %p59 = scmp.eq.s32.totalorder %s19, 0
      %p60 = por %p58, %p59
      %s61 = ssub.s32 %s20, %s32
      %s62 = ssub.s32 %s21, %s28
      %s63 = sor.u32 %s61, %s62
      %p64 = scmp.eq.s32.totalorder %s63, 0
      %s66 = sadd.s32 %s65, 1
      %s67 = scalar_select %p64, %s65, %s66
      %p70 = pneg %p64
      %p71 = scmp.eq.s32.totalorder %s13, 1
      %p72 = por %p70, %p71
      %p73 = scmp.ne.s32.totalorder %s65, %s68
      %p74 = scmp.eq.s32.totalorder %s13, 0
      %p75 = por %p73, %p74
      %p76 = scmp.ne.s32.totalorder %s65, %s68
      %p77 = scmp.eq.s32.totalorder %s18, 1
      %p78 = por %p76, %p77
      %p79 = scmp.ne.s32.totalorder %s68, %s69
      %p80 = scmp.eq.s32.totalorder %s18, 0
      %p81 = por %p79, %p80
      %p82 = scmp.ne.s32.totalorder %s68, %s69
      %p83 = scmp.eq.s32.totalorder %s19, 1
      %p84 = por %p82, %p83
      %p86 = scmp.ne.s32.totalorder %s69, %s85
      %p87 = scmp.eq.s32.totalorder %s19, 0
      %p88 = por %p86, %p87
      %s90 = sadd.s32 %s89, 1
      %p93 = scmp.eq.s32.totalorder %s13, 1
      %p94 = scmp.ne.s32.totalorder %s89, %s91
      %p95 = scmp.eq.s32.totalorder %s13, 0
      %p96 = por %p94, %p95
      %p97 = scmp.ne.s32.totalorder %s89, %s91
      %p98 = scmp.eq.s32.totalorder %s18, 1
      %p99 = por %p97, %p98
      %p100 = scmp.ne.s32.totalorder %s91, %s92
      %p101 = scmp.eq.s32.totalorder %s18, 0
      %p102 = por %p100, %p101
      %p103 = scmp.ne.s32.totalorder %s91, %s92
      %p104 = scmp.eq.s32.totalorder %s19, 1
      %p105 = por %p103, %p104
      %p107 = scmp.ne.s32.totalorder %s92, %s106
      %p108 = scmp.eq.s32.totalorder %s19, 0
      %p109 = por %p107, %p108
      %s111 = sadd.s32 %s110, 1
      %p114 = scmp.eq.s32.totalorder %s13, 1
      %p115 = scmp.ne.s32.totalorder %s110, %s112
      %p116 = scmp.eq.s32.totalorder %s13, 0
      %p117 = por %p115, %p116
      %p118 = scmp.ne.s32.totalorder %s110, %s112
      %p119 = scmp.eq.s32.totalorder %s18, 1
      %p120 = por %p118, %p119
      %p121 = scmp.ne.s32.totalorder %s112, %s113
      %p122 = scmp.eq.s32.totalorder %s18, 0
      %p123 = por %p121, %p122
      %p124 = scmp.ne.s32.totalorder %s112, %s113
      %p125 = scmp.eq.s32.totalorder %s19, 1
      %p126 = por %p124, %p125
      %p128 = scmp.ne.s32.totalorder %s113, %s127
      %p129 = scmp.eq.s32.totalorder %s19, 0
      %p130 = por %p128, %p129
      %s132 = sadd.s32 %s131, 1
      %p135 = scmp.eq.s32.totalorder %s13, 1
      %p136 = scmp.ne.s32.totalorder %s131, %s133
      %p137 = scmp.eq.s32.totalorder %s13, 0
      %p138 = por %p136, %p137
      %p139 = scmp.ne.s32.totalorder %s131, %s133
      %p140 = scmp.eq.s32.totalorder %s18, 1
      %p141 = por %p139, %p140
      %p142 = scmp.ne.s32.totalorder %s133, %s134
      %p143 = scmp.eq.s32.totalorder %s18, 0
      %p144 = por %p142, %p143
      %p145 = scmp.ne.s32.totalorder %s133, %s134
      %p146 = scmp.eq.s32.totalorder %s19, 1
      %p147 = por %p145, %p146
      %p149 = scmp.ne.s32.totalorder %s134, %s148
      %p150 = scmp.eq.s32.totalorder %s19, 0
      %p151 = por %p149, %p150
      %s152 = ssub.s32 %s20, %s32
      %s153 = ssub.s32 %s21, %s28
      %s154 = sor.u32 %s152, %s153
      %p155 = scmp.eq.s32.totalorder %s154, 0
      %s157 = sadd.s32 %s156, 1
      %s158 = scalar_select %p155, %s156, %s157
      %p161 = pneg %p155
      %p162 = scmp.eq.s32.totalorder %s13, 1
      %p163 = por %p161, %p162
      %p164 = scmp.ne.s32.totalorder %s156, %s159
      %p165 = scmp.eq.s32.totalorder %s13, 0
      %p166 = por %p164, %p165
      %p167 = scmp.ne.s32.totalorder %s156, %s159
      %p168 = scmp.eq.s32.totalorder %s18, 1
      %p169 = por %p167, %p168
      %p170 = scmp.ne.s32.totalorder %s159, %s160
      %p171 = scmp.eq.s32.totalorder %s18, 0
      %p172 = por %p170, %p171
      %p173 = scmp.ne.s32.totalorder %s159, %s160
      %p174 = scmp.eq.s32.totalorder %s19, 1
      %p175 = por %p173, %p174
      %p177 = scmp.ne.s32.totalorder %s160, %s176
      %p178 = scmp.eq.s32.totalorder %s19, 0
      %p179 = por %p177, %p178
      %p180 = scmp.le.s32.totalorder 1, %s13
      %p181 = scmp.lt.s32.totalorder %s13, 3
      %p182 = pnand %p180, %p181
      %p183 = pneg %p182
      // Predicated region
      $region9: #{ssvm_forward_svc_infer.8} parent=5 // pred_check
        _
      $region10: #{ssvm_forward_svc_infer.8} parent=5 // pred_check_branch
        %185 = sbr.rel (%p182) target = $region12
      $region11: #{ssvm_forward_svc_infer.8} parent=5 // pred_region
        %s186 = ssub.s32 %s13, 1
        // Predicated region
        $region13: #{ssvm_forward_svc_infer.8} parent=11 // pred_check
          %p187 = pneg %p102
        $region14: #{ssvm_forward_svc_infer.8} parent=11 // pred_check_branch
          %189 = sbr.rel (%p187) target = $region16
        $region15: #{ssvm_forward_svc_infer.8} parent=11 // pred_region
          %191 = vsyncadd [#allocation3], 0
          %s192 = sshll.u32 %s2, 4
          %s193 = int_to_ptr.hbm [resolvable:$true] %s192
          %s194 = sshll.u32 [#allocation2], 4
          %s195 = int_to_ptr.vmem [resolvable:$true] %s194
          %200 = dma.hbm_to_vmem [thread:$0]  %s193, 12288, %s195, [#allocation3], 128, 128, 8
        $region16: #{ssvm_forward_svc_infer.8} parent=11 // pred_fallthru
          _
        // Predicated region
        $region17: #{ssvm_forward_svc_infer.8} parent=11 // pred_check
          %p201 = pneg %p123
        $region18: #{ssvm_forward_svc_infer.8} parent=11 // pred_check_branch
          %203 = sbr.rel (%p201) target = $region20
        $region19: #{ssvm_forward_svc_infer.8} parent=11 // pred_region
          %205 = vsyncadd [#allocation5], 0
          %s207 = sshll.u32 %s3, 4
          %s208 = int_to_ptr.hbm [resolvable:$true] %s207
          %s209 = sshll.u32 [#allocation4], 4
          %s210 = int_to_ptr.vmem [resolvable:$true] %s209
          %212 = dma.hbm_to_vmem [thread:$0]  %s208, 32, %s210, [#allocation5]
        $region20: #{ssvm_forward_svc_infer.8} parent=11 // pred_fallthru
          _
        // Predicated region
        $region21: #{ssvm_forward_svc_infer.8} parent=11 // pred_check
          %p213 = pneg %p144
        $region22: #{ssvm_forward_svc_infer.8} parent=11 // pred_check_branch
          %215 = sbr.rel (%p213) target = $region24
        $region23: #{ssvm_forward_svc_infer.8} parent=11 // pred_region
          %217 = vsyncadd [#allocation5], 0
          %s219 = sshll.u32 %s4, 4
          %s220 = int_to_ptr.hbm [resolvable:$true] %s219
          %s221 = sshll.u32 [#allocation6], 4
          %s222 = int_to_ptr.vmem [resolvable:$true] %s221
          %224 = dma.hbm_to_vmem [thread:$0]  %s220, 32, %s222, [#allocation5]
        $region24: #{ssvm_forward_svc_infer.8} parent=11 // pred_fallthru
          _
      $region12: #{ssvm_forward_svc_infer.8} parent=5 // pred_fallthru
        _
      %p225 = scmp.lt.s32.totalorder %s13, 2
      // Predicated region
      $region25: #{ssvm_forward_svc_infer.8} parent=5 // pred_check
        %p226 = pneg %p225
      $region26: #{ssvm_forward_svc_infer.8} parent=5 // pred_check_branch
        %228 = sbr.rel (%p226) target = $region28
      $region27: #{ssvm_forward_svc_infer.8} parent=5 // pred_region
        // Predicated region
        $region29: #{ssvm_forward_svc_infer.8} parent=27 // pred_check
          %p229 = pneg %p47
        $region30: #{ssvm_forward_svc_infer.8} parent=27 // pred_check_branch
          %231 = sbr.rel (%p229) target = $region32
        $region31: #{ssvm_forward_svc_infer.8} parent=27 // pred_region
          %p232 = scmp.lt.s32.totalorder %s20, 1
          %s233 = scalar_select %p232, %s20, 1
          %p234 = scmp.lt.s32.totalorder %s21, 0
          %s235 = scalar_select %p234, %s21, 0
          %s236 = smul.addr %s233, 96
          %s237 = sadd.s32 %s235, %s236
          %s238 = smul.addr %s237, 8
          %s239 = scalar_lea.vmem %s0, %s238
        $region32: #{ssvm_forward_svc_infer.8} parent=27 // pred_fallthru
          _
        // Predicated region
        $region33: #{ssvm_forward_svc_infer.8} parent=27 // pred_check
          %p240 = pneg %p75
        $region34: #{ssvm_forward_svc_infer.8} parent=27 // pred_check_branch
          %242 = sbr.rel (%p240) target = $region36
        $region35: #{ssvm_forward_svc_infer.8} parent=27 // pred_region
          %s243 = smul.u32 2, %s21
          %p244 = scmp.lt.s32.totalorder %s20, 1
          %s245 = scalar_select %p244, %s20, 1
          %p246 = scmp.lt.s32.totalorder %s243, 1
          %s247 = scalar_select %p246, %s243, 1
          %s248 = smul.addr %s245, 2
          %s249 = sadd.s32 %s247, %s248
          %s250 = smul.addr %s249, 8
          %s251 = scalar_lea.vmem %s1, %s250
          %s252 = smul.u32 2, %s21
        $region36: #{ssvm_forward_svc_infer.8} parent=27 // pred_fallthru
          _
      $region28: #{ssvm_forward_svc_infer.8} parent=5 // pred_fallthru
        _
      %p253 = scmp.le.s32.totalorder 1, %s13
      %p254 = scmp.lt.s32.totalorder %s13, 3
      %p255 = pnand %p253, %p254
      %p256 = pneg %p255
      // Predicated region
      $region37: #{ssvm_forward_svc_infer.8} parent=5 // pred_check
        _
      $region38: #{ssvm_forward_svc_infer.8} parent=5 // pred_check_branch
        %258 = sbr.rel (%p255) target = $region40
      $region39: #{ssvm_forward_svc_infer.8} parent=5 // pred_region
        %s259 = ssub.s32 %s13, 1
        // Predicated region
        $region41: #{ssvm_forward_svc_infer.8} parent=39 // pred_check
          %p260 = pneg %p102
        $region42: #{ssvm_forward_svc_infer.8} parent=39 // pred_check_branch
          %262 = sbr.rel (%p260) target = $region44
        $region43: #{ssvm_forward_svc_infer.8} parent=39 // pred_region
          %264 = dma.done [#allocation3], 12288
        $region44: #{ssvm_forward_svc_infer.8} parent=39 // pred_fallthru
          _
        // Predicated region
        $region45: #{ssvm_forward_svc_infer.8} parent=39 // pred_check
          %p265 = pneg %p123
        $region46: #{ssvm_forward_svc_infer.8} parent=39 // pred_check_branch
          %267 = sbr.rel (%p265) target = $region48
        $region47: #{ssvm_forward_svc_infer.8} parent=39 // pred_region
          %269 = dma.done [#allocation5], 32
        $region48: #{ssvm_forward_svc_infer.8} parent=39 // pred_fallthru
          _
        // Predicated region
        $region49: #{ssvm_forward_svc_infer.8} parent=39 // pred_check
          %p270 = pneg %p144
        $region50: #{ssvm_forward_svc_infer.8} parent=39 // pred_check_branch
          %272 = sbr.rel (%p270) target = $region52
        $region51: #{ssvm_forward_svc_infer.8} parent=39 // pred_region
          %274 = dma.done [#allocation5], 32
        $region52: #{ssvm_forward_svc_infer.8} parent=39 // pred_fallthru
          _
        %p275 = scmp.lt.s32.totalorder %s22, 1
        %s276 = scalar_select %p275, %s22, 1
        %p277 = scmp.lt.s32.totalorder %s23, 0
        %s278 = scalar_select %p277, %s23, 0
        %s279 = smul.addr %s276, 96
        %s280 = sadd.s32 %s278, %s279
        %s281 = smul.addr %s280, 8
        %s282 = scalar_lea.vmem %s0, %s281
        %p283 = pneg %p53
        %p284 = pneg %p50
        %s285 = smul.u32 2, %s23
        %p286 = scmp.lt.s32.totalorder %s22, 1
        %s287 = scalar_select %p286, %s22, 1
        %p288 = scmp.lt.s32.totalorder %s285, 1
        %s289 = scalar_select %p288, %s285, 1
        %s290 = smul.addr %s287, 2
        %s291 = sadd.s32 %s289, %s290
        %s292 = smul.addr %s291, 8
        %s293 = scalar_lea.vmem %s1, %s292
        %p294 = pneg %p81
        %p295 = pneg %p78
        %p296 = pneg %p102
        %p297 = pneg %p99
        %p298 = pneg %p123
        %p299 = pneg %p120
        %p300 = pneg %p144
        %p301 = pneg %p141
        %p302 = pneg %p172
        %p303 = pneg %p169
        %s304 = smul.u32 2, %s23
        %p305 = scmp.lt.s32.totalorder %s22, 1
        %s306 = scalar_select %p305, %s22, 1
        %p307 = scmp.lt.s32.totalorder %s304, 1
        %s308 = scalar_select %p307, %s304, 1
        %s309 = smul.addr %s308, 2
        %s310 = smul.addr %s306, 4
        %s311 = sadd.s32 %s309, %s310
        %s312 = smul.addr %s311, 4
        %s313 = scalar_lea.vmem %s5, %s312
        %p314 = scmp.lt.s32.totalorder %s22, 1
        %s315 = scalar_select %p314, %s22, 1
        %p316 = scmp.lt.s32.totalorder %s23, 0
        %s317 = scalar_select %p316, %s23, 0
        %s318 = smul.addr %s315, 96
        %s319 = sadd.s32 %s317, %s318
        %s320 = smul.addr %s319, 8
        %s321 = scalar_lea.vmem %s0, %s320
        %s322 = smul.u32 2, %s23
        %p323 = scmp.lt.s32.totalorder %s22, 1
        %s324 = scalar_select %p323, %s22, 1
        %p325 = scmp.lt.s32.totalorder %s322, 1
        %s326 = scalar_select %p325, %s322, 1
        %s327 = smul.addr %s324, 2
        %s328 = sadd.s32 %s326, %s327
        %s329 = smul.addr %s328, 8
        %s330 = scalar_lea.vmem %s1, %s329
        %s331 = smul.u32 2, %s23
        %s332 = smul.u32 2, %s23
        %p333 = scmp.lt.s32.totalorder %s22, 1
        %s334 = scalar_select %p333, %s22, 1
        %p335 = scmp.lt.s32.totalorder %s332, 1
        %s336 = scalar_select %p335, %s332, 1
        %s337 = smul.addr %s336, 2
        %s338 = smul.addr %s334, 4
        %s339 = sadd.s32 %s337, %s338
        %s340 = smul.addr %s339, 4
        %s341 = scalar_lea.vmem %s5, %s340
        %s342 = smul.u32 2, %s23
        %v343 = vld [vmem:[%s321] sm:$0xff]
        %v344 = vld [vmem:[%s321 + $0x8] sm:$0xff]
        %v345 = vld [vmem:[%s321 + $0x10] sm:$0xff]
        %v346 = vld [vmem:[%s321 + $0x18] sm:$0xff]
        %v347 = vld [vmem:[%s321 + $0x20] sm:$0xff]
        %v348 = vld [vmem:[%s321 + $0x28] sm:$0xff]
        %v349 = vld [vmem:[%s321 + $0x30] sm:$0xff]
        %v350 = vld [vmem:[%s321 + $0x38] sm:$0xff]
        %v351 = vld [vmem:[%s321 + $0x40] sm:$0xff]
        %v352 = vld [vmem:[%s321 + $0x48] sm:$0xff]
        %v353 = vld [vmem:[%s321 + $0x50] sm:$0xff]
        %v354 = vld [vmem:[%s321 + $0x58] sm:$0xff]
        %v355 = vld [vmem:[%s321 + $0x60] sm:$0xff]
        %v356 = vld [vmem:[%s321 + $0x68] sm:$0xff]
        %v357 = vld [vmem:[%s321 + $0x70] sm:$0xff]
        %v358 = vld [vmem:[%s321 + $0x78] sm:$0xff]
        %v359 = vld [vmem:[%s321 + $0x80] sm:$0xff]
        %v360 = vld [vmem:[%s321 + $0x88] sm:$0xff]
        %v361 = vld [vmem:[%s321 + $0x90] sm:$0xff]
        %v362 = vld [vmem:[%s321 + $0x98] sm:$0xff]
        %v363 = vld [vmem:[%s321 + $0xa0] sm:$0xff]
        %v364 = vld [vmem:[%s321 + $0xa8] sm:$0xff]
        %v365 = vld [vmem:[%s321 + $0xb0] sm:$0xff]
        %v366 = vld [vmem:[%s321 + $0xb8] sm:$0xff]
        %v367 = vld [vmem:[%s321 + $0xc0] sm:$0xff]
        %v368 = vld [vmem:[%s321 + $0xc8] sm:$0xff]
        %v369 = vld [vmem:[%s321 + $0xd0] sm:$0xff]
        %v370 = vld [vmem:[%s321 + $0xd8] sm:$0xff]
        %v371 = vld [vmem:[%s321 + $0xe0] sm:$0xff]
        %v372 = vld [vmem:[%s321 + $0xe8] sm:$0xff]
        %v373 = vld [vmem:[%s321 + $0xf0] sm:$0xff]
        %v374 = vld [vmem:[%s321 + $0xf8] sm:$0xff]
        %v375 = vld [vmem:[%s321 + $0x100] sm:$0xff]
        %v376 = vld [vmem:[%s321 + $0x108] sm:$0xff]
        %v377 = vld [vmem:[%s321 + $0x110] sm:$0xff]
        %v378 = vld [vmem:[%s321 + $0x118] sm:$0xff]
        %v379 = vld [vmem:[%s321 + $0x120] sm:$0xff]
        %v380 = vld [vmem:[%s321 + $0x128] sm:$0xff]
        %v381 = vld [vmem:[%s321 + $0x130] sm:$0xff]
        %v382 = vld [vmem:[%s321 + $0x138] sm:$0xff]
        %v383 = vld [vmem:[%s321 + $0x140] sm:$0xff]
        %v384 = vld [vmem:[%s321 + $0x148] sm:$0xff]
        %v385 = vld [vmem:[%s321 + $0x150] sm:$0xff]
        %v386 = vld [vmem:[%s321 + $0x158] sm:$0xff]
        %v387 = vld [vmem:[%s321 + $0x160] sm:$0xff]
        %v388 = vld [vmem:[%s321 + $0x168] sm:$0xff]
        %v389 = vld [vmem:[%s321 + $0x170] sm:$0xff]
        %v390 = vld [vmem:[%s321 + $0x178] sm:$0xff]
        %v391 = vld [vmem:[%s321 + $0x180] sm:$0xff]
        %v392 = vld [vmem:[%s321 + $0x188] sm:$0xff]
        %v393 = vld [vmem:[%s321 + $0x190] sm:$0xff]
        %v394 = vld [vmem:[%s321 + $0x198] sm:$0xff]
        %v395 = vld [vmem:[%s321 + $0x1a0] sm:$0xff]
        %v396 = vld [vmem:[%s321 + $0x1a8] sm:$0xff]
        %v397 = vld [vmem:[%s321 + $0x1b0] sm:$0xff]
        %v398 = vld [vmem:[%s321 + $0x1b8] sm:$0xff]
        %v399 = vld [vmem:[%s321 + $0x1c0] sm:$0xff]
        %v400 = vld [vmem:[%s321 + $0x1c8] sm:$0xff]
        %v401 = vld [vmem:[%s321 + $0x1d0] sm:$0xff]
        %v402 = vld [vmem:[%s321 + $0x1d8] sm:$0xff]
        %v403 = vld [vmem:[%s321 + $0x1e0] sm:$0xff]
        %v404 = vld [vmem:[%s321 + $0x1e8] sm:$0xff]
        %v405 = vld [vmem:[%s321 + $0x1f0] sm:$0xff]
        %v406 = vld [vmem:[%s321 + $0x1f8] sm:$0xff]
        %v407 = vld [vmem:[%s321 + $0x200] sm:$0xff]
        %v408 = vld [vmem:[%s321 + $0x208] sm:$0xff]
        %v409 = vld [vmem:[%s321 + $0x210] sm:$0xff]
        %v410 = vld [vmem:[%s321 + $0x218] sm:$0xff]
        %v411 = vld [vmem:[%s321 + $0x220] sm:$0xff]
        %v412 = vld [vmem:[%s321 + $0x228] sm:$0xff]
        %v413 = vld [vmem:[%s321 + $0x230] sm:$0xff]
        %v414 = vld [vmem:[%s321 + $0x238] sm:$0xff]
        %v415 = vld [vmem:[%s321 + $0x240] sm:$0xff]
        %v416 = vld [vmem:[%s321 + $0x248] sm:$0xff]
        %v417 = vld [vmem:[%s321 + $0x250] sm:$0xff]
        %v418 = vld [vmem:[%s321 + $0x258] sm:$0xff]
        %v419 = vld [vmem:[%s321 + $0x260] sm:$0xff]
        %v420 = vld [vmem:[%s321 + $0x268] sm:$0xff]
        %v421 = vld [vmem:[%s321 + $0x270] sm:$0xff]
        %v422 = vld [vmem:[%s321 + $0x278] sm:$0xff]
        %v423 = vld [vmem:[%s321 + $0x280] sm:$0xff]
        %v424 = vld [vmem:[%s321 + $0x288] sm:$0xff]
        %v425 = vld [vmem:[%s321 + $0x290] sm:$0xff]
        %v426 = vld [vmem:[%s321 + $0x298] sm:$0xff]
        %v427 = vld [vmem:[%s321 + $0x2a0] sm:$0xff]
        %v428 = vld [vmem:[%s321 + $0x2a8] sm:$0xff]
        %v429 = vld [vmem:[%s321 + $0x2b0] sm:$0xff]
        %v430 = vld [vmem:[%s321 + $0x2b8] sm:$0xff]
        %v431 = vld [vmem:[%s321 + $0x2c0] sm:$0xff]
        %v432 = vld [vmem:[%s321 + $0x2c8] sm:$0xff]
        %v433 = vld [vmem:[%s321 + $0x2d0] sm:$0xff]
        %v434 = vld [vmem:[%s321 + $0x2d8] sm:$0xff]
        %v435 = vld [vmem:[%s321 + $0x2e0] sm:$0xff]
        %v436 = vld [vmem:[%s321 + $0x2e8] sm:$0xff]
        %v437 = vld [vmem:[%s321 + $0x2f0] sm:$0xff]
        %v438 = vld [vmem:[%s321 + $0x2f8] sm:$0xff]
        %v439 = vld [vmem:[%s330] sm:$0xff]
        %v440 = vld [vmem:[%s330 + $0x8] sm:$0xff]
        %v441 = vrcp.pop 700.0
        %v442 = vmul.f32 700.0, %v441
        %v443 = vsub.f32 1.0, %v442
        %v444 = vmul.f32 %v441, %v443
        %v445 = vadd.f32 %v441, %v444
        %vm446 = vweird.f32 %v441
        %v447 = vsel %vm446, %v441, %v445
        %v448 = vmul.f32 %v439, %v447
        %v449 = vmul.f32 %v440, %v447
        %v450 = vadd.f32 %v448, 1.0
        %v451 = vadd.f32 %v449, 1.0
        %v452 = vlog2.pop %v450
        %v453 = vmul.f32 %v452, 0.6931472
        %v454 = vlog2.pop %v451
        %v455 = vmul.f32 %v454, 0.6931472
        %v456 = vld [vmem:[#allocation2] sm:$0xff]
        %v457 = vld [vmem:[#allocation2 + $0x8] sm:$0xff]
        %v458 = vld [vmem:[#allocation2 + $0x10] sm:$0xff]
        %v459 = vld [vmem:[#allocation2 + $0x18] sm:$0xff]
        %v460 = vld [vmem:[#allocation2 + $0x20] sm:$0xff]
        %v461 = vld [vmem:[#allocation2 + $0x28] sm:$0xff]
        %v462 = vld [vmem:[#allocation2 + $0x30] sm:$0xff]
        %v463 = vld [vmem:[#allocation2 + $0x38] sm:$0xff]
        %v464 = vld [vmem:[#allocation2 + $0x40] sm:$0xff]
        %v465 = vld [vmem:[#allocation2 + $0x48] sm:$0xff]
        %v466 = vld [vmem:[#allocation2 + $0x50] sm:$0xff]
        %v467 = vld [vmem:[#allocation2 + $0x58] sm:$0xff]
        %v468 = vld [vmem:[#allocation2 + $0x60] sm:$0xff]
        %v469 = vld [vmem:[#allocation2 + $0x68] sm:$0xff]
        %v470 = vld [vmem:[#allocation2 + $0x70] sm:$0xff]
        %v471 = vld [vmem:[#allocation2 + $0x78] sm:$0xff]
        %v472 = vld [vmem:[#allocation2 + $0x80] sm:$0xff]
        %v473 = vld [vmem:[#allocation2 + $0x88] sm:$0xff]
        %v474 = vld [vmem:[#allocation2 + $0x90] sm:$0xff]
        %v475 = vld [vmem:[#allocation2 + $0x98] sm:$0xff]
        %v476 = vld [vmem:[#allocation2 + $0xa0] sm:$0xff]
        %v477 = vld [vmem:[#allocation2 + $0xa8] sm:$0xff]
        %v478 = vld [vmem:[#allocation2 + $0xb0] sm:$0xff]
        %v479 = vld [vmem:[#allocation2 + $0xb8] sm:$0xff]
        %v480 = vld [vmem:[#allocation2 + $0xc0] sm:$0xff]
        %v481 = vld [vmem:[#allocation2 + $0xc8] sm:$0xff]
        %v482 = vld [vmem:[#allocation2 + $0xd0] sm:$0xff]
        %v483 = vld [vmem:[#allocation2 + $0xd8] sm:$0xff]
        %v484 = vld [vmem:[#allocation2 + $0xe0] sm:$0xff]
        %v485 = vld [vmem:[#allocation2 + $0xe8] sm:$0xff]
        %v486 = vld [vmem:[#allocation2 + $0xf0] sm:$0xff]
        %v487 = vld [vmem:[#allocation2 + $0xf8] sm:$0xff]
        %v488 = vld [vmem:[#allocation2 + $0x100] sm:$0xff]
        %v489 = vld [vmem:[#allocation2 + $0x108] sm:$0xff]
        %v490 = vld [vmem:[#allocation2 + $0x110] sm:$0xff]
        %v491 = vld [vmem:[#allocation2 + $0x118] sm:$0xff]
        %v492 = vld [vmem:[#allocation2 + $0x120] sm:$0xff]
        %v493 = vld [vmem:[#allocation2 + $0x128] sm:$0xff]
        %v494 = vld [vmem:[#allocation2 + $0x130] sm:$0xff]
        %v495 = vld [vmem:[#allocation2 + $0x138] sm:$0xff]
        %v496 = vld [vmem:[#allocation2 + $0x140] sm:$0xff]
        %v497 = vld [vmem:[#allocation2 + $0x148] sm:$0xff]
        %v498 = vld [vmem:[#allocation2 + $0x150] sm:$0xff]
        %v499 = vld [vmem:[#allocation2 + $0x158] sm:$0xff]
        %v500 = vld [vmem:[#allocation2 + $0x160] sm:$0xff]
        %v501 = vld [vmem:[#allocation2 + $0x168] sm:$0xff]
        %v502 = vld [vmem:[#allocation2 + $0x170] sm:$0xff]
        %v503 = vld [vmem:[#allocation2 + $0x178] sm:$0xff]
        %v504 = vld [vmem:[#allocation2 + $0x180] sm:$0xff]
        %v505 = vld [vmem:[#allocation2 + $0x188] sm:$0xff]
        %v506 = vld [vmem:[#allocation2 + $0x190] sm:$0xff]
        %v507 = vld [vmem:[#allocation2 + $0x198] sm:$0xff]
        %v508 = vld [vmem:[#allocation2 + $0x1a0] sm:$0xff]
        %v509 = vld [vmem:[#allocation2 + $0x1a8] sm:$0xff]
        %v510 = vld [vmem:[#allocation2 + $0x1b0] sm:$0xff]
        %v511 = vld [vmem:[#allocation2 + $0x1b8] sm:$0xff]
        %v512 = vld [vmem:[#allocation2 + $0x1c0] sm:$0xff]
        %v513 = vld [vmem:[#allocation2 + $0x1c8] sm:$0xff]
        %v514 = vld [vmem:[#allocation2 + $0x1d0] sm:$0xff]
        %v515 = vld [vmem:[#allocation2 + $0x1d8] sm:$0xff]
        %v516 = vld [vmem:[#allocation2 + $0x1e0] sm:$0xff]
        %v517 = vld [vmem:[#allocation2 + $0x1e8] sm:$0xff]
        %v518 = vld [vmem:[#allocation2 + $0x1f0] sm:$0xff]
        %v519 = vld [vmem:[#allocation2 + $0x1f8] sm:$0xff]
        %v520 = vld [vmem:[#allocation2 + $0x200] sm:$0xff]
        %v521 = vld [vmem:[#allocation2 + $0x208] sm:$0xff]
        %v522 = vld [vmem:[#allocation2 + $0x210] sm:$0xff]
        %v523 = vld [vmem:[#allocation2 + $0x218] sm:$0xff]
        %v524 = vld [vmem:[#allocation2 + $0x220] sm:$0xff]
        %v525 = vld [vmem:[#allocation2 + $0x228] sm:$0xff]
        %v526 = vld [vmem:[#allocation2 + $0x230] sm:$0xff]
        %v527 = vld [vmem:[#allocation2 + $0x238] sm:$0xff]
        %v528 = vld [vmem:[#allocation2 + $0x240] sm:$0xff]
        %v529 = vld [vmem:[#allocation2 + $0x248] sm:$0xff]
        %v530 = vld [vmem:[#allocation2 + $0x250] sm:$0xff]
        %v531 = vld [vmem:[#allocation2 + $0x258] sm:$0xff]
        %v532 = vld [vmem:[#allocation2 + $0x260] sm:$0xff]
        %v533 = vld [vmem:[#allocation2 + $0x268] sm:$0xff]
        %v534 = vld [vmem:[#allocation2 + $0x270] sm:$0xff]
        %v535 = vld [vmem:[#allocation2 + $0x278] sm:$0xff]
        %v536 = vld [vmem:[#allocation2 + $0x280] sm:$0xff]
        %v537 = vld [vmem:[#allocation2 + $0x288] sm:$0xff]
        %v538 = vld [vmem:[#allocation2 + $0x290] sm:$0xff]
        %v539 = vld [vmem:[#allocation2 + $0x298] sm:$0xff]
        %v540 = vld [vmem:[#allocation2 + $0x2a0] sm:$0xff]
        %v541 = vld [vmem:[#allocation2 + $0x2a8] sm:$0xff]
        %v542 = vld [vmem:[#allocation2 + $0x2b0] sm:$0xff]
        %v543 = vld [vmem:[#allocation2 + $0x2b8] sm:$0xff]
        %v544 = vld [vmem:[#allocation2 + $0x2c0] sm:$0xff]
        %v545 = vld [vmem:[#allocation2 + $0x2c8] sm:$0xff]
        %v546 = vld [vmem:[#allocation2 + $0x2d0] sm:$0xff]
        %v547 = vld [vmem:[#allocation2 + $0x2d8] sm:$0xff]
        %v548 = vld [vmem:[#allocation2 + $0x2e0] sm:$0xff]
        %v549 = vld [vmem:[#allocation2 + $0x2e8] sm:$0xff]
        %v550 = vld [vmem:[#allocation2 + $0x2f0] sm:$0xff]
        %v551 = vld [vmem:[#allocation2 + $0x2f8] sm:$0xff]
        %v552 = vpack.c.bf16 %v344, %v343
        %v553 = vpack.c.bf16 %v346, %v345
        %v554 = vpack.c.bf16 %v348, %v347
        %v555 = vpack.c.bf16 %v350, %v349
        %v556 = vpack.c.bf16 %v352, %v351
        %v557 = vpack.c.bf16 %v354, %v353
        %v558 = vpack.c.bf16 %v356, %v355
        %v559 = vpack.c.bf16 %v358, %v357
        %v560 = vpack.c.bf16 %v360, %v359
        %v561 = vpack.c.bf16 %v362, %v361
        %v562 = vpack.c.bf16 %v364, %v363
        %v563 = vpack.c.bf16 %v366, %v365
        %v564 = vpack.c.bf16 %v368, %v367
        %v565 = vpack.c.bf16 %v370, %v369
        %v566 = vpack.c.bf16 %v372, %v371
        %v567 = vpack.c.bf16 %v374, %v373
        %v568 = vpack.c.bf16 %v376, %v375
        %v569 = vpack.c.bf16 %v378, %v377
        %v570 = vpack.c.bf16 %v380, %v379
        %v571 = vpack.c.bf16 %v382, %v381
        %v572 = vpack.c.bf16 %v384, %v383
        %v573 = vpack.c.bf16 %v386, %v385
        %v574 = vpack.c.bf16 %v388, %v387
        %v575 = vpack.c.bf16 %v390, %v389
        %v576 = vpack.c.bf16 %v392, %v391
        %v577 = vpack.c.bf16 %v394, %v393
        %v578 = vpack.c.bf16 %v396, %v395
        %v579 = vpack.c.bf16 %v398, %v397
        %v580 = vpack.c.bf16 %v400, %v399
        %v581 = vpack.c.bf16 %v402, %v401
        %v582 = vpack.c.bf16 %v404, %v403
        %v583 = vpack.c.bf16 %v406, %v405
        %v584 = vpack.c.bf16 %v408, %v407
        %v585 = vpack.c.bf16 %v410, %v409
        %v586 = vpack.c.bf16 %v412, %v411
        %v587 = vpack.c.bf16 %v414, %v413
        %v588 = vpack.c.bf16 %v416, %v415
        %v589 = vpack.c.bf16 %v418, %v417
        %v590 = vpack.c.bf16 %v420, %v419
        %v591 = vpack.c.bf16 %v422, %v421
        %v592 = vpack.c.bf16 %v424, %v423
        %v593 = vpack.c.bf16 %v426, %v425
        %v594 = vpack.c.bf16 %v428, %v427
        %v595 = vpack.c.bf16 %v430, %v429
        %v596 = vpack.c.bf16 %v432, %v431
        %v597 = vpack.c.bf16 %v434, %v433
        %v598 = vpack.c.bf16 %v436, %v435
        %v599 = vpack.c.bf16 %v438, %v437
        %v600 = vld [vmem:[#allocation4] sm:$0x3]
        %602 = vset.pattern.permute.xlu0 0
        %603 = vperm.xlu0 %602, %v453
        %v604 = vpop.permute.xlu0 %603
        %607 = vset.pattern.permute.xlu0 0
        %608 = vperm.xlu0 %607, %v455
        %v609 = vpop.permute.xlu0 %608
        %v612 = vperm.slane %v600, 0
        %v613 = vperm.slane %v600, 1
        %v616 = vmul.f32 %v604, %v612
        %v617 = vmul.f32 %v604, %v613
        %v618 = vmul.f32 %v609, %v612
        %v619 = vmul.f32 %v609, %v613
        %620 = vxpose.xlu0.c.b16.start [1/8] %v552, 128
        %621 = vxpose.xlu0.c.b16.cont [2/8] %v553, 128
        %622 = vxpose.xlu0.c.b16.cont [3/8] %v554, 128
        %623 = vxpose.xlu0.c.b16.cont [4/8] %v555, 128
        %624 = vxpose.xlu0.c.b16.cont [5/8] %v556, 128
        %625 = vxpose.xlu0.c.b16.cont [6/8] %v557, 128
        %626 = vxpose.xlu0.c.b16.cont [7/8] %v558, 128
        %627 = vxpose.xlu0.c.b16.end [8/8] %v559, 128
        %v628 = vpop.trf.xlu0
        %v629 = vpop.trf.xlu0
        %v630 = vpop.trf.xlu0
        %v631 = vpop.trf.xlu0
        %v632 = vpop.trf.xlu0
        %v633 = vpop.trf.xlu0
        %v634 = vpop.trf.xlu0
        %v635 = vpop.trf.xlu0
        %636 = vxpose.xlu0.c.b16.start [1/8] %v560, 128
        %637 = vxpose.xlu0.c.b16.cont [2/8] %v561, 128
        %638 = vxpose.xlu0.c.b16.cont [3/8] %v562, 128
        %639 = vxpose.xlu0.c.b16.cont [4/8] %v563, 128
        %640 = vxpose.xlu0.c.b16.cont [5/8] %v564, 128
        %641 = vxpose.xlu0.c.b16.cont [6/8] %v565, 128
        %642 = vxpose.xlu0.c.b16.cont [7/8] %v566, 128
        %643 = vxpose.xlu0.c.b16.end [8/8] %v567, 128
        %v644 = vpop.trf.xlu0
        %v645 = vpop.trf.xlu0
        %v646 = vpop.trf.xlu0
        %v647 = vpop.trf.xlu0
        %v648 = vpop.trf.xlu0
        %v649 = vpop.trf.xlu0
        %v650 = vpop.trf.xlu0
        %v651 = vpop.trf.xlu0
        %652 = vxpose.xlu0.c.b16.start [1/8] %v568, 128
        %653 = vxpose.xlu0.c.b16.cont [2/8] %v569, 128
        %654 = vxpose.xlu0.c.b16.cont [3/8] %v570, 128
        %655 = vxpose.xlu0.c.b16.cont [4/8] %v571, 128
        %656 = vxpose.xlu0.c.b16.cont [5/8] %v572, 128
        %657 = vxpose.xlu0.c.b16.cont [6/8] %v573, 128
        %658 = vxpose.xlu0.c.b16.cont [7/8] %v574, 128
        %659 = vxpose.xlu0.c.b16.end [8/8] %v575, 128
        %v660 = vpop.trf.xlu0
        %v661 = vpop.trf.xlu0
        %v662 = vpop.trf.xlu0
        %v663 = vpop.trf.xlu0
        %v664 = vpop.trf.xlu0
        %v665 = vpop.trf.xlu0
        %v666 = vpop.trf.xlu0
        %v667 = vpop.trf.xlu0
        %668 = vxpose.xlu0.c.b16.start [1/8] %v576, 128
        %669 = vxpose.xlu0.c.b16.cont [2/8] %v577, 128
        %670 = vxpose.xlu0.c.b16.cont [3/8] %v578, 128
        %671 = vxpose.xlu0.c.b16.cont [4/8] %v579, 128
        %672 = vxpose.xlu0.c.b16.cont [5/8] %v580, 128
        %673 = vxpose.xlu0.c.b16.cont [6/8] %v581, 128
        %674 = vxpose.xlu0.c.b16.cont [7/8] %v582, 128
        %675 = vxpose.xlu0.c.b16.end [8/8] %v583, 128
        %v676 = vpop.trf.xlu0
        %v677 = vpop.trf.xlu0
        %v678 = vpop.trf.xlu0
        %v679 = vpop.trf.xlu0
        %v680 = vpop.trf.xlu0
        %v681 = vpop.trf.xlu0
        %v682 = vpop.trf.xlu0
        %v683 = vpop.trf.xlu0
        %684 = vxpose.xlu0.c.b16.start [1/8] %v584, 128
        %685 = vxpose.xlu0.c.b16.cont [2/8] %v585, 128
        %686 = vxpose.xlu0.c.b16.cont [3/8] %v586, 128
        %687 = vxpose.xlu0.c.b16.cont [4/8] %v587, 128
        %688 = vxpose.xlu0.c.b16.cont [5/8] %v588, 128
        %689 = vxpose.xlu0.c.b16.cont [6/8] %v589, 128
        %690 = vxpose.xlu0.c.b16.cont [7/8] %v590, 128
        %691 = vxpose.xlu0.c.b16.end [8/8] %v591, 128
        %v692 = vpop.trf.xlu0
        %v693 = vpop.trf.xlu0
        %v694 = vpop.trf.xlu0
        %v695 = vpop.trf.xlu0
        %v696 = vpop.trf.xlu0
        %v697 = vpop.trf.xlu0
        %v698 = vpop.trf.xlu0
        %v699 = vpop.trf.xlu0
        %700 = vxpose.xlu0.c.b16.start [1/8] %v592, 128
        %701 = vxpose.xlu0.c.b16.cont [2/8] %v593, 128
        %702 = vxpose.xlu0.c.b16.cont [3/8] %v594, 128
        %703 = vxpose.xlu0.c.b16.cont [4/8] %v595, 128
        %704 = vxpose.xlu0.c.b16.cont [5/8] %v596, 128
        %705 = vxpose.xlu0.c.b16.cont [6/8] %v597, 128
        %706 = vxpose.xlu0.c.b16.cont [7/8] %v598, 128
        %707 = vxpose.xlu0.c.b16.end [8/8] %v599, 128
        %v708 = vpop.trf.xlu0
        %v709 = vpop.trf.xlu0
        %v710 = vpop.trf.xlu0
        %v711 = vpop.trf.xlu0
        %v712 = vpop.trf.xlu0
        %v713 = vpop.trf.xlu0
        %v714 = vpop.trf.xlu0
        %v715 = vpop.trf.xlu0
        %v812 = vunpack.c.l.b16 %v456
        %v813 = vunpack.c.h.b16 %v456
        %v814 = vunpack.c.l.b16 %v457
        %v815 = vunpack.c.h.b16 %v457
        %v816 = vunpack.c.l.b16 %v458
        %v817 = vunpack.c.h.b16 %v458
        %v818 = vunpack.c.l.b16 %v459
        %v819 = vunpack.c.h.b16 %v459
        %v820 = vunpack.c.l.b16 %v460
        %v821 = vunpack.c.h.b16 %v460
        %v822 = vunpack.c.l.b16 %v461
        %v823 = vunpack.c.h.b16 %v461
        %v824 = vunpack.c.l.b16 %v462
        %v825 = vunpack.c.h.b16 %v462
        %v826 = vunpack.c.l.b16 %v463
        %v827 = vunpack.c.h.b16 %v463
        %v828 = vunpack.c.l.b16 %v464
        %v829 = vunpack.c.h.b16 %v464
        %v830 = vunpack.c.l.b16 %v465
        %v831 = vunpack.c.h.b16 %v465
        %v832 = vunpack.c.l.b16 %v466
        %v833 = vunpack.c.h.b16 %v466
        %v834 = vunpack.c.l.b16 %v467
        %v835 = vunpack.c.h.b16 %v467
        %v836 = vunpack.c.l.b16 %v468
        %v837 = vunpack.c.h.b16 %v468
        %v838 = vunpack.c.l.b16 %v469
        %v839 = vunpack.c.h.b16 %v469
        %v840 = vunpack.c.l.b16 %v470
        %v841 = vunpack.c.h.b16 %v470
        %v842 = vunpack.c.l.b16 %v471
        %v843 = vunpack.c.h.b16 %v471
        %v844 = vunpack.c.l.b16 %v472
        %v845 = vunpack.c.h.b16 %v472
        %v846 = vunpack.c.l.b16 %v473
        %v847 = vunpack.c.h.b16 %v473
        %v848 = vunpack.c.l.b16 %v474
        %v849 = vunpack.c.h.b16 %v474
        %v850 = vunpack.c.l.b16 %v475
        %v851 = vunpack.c.h.b16 %v475
        %v852 = vunpack.c.l.b16 %v476
        %v853 = vunpack.c.h.b16 %v476
        %v854 = vunpack.c.l.b16 %v477
        %v855 = vunpack.c.h.b16 %v477
        %v856 = vunpack.c.l.b16 %v478
        %v857 = vunpack.c.h.b16 %v478
        %v858 = vunpack.c.l.b16 %v479
        %v859 = vunpack.c.h.b16 %v479
        %v860 = vunpack.c.l.b16 %v480
        %v861 = vunpack.c.h.b16 %v480
        %v862 = vunpack.c.l.b16 %v481
        %v863 = vunpack.c.h.b16 %v481
        %v864 = vunpack.c.l.b16 %v482
        %v865 = vunpack.c.h.b16 %v482
        %v866 = vunpack.c.l.b16 %v483
        %v867 = vunpack.c.h.b16 %v483
        %v868 = vunpack.c.l.b16 %v484
        %v869 = vunpack.c.h.b16 %v484
        %v870 = vunpack.c.l.b16 %v485
        %v871 = vunpack.c.h.b16 %v485
        %v872 = vunpack.c.l.b16 %v486
        %v873 = vunpack.c.h.b16 %v486
        %v874 = vunpack.c.l.b16 %v487
        %v875 = vunpack.c.h.b16 %v487
        %v876 = vunpack.c.l.b16 %v488
        %v877 = vunpack.c.h.b16 %v488
        %v878 = vunpack.c.l.b16 %v489
        %v879 = vunpack.c.h.b16 %v489
        %v880 = vunpack.c.l.b16 %v490
        %v881 = vunpack.c.h.b16 %v490
        %v882 = vunpack.c.l.b16 %v491
        %v883 = vunpack.c.h.b16 %v491
        %v884 = vunpack.c.l.b16 %v492
        %v885 = vunpack.c.h.b16 %v492
        %v886 = vunpack.c.l.b16 %v493
        %v887 = vunpack.c.h.b16 %v493
        %v888 = vunpack.c.l.b16 %v494
        %v889 = vunpack.c.h.b16 %v494
        %v890 = vunpack.c.l.b16 %v495
        %v891 = vunpack.c.h.b16 %v495
        %v892 = vunpack.c.l.b16 %v496
        %v893 = vunpack.c.h.b16 %v496
        %v894 = vunpack.c.l.b16 %v497
        %v895 = vunpack.c.h.b16 %v497
        %v896 = vunpack.c.l.b16 %v498
        %v897 = vunpack.c.h.b16 %v498
        %v898 = vunpack.c.l.b16 %v499
        %v899 = vunpack.c.h.b16 %v499
        %v900 = vunpack.c.l.b16 %v500
        %v901 = vunpack.c.h.b16 %v500
        %v902 = vunpack.c.l.b16 %v501
        %v903 = vunpack.c.h.b16 %v501
        %v904 = vunpack.c.l.b16 %v502
        %v905 = vunpack.c.h.b16 %v502
        %v906 = vunpack.c.l.b16 %v503
        %v907 = vunpack.c.h.b16 %v503
        %v908 = vunpack.c.l.b16 %v504
        %v909 = vunpack.c.h.b16 %v504
        %v910 = vunpack.c.l.b16 %v505
        %v911 = vunpack.c.h.b16 %v505
        %v912 = vunpack.c.l.b16 %v506
        %v913 = vunpack.c.h.b16 %v506
        %v914 = vunpack.c.l.b16 %v507
        %v915 = vunpack.c.h.b16 %v507
        %v916 = vunpack.c.l.b16 %v508
        %v917 = vunpack.c.h.b16 %v508
        %v918 = vunpack.c.l.b16 %v509
        %v919 = vunpack.c.h.b16 %v509
        %v920 = vunpack.c.l.b16 %v510
        %v921 = vunpack.c.h.b16 %v510
        %v922 = vunpack.c.l.b16 %v511
        %v923 = vunpack.c.h.b16 %v511
        %v924 = vunpack.c.l.b16 %v512
        %v925 = vunpack.c.h.b16 %v512
        %v926 = vunpack.c.l.b16 %v513
        %v927 = vunpack.c.h.b16 %v513
        %v928 = vunpack.c.l.b16 %v514
        %v929 = vunpack.c.h.b16 %v514
        %v930 = vunpack.c.l.b16 %v515
        %v931 = vunpack.c.h.b16 %v515
        %v932 = vunpack.c.l.b16 %v516
        %v933 = vunpack.c.h.b16 %v516
        %v934 = vunpack.c.l.b16 %v517
        %v935 = vunpack.c.h.b16 %v517
        %v936 = vunpack.c.l.b16 %v518
        %v937 = vunpack.c.h.b16 %v518
        %v938 = vunpack.c.l.b16 %v519
        %v939 = vunpack.c.h.b16 %v519
        %v940 = vunpack.c.l.b16 %v520
        %v941 = vunpack.c.h.b16 %v520
        %v942 = vunpack.c.l.b16 %v521
        %v943 = vunpack.c.h.b16 %v521
        %v944 = vunpack.c.l.b16 %v522
        %v945 = vunpack.c.h.b16 %v522
        %v946 = vunpack.c.l.b16 %v523
        %v947 = vunpack.c.h.b16 %v523
        %v948 = vunpack.c.l.b16 %v524
        %v949 = vunpack.c.h.b16 %v524
        %v950 = vunpack.c.l.b16 %v525
        %v951 = vunpack.c.h.b16 %v525
        %v952 = vunpack.c.l.b16 %v526
        %v953 = vunpack.c.h.b16 %v526
        %v954 = vunpack.c.l.b16 %v527
        %v955 = vunpack.c.h.b16 %v527
        %v956 = vunpack.c.l.b16 %v528
        %v957 = vunpack.c.h.b16 %v528
        %v958 = vunpack.c.l.b16 %v529
        %v959 = vunpack.c.h.b16 %v529
        %v960 = vunpack.c.l.b16 %v530
        %v961 = vunpack.c.h.b16 %v530
        %v962 = vunpack.c.l.b16 %v531
        %v963 = vunpack.c.h.b16 %v531
        %v964 = vunpack.c.l.b16 %v532
        %v965 = vunpack.c.h.b16 %v532
        %v966 = vunpack.c.l.b16 %v533
        %v967 = vunpack.c.h.b16 %v533
        %v968 = vunpack.c.l.b16 %v534
        %v969 = vunpack.c.h.b16 %v534
        %v970 = vunpack.c.l.b16 %v535
        %v971 = vunpack.c.h.b16 %v535
        %v972 = vunpack.c.l.b16 %v536
        %v973 = vunpack.c.h.b16 %v536
        %v974 = vunpack.c.l.b16 %v537
        %v975 = vunpack.c.h.b16 %v537
        %v976 = vunpack.c.l.b16 %v538
        %v977 = vunpack.c.h.b16 %v538
        %v978 = vunpack.c.l.b16 %v539
        %v979 = vunpack.c.h.b16 %v539
        %v980 = vunpack.c.l.b16 %v540
        %v981 = vunpack.c.h.b16 %v540
        %v982 = vunpack.c.l.b16 %v541
        %v983 = vunpack.c.h.b16 %v541
        %v984 = vunpack.c.l.b16 %v542
        %v985 = vunpack.c.h.b16 %v542
        %v986 = vunpack.c.l.b16 %v543
        %v987 = vunpack.c.h.b16 %v543
        %v988 = vunpack.c.l.b16 %v544
        %v989 = vunpack.c.h.b16 %v544
        %v990 = vunpack.c.l.b16 %v545
        %v991 = vunpack.c.h.b16 %v545
        %v992 = vunpack.c.l.b16 %v546
        %v993 = vunpack.c.h.b16 %v546
        %v994 = vunpack.c.l.b16 %v547
        %v995 = vunpack.c.h.b16 %v547
        %v996 = vunpack.c.l.b16 %v548
        %v997 = vunpack.c.h.b16 %v548
        %v998 = vunpack.c.l.b16 %v549
        %v999 = vunpack.c.h.b16 %v549
        %v1000 = vunpack.c.l.b16 %v550
        %v1001 = vunpack.c.h.b16 %v550
        %v1002 = vunpack.c.l.b16 %v551
        %v1003 = vunpack.c.h.b16 %v551
        %v1004 = vpack.c.b16 %v814, %v812
        %v1005 = vpack.c.b16 %v815, %v813
        %v1006 = vpack.c.b16 %v818, %v816
        %v1007 = vpack.c.b16 %v819, %v817
        %v1008 = vpack.c.b16 %v822, %v820
        %v1009 = vpack.c.b16 %v823, %v821
        %v1010 = vpack.c.b16 %v826, %v824
        %v1011 = vpack.c.b16 %v827, %v825
        %v1012 = vpack.c.b16 %v830, %v828
        %v1013 = vpack.c.b16 %v831, %v829
        %v1014 = vpack.c.b16 %v834, %v832
        %v1015 = vpack.c.b16 %v835, %v833
        %v1016 = vpack.c.b16 %v838, %v836
        %v1017 = vpack.c.b16 %v839, %v837
        %v1018 = vpack.c.b16 %v842, %v840
        %v1019 = vpack.c.b16 %v843, %v841
        %v1020 = vpack.c.b16 %v846, %v844
        %v1021 = vpack.c.b16 %v847, %v845
        %v1022 = vpack.c.b16 %v850, %v848
        %v1023 = vpack.c.b16 %v851, %v849
        %v1024 = vpack.c.b16 %v854, %v852
        %v1025 = vpack.c.b16 %v855, %v853
        %v1026 = vpack.c.b16 %v858, %v856
        %v1027 = vpack.c.b16 %v859, %v857
        %v1028 = vpack.c.b16 %v862, %v860
        %v1029 = vpack.c.b16 %v863, %v861
        %v1030 = vpack.c.b16 %v866, %v864
        %v1031 = vpack.c.b16 %v867, %v865
        %v1032 = vpack.c.b16 %v870, %v868
        %v1033 = vpack.c.b16 %v871, %v869
        %v1034 = vpack.c.b16 %v874, %v872
        %v1035 = vpack.c.b16 %v875, %v873
        %v1036 = vpack.c.b16 %v878, %v876
        %v1037 = vpack.c.b16 %v879, %v877
        %v1038 = vpack.c.b16 %v882, %v880
        %v1039 = vpack.c.b16 %v883, %v881
        %v1040 = vpack.c.b16 %v886, %v884
        %v1041 = vpack.c.b16 %v887, %v885
        %v1042 = vpack.c.b16 %v890, %v888
        %v1043 = vpack.c.b16 %v891, %v889
        %v1044 = vpack.c.b16 %v894, %v892
        %v1045 = vpack.c.b16 %v895, %v893
        %v1046 = vpack.c.b16 %v898, %v896
        %v1047 = vpack.c.b16 %v899, %v897
        %v1048 = vpack.c.b16 %v902, %v900
        %v1049 = vpack.c.b16 %v903, %v901
        %v1050 = vpack.c.b16 %v906, %v904
        %v1051 = vpack.c.b16 %v907, %v905
        %v1052 = vpack.c.b16 %v910, %v908
        %v1053 = vpack.c.b16 %v911, %v909
        %v1054 = vpack.c.b16 %v914, %v912
        %v1055 = vpack.c.b16 %v915, %v913
        %v1056 = vpack.c.b16 %v918, %v916
        %v1057 = vpack.c.b16 %v919, %v917
        %v1058 = vpack.c.b16 %v922, %v920
        %v1059 = vpack.c.b16 %v923, %v921
        %v1060 = vpack.c.b16 %v926, %v924
        %v1061 = vpack.c.b16 %v927, %v925
        %v1062 = vpack.c.b16 %v930, %v928
        %v1063 = vpack.c.b16 %v931, %v929
        %v1064 = vpack.c.b16 %v934, %v932
        %v1065 = vpack.c.b16 %v935, %v933
        %v1066 = vpack.c.b16 %v938, %v936
        %v1067 = vpack.c.b16 %v939, %v937
        %v1068 = vpack.c.b16 %v942, %v940
        %v1069 = vpack.c.b16 %v943, %v941
        %v1070 = vpack.c.b16 %v946, %v944
        %v1071 = vpack.c.b16 %v947, %v945
        %v1072 = vpack.c.b16 %v950, %v948
        %v1073 = vpack.c.b16 %v951, %v949
        %v1074 = vpack.c.b16 %v954, %v952
        %v1075 = vpack.c.b16 %v955, %v953
        %v1076 = vpack.c.b16 %v958, %v956
        %v1077 = vpack.c.b16 %v959, %v957
        %v1078 = vpack.c.b16 %v962, %v960
        %v1079 = vpack.c.b16 %v963, %v961
        %v1080 = vpack.c.b16 %v966, %v964
        %v1081 = vpack.c.b16 %v967, %v965
        %v1082 = vpack.c.b16 %v970, %v968
        %v1083 = vpack.c.b16 %v971, %v969
        %v1084 = vpack.c.b16 %v974, %v972
        %v1085 = vpack.c.b16 %v975, %v973
        %v1086 = vpack.c.b16 %v978, %v976
        %v1087 = vpack.c.b16 %v979, %v977
        %v1088 = vpack.c.b16 %v982, %v980
        %v1089 = vpack.c.b16 %v983, %v981
        %v1090 = vpack.c.b16 %v986, %v984
        %v1091 = vpack.c.b16 %v987, %v985
        %v1092 = vpack.c.b16 %v990, %v988
        %v1093 = vpack.c.b16 %v991, %v989
        %v1094 = vpack.c.b16 %v994, %v992
        %v1095 = vpack.c.b16 %v995, %v993
        %v1096 = vpack.c.b16 %v998, %v996
        %v1097 = vpack.c.b16 %v999, %v997
        %v1098 = vpack.c.b16 %v1002, %v1000
        %v1099 = vpack.c.b16 %v1003, %v1001
        %1196 = vmatpush.bf16.msra.mxu0 %v1018
        %1197 = vmatpush.bf16.msra.mxu0 %v1016
        %1198 = vmatpush.bf16.msra.mxu0 %v1014
        %1199 = vmatpush.bf16.msra.mxu0 %v1012
        %1200 = vmatpush.bf16.msra.mxu0 %v1010
        %1201 = vmatpush.bf16.msra.mxu0 %v1008
        %1202 = vmatpush.bf16.msra.mxu0 %v1006
        %1203 = vmatpush.bf16.msra.mxu0 %v1004
        %1204 = vmatmul.bf16.gmra.mxu0 %v628
        %v1205 = vpop.f32.mrf.mxu0
        %v1206 = vadd.f32 %v616, %v1205
        %v1207 = vpop.f32.mrf.mxu0
        %v1208 = vadd.f32 %v618, %v1207
        %1209 = vdwg.mxu0
        %1210 = vmatpush.bf16.msra.mxu0 %v1034
        %1211 = vmatpush.bf16.msra.mxu0 %v1032
        %1212 = vmatpush.bf16.msra.mxu0 %v1030
        %1213 = vmatpush.bf16.msra.mxu0 %v1028
        %1214 = vmatpush.bf16.msra.mxu0 %v1026
        %1215 = vmatpush.bf16.msra.mxu0 %v1024
        %1216 = vmatpush.bf16.msra.mxu0 %v1022
        %1217 = vmatpush.bf16.msra.mxu0 %v1020
        %1218 = vmatmul.bf16.gmra.mxu0 %v644
        %v1219 = vpop.f32.mrf.mxu0
        %v1220 = vadd.f32 %v1206, %v1219
        %v1221 = vpop.f32.mrf.mxu0
        %v1222 = vadd.f32 %v1208, %v1221
        %1223 = vdwg.mxu0
        %1224 = vmatpush.bf16.msra.mxu0 %v1050
        %1225 = vmatpush.bf16.msra.mxu0 %v1048
        %1226 = vmatpush.bf16.msra.mxu0 %v1046
        %1227 = vmatpush.bf16.msra.mxu0 %v1044
        %1228 = vmatpush.bf16.msra.mxu0 %v1042
        %1229 = vmatpush.bf16.msra.mxu0 %v1040
        %1230 = vmatpush.bf16.msra.mxu0 %v1038
        %1231 = vmatpush.bf16.msra.mxu0 %v1036
        %1232 = vmatmul.bf16.gmra.mxu0 %v660
        %v1233 = vpop.f32.mrf.mxu0
        %v1234 = vadd.f32 %v1220, %v1233
        %v1235 = vpop.f32.mrf.mxu0
        %v1236 = vadd.f32 %v1222, %v1235
        %1237 = vdwg.mxu0
        %1238 = vmatpush.bf16.msra.mxu0 %v1066
        %1239 = vmatpush.bf16.msra.mxu0 %v1064
        %1240 = vmatpush.bf16.msra.mxu0 %v1062
        %1241 = vmatpush.bf16.msra.mxu0 %v1060
        %1242 = vmatpush.bf16.msra.mxu0 %v1058
        %1243 = vmatpush.bf16.msra.mxu0 %v1056
        %1244 = vmatpush.bf16.msra.mxu0 %v1054
        %1245 = vmatpush.bf16.msra.mxu0 %v1052
        %1246 = vmatmul.bf16.gmra.mxu0 %v676
        %v1247 = vpop.f32.mrf.mxu0
        %v1248 = vadd.f32 %v1234, %v1247
        %v1249 = vpop.f32.mrf.mxu0
        %v1250 = vadd.f32 %v1236, %v1249
        %1251 = vdwg.mxu0
        %1252 = vmatpush.bf16.msra.mxu0 %v1082
        %1253 = vmatpush.bf16.msra.mxu0 %v1080
        %1254 = vmatpush.bf16.msra.mxu0 %v1078
        %1255 = vmatpush.bf16.msra.mxu0 %v1076
        %1256 = vmatpush.bf16.msra.mxu0 %v1074
        %1257 = vmatpush.bf16.msra.mxu0 %v1072
        %1258 = vmatpush.bf16.msra.mxu0 %v1070
        %1259 = vmatpush.bf16.msra.mxu0 %v1068
        %1260 = vmatmul.bf16.gmra.mxu0 %v692
        %v1261 = vpop.f32.mrf.mxu0
        %v1262 = vadd.f32 %v1248, %v1261
        %v1263 = vpop.f32.mrf.mxu0
        %v1264 = vadd.f32 %v1250, %v1263
        %1265 = vdwg.mxu0
        %1266 = vmatpush.bf16.msra.mxu0 %v1098
        %1267 = vmatpush.bf16.msra.mxu0 %v1096
        %1268 = vmatpush.bf16.msra.mxu0 %v1094
        %1269 = vmatpush.bf16.msra.mxu0 %v1092
        %1270 = vmatpush.bf16.msra.mxu0 %v1090
        %1271 = vmatpush.bf16.msra.mxu0 %v1088
        %1272 = vmatpush.bf16.msra.mxu0 %v1086
        %1273 = vmatpush.bf16.msra.mxu0 %v1084
        %1274 = vmatmul.bf16.gmra.mxu0 %v708
        %v1275 = vpop.f32.mrf.mxu0
        %v1276 = vadd.f32 %v1262, %v1275
        %v1277 = vpop.f32.mrf.mxu0
        %v1278 = vadd.f32 %v1264, %v1277
        %1279 = vdwg.mxu0
        %1280 = vmatpush.bf16.msra.mxu0 %v1019
        %1281 = vmatpush.bf16.msra.mxu0 %v1017
        %1282 = vmatpush.bf16.msra.mxu0 %v1015
        %1283 = vmatpush.bf16.msra.mxu0 %v1013
        %1284 = vmatpush.bf16.msra.mxu0 %v1011
        %1285 = vmatpush.bf16.msra.mxu0 %v1009
        %1286 = vmatpush.bf16.msra.mxu0 %v1007
        %1287 = vmatpush.bf16.msra.mxu0 %v1005
        %1288 = vmatmul.bf16.gmra.mxu0 %v628
        %v1289 = vpop.f32.mrf.mxu0
        %v1290 = vadd.f32 %v617, %v1289
        %v1291 = vpop.f32.mrf.mxu0
        %v1292 = vadd.f32 %v619, %v1291
        %1293 = vdwg.mxu0
        %1294 = vmatpush.bf16.msra.mxu0 %v1035
        %1295 = vmatpush.bf16.msra.mxu0 %v1033
        %1296 = vmatpush.bf16.msra.mxu0 %v1031
        %1297 = vmatpush.bf16.msra.mxu0 %v1029
        %1298 = vmatpush.bf16.msra.mxu0 %v1027
        %1299 = vmatpush.bf16.msra.mxu0 %v1025
        %1300 = vmatpush.bf16.msra.mxu0 %v1023
        %1301 = vmatpush.bf16.msra.mxu0 %v1021
        %1302 = vmatmul.bf16.gmra.mxu0 %v644
        %v1303 = vpop.f32.mrf.mxu0
        %v1304 = vadd.f32 %v1290, %v1303
        %v1305 = vpop.f32.mrf.mxu0
        %v1306 = vadd.f32 %v1292, %v1305
        %1307 = vdwg.mxu0
        %1308 = vmatpush.bf16.msra.mxu0 %v1051
        %1309 = vmatpush.bf16.msra.mxu0 %v1049
        %1310 = vmatpush.bf16.msra.mxu0 %v1047
        %1311 = vmatpush.bf16.msra.mxu0 %v1045
        %1312 = vmatpush.bf16.msra.mxu0 %v1043
        %1313 = vmatpush.bf16.msra.mxu0 %v1041
        %1314 = vmatpush.bf16.msra.mxu0 %v1039
        %1315 = vmatpush.bf16.msra.mxu0 %v1037
        %1316 = vmatmul.bf16.gmra.mxu0 %v660
        %v1317 = vpop.f32.mrf.mxu0
        %v1318 = vadd.f32 %v1304, %v1317
        %v1319 = vpop.f32.mrf.mxu0
        %v1320 = vadd.f32 %v1306, %v1319
        %1321 = vdwg.mxu0
        %1322 = vmatpush.bf16.msra.mxu0 %v1067
        %1323 = vmatpush.bf16.msra.mxu0 %v1065
        %1324 = vmatpush.bf16.msra.mxu0 %v1063
        %1325 = vmatpush.bf16.msra.mxu0 %v1061
        %1326 = vmatpush.bf16.msra.mxu0 %v1059
        %1327 = vmatpush.bf16.msra.mxu0 %v1057
        %1328 = vmatpush.bf16.msra.mxu0 %v1055
        %1329 = vmatpush.bf16.msra.mxu0 %v1053
        %1330 = vmatmul.bf16.gmra.mxu0 %v676
        %v1331 = vpop.f32.mrf.mxu0
        %v1332 = vadd.f32 %v1318, %v1331
        %v1333 = vpop.f32.mrf.mxu0
        %v1334 = vadd.f32 %v1320, %v1333
        %1335 = vdwg.mxu0
        %1336 = vmatpush.bf16.msra.mxu0 %v1083
        %1337 = vmatpush.bf16.msra.mxu0 %v1081
        %1338 = vmatpush.bf16.msra.mxu0 %v1079
        %1339 = vmatpush.bf16.msra.mxu0 %v1077
        %1340 = vmatpush.bf16.msra.mxu0 %v1075
        %1341 = vmatpush.bf16.msra.mxu0 %v1073
        %1342 = vmatpush.bf16.msra.mxu0 %v1071
        %1343 = vmatpush.bf16.msra.mxu0 %v1069
        %1344 = vmatmul.bf16.gmra.mxu0 %v692
        %v1345 = vpop.f32.mrf.mxu0
        %v1346 = vadd.f32 %v1332, %v1345
        %v1347 = vpop.f32.mrf.mxu0
        %v1348 = vadd.f32 %v1334, %v1347
        %1349 = vdwg.mxu0
        %1350 = vmatpush.bf16.msra.mxu0 %v1099
        %1351 = vmatpush.bf16.msra.mxu0 %v1097
        %1352 = vmatpush.bf16.msra.mxu0 %v1095
        %1353 = vmatpush.bf16.msra.mxu0 %v1093
        %1354 = vmatpush.bf16.msra.mxu0 %v1091
        %1355 = vmatpush.bf16.msra.mxu0 %v1089
        %1356 = vmatpush.bf16.msra.mxu0 %v1087
        %1357 = vmatpush.bf16.msra.mxu0 %v1085
        %1358 = vmatmul.bf16.gmra.mxu0 %v708
        %v1359 = vpop.f32.mrf.mxu0
        %v1360 = vadd.f32 %v1346, %v1359
        %v1361 = vpop.f32.mrf.mxu0
        %v1362 = vadd.f32 %v1348, %v1361
        %1363 = vdwg.mxu0
        %v1364 = vld [vmem:[#allocation6] sm:$0x3]
        %v1366 = vperm.slane %v1364, 0
        %v1367 = vperm.slane %v1364, 1
        %v1370 = vadd.f32 %v1276, %v1366
        %v1371 = vadd.f32 %v1360, %v1367
        %v1372 = vadd.f32 %v1278, %v1366
        %v1373 = vadd.f32 %v1362, %v1367
        %v1374 = vpack.c.bf16 %v1371, %v1370
        %v1375 = vpack.c.bf16 %v1373, %v1372
        %1376 = vst [vmem:[%s341] sm:$0xff] %v1374
        %1377 = vst [vmem:[%s341 + $0x8] sm:$0xff] %v1375
        %s1378 = smul.u32 2, %s23
        %p1379 = scmp.lt.s32.totalorder %s22, 1
        %s1380 = scalar_select %p1379, %s22, 1
        %p1381 = scmp.lt.s32.totalorder %s1378, 1
        %s1382 = scalar_select %p1381, %s1378, 1
        %s1383 = smul.addr %s1382, 2
        %s1384 = smul.addr %s1380, 4
        %s1385 = sadd.s32 %s1383, %s1384
        %s1386 = smul.addr %s1385, 4
        %s1387 = scalar_lea.vmem %s5, %s1386
        // Predicated region
        $region53: #{ssvm_forward_svc_infer.8} parent=39 // pred_check
          %p1388 = pneg %p169
        $region54: #{ssvm_forward_svc_infer.8} parent=39 // pred_check_branch
          %1390 = sbr.rel (%p1388) target = $region56
        $region55: #{ssvm_forward_svc_infer.8} parent=39 // pred_region
          %s1391 = smul.u32 2, %s23
        $region56: #{ssvm_forward_svc_infer.8} parent=39 // pred_fallthru
          _
      $region40: #{ssvm_forward_svc_infer.8} parent=5 // pred_fallthru
        _
      %p1392 = scmp.le.s32.totalorder 2, %s13
      // Predicated region
      $region57: #{ssvm_forward_svc_infer.8} parent=5 // pred_check
        %p1393 = pneg %p1392
      $region58: #{ssvm_forward_svc_infer.8} parent=5 // pred_check_branch
        %1395 = sbr.rel (%p1393) target = $region60
      $region59: #{ssvm_forward_svc_infer.8} parent=5 // pred_region
        %s1396 = ssub.s32 %s13, 2
        // Predicated region
        $region61: #{ssvm_forward_svc_infer.8} parent=59 // pred_check
          %p1397 = pneg %p175
        $region62: #{ssvm_forward_svc_infer.8} parent=59 // pred_check_branch
          %1399 = sbr.rel (%p1397) target = $region64
        $region63: #{ssvm_forward_svc_infer.8} parent=59 // pred_region
          %s1400 = smul.u32 2, %s25
          %p1401 = scmp.lt.s32.totalorder %s24, 1
          %s1402 = scalar_select %p1401, %s24, 1
          %p1403 = scmp.lt.s32.totalorder %s1400, 1
          %s1404 = scalar_select %p1403, %s1400, 1
          %s1405 = smul.addr %s1404, 2
          %s1406 = smul.addr %s1402, 4
          %s1407 = sadd.s32 %s1405, %s1406
          %s1408 = smul.addr %s1407, 4
          %s1409 = scalar_lea.vmem %s5, %s1408
        $region64: #{ssvm_forward_svc_infer.8} parent=59 // pred_fallthru
          _
      $region60: #{ssvm_forward_svc_infer.8} parent=5 // pred_fallthru
        _
    $region6: #{ssvm_forward_svc_infer.8} parent=1 // loop_footer
      %s17 = sadd.s32 1, %s13
    $region7: #{ssvm_forward_svc_infer.8} parent=1 // loop_footer_branch
      %12 = sbr.rel target = $region3
    $region8: #{ssvm_forward_svc_infer.8} parent=1 // loop_exit
      _
    %1410 = vsyncpa [#allocation3], 1
    %s1411 = scalar_lea.sflag [#allocation3], 1
    %1412 = vsyncpa %s1411, 1
    %1413 = vsyncpa [#allocation5], 1

// kernel: ssvm_forward_svc_infer.9
$region0: #{ssvm_forward_svc_infer.9}
  #allocation0 [shape = 'u32[]', space=smem, size = 0x4, offset = 0x4, fixed_abs, tag = 'smem constant byte address 0x4 - core index']
  #allocation1 [shape = 'u32[72,128]{1,0:T(1,128)}', space=vmem, size = 0x9000, scoped, tag = 'internal scratch']
  #allocation2 [shape = 'bf16[32,256]{1,0:T(8,128)(2,1)}', space=vmem, size = 0x4000, scoped, tag = 'scratch operand']
  %s0 = inlined_call_operand.vmem [shape: bf16[2,16,256], index: 0, kind: input, shape index: {}]
  %s1 = inlined_call_operand.hbm [shape: bf16[7,256,384], index: 1, kind: input, shape index: {}]
  %s2 = inlined_call_operand.hbm [shape: f32[1,384], index: 2, kind: input, shape index: {}]
  %s3 = inlined_call_operand.vmem [shape: bf16[2,16,384], index: 3, kind: output, shape index: {}]
  %s4 = sld [smem:[#allocation0]]
  $region53: #{ssvm_forward_svc_infer.9} parent=0
    _
  %s6 = ssub.s32 1, %s4
  %s7 = scalar_select 0, %s6, %s4
  $region1: #{ssvm_forward_svc_infer.9} parent=0
    #allocation3 [shape = 'u8[1376256]{0}', space=vmem, size = 0x150000, scoped, tag = 'input window, operand 1, single buffered']
    #allocation4 [shape = 's32[2]{0}', space=sflag, size = 0x8, scoped, tag = 'scoped memory for ssvm_forward_svc_infer.9']
    #allocation5 [shape = 'u8[1536]{0}', space=vmem, size = 0x800, scoped, tag = 'input window, operand 2, single buffered']
    #allocation6 [shape = 's32[1]{0}', space=sflag, size = 0x4, scoped, tag = 'scoped memory for ssvm_forward_svc_infer.9']
    %8 = vsyncpa [#allocation4], 0
    %9 = vsyncpa [#allocation6], 0
    loop: start=0, step=1, limit=4
    $region2: #{ssvm_forward_svc_infer.9} parent=1 // loop_pre_header
      _
    $region3: #{ssvm_forward_svc_infer.9} parent=1 // loop_header
      %s11 = sphi 0, %s15
      %p12 = scmp.ge.s32.totalorder %s11, 4
      %s18 = sphi 0, %s30
      %s19 = sphi 0, %s26
      %s20 = sphi 0, %s18
      %s21 = sphi 0, %s19
      %s22 = sphi 0, %s20
      %s23 = sphi 0, %s21
      %s33 = sphi 0, %s35
      %s36 = sphi 0, %s33
      %s37 = sphi 0, %s36
      %s53 = sphi 0, %s37
      %s57 = sphi 0, %s57
      %s59 = sphi 0, %s57
      %s60 = sphi 0, %s59
      %s74 = sphi 0, %s60
      %s78 = sphi 0, %s78
      %s80 = sphi 0, %s78
      %s81 = sphi 0, %s80
      %s95 = sphi 0, %s81
      %s103 = sphi 0, %s105
      %s106 = sphi 0, %s103
      %s107 = sphi 0, %s106
      %s123 = sphi 0, %s107
    $region4: #{ssvm_forward_svc_infer.9} parent=1 // loop_header_branch
      %14 = sbr.rel (%p12) target = $region8
    $region5: #{ssvm_forward_svc_infer.9} parent=1 // loop_body
      %s16 = ssub.s32 %s11, 1
      %s17 = ssub.s32 %s11, 2
      %s24 = sadd.s32 1, %s19
      %p25 = scmp.ge.s32.totalorder %s24, 1
      %s26 = scalar_select %p25, 0, %s24
      %s27 = sadd.s32 1, %s18
      %s28 = scalar_select %p25, %s27, %s18
      %p29 = scmp.ge.s32.totalorder %s28, 2
      %s30 = scalar_select %p29, 0, %s28
      %s31 = ssub.s32 %s18, %s30
      %p32 = scmp.eq.s32.totalorder %s31, 0
      %s34 = sadd.s32 %s33, 1
      %s35 = scalar_select %p32, %s33, %s34
      %p38 = pneg %p32
      %p39 = scmp.eq.s32.totalorder %s11, 1
      %p40 = por %p38, %p39
      %p41 = scmp.ne.s32.totalorder %s33, %s36
      %p42 = scmp.eq.s32.totalorder %s11, 0
      %p43 = por %p41, %p42
      %p44 = scmp.ne.s32.totalorder %s33, %s36
      %p45 = scmp.eq.s32.totalorder %s16, 1
      %p46 = por %p44, %p45
      %p47 = scmp.ne.s32.totalorder %s36, %s37
      %p48 = scmp.eq.s32.totalorder %s16, 0
      %p49 = por %p47, %p48
      %p50 = scmp.ne.s32.totalorder %s36, %s37
      %p51 = scmp.eq.s32.totalorder %s17, 1
      %p52 = por %p50, %p51
      %p54 = scmp.ne.s32.totalorder %s37, %s53
      %p55 = scmp.eq.s32.totalorder %s17, 0
      %p56 = por %p54, %p55
      %s58 = sadd.s32 %s57, 1
      %p61 = scmp.eq.s32.totalorder %s11, 1
      %p62 = scmp.ne.s32.totalorder %s57, %s59
      %p63 = scmp.eq.s32.totalorder %s11, 0
      %p64 = por %p62, %p63
      %p65 = scmp.ne.s32.totalorder %s57, %s59
      %p66 = scmp.eq.s32.totalorder %s16, 1
      %p67 = por %p65, %p66
      %p68 = scmp.ne.s32.totalorder %s59, %s60
      %p69 = scmp.eq.s32.totalorder %s16, 0
      %p70 = por %p68, %p69
      %p71 = scmp.ne.s32.totalorder %s59, %s60
      %p72 = scmp.eq.s32.totalorder %s17, 1
      %p73 = por %p71, %p72
      %p75 = scmp.ne.s32.totalorder %s60, %s74
      %p76 = scmp.eq.s32.totalorder %s17, 0
      %p77 = por %p75, %p76
      %s79 = sadd.s32 %s78, 1
      %p82 = scmp.eq.s32.totalorder %s11, 1
      %p83 = scmp.ne.s32.totalorder %s78, %s80
      %p84 = scmp.eq.s32.totalorder %s11, 0
      %p85 = por %p83, %p84
      %p86 = scmp.ne.s32.totalorder %s78, %s80
      %p87 = scmp.eq.s32.totalorder %s16, 1
      %p88 = por %p86, %p87
      %p89 = scmp.ne.s32.totalorder %s80, %s81
      %p90 = scmp.eq.s32.totalorder %s16, 0
      %p91 = por %p89, %p90
      %p92 = scmp.ne.s32.totalorder %s80, %s81
      %p93 = scmp.eq.s32.totalorder %s17, 1
      %p94 = por %p92, %p93
      %p96 = scmp.ne.s32.totalorder %s81, %s95
      %p97 = scmp.eq.s32.totalorder %s17, 0
      %p98 = por %p96, %p97
      %s99 = ssub.s32 %s18, %s30
      %s100 = ssub.s32 %s19, %s26
      %s101 = sor.u32 %s99, %s100
      %p102 = scmp.eq.s32.totalorder %s101, 0
      %s104 = sadd.s32 %s103, 1
      %s105 = scalar_select %p102, %s103, %s104
      %p108 = pneg %p102
      %p109 = scmp.eq.s32.totalorder %s11, 1
      %p110 = por %p108, %p109
      %p111 = scmp.ne.s32.totalorder %s103, %s106
      %p112 = scmp.eq.s32.totalorder %s11, 0
      %p113 = por %p111, %p112
      %p114 = scmp.ne.s32.totalorder %s103, %s106
      %p115 = scmp.eq.s32.totalorder %s16, 1
      %p116 = por %p114, %p115
      %p117 = scmp.ne.s32.totalorder %s106, %s107
      %p118 = scmp.eq.s32.totalorder %s16, 0
      %p119 = por %p117, %p118
      %p120 = scmp.ne.s32.totalorder %s106, %s107
      %p121 = scmp.eq.s32.totalorder %s17, 1
      %p122 = por %p120, %p121
      %p124 = scmp.ne.s32.totalorder %s107, %s123
      %p125 = scmp.eq.s32.totalorder %s17, 0
      %p126 = por %p124, %p125
      %p127 = scmp.le.s32.totalorder 1, %s11
      %p128 = scmp.lt.s32.totalorder %s11, 3
      %p129 = pnand %p127, %p128
      %p130 = pneg %p129
      // Predicated region
      $region9: #{ssvm_forward_svc_infer.9} parent=5 // pred_check
        _
      $region10: #{ssvm_forward_svc_infer.9} parent=5 // pred_check_branch
        %132 = sbr.rel (%p129) target = $region12
      $region11: #{ssvm_forward_svc_infer.9} parent=5 // pred_region
        %s133 = ssub.s32 %s11, 1
        // Predicated region
        $region13: #{ssvm_forward_svc_infer.9} parent=11 // pred_check
          %p134 = pneg %p70
        $region14: #{ssvm_forward_svc_infer.9} parent=11 // pred_check_branch
          %136 = sbr.rel (%p134) target = $region16
        $region15: #{ssvm_forward_svc_infer.9} parent=11 // pred_region
          %138 = vsyncadd [#allocation4], 0
          %s139 = sshll.u32 %s1, 4
          %s140 = int_to_ptr.hbm [resolvable:$true] %s139
          %s141 = sshll.u32 [#allocation3], 4
          %s142 = int_to_ptr.vmem [resolvable:$true] %s141
          %147 = dma.hbm_to_vmem [thread:$0]  %s140, 43008, %s142, [#allocation4], 192, 192, 12
        $region16: #{ssvm_forward_svc_infer.9} parent=11 // pred_fallthru
          _
        // Predicated region
        $region17: #{ssvm_forward_svc_infer.9} parent=11 // pred_check
          %p148 = pneg %p91
        $region18: #{ssvm_forward_svc_infer.9} parent=11 // pred_check_branch
          %150 = sbr.rel (%p148) target = $region20
        $region19: #{ssvm_forward_svc_infer.9} parent=11 // pred_region
          %152 = vsyncadd [#allocation6], 0
          %s154 = sshll.u32 %s2, 4
          %s155 = int_to_ptr.hbm [resolvable:$true] %s154
          %s156 = sshll.u32 [#allocation5], 4
          %s157 = int_to_ptr.vmem [resolvable:$true] %s156
          %159 = dma.hbm_to_vmem [thread:$0]  %s155, 48, %s157, [#allocation6]
        $region20: #{ssvm_forward_svc_infer.9} parent=11 // pred_fallthru
          _
      $region12: #{ssvm_forward_svc_infer.9} parent=5 // pred_fallthru
        _
      %p160 = scmp.lt.s32.totalorder %s11, 2
      // Predicated region
      $region21: #{ssvm_forward_svc_infer.9} parent=5 // pred_check
        %p161 = pneg %p160
      $region22: #{ssvm_forward_svc_infer.9} parent=5 // pred_check_branch
        %163 = sbr.rel (%p161) target = $region24
      $region23: #{ssvm_forward_svc_infer.9} parent=5 // pred_region
        // Predicated region
        $region25: #{ssvm_forward_svc_infer.9} parent=23 // pred_check
          %p164 = pneg %p43
        $region26: #{ssvm_forward_svc_infer.9} parent=23 // pred_check_branch
          %166 = sbr.rel (%p164) target = $region28
        $region27: #{ssvm_forward_svc_infer.9} parent=23 // pred_region
          %p167 = scmp.lt.s32.totalorder %s18, 1
          %s168 = scalar_select %p167, %s18, 1
          %s169 = smul.addr %s168, 4
          %s170 = smul.addr %s169, 4
          %s171 = scalar_lea.vmem %s0, %s170
        $region28: #{ssvm_forward_svc_infer.9} parent=23 // pred_fallthru
          _
      $region24: #{ssvm_forward_svc_infer.9} parent=5 // pred_fallthru
        _
      %p172 = scmp.le.s32.totalorder 1, %s11
      %p173 = scmp.lt.s32.totalorder %s11, 3
      %p174 = pnand %p172, %p173
      %p175 = pneg %p174
      // Predicated region
      $region29: #{ssvm_forward_svc_infer.9} parent=5 // pred_check
        _
      $region30: #{ssvm_forward_svc_infer.9} parent=5 // pred_check_branch
        %177 = sbr.rel (%p174) target = $region32
      $region31: #{ssvm_forward_svc_infer.9} parent=5 // pred_region
        %s178 = ssub.s32 %s11, 1
        // Predicated region
        $region33: #{ssvm_forward_svc_infer.9} parent=31 // pred_check
          %p179 = pneg %p70
        $region34: #{ssvm_forward_svc_infer.9} parent=31 // pred_check_branch
          %181 = sbr.rel (%p179) target = $region36
        $region35: #{ssvm_forward_svc_infer.9} parent=31 // pred_region
          %183 = dma.done [#allocation4], 43008
        $region36: #{ssvm_forward_svc_infer.9} parent=31 // pred_fallthru
          _
        // Predicated region
        $region37: #{ssvm_forward_svc_infer.9} parent=31 // pred_check
          %p184 = pneg %p91
        $region38: #{ssvm_forward_svc_infer.9} parent=31 // pred_check_branch
          %186 = sbr.rel (%p184) target = $region40
        $region39: #{ssvm_forward_svc_infer.9} parent=31 // pred_region
          %188 = dma.done [#allocation6], 48
        $region40: #{ssvm_forward_svc_infer.9} parent=31 // pred_fallthru
          _
        %p189 = scmp.lt.s32.totalorder %s20, 1
        %s190 = scalar_select %p189, %s20, 1
        %s191 = smul.addr %s190, 4
        %s192 = smul.addr %s191, 4
        %s193 = scalar_lea.vmem %s0, %s192
        %p194 = pneg %p49
        %p195 = pneg %p46
        %p196 = pneg %p70
        %p197 = pneg %p67
        %p198 = pneg %p91
        %p199 = pneg %p88
        %p200 = pneg %p119
        %p201 = pneg %p116
        %s202 = smul.u32 2, %s21
        %p203 = scmp.lt.s32.totalorder %s20, 1
        %s204 = scalar_select %p203, %s20, 1
        %p205 = scmp.lt.s32.totalorder %s202, 1
        %s206 = scalar_select %p205, %s202, 1
        %s207 = smul.addr %s206, 3
        %s208 = smul.addr %s204, 6
        %s209 = sadd.s32 %s207, %s208
        %s210 = smul.addr %s209, 4
        %s211 = scalar_lea.vmem %s3, %s210
        %p212 = scmp.lt.s32.totalorder %s20, 1
        %s213 = scalar_select %p212, %s20, 1
        %s214 = smul.addr %s213, 4
        %s215 = smul.addr %s214, 4
        %s216 = scalar_lea.vmem %s0, %s215
        %s217 = smul.u32 2, %s21
        %p218 = scmp.lt.s32.totalorder %s20, 1
        %s219 = scalar_select %p218, %s20, 1
        %p220 = scmp.lt.s32.totalorder %s217, 1
        %s221 = scalar_select %p220, %s217, 1
        %s222 = smul.addr %s221, 3
        %s223 = smul.addr %s219, 6
        %s224 = sadd.s32 %s222, %s223
        %s225 = smul.addr %s224, 4
        %s226 = scalar_lea.vmem %s3, %s225
        %s227 = smul.u32 2, %s21
        %s229 = smul.u32 %s21, 16
        %s230 = sshra.s32 %s229, 3
        %s231 = sand.u32 %s229, 7
        %s232 = smul.u32 %s230, 2
        %s233 = smul.addr %s232, 4
        %s234 = scalar_lea.vmem %s216, %s233
        %v235 = vld [vmem:[%s234] sm:$0xff]
        %v236 = vld [vmem:[%s234 + $0x8] sm:$0xff]
        %s237 = ssub.s32 %s229, 8
        %p238 = scmp.gt.s32.totalorder %s237, 0
        %s239 = scalar_select %p238, %s237, 0
        %s240 = sshra.s32 %s239, 3
        %s241 = sand.u32 %s239, 7
        %s242 = smul.u32 %s240, 2
        %s243 = smul.addr %s242, 4
        %s244 = scalar_lea.vmem %s216, %s243
        %v245 = vld [vmem:[%s244] sm:$0xff]
        %p246 = scmp.gt.s32.totalorder %s21, 0
        %s247 = scalar_select %p246, 1, 0
        %v248 = vstv %s247
        %vm249 = vcmp.eq.s32.totalorder %v248, 1
        %v250 = vsel %vm249, %v245, 0
        %s251 = sadd.s32 %s229, 16
        %p252 = scmp.lt.s32.totalorder %s251, 8
        %s253 = scalar_select %p252, %s251, 8
        %s254 = sshra.s32 %s253, 3
        %s255 = sand.u32 %s253, 7
        %s256 = smul.u32 %s254, 2
        %s257 = smul.addr %s256, 4
        %s258 = scalar_lea.vmem %s216, %s257
        %v259 = vld [vmem:[%s258] sm:$0xff]
        %p260 = scmp.lt.s32.totalorder %s21, 0
        %s261 = scalar_select %p260, 1, 0
        %v262 = vstv %s261
        %vm263 = vcmp.eq.s32.totalorder %v262, 1
        %v264 = vsel %vm263, %v259, 0
        %265 = vst [vmem:[#allocation2] sm:$0xff] %v250
        %266 = vst [vmem:[#allocation2 + $0x8] sm:$0xff] %v235
        %267 = vst [vmem:[#allocation2 + $0x10] sm:$0xff] %v236
        %268 = vst [vmem:[#allocation2 + $0x18] sm:$0xff] %v264
        %v269 = vld [vmem:[#allocation5] sm:$0x7]
        %v271 = vperm.slane %v269, 0
        %v272 = vperm.slane %v269, 1
        %v273 = vperm.slane %v269, 2
        %v277 = vld [vmem:[#allocation2] sm:$0xcc]
        %v278 = vld [vmem:[#allocation2 + $0x8] sm:$0xff]
        %v279 = vld [vmem:[#allocation2 + $0x10] sm:$0x77]
        %v280 = vld [vmem:[#allocation3] sm:$0xff]
        %v281 = vld [vmem:[#allocation3 + $0x8] sm:$0xf]
        %v282 = vld [vmem:[#allocation3 + $0xc] sm:$0xff]
        %v283 = vld [vmem:[#allocation3 + $0x14] sm:$0xf]
        %v284 = vld [vmem:[#allocation3 + $0x18] sm:$0xff]
        %v285 = vld [vmem:[#allocation3 + $0x20] sm:$0xf]
        %v286 = vld [vmem:[#allocation3 + $0x24] sm:$0xff]
        %v287 = vld [vmem:[#allocation3 + $0x2c] sm:$0xf]
        %v288 = vld [vmem:[#allocation3 + $0x30] sm:$0xff]
        %v289 = vld [vmem:[#allocation3 + $0x38] sm:$0xf]
        %v290 = vld [vmem:[#allocation3 + $0x3c] sm:$0xff]
        %v291 = vld [vmem:[#allocation3 + $0x44] sm:$0xf]
        %v292 = vld [vmem:[#allocation3 + $0x48] sm:$0xff]
        %v293 = vld [vmem:[#allocation3 + $0x50] sm:$0xf]
        %v294 = vld [vmem:[#allocation3 + $0x54] sm:$0xff]
        %v295 = vld [vmem:[#allocation3 + $0x5c] sm:$0xf]
        %v296 = vld [vmem:[#allocation3 + $0x60] sm:$0xff]
        %v297 = vld [vmem:[#allocation3 + $0x68] sm:$0xf]
        %v298 = vld [vmem:[#allocation3 + $0x6c] sm:$0xff]
        %v299 = vld [vmem:[#allocation3 + $0x74] sm:$0xf]
        %v300 = vld [vmem:[#allocation3 + $0x78] sm:$0xff]
        %v301 = vld [vmem:[#allocation3 + $0x80] sm:$0xf]
        %v302 = vld [vmem:[#allocation3 + $0x84] sm:$0xff]
        %v303 = vld [vmem:[#allocation3 + $0x8c] sm:$0xf]
        %v304 = vld [vmem:[#allocation3 + $0x90] sm:$0xff]
        %v305 = vld [vmem:[#allocation3 + $0x98] sm:$0xf]
        %v306 = vld [vmem:[#allocation3 + $0x9c] sm:$0xff]
        %v307 = vld [vmem:[#allocation3 + $0xa4] sm:$0xf]
        %v308 = vld [vmem:[#allocation3 + $0xa8] sm:$0xff]
        %v309 = vld [vmem:[#allocation3 + $0xb0] sm:$0xf]
        %v310 = vld [vmem:[#allocation3 + $0xb4] sm:$0xff]
        %v311 = vld [vmem:[#allocation3 + $0xbc] sm:$0xf]
        %v312 = vld [vmem:[#allocation3 + $0xc0] sm:$0xff]
        %v313 = vld [vmem:[#allocation3 + $0xc8] sm:$0xf]
        %v314 = vld [vmem:[#allocation3 + $0xcc] sm:$0xff]
        %v315 = vld [vmem:[#allocation3 + $0xd4] sm:$0xf]
        %v316 = vld [vmem:[#allocation3 + $0xd8] sm:$0xff]
        %v317 = vld [vmem:[#allocation3 + $0xe0] sm:$0xf]
        %v318 = vld [vmem:[#allocation3 + $0xe4] sm:$0xff]
        %v319 = vld [vmem:[#allocation3 + $0xec] sm:$0xf]
        %v320 = vld [vmem:[#allocation3 + $0xf0] sm:$0xff]
        %v321 = vld [vmem:[#allocation3 + $0xf8] sm:$0xf]
        %v322 = vld [vmem:[#allocation3 + $0xfc] sm:$0xff]
        %v323 = vld [vmem:[#allocation3 + $0x104] sm:$0xf]
        %v324 = vld [vmem:[#allocation3 + $0x108] sm:$0xff]
        %v325 = vld [vmem:[#allocation3 + $0x110] sm:$0xf]
        %v326 = vld [vmem:[#allocation3 + $0x114] sm:$0xff]
        %v327 = vld [vmem:[#allocation3 + $0x11c] sm:$0xf]
        %v328 = vld [vmem:[#allocation3 + $0x120] sm:$0xff]
        %v329 = vld [vmem:[#allocation3 + $0x128] sm:$0xf]
        %v330 = vld [vmem:[#allocation3 + $0x12c] sm:$0xff]
        %v331 = vld [vmem:[#allocation3 + $0x134] sm:$0xf]
        %v332 = vld [vmem:[#allocation3 + $0x138] sm:$0xff]
        %v333 = vld [vmem:[#allocation3 + $0x140] sm:$0xf]
        %v334 = vld [vmem:[#allocation3 + $0x144] sm:$0xff]
        %v335 = vld [vmem:[#allocation3 + $0x14c] sm:$0xf]
        %v336 = vld [vmem:[#allocation3 + $0x150] sm:$0xff]
        %v337 = vld [vmem:[#allocation3 + $0x158] sm:$0xf]
        %v338 = vld [vmem:[#allocation3 + $0x15c] sm:$0xff]
        %v339 = vld [vmem:[#allocation3 + $0x164] sm:$0xf]
        %v340 = vld [vmem:[#allocation3 + $0x168] sm:$0xff]
        %v341 = vld [vmem:[#allocation3 + $0x170] sm:$0xf]
        %v342 = vld [vmem:[#allocation3 + $0x174] sm:$0xff]
        %v343 = vld [vmem:[#allocation3 + $0x17c] sm:$0xf]
        %v347 = vunpack.c.l.b16 %v277
        %v348 = vunpack.c.h.b16 %v277
        %v349 = vunpack.c.l.b16 %v278
        %v350 = vunpack.c.h.b16 %v278
        %v351 = vunpack.c.l.b16 %v279
        %v352 = vunpack.c.h.b16 %v279
        %v353 = vpack.c.b16 %v349, %v347
        %v354 = vpack.c.b16 %v350, %v348
        %v355 = vpack.c.b16 %v351, %v351
        %v356 = vpack.c.b16 %v352, %v352
        %vm357 = vsmask.f32 5376
        %v359 = vshrl.u32 %v353, 16
        %v361 = vrot.slane %v359, 2
        %v362 = vshll.u32 %v353, 16
        %v364 = vrot.slane %v362, 3
        %v365 = vor.u32 %v361, %v364
        %v367 = vshrl.u32 %v355, 16
        %v369 = vrot.slane %v367, 2
        %v370 = vshll.u32 %v355, 16
        %v372 = vrot.slane %v370, 3
        %v373 = vor.u32 %v369, %v372
        %v374 = vsel %vm357, %v365, %v373
        %v376 = vshrl.u32 %v354, 16
        %v378 = vrot.slane %v376, 2
        %v379 = vshll.u32 %v354, 16
        %v381 = vrot.slane %v379, 3
        %v382 = vor.u32 %v378, %v381
        %v384 = vshrl.u32 %v356, 16
        %v386 = vrot.slane %v384, 2
        %v387 = vshll.u32 %v356, 16
        %v389 = vrot.slane %v387, 3
        %v390 = vor.u32 %v386, %v389
        %v391 = vsel %vm357, %v382, %v390
        %v458 = vunpack.c.l.b16 %v280
        %v459 = vunpack.c.h.b16 %v280
        %v460 = vunpack.c.l.b16 %v281
        %v461 = vunpack.c.l.b16 %v282
        %v462 = vunpack.c.h.b16 %v282
        %v463 = vunpack.c.l.b16 %v283
        %v464 = vunpack.c.l.b16 %v284
        %v465 = vunpack.c.h.b16 %v284
        %v466 = vunpack.c.l.b16 %v285
        %v467 = vunpack.c.l.b16 %v286
        %v468 = vunpack.c.h.b16 %v286
        %v469 = vunpack.c.l.b16 %v287
        %v470 = vunpack.c.l.b16 %v288
        %v471 = vunpack.c.h.b16 %v288
        %v472 = vunpack.c.l.b16 %v289
        %v473 = vunpack.c.l.b16 %v290
        %v474 = vunpack.c.h.b16 %v290
        %v475 = vunpack.c.l.b16 %v291
        %v476 = vunpack.c.l.b16 %v292
        %v477 = vunpack.c.h.b16 %v292
        %v478 = vunpack.c.l.b16 %v293
        %v479 = vunpack.c.l.b16 %v294
        %v480 = vunpack.c.h.b16 %v294
        %v481 = vunpack.c.l.b16 %v295
        %v482 = vunpack.c.l.b16 %v296
        %v483 = vunpack.c.h.b16 %v296
        %v484 = vunpack.c.l.b16 %v297
        %v485 = vunpack.c.l.b16 %v298
        %v486 = vunpack.c.h.b16 %v298
        %v487 = vunpack.c.l.b16 %v299
        %v488 = vunpack.c.l.b16 %v300
        %v489 = vunpack.c.h.b16 %v300
        %v490 = vunpack.c.l.b16 %v301
        %v491 = vunpack.c.l.b16 %v302
        %v492 = vunpack.c.h.b16 %v302
        %v493 = vunpack.c.l.b16 %v303
        %v494 = vunpack.c.l.b16 %v304
        %v495 = vunpack.c.h.b16 %v304
        %v496 = vunpack.c.l.b16 %v305
        %v497 = vunpack.c.l.b16 %v306
        %v498 = vunpack.c.h.b16 %v306
        %v499 = vunpack.c.l.b16 %v307
        %v500 = vunpack.c.l.b16 %v308
        %v501 = vunpack.c.h.b16 %v308
        %v502 = vunpack.c.l.b16 %v309
        %v503 = vunpack.c.l.b16 %v310
        %v504 = vunpack.c.h.b16 %v310
        %v505 = vunpack.c.l.b16 %v311
        %v506 = vunpack.c.l.b16 %v312
        %v507 = vunpack.c.h.b16 %v312
        %v508 = vunpack.c.l.b16 %v313
        %v509 = vunpack.c.l.b16 %v314
        %v510 = vunpack.c.h.b16 %v314
        %v511 = vunpack.c.l.b16 %v315
        %v512 = vunpack.c.l.b16 %v316
        %v513 = vunpack.c.h.b16 %v316
        %v514 = vunpack.c.l.b16 %v317
        %v515 = vunpack.c.l.b16 %v318
        %v516 = vunpack.c.h.b16 %v318
        %v517 = vunpack.c.l.b16 %v319
        %v518 = vunpack.c.l.b16 %v320
        %v519 = vunpack.c.h.b16 %v320
        %v520 = vunpack.c.l.b16 %v321
        %v521 = vunpack.c.l.b16 %v322
        %v522 = vunpack.c.h.b16 %v322
        %v523 = vunpack.c.l.b16 %v323
        %v524 = vunpack.c.l.b16 %v324
        %v525 = vunpack.c.h.b16 %v324
        %v526 = vunpack.c.l.b16 %v325
        %v527 = vunpack.c.l.b16 %v326
        %v528 = vunpack.c.h.b16 %v326
        %v529 = vunpack.c.l.b16 %v327
        %v530 = vunpack.c.l.b16 %v328
        %v531 = vunpack.c.h.b16 %v328
        %v532 = vunpack.c.l.b16 %v329
        %v533 = vunpack.c.l.b16 %v330
        %v534 = vunpack.c.h.b16 %v330
        %v535 = vunpack.c.l.b16 %v331
        %v536 = vunpack.c.l.b16 %v332
        %v537 = vunpack.c.h.b16 %v332
        %v538 = vunpack.c.l.b16 %v333
        %v539 = vunpack.c.l.b16 %v334
        %v540 = vunpack.c.h.b16 %v334
        %v541 = vunpack.c.l.b16 %v335
        %v542 = vunpack.c.l.b16 %v336
        %v543 = vunpack.c.h.b16 %v336
        %v544 = vunpack.c.l.b16 %v337
        %v545 = vunpack.c.l.b16 %v338
        %v546 = vunpack.c.h.b16 %v338
        %v547 = vunpack.c.l.b16 %v339
        %v548 = vunpack.c.l.b16 %v340
        %v549 = vunpack.c.h.b16 %v340
        %v550 = vunpack.c.l.b16 %v341
        %v551 = vunpack.c.l.b16 %v342
        %v552 = vunpack.c.h.b16 %v342
        %v553 = vunpack.c.l.b16 %v343
        %v554 = vpack.c.b16 %v461, %v458
        %v555 = vpack.c.b16 %v462, %v459
        %v556 = vpack.c.b16 %v463, %v460
        %v557 = vpack.c.b16 %v467, %v464
        %v558 = vpack.c.b16 %v468, %v465
        %v559 = vpack.c.b16 %v469, %v466
        %v560 = vpack.c.b16 %v473, %v470
        %v561 = vpack.c.b16 %v474, %v471
        %v562 = vpack.c.b16 %v475, %v472
        %v563 = vpack.c.b16 %v479, %v476
        %v564 = vpack.c.b16 %v480, %v477
        %v565 = vpack.c.b16 %v481, %v478
        %v566 = vpack.c.b16 %v485, %v482
        %v567 = vpack.c.b16 %v486, %v483
        %v568 = vpack.c.b16 %v487, %v484
        %v569 = vpack.c.b16 %v491, %v488
        %v570 = vpack.c.b16 %v492, %v489
        %v571 = vpack.c.b16 %v493, %v490
        %v572 = vpack.c.b16 %v497, %v494
        %v573 = vpack.c.b16 %v498, %v495
        %v574 = vpack.c.b16 %v499, %v496
        %v575 = vpack.c.b16 %v503, %v500
        %v576 = vpack.c.b16 %v504, %v501
        %v577 = vpack.c.b16 %v505, %v502
        %v578 = vpack.c.b16 %v509, %v506
        %v579 = vpack.c.b16 %v510, %v507
        %v580 = vpack.c.b16 %v511, %v508
        %v581 = vpack.c.b16 %v515, %v512
        %v582 = vpack.c.b16 %v516, %v513
        %v583 = vpack.c.b16 %v517, %v514
        %v584 = vpack.c.b16 %v521, %v518
        %v585 = vpack.c.b16 %v522, %v519
        %v586 = vpack.c.b16 %v523, %v520
        %v587 = vpack.c.b16 %v527, %v524
        %v588 = vpack.c.b16 %v528, %v525
        %v589 = vpack.c.b16 %v529, %v526
        %v590 = vpack.c.b16 %v533, %v530
        %v591 = vpack.c.b16 %v534, %v531
        %v592 = vpack.c.b16 %v535, %v532
        %v593 = vpack.c.b16 %v539, %v536
        %v594 = vpack.c.b16 %v540, %v537
        %v595 = vpack.c.b16 %v541, %v538
        %v596 = vpack.c.b16 %v545, %v542
        %v597 = vpack.c.b16 %v546, %v543
        %v598 = vpack.c.b16 %v547, %v544
        %v599 = vpack.c.b16 %v551, %v548
        %v600 = vpack.c.b16 %v552, %v549
        %v601 = vpack.c.b16 %v553, %v550
        %650 = vmatpush.bf16.msra.mxu0 %v575
        %651 = vmatpush.bf16.msra.mxu0 %v572
        %652 = vmatpush.bf16.msra.mxu0 %v569
        %653 = vmatpush.bf16.msra.mxu0 %v566
        %654 = vmatpush.bf16.msra.mxu0 %v563
        %655 = vmatpush.bf16.msra.mxu0 %v560
        %656 = vmatpush.bf16.msra.mxu0 %v557
        %657 = vmatpush.bf16.msra.mxu0 %v554
        %658 = vmatmul.bf16.gmra.mxu0 %v374
        %v659 = vpop.f32.mrf.mxu0
        %v660 = vadd.f32 0.0, %v659
        %v661 = vpop.f32.mrf.mxu0
        %v662 = vadd.f32 0.0, %v661
        %663 = vdwg.mxu0
        %664 = vmatpush.bf16.msra.mxu0 %v599
        %665 = vmatpush.bf16.msra.mxu0 %v596
        %666 = vmatpush.bf16.msra.mxu0 %v593
        %667 = vmatpush.bf16.msra.mxu0 %v590
        %668 = vmatpush.bf16.msra.mxu0 %v587
        %669 = vmatpush.bf16.msra.mxu0 %v584
        %670 = vmatpush.bf16.msra.mxu0 %v581
        %671 = vmatpush.bf16.msra.mxu0 %v578
        %672 = vmatmul.bf16.gmra.mxu0 %v391
        %v673 = vpop.f32.mrf.mxu0
        %v674 = vadd.f32 %v660, %v673
        %v675 = vpop.f32.mrf.mxu0
        %v676 = vadd.f32 %v662, %v675
        %677 = vdwg.mxu0
        %678 = vmatpush.bf16.msra.mxu0 %v576
        %679 = vmatpush.bf16.msra.mxu0 %v573
        %680 = vmatpush.bf16.msra.mxu0 %v570
        %681 = vmatpush.bf16.msra.mxu0 %v567
        %682 = vmatpush.bf16.msra.mxu0 %v564
        %683 = vmatpush.bf16.msra.mxu0 %v561
        %684 = vmatpush.bf16.msra.mxu0 %v558
        %685 = vmatpush.bf16.msra.mxu0 %v555
        %686 = vmatmul.bf16.gmra.mxu0 %v374
        %v687 = vpop.f32.mrf.mxu0
        %v688 = vadd.f32 0.0, %v687
        %v689 = vpop.f32.mrf.mxu0
        %v690 = vadd.f32 0.0, %v689
        %691 = vdwg.mxu0
        %692 = vmatpush.bf16.msra.mxu0 %v600
        %693 = vmatpush.bf16.msra.mxu0 %v597
        %694 = vmatpush.bf16.msra.mxu0 %v594
        %695 = vmatpush.bf16.msra.mxu0 %v591
        %696 = vmatpush.bf16.msra.mxu0 %v588
        %697 = vmatpush.bf16.msra.mxu0 %v585
        %698 = vmatpush.bf16.msra.mxu0 %v582
        %699 = vmatpush.bf16.msra.mxu0 %v579
        %700 = vmatmul.bf16.gmra.mxu0 %v391
        %v701 = vpop.f32.mrf.mxu0
        %v702 = vadd.f32 %v688, %v701
        %v703 = vpop.f32.mrf.mxu0
        %v704 = vadd.f32 %v690, %v703
        %705 = vdwg.mxu0
        %706 = vmatpush.bf16.msra.mxu0 %v577
        %707 = vmatpush.bf16.msra.mxu0 %v574
        %708 = vmatpush.bf16.msra.mxu0 %v571
        %709 = vmatpush.bf16.msra.mxu0 %v568
        %710 = vmatpush.bf16.msra.mxu0 %v565
        %711 = vmatpush.bf16.msra.mxu0 %v562
        %712 = vmatpush.bf16.msra.mxu0 %v559
        %713 = vmatpush.bf16.msra.mxu0 %v556
        %714 = vmatmul.bf16.gmra.mxu0 %v374
        %v715 = vpop.f32.mrf.mxu0
        %v716 = vadd.f32 0.0, %v715
        %v717 = vpop.f32.mrf.mxu0
        %v718 = vadd.f32 0.0, %v717
        %719 = vdwg.mxu0
        %720 = vmatpush.bf16.msra.mxu0 %v601
        %721 = vmatpush.bf16.msra.mxu0 %v598
        %722 = vmatpush.bf16.msra.mxu0 %v595
        %723 = vmatpush.bf16.msra.mxu0 %v592
        %724 = vmatpush.bf16.msra.mxu0 %v589
        %725 = vmatpush.bf16.msra.mxu0 %v586
        %726 = vmatpush.bf16.msra.mxu0 %v583
        %727 = vmatpush.bf16.msra.mxu0 %v580
        %728 = vmatmul.bf16.gmra.mxu0 %v391
        %v729 = vpop.f32.mrf.mxu0
        %v730 = vadd.f32 %v716, %v729
        %v731 = vpop.f32.mrf.mxu0
        %v732 = vadd.f32 %v718, %v731
        %733 = vdwg.mxu0
        %v734 = vadd.f32 %v271, %v674
        %v735 = vadd.f32 %v272, %v702
        %v736 = vadd.f32 %v273, %v730
        %v737 = vadd.f32 %v271, %v676
        %v738 = vadd.f32 %v272, %v704
        %v739 = vadd.f32 %v273, %v732
        %v740 = vld [vmem:[#allocation2] sm:$0x88]
        %s741 = scalar_lea.vmem [#allocation3], 384
        %v742 = vld [vmem:[%s741] sm:$0xff]
        %v743 = vld [vmem:[%s741 + $0x8] sm:$0xf]
        %v744 = vld [vmem:[%s741 + $0xc] sm:$0xff]
        %v745 = vld [vmem:[%s741 + $0x14] sm:$0xf]
        %v746 = vld [vmem:[%s741 + $0x18] sm:$0xff]
        %v747 = vld [vmem:[%s741 + $0x20] sm:$0xf]
        %v748 = vld [vmem:[%s741 + $0x24] sm:$0xff]
        %v749 = vld [vmem:[%s741 + $0x2c] sm:$0xf]
        %v750 = vld [vmem:[%s741 + $0x30] sm:$0xff]
        %v751 = vld [vmem:[%s741 + $0x38] sm:$0xf]
        %v752 = vld [vmem:[%s741 + $0x3c] sm:$0xff]
        %v753 = vld [vmem:[%s741 + $0x44] sm:$0xf]
        %v754 = vld [vmem:[%s741 + $0x48] sm:$0xff]
        %v755 = vld [vmem:[%s741 + $0x50] sm:$0xf]
        %v756 = vld [vmem:[%s741 + $0x54] sm:$0xff]
        %v757 = vld [vmem:[%s741 + $0x5c] sm:$0xf]
        %v758 = vld [vmem:[%s741 + $0x60] sm:$0xff]
        %v759 = vld [vmem:[%s741 + $0x68] sm:$0xf]
        %v760 = vld [vmem:[%s741 + $0x6c] sm:$0xff]
        %v761 = vld [vmem:[%s741 + $0x74] sm:$0xf]
        %v762 = vld [vmem:[%s741 + $0x78] sm:$0xff]
        %v763 = vld [vmem:[%s741 + $0x80] sm:$0xf]
        %v764 = vld [vmem:[%s741 + $0x84] sm:$0xff]
        %v765 = vld [vmem:[%s741 + $0x8c] sm:$0xf]
        %v766 = vld [vmem:[%s741 + $0x90] sm:$0xff]
        %v767 = vld [vmem:[%s741 + $0x98] sm:$0xf]
        %v768 = vld [vmem:[%s741 + $0x9c] sm:$0xff]
        %v769 = vld [vmem:[%s741 + $0xa4] sm:$0xf]
        %v770 = vld [vmem:[%s741 + $0xa8] sm:$0xff]
        %v771 = vld [vmem:[%s741 + $0xb0] sm:$0xf]
        %v772 = vld [vmem:[%s741 + $0xb4] sm:$0xff]
        %v773 = vld [vmem:[%s741 + $0xbc] sm:$0xf]
        %v774 = vld [vmem:[%s741 + $0xc0] sm:$0xff]
        %v775 = vld [vmem:[%s741 + $0xc8] sm:$0xf]
        %v776 = vld [vmem:[%s741 + $0xcc] sm:$0xff]
        %v777 = vld [vmem:[%s741 + $0xd4] sm:$0xf]
        %v778 = vld [vmem:[%s741 + $0xd8] sm:$0xff]
        %v779 = vld [vmem:[%s741 + $0xe0] sm:$0xf]
        %v780 = vld [vmem:[%s741 + $0xe4] sm:$0xff]
        %v781 = vld [vmem:[%s741 + $0xec] sm:$0xf]
        %v782 = vld [vmem:[%s741 + $0xf0] sm:$0xff]
        %v783 = vld [vmem:[%s741 + $0xf8] sm:$0xf]
        %v784 = vld [vmem:[%s741 + $0xfc] sm:$0xff]
        %v785 = vld [vmem:[%s741 + $0x104] sm:$0xf]
        %v786 = vld [vmem:[%s741 + $0x108] sm:$0xff]
        %v787 = vld [vmem:[%s741 + $0x110] sm:$0xf]
        %v788 = vld [vmem:[%s741 + $0x114] sm:$0xff]
        %v789 = vld [vmem:[%s741 + $0x11c] sm:$0xf]
        %v790 = vld [vmem:[%s741 + $0x120] sm:$0xff]
        %v791 = vld [vmem:[%s741 + $0x128] sm:$0xf]
        %v792 = vld [vmem:[%s741 + $0x12c] sm:$0xff]
        %v793 = vld [vmem:[%s741 + $0x134] sm:$0xf]
        %v794 = vld [vmem:[%s741 + $0x138] sm:$0xff]
        %v795 = vld [vmem:[%s741 + $0x140] sm:$0xf]
        %v796 = vld [vmem:[%s741 + $0x144] sm:$0xff]
        %v797 = vld [vmem:[%s741 + $0x14c] sm:$0xf]
        %v798 = vld [vmem:[%s741 + $0x150] sm:$0xff]
        %v799 = vld [vmem:[%s741 + $0x158] sm:$0xf]
        %v800 = vld [vmem:[%s741 + $0x15c] sm:$0xff]
        %v801 = vld [vmem:[%s741 + $0x164] sm:$0xf]
        %v802 = vld [vmem:[%s741 + $0x168] sm:$0xff]
        %v803 = vld [vmem:[%s741 + $0x170] sm:$0xf]
        %v804 = vld [vmem:[%s741 + $0x174] sm:$0xff]
        %v805 = vld [vmem:[%s741 + $0x17c] sm:$0xf]
        %v807 = vunpack.c.l.b16 %v740
        %v808 = vunpack.c.h.b16 %v740
        %v809 = vpack.c.b16 %v349, %v807
        %v810 = vpack.c.b16 %v350, %v808
        %vm811 = vcmask 1044480
        %v812 = vrot.slane %v809, 3
        %v813 = vrot.slane %v355, 3
        %v814 = vsel %vm811, %v812, %v813
        %v815 = vrot.slane %v810, 3
        %v816 = vrot.slane %v356, 3
        %v817 = vsel %vm811, %v815, %v816
        %v884 = vunpack.c.l.b16 %v742
        %v885 = vunpack.c.h.b16 %v742
        %v886 = vunpack.c.l.b16 %v743
        %v887 = vunpack.c.l.b16 %v744
        %v888 = vunpack.c.h.b16 %v744
        %v889 = vunpack.c.l.b16 %v745
        %v890 = vunpack.c.l.b16 %v746
        %v891 = vunpack.c.h.b16 %v746
        %v892 = vunpack.c.l.b16 %v747
        %v893 = vunpack.c.l.b16 %v748
        %v894 = vunpack.c.h.b16 %v748
        %v895 = vunpack.c.l.b16 %v749
        %v896 = vunpack.c.l.b16 %v750
        %v897 = vunpack.c.h.b16 %v750
        %v898 = vunpack.c.l.b16 %v751
        %v899 = vunpack.c.l.b16 %v752
        %v900 = vunpack.c.h.b16 %v752
        %v901 = vunpack.c.l.b16 %v753
        %v902 = vunpack.c.l.b16 %v754
        %v903 = vunpack.c.h.b16 %v754
        %v904 = vunpack.c.l.b16 %v755
        %v905 = vunpack.c.l.b16 %v756
        %v906 = vunpack.c.h.b16 %v756
        %v907 = vunpack.c.l.b16 %v757
        %v908 = vunpack.c.l.b16 %v758
        %v909 = vunpack.c.h.b16 %v758
        %v910 = vunpack.c.l.b16 %v759
        %v911 = vunpack.c.l.b16 %v760
        %v912 = vunpack.c.h.b16 %v760
        %v913 = vunpack.c.l.b16 %v761
        %v914 = vunpack.c.l.b16 %v762
        %v915 = vunpack.c.h.b16 %v762
        %v916 = vunpack.c.l.b16 %v763
        %v917 = vunpack.c.l.b16 %v764
        %v918 = vunpack.c.h.b16 %v764
        %v919 = vunpack.c.l.b16 %v765
        %v920 = vunpack.c.l.b16 %v766
        %v921 = vunpack.c.h.b16 %v766
        %v922 = vunpack.c.l.b16 %v767
        %v923 = vunpack.c.l.b16 %v768
        %v924 = vunpack.c.h.b16 %v768
        %v925 = vunpack.c.l.b16 %v769
        %v926 = vunpack.c.l.b16 %v770
        %v927 = vunpack.c.h.b16 %v770
        %v928 = vunpack.c.l.b16 %v771
        %v929 = vunpack.c.l.b16 %v772
        %v930 = vunpack.c.h.b16 %v772
        %v931 = vunpack.c.l.b16 %v773
        %v932 = vunpack.c.l.b16 %v774
        %v933 = vunpack.c.h.b16 %v774
        %v934 = vunpack.c.l.b16 %v775
        %v935 = vunpack.c.l.b16 %v776
        %v936 = vunpack.c.h.b16 %v776
        %v937 = vunpack.c.l.b16 %v777
        %v938 = vunpack.c.l.b16 %v778
        %v939 = vunpack.c.h.b16 %v778
        %v940 = vunpack.c.l.b16 %v779
        %v941 = vunpack.c.l.b16 %v780
        %v942 = vunpack.c.h.b16 %v780
        %v943 = vunpack.c.l.b16 %v781
        %v944 = vunpack.c.l.b16 %v782
        %v945 = vunpack.c.h.b16 %v782
        %v946 = vunpack.c.l.b16 %v783
        %v947 = vunpack.c.l.b16 %v784
        %v948 = vunpack.c.h.b16 %v784
        %v949 = vunpack.c.l.b16 %v785
        %v950 = vunpack.c.l.b16 %v786
        %v951 = vunpack.c.h.b16 %v786
        %v952 = vunpack.c.l.b16 %v787
        %v953 = vunpack.c.l.b16 %v788
        %v954 = vunpack.c.h.b16 %v788
        %v955 = vunpack.c.l.b16 %v789
        %v956 = vunpack.c.l.b16 %v790
        %v957 = vunpack.c.h.b16 %v790
        %v958 = vunpack.c.l.b16 %v791
        %v959 = vunpack.c.l.b16 %v792
        %v960 = vunpack.c.h.b16 %v792
        %v961 = vunpack.c.l.b16 %v793
        %v962 = vunpack.c.l.b16 %v794
        %v963 = vunpack.c.h.b16 %v794
        %v964 = vunpack.c.l.b16 %v795
        %v965 = vunpack.c.l.b16 %v796
        %v966 = vunpack.c.h.b16 %v796
        %v967 = vunpack.c.l.b16 %v797
        %v968 = vunpack.c.l.b16 %v798
        %v969 = vunpack.c.h.b16 %v798
        %v970 = vunpack.c.l.b16 %v799
        %v971 = vunpack.c.l.b16 %v800
        %v972 = vunpack.c.h.b16 %v800
        %v973 = vunpack.c.l.b16 %v801
        %v974 = vunpack.c.l.b16 %v802
        %v975 = vunpack.c.h.b16 %v802
        %v976 = vunpack.c.l.b16 %v803
        %v977 = vunpack.c.l.b16 %v804
        %v978 = vunpack.c.h.b16 %v804
        %v979 = vunpack.c.l.b16 %v805
        %v980 = vpack.c.b16 %v887, %v884
        %v981 = vpack.c.b16 %v888, %v885
        %v982 = vpack.c.b16 %v889, %v886
        %v983 = vpack.c.b16 %v893, %v890
        %v984 = vpack.c.b16 %v894, %v891
        %v985 = vpack.c.b16 %v895, %v892
        %v986 = vpack.c.b16 %v899, %v896
        %v987 = vpack.c.b16 %v900, %v897
        %v988 = vpack.c.b16 %v901, %v898
        %v989 = vpack.c.b16 %v905, %v902
        %v990 = vpack.c.b16 %v906, %v903
        %v991 = vpack.c.b16 %v907, %v904
        %v992 = vpack.c.b16 %v911, %v908
        %v993 = vpack.c.b16 %v912, %v909
        %v994 = vpack.c.b16 %v913, %v910
        %v995 = vpack.c.b16 %v917, %v914
        %v996 = vpack.c.b16 %v918, %v915
        %v997 = vpack.c.b16 %v919, %v916
        %v998 = vpack.c.b16 %v923, %v920
        %v999 = vpack.c.b16 %v924, %v921
        %v1000 = vpack.c.b16 %v925, %v922
        %v1001 = vpack.c.b16 %v929, %v926
        %v1002 = vpack.c.b16 %v930, %v927
        %v1003 = vpack.c.b16 %v931, %v928
        %v1004 = vpack.c.b16 %v935, %v932
        %v1005 = vpack.c.b16 %v936, %v933
        %v1006 = vpack.c.b16 %v937, %v934
        %v1007 = vpack.c.b16 %v941, %v938
        %v1008 = vpack.c.b16 %v942, %v939
        %v1009 = vpack.c.b16 %v943, %v940
        %v1010 = vpack.c.b16 %v947, %v944
        %v1011 = vpack.c.b16 %v948, %v945
        %v1012 = vpack.c.b16 %v949, %v946
        %v1013 = vpack.c.b16 %v953, %v950
        %v1014 = vpack.c.b16 %v954, %v951
        %v1015 = vpack.c.b16 %v955, %v952
        %v1016 = vpack.c.b16 %v959, %v956
        %v1017 = vpack.c.b16 %v960, %v957
        %v1018 = vpack.c.b16 %v961, %v958
        %v1019 = vpack.c.b16 %v965, %v962
        %v1020 = vpack.c.b16 %v966, %v963
        %v1021 = vpack.c.b16 %v967, %v964
        %v1022 = vpack.c.b16 %v971, %v968
        %v1023 = vpack.c.b16 %v972, %v969
        %v1024 = vpack.c.b16 %v973, %v970
        %v1025 = vpack.c.b16 %v977, %v974
        %v1026 = vpack.c.b16 %v978, %v975
        %v1027 = vpack.c.b16 %v979, %v976
        %1076 = vmatpush.bf16.msra.mxu0 %v1001
        %1077 = vmatpush.bf16.msra.mxu0 %v998
        %1078 = vmatpush.bf16.msra.mxu0 %v995
        %1079 = vmatpush.bf16.msra.mxu0 %v992
        %1080 = vmatpush.bf16.msra.mxu0 %v989
        %1081 = vmatpush.bf16.msra.mxu0 %v986
        %1082 = vmatpush.bf16.msra.mxu0 %v983
        %1083 = vmatpush.bf16.msra.mxu0 %v980
        %1084 = vmatmul.bf16.gmra.mxu0 %v814
        %v1085 = vpop.f32.mrf.mxu0
        %v1086 = vadd.f32 0.0, %v1085
        %v1087 = vpop.f32.mrf.mxu0
        %v1088 = vadd.f32 0.0, %v1087
        %1089 = vdwg.mxu0
        %1090 = vmatpush.bf16.msra.mxu0 %v1025
        %1091 = vmatpush.bf16.msra.mxu0 %v1022
        %1092 = vmatpush.bf16.msra.mxu0 %v1019
        %1093 = vmatpush.bf16.msra.mxu0 %v1016
        %1094 = vmatpush.bf16.msra.mxu0 %v1013
        %1095 = vmatpush.bf16.msra.mxu0 %v1010
        %1096 = vmatpush.bf16.msra.mxu0 %v1007
        %1097 = vmatpush.bf16.msra.mxu0 %v1004
        %1098 = vmatmul.bf16.gmra.mxu0 %v817
        %v1099 = vpop.f32.mrf.mxu0
        %v1100 = vadd.f32 %v1086, %v1099
        %v1101 = vpop.f32.mrf.mxu0
        %v1102 = vadd.f32 %v1088, %v1101
        %1103 = vdwg.mxu0
        %1104 = vmatpush.bf16.msra.mxu0 %v1002
        %1105 = vmatpush.bf16.msra.mxu0 %v999
        %1106 = vmatpush.bf16.msra.mxu0 %v996
        %1107 = vmatpush.bf16.msra.mxu0 %v993
        %1108 = vmatpush.bf16.msra.mxu0 %v990
        %1109 = vmatpush.bf16.msra.mxu0 %v987
        %1110 = vmatpush.bf16.msra.mxu0 %v984
        %1111 = vmatpush.bf16.msra.mxu0 %v981
        %1112 = vmatmul.bf16.gmra.mxu0 %v814
        %v1113 = vpop.f32.mrf.mxu0
        %v1114 = vadd.f32 0.0, %v1113
        %v1115 = vpop.f32.mrf.mxu0
        %v1116 = vadd.f32 0.0, %v1115
        %1117 = vdwg.mxu0
        %1118 = vmatpush.bf16.msra.mxu0 %v1026
        %1119 = vmatpush.bf16.msra.mxu0 %v1023
        %1120 = vmatpush.bf16.msra.mxu0 %v1020
        %1121 = vmatpush.bf16.msra.mxu0 %v1017
        %1122 = vmatpush.bf16.msra.mxu0 %v1014
        %1123 = vmatpush.bf16.msra.mxu0 %v1011
        %1124 = vmatpush.bf16.msra.mxu0 %v1008
        %1125 = vmatpush.bf16.msra.mxu0 %v1005
        %1126 = vmatmul.bf16.gmra.mxu0 %v817
        %v1127 = vpop.f32.mrf.mxu0
        %v1128 = vadd.f32 %v1114, %v1127
        %v1129 = vpop.f32.mrf.mxu0
        %v1130 = vadd.f32 %v1116, %v1129
        %1131 = vdwg.mxu0
        %1132 = vmatpush.bf16.msra.mxu0 %v1003
        %1133 = vmatpush.bf16.msra.mxu0 %v1000
        %1134 = vmatpush.bf16.msra.mxu0 %v997
        %1135 = vmatpush.bf16.msra.mxu0 %v994
        %1136 = vmatpush.bf16.msra.mxu0 %v991
        %1137 = vmatpush.bf16.msra.mxu0 %v988
        %1138 = vmatpush.bf16.msra.mxu0 %v985
        %1139 = vmatpush.bf16.msra.mxu0 %v982
        %1140 = vmatmul.bf16.gmra.mxu0 %v814
        %v1141 = vpop.f32.mrf.mxu0
        %v1142 = vadd.f32 0.0, %v1141
        %v1143 = vpop.f32.mrf.mxu0
        %v1144 = vadd.f32 0.0, %v1143
        %1145 = vdwg.mxu0
        %1146 = vmatpush.bf16.msra.mxu0 %v1027
        %1147 = vmatpush.bf16.msra.mxu0 %v1024
        %1148 = vmatpush.bf16.msra.mxu0 %v1021
        %1149 = vmatpush.bf16.msra.mxu0 %v1018
        %1150 = vmatpush.bf16.msra.mxu0 %v1015
        %1151 = vmatpush.bf16.msra.mxu0 %v1012
        %1152 = vmatpush.bf16.msra.mxu0 %v1009
        %1153 = vmatpush.bf16.msra.mxu0 %v1006
        %1154 = vmatmul.bf16.gmra.mxu0 %v817
        %v1155 = vpop.f32.mrf.mxu0
        %v1156 = vadd.f32 %v1142, %v1155
        %v1157 = vpop.f32.mrf.mxu0
        %v1158 = vadd.f32 %v1144, %v1157
        %1159 = vdwg.mxu0
        %v1160 = vadd.f32 %v734, %v1100
        %v1161 = vadd.f32 %v735, %v1128
        %v1162 = vadd.f32 %v736, %v1156
        %v1163 = vadd.f32 %v737, %v1102
        %v1164 = vadd.f32 %v738, %v1130
        %v1165 = vadd.f32 %v739, %v1158
        %v1166 = vld [vmem:[#allocation2 + $0x10] sm:$0xff]
        %s1167 = scalar_lea.vmem [#allocation3], 768
        %v1168 = vld [vmem:[%s1167] sm:$0xff]
        %v1169 = vld [vmem:[%s1167 + $0x8] sm:$0xf]
        %v1170 = vld [vmem:[%s1167 + $0xc] sm:$0xff]
        %v1171 = vld [vmem:[%s1167 + $0x14] sm:$0xf]
        %v1172 = vld [vmem:[%s1167 + $0x18] sm:$0xff]
        %v1173 = vld [vmem:[%s1167 + $0x20] sm:$0xf]
        %v1174 = vld [vmem:[%s1167 + $0x24] sm:$0xff]
        %v1175 = vld [vmem:[%s1167 + $0x2c] sm:$0xf]
        %v1176 = vld [vmem:[%s1167 + $0x30] sm:$0xff]
        %v1177 = vld [vmem:[%s1167 + $0x38] sm:$0xf]
        %v1178 = vld [vmem:[%s1167 + $0x3c] sm:$0xff]
        %v1179 = vld [vmem:[%s1167 + $0x44] sm:$0xf]
        %v1180 = vld [vmem:[%s1167 + $0x48] sm:$0xff]
        %v1181 = vld [vmem:[%s1167 + $0x50] sm:$0xf]
        %v1182 = vld [vmem:[%s1167 + $0x54] sm:$0xff]
        %v1183 = vld [vmem:[%s1167 + $0x5c] sm:$0xf]
        %v1184 = vld [vmem:[%s1167 + $0x60] sm:$0xff]
        %v1185 = vld [vmem:[%s1167 + $0x68] sm:$0xf]
        %v1186 = vld [vmem:[%s1167 + $0x6c] sm:$0xff]
        %v1187 = vld [vmem:[%s1167 + $0x74] sm:$0xf]
        %v1188 = vld [vmem:[%s1167 + $0x78] sm:$0xff]
        %v1189 = vld [vmem:[%s1167 + $0x80] sm:$0xf]
        %v1190 = vld [vmem:[%s1167 + $0x84] sm:$0xff]
        %v1191 = vld [vmem:[%s1167 + $0x8c] sm:$0xf]
        %v1192 = vld [vmem:[%s1167 + $0x90] sm:$0xff]
        %v1193 = vld [vmem:[%s1167 + $0x98] sm:$0xf]
        %v1194 = vld [vmem:[%s1167 + $0x9c] sm:$0xff]
        %v1195 = vld [vmem:[%s1167 + $0xa4] sm:$0xf]
        %v1196 = vld [vmem:[%s1167 + $0xa8] sm:$0xff]
        %v1197 = vld [vmem:[%s1167 + $0xb0] sm:$0xf]
        %v1198 = vld [vmem:[%s1167 + $0xb4] sm:$0xff]
        %v1199 = vld [vmem:[%s1167 + $0xbc] sm:$0xf]
        %v1200 = vld [vmem:[%s1167 + $0xc0] sm:$0xff]
        %v1201 = vld [vmem:[%s1167 + $0xc8] sm:$0xf]
        %v1202 = vld [vmem:[%s1167 + $0xcc] sm:$0xff]
        %v1203 = vld [vmem:[%s1167 + $0xd4] sm:$0xf]
        %v1204 = vld [vmem:[%s1167 + $0xd8] sm:$0xff]
        %v1205 = vld [vmem:[%s1167 + $0xe0] sm:$0xf]
        %v1206 = vld [vmem:[%s1167 + $0xe4] sm:$0xff]
        %v1207 = vld [vmem:[%s1167 + $0xec] sm:$0xf]
        %v1208 = vld [vmem:[%s1167 + $0xf0] sm:$0xff]
        %v1209 = vld [vmem:[%s1167 + $0xf8] sm:$0xf]
        %v1210 = vld [vmem:[%s1167 + $0xfc] sm:$0xff]
        %v1211 = vld [vmem:[%s1167 + $0x104] sm:$0xf]
        %v1212 = vld [vmem:[%s1167 + $0x108] sm:$0xff]
        %v1213 = vld [vmem:[%s1167 + $0x110] sm:$0xf]
        %v1214 = vld [vmem:[%s1167 + $0x114] sm:$0xff]
        %v1215 = vld [vmem:[%s1167 + $0x11c] sm:$0xf]
        %v1216 = vld [vmem:[%s1167 + $0x120] sm:$0xff]
        %v1217 = vld [vmem:[%s1167 + $0x128] sm:$0xf]
        %v1218 = vld [vmem:[%s1167 + $0x12c] sm:$0xff]
        %v1219 = vld [vmem:[%s1167 + $0x134] sm:$0xf]
        %v1220 = vld [vmem:[%s1167 + $0x138] sm:$0xff]
        %v1221 = vld [vmem:[%s1167 + $0x140] sm:$0xf]
        %v1222 = vld [vmem:[%s1167 + $0x144] sm:$0xff]
        %v1223 = vld [vmem:[%s1167 + $0x14c] sm:$0xf]
        %v1224 = vld [vmem:[%s1167 + $0x150] sm:$0xff]
        %v1225 = vld [vmem:[%s1167 + $0x158] sm:$0xf]
        %v1226 = vld [vmem:[%s1167 + $0x15c] sm:$0xff]
        %v1227 = vld [vmem:[%s1167 + $0x164] sm:$0xf]
        %v1228 = vld [vmem:[%s1167 + $0x168] sm:$0xff]
        %v1229 = vld [vmem:[%s1167 + $0x170] sm:$0xf]
        %v1230 = vld [vmem:[%s1167 + $0x174] sm:$0xff]
        %v1231 = vld [vmem:[%s1167 + $0x17c] sm:$0xf]
        %v1233 = vunpack.c.l.b16 %v1166
        %v1234 = vunpack.c.h.b16 %v1166
        %v1235 = vpack.c.b16 %v1233, %v1233
        %v1236 = vpack.c.b16 %v1234, %v1234
        %vm1237 = vsmask.f32 4352
        %v1239 = vshrl.u32 %v809, 16
        %v1241 = vrot.slane %v1239, 3
        %v1242 = vshll.u32 %v809, 16
        %v1244 = vrot.slane %v1242, 4
        %v1245 = vor.u32 %v1241, %v1244
        %v1247 = vshrl.u32 %v1235, 16
        %v1249 = vrot.slane %v1247, 3
        %v1250 = vshll.u32 %v1235, 16
        %v1252 = vrot.slane %v1250, 4
        %v1253 = vor.u32 %v1249, %v1252
        %v1254 = vsel %vm1237, %v1245, %v1253
        %v1256 = vshrl.u32 %v810, 16
        %v1258 = vrot.slane %v1256, 3
        %v1259 = vshll.u32 %v810, 16
        %v1261 = vrot.slane %v1259, 4
        %v1262 = vor.u32 %v1258, %v1261
        %v1264 = vshrl.u32 %v1236, 16
        %v1266 = vrot.slane %v1264, 3
        %v1267 = vshll.u32 %v1236, 16
        %v1269 = vrot.slane %v1267, 4
        %v1270 = vor.u32 %v1266, %v1269
        %v1271 = vsel %vm1237, %v1262, %v1270
        %v1338 = vunpack.c.l.b16 %v1168
        %v1339 = vunpack.c.h.b16 %v1168
        %v1340 = vunpack.c.l.b16 %v1169
        %v1341 = vunpack.c.l.b16 %v1170
        %v1342 = vunpack.c.h.b16 %v1170
        %v1343 = vunpack.c.l.b16 %v1171
        %v1344 = vunpack.c.l.b16 %v1172
        %v1345 = vunpack.c.h.b16 %v1172
        %v1346 = vunpack.c.l.b16 %v1173
        %v1347 = vunpack.c.l.b16 %v1174
        %v1348 = vunpack.c.h.b16 %v1174
        %v1349 = vunpack.c.l.b16 %v1175
        %v1350 = vunpack.c.l.b16 %v1176
        %v1351 = vunpack.c.h.b16 %v1176
        %v1352 = vunpack.c.l.b16 %v1177
        %v1353 = vunpack.c.l.b16 %v1178
        %v1354 = vunpack.c.h.b16 %v1178
        %v1355 = vunpack.c.l.b16 %v1179
        %v1356 = vunpack.c.l.b16 %v1180
        %v1357 = vunpack.c.h.b16 %v1180
        %v1358 = vunpack.c.l.b16 %v1181
        %v1359 = vunpack.c.l.b16 %v1182
        %v1360 = vunpack.c.h.b16 %v1182
        %v1361 = vunpack.c.l.b16 %v1183
        %v1362 = vunpack.c.l.b16 %v1184
        %v1363 = vunpack.c.h.b16 %v1184
        %v1364 = vunpack.c.l.b16 %v1185
        %v1365 = vunpack.c.l.b16 %v1186
        %v1366 = vunpack.c.h.b16 %v1186
        %v1367 = vunpack.c.l.b16 %v1187
        %v1368 = vunpack.c.l.b16 %v1188
        %v1369 = vunpack.c.h.b16 %v1188
        %v1370 = vunpack.c.l.b16 %v1189
        %v1371 = vunpack.c.l.b16 %v1190
        %v1372 = vunpack.c.h.b16 %v1190
        %v1373 = vunpack.c.l.b16 %v1191
        %v1374 = vunpack.c.l.b16 %v1192
        %v1375 = vunpack.c.h.b16 %v1192
        %v1376 = vunpack.c.l.b16 %v1193
        %v1377 = vunpack.c.l.b16 %v1194
        %v1378 = vunpack.c.h.b16 %v1194
        %v1379 = vunpack.c.l.b16 %v1195
        %v1380 = vunpack.c.l.b16 %v1196
        %v1381 = vunpack.c.h.b16 %v1196
        %v1382 = vunpack.c.l.b16 %v1197
        %v1383 = vunpack.c.l.b16 %v1198
        %v1384 = vunpack.c.h.b16 %v1198
        %v1385 = vunpack.c.l.b16 %v1199
        %v1386 = vunpack.c.l.b16 %v1200
        %v1387 = vunpack.c.h.b16 %v1200
        %v1388 = vunpack.c.l.b16 %v1201
        %v1389 = vunpack.c.l.b16 %v1202
        %v1390 = vunpack.c.h.b16 %v1202
        %v1391 = vunpack.c.l.b16 %v1203
        %v1392 = vunpack.c.l.b16 %v1204
        %v1393 = vunpack.c.h.b16 %v1204
        %v1394 = vunpack.c.l.b16 %v1205
        %v1395 = vunpack.c.l.b16 %v1206
        %v1396 = vunpack.c.h.b16 %v1206
        %v1397 = vunpack.c.l.b16 %v1207
        %v1398 = vunpack.c.l.b16 %v1208
        %v1399 = vunpack.c.h.b16 %v1208
        %v1400 = vunpack.c.l.b16 %v1209
        %v1401 = vunpack.c.l.b16 %v1210
        %v1402 = vunpack.c.h.b16 %v1210
        %v1403 = vunpack.c.l.b16 %v1211
        %v1404 = vunpack.c.l.b16 %v1212
        %v1405 = vunpack.c.h.b16 %v1212
        %v1406 = vunpack.c.l.b16 %v1213
        %v1407 = vunpack.c.l.b16 %v1214
        %v1408 = vunpack.c.h.b16 %v1214
        %v1409 = vunpack.c.l.b16 %v1215
        %v1410 = vunpack.c.l.b16 %v1216
        %v1411 = vunpack.c.h.b16 %v1216
        %v1412 = vunpack.c.l.b16 %v1217
        %v1413 = vunpack.c.l.b16 %v1218
        %v1414 = vunpack.c.h.b16 %v1218
        %v1415 = vunpack.c.l.b16 %v1219
        %v1416 = vunpack.c.l.b16 %v1220
        %v1417 = vunpack.c.h.b16 %v1220
        %v1418 = vunpack.c.l.b16 %v1221
        %v1419 = vunpack.c.l.b16 %v1222
        %v1420 = vunpack.c.h.b16 %v1222
        %v1421 = vunpack.c.l.b16 %v1223
        %v1422 = vunpack.c.l.b16 %v1224
        %v1423 = vunpack.c.h.b16 %v1224
        %v1424 = vunpack.c.l.b16 %v1225
        %v1425 = vunpack.c.l.b16 %v1226
        %v1426 = vunpack.c.h.b16 %v1226
        %v1427 = vunpack.c.l.b16 %v1227
        %v1428 = vunpack.c.l.b16 %v1228
        %v1429 = vunpack.c.h.b16 %v1228
        %v1430 = vunpack.c.l.b16 %v1229
        %v1431 = vunpack.c.l.b16 %v1230
        %v1432 = vunpack.c.h.b16 %v1230
        %v1433 = vunpack.c.l.b16 %v1231
        %v1434 = vpack.c.b16 %v1341, %v1338
        %v1435 = vpack.c.b16 %v1342, %v1339
        %v1436 = vpack.c.b16 %v1343, %v1340
        %v1437 = vpack.c.b16 %v1347, %v1344
        %v1438 = vpack.c.b16 %v1348, %v1345
        %v1439 = vpack.c.b16 %v1349, %v1346
        %v1440 = vpack.c.b16 %v1353, %v1350
        %v1441 = vpack.c.b16 %v1354, %v1351
        %v1442 = vpack.c.b16 %v1355, %v1352
        %v1443 = vpack.c.b16 %v1359, %v1356
        %v1444 = vpack.c.b16 %v1360, %v1357
        %v1445 = vpack.c.b16 %v1361, %v1358
        %v1446 = vpack.c.b16 %v1365, %v1362
        %v1447 = vpack.c.b16 %v1366, %v1363
        %v1448 = vpack.c.b16 %v1367, %v1364
        %v1449 = vpack.c.b16 %v1371, %v1368
        %v1450 = vpack.c.b16 %v1372, %v1369
        %v1451 = vpack.c.b16 %v1373, %v1370
        %v1452 = vpack.c.b16 %v1377, %v1374
        %v1453 = vpack.c.b16 %v1378, %v1375
        %v1454 = vpack.c.b16 %v1379, %v1376
        %v1455 = vpack.c.b16 %v1383, %v1380
        %v1456 = vpack.c.b16 %v1384, %v1381
        %v1457 = vpack.c.b16 %v1385, %v1382
        %v1458 = vpack.c.b16 %v1389, %v1386
        %v1459 = vpack.c.b16 %v1390, %v1387
        %v1460 = vpack.c.b16 %v1391, %v1388
        %v1461 = vpack.c.b16 %v1395, %v1392
        %v1462 = vpack.c.b16 %v1396, %v1393
        %v1463 = vpack.c.b16 %v1397, %v1394
        %v1464 = vpack.c.b16 %v1401, %v1398
        %v1465 = vpack.c.b16 %v1402, %v1399
        %v1466 = vpack.c.b16 %v1403, %v1400
        %v1467 = vpack.c.b16 %v1407, %v1404
        %v1468 = vpack.c.b16 %v1408, %v1405
        %v1469 = vpack.c.b16 %v1409, %v1406
        %v1470 = vpack.c.b16 %v1413, %v1410
        %v1471 = vpack.c.b16 %v1414, %v1411
        %v1472 = vpack.c.b16 %v1415, %v1412
        %v1473 = vpack.c.b16 %v1419, %v1416
        %v1474 = vpack.c.b16 %v1420, %v1417
        %v1475 = vpack.c.b16 %v1421, %v1418
        %v1476 = vpack.c.b16 %v1425, %v1422
        %v1477 = vpack.c.b16 %v1426, %v1423
        %v1478 = vpack.c.b16 %v1427, %v1424
        %v1479 = vpack.c.b16 %v1431, %v1428
        %v1480 = vpack.c.b16 %v1432, %v1429
        %v1481 = vpack.c.b16 %v1433, %v1430
        %1530 = vmatpush.bf16.msra.mxu0 %v1455
        %1531 = vmatpush.bf16.msra.mxu0 %v1452
        %1532 = vmatpush.bf16.msra.mxu0 %v1449
        %1533 = vmatpush.bf16.msra.mxu0 %v1446
        %1534 = vmatpush.bf16.msra.mxu0 %v1443
        %1535 = vmatpush.bf16.msra.mxu0 %v1440
        %1536 = vmatpush.bf16.msra.mxu0 %v1437
        %1537 = vmatpush.bf16.msra.mxu0 %v1434
        %1538 = vmatmul.bf16.gmra.mxu0 %v1254
        %v1539 = vpop.f32.mrf.mxu0
        %v1540 = vadd.f32 0.0, %v1539
        %v1541 = vpop.f32.mrf.mxu0
        %v1542 = vadd.f32 0.0, %v1541
        %1543 = vdwg.mxu0
        %1544 = vmatpush.bf16.msra.mxu0 %v1479
        %1545 = vmatpush.bf16.msra.mxu0 %v1476
        %1546 = vmatpush.bf16.msra.mxu0 %v1473
        %1547 = vmatpush.bf16.msra.mxu0 %v1470
        %1548 = vmatpush.bf16.msra.mxu0 %v1467
        %1549 = vmatpush.bf16.msra.mxu0 %v1464
        %1550 = vmatpush.bf16.msra.mxu0 %v1461
        %1551 = vmatpush.bf16.msra.mxu0 %v1458
        %1552 = vmatmul.bf16.gmra.mxu0 %v1271
        %v1553 = vpop.f32.mrf.mxu0
        %v1554 = vadd.f32 %v1540, %v1553
        %v1555 = vpop.f32.mrf.mxu0
        %v1556 = vadd.f32 %v1542, %v1555
        %1557 = vdwg.mxu0
        %1558 = vmatpush.bf16.msra.mxu0 %v1456
        %1559 = vmatpush.bf16.msra.mxu0 %v1453
        %1560 = vmatpush.bf16.msra.mxu0 %v1450
        %1561 = vmatpush.bf16.msra.mxu0 %v1447
        %1562 = vmatpush.bf16.msra.mxu0 %v1444
        %1563 = vmatpush.bf16.msra.mxu0 %v1441
        %1564 = vmatpush.bf16.msra.mxu0 %v1438
        %1565 = vmatpush.bf16.msra.mxu0 %v1435
        %1566 = vmatmul.bf16.gmra.mxu0 %v1254
        %v1567 = vpop.f32.mrf.mxu0
        %v1568 = vadd.f32 0.0, %v1567
        %v1569 = vpop.f32.mrf.mxu0
        %v1570 = vadd.f32 0.0, %v1569
        %1571 = vdwg.mxu0
        %1572 = vmatpush.bf16.msra.mxu0 %v1480
        %1573 = vmatpush.bf16.msra.mxu0 %v1477
        %1574 = vmatpush.bf16.msra.mxu0 %v1474
        %1575 = vmatpush.bf16.msra.mxu0 %v1471
        %1576 = vmatpush.bf16.msra.mxu0 %v1468
        %1577 = vmatpush.bf16.msra.mxu0 %v1465
        %1578 = vmatpush.bf16.msra.mxu0 %v1462
        %1579 = vmatpush.bf16.msra.mxu0 %v1459
        %1580 = vmatmul.bf16.gmra.mxu0 %v1271
        %v1581 = vpop.f32.mrf.mxu0
        %v1582 = vadd.f32 %v1568, %v1581
        %v1583 = vpop.f32.mrf.mxu0
        %v1584 = vadd.f32 %v1570, %v1583
        %1585 = vdwg.mxu0
        %1586 = vmatpush.bf16.msra.mxu0 %v1457
        %1587 = vmatpush.bf16.msra.mxu0 %v1454
        %1588 = vmatpush.bf16.msra.mxu0 %v1451
        %1589 = vmatpush.bf16.msra.mxu0 %v1448
        %1590 = vmatpush.bf16.msra.mxu0 %v1445
        %1591 = vmatpush.bf16.msra.mxu0 %v1442
        %1592 = vmatpush.bf16.msra.mxu0 %v1439
        %1593 = vmatpush.bf16.msra.mxu0 %v1436
        %1594 = vmatmul.bf16.gmra.mxu0 %v1254
        %v1595 = vpop.f32.mrf.mxu0
        %v1596 = vadd.f32 0.0, %v1595
        %v1597 = vpop.f32.mrf.mxu0
        %v1598 = vadd.f32 0.0, %v1597
        %1599 = vdwg.mxu0
        %1600 = vmatpush.bf16.msra.mxu0 %v1481
        %1601 = vmatpush.bf16.msra.mxu0 %v1478
        %1602 = vmatpush.bf16.msra.mxu0 %v1475
        %1603 = vmatpush.bf16.msra.mxu0 %v1472
        %1604 = vmatpush.bf16.msra.mxu0 %v1469
        %1605 = vmatpush.bf16.msra.mxu0 %v1466
        %1606 = vmatpush.bf16.msra.mxu0 %v1463
        %1607 = vmatpush.bf16.msra.mxu0 %v1460
        %1608 = vmatmul.bf16.gmra.mxu0 %v1271
        %v1609 = vpop.f32.mrf.mxu0
        %v1610 = vadd.f32 %v1596, %v1609
        %v1611 = vpop.f32.mrf.mxu0
        %v1612 = vadd.f32 %v1598, %v1611
        %1613 = vdwg.mxu0
        %v1614 = vadd.f32 %v1160, %v1554
        %v1615 = vadd.f32 %v1161, %v1582
        %v1616 = vadd.f32 %v1162, %v1610
        %v1617 = vadd.f32 %v1163, %v1556
        %v1618 = vadd.f32 %v1164, %v1584
        %v1619 = vadd.f32 %v1165, %v1612
        %s1620 = scalar_lea.vmem [#allocation3], 1152
        %v1621 = vld [vmem:[%s1620] sm:$0xff]
        %v1622 = vld [vmem:[%s1620 + $0x8] sm:$0xf]
        %v1623 = vld [vmem:[%s1620 + $0xc] sm:$0xff]
        %v1624 = vld [vmem:[%s1620 + $0x14] sm:$0xf]
        %v1625 = vld [vmem:[%s1620 + $0x18] sm:$0xff]
        %v1626 = vld [vmem:[%s1620 + $0x20] sm:$0xf]
        %v1627 = vld [vmem:[%s1620 + $0x24] sm:$0xff]
        %v1628 = vld [vmem:[%s1620 + $0x2c] sm:$0xf]
        %v1629 = vld [vmem:[%s1620 + $0x30] sm:$0xff]
        %v1630 = vld [vmem:[%s1620 + $0x38] sm:$0xf]
        %v1631 = vld [vmem:[%s1620 + $0x3c] sm:$0xff]
        %v1632 = vld [vmem:[%s1620 + $0x44] sm:$0xf]
        %v1633 = vld [vmem:[%s1620 + $0x48] sm:$0xff]
        %v1634 = vld [vmem:[%s1620 + $0x50] sm:$0xf]
        %v1635 = vld [vmem:[%s1620 + $0x54] sm:$0xff]
        %v1636 = vld [vmem:[%s1620 + $0x5c] sm:$0xf]
        %v1637 = vld [vmem:[%s1620 + $0x60] sm:$0xff]
        %v1638 = vld [vmem:[%s1620 + $0x68] sm:$0xf]
        %v1639 = vld [vmem:[%s1620 + $0x6c] sm:$0xff]
        %v1640 = vld [vmem:[%s1620 + $0x74] sm:$0xf]
        %v1641 = vld [vmem:[%s1620 + $0x78] sm:$0xff]
        %v1642 = vld [vmem:[%s1620 + $0x80] sm:$0xf]
        %v1643 = vld [vmem:[%s1620 + $0x84] sm:$0xff]
        %v1644 = vld [vmem:[%s1620 + $0x8c] sm:$0xf]
        %v1645 = vld [vmem:[%s1620 + $0x90] sm:$0xff]
        %v1646 = vld [vmem:[%s1620 + $0x98] sm:$0xf]
        %v1647 = vld [vmem:[%s1620 + $0x9c] sm:$0xff]
        %v1648 = vld [vmem:[%s1620 + $0xa4] sm:$0xf]
        %v1649 = vld [vmem:[%s1620 + $0xa8] sm:$0xff]
        %v1650 = vld [vmem:[%s1620 + $0xb0] sm:$0xf]
        %v1651 = vld [vmem:[%s1620 + $0xb4] sm:$0xff]
        %v1652 = vld [vmem:[%s1620 + $0xbc] sm:$0xf]
        %v1653 = vld [vmem:[%s1620 + $0xc0] sm:$0xff]
        %v1654 = vld [vmem:[%s1620 + $0xc8] sm:$0xf]
        %v1655 = vld [vmem:[%s1620 + $0xcc] sm:$0xff]
        %v1656 = vld [vmem:[%s1620 + $0xd4] sm:$0xf]
        %v1657 = vld [vmem:[%s1620 + $0xd8] sm:$0xff]
        %v1658 = vld [vmem:[%s1620 + $0xe0] sm:$0xf]
        %v1659 = vld [vmem:[%s1620 + $0xe4] sm:$0xff]
        %v1660 = vld [vmem:[%s1620 + $0xec] sm:$0xf]
        %v1661 = vld [vmem:[%s1620 + $0xf0] sm:$0xff]
        %v1662 = vld [vmem:[%s1620 + $0xf8] sm:$0xf]
        %v1663 = vld [vmem:[%s1620 + $0xfc] sm:$0xff]
        %v1664 = vld [vmem:[%s1620 + $0x104] sm:$0xf]
        %v1665 = vld [vmem:[%s1620 + $0x108] sm:$0xff]
        %v1666 = vld [vmem:[%s1620 + $0x110] sm:$0xf]
        %v1667 = vld [vmem:[%s1620 + $0x114] sm:$0xff]
        %v1668 = vld [vmem:[%s1620 + $0x11c] sm:$0xf]
        %v1669 = vld [vmem:[%s1620 + $0x120] sm:$0xff]
        %v1670 = vld [vmem:[%s1620 + $0x128] sm:$0xf]
        %v1671 = vld [vmem:[%s1620 + $0x12c] sm:$0xff]
        %v1672 = vld [vmem:[%s1620 + $0x134] sm:$0xf]
        %v1673 = vld [vmem:[%s1620 + $0x138] sm:$0xff]
        %v1674 = vld [vmem:[%s1620 + $0x140] sm:$0xf]
        %v1675 = vld [vmem:[%s1620 + $0x144] sm:$0xff]
        %v1676 = vld [vmem:[%s1620 + $0x14c] sm:$0xf]
        %v1677 = vld [vmem:[%s1620 + $0x150] sm:$0xff]
        %v1678 = vld [vmem:[%s1620 + $0x158] sm:$0xf]
        %v1679 = vld [vmem:[%s1620 + $0x15c] sm:$0xff]
        %v1680 = vld [vmem:[%s1620 + $0x164] sm:$0xf]
        %v1681 = vld [vmem:[%s1620 + $0x168] sm:$0xff]
        %v1682 = vld [vmem:[%s1620 + $0x170] sm:$0xf]
        %v1683 = vld [vmem:[%s1620 + $0x174] sm:$0xff]
        %v1684 = vld [vmem:[%s1620 + $0x17c] sm:$0xf]
        %v1685 = vpack.c.b16 %v1233, %v349
        %v1686 = vpack.c.b16 %v1234, %v350
        %v1753 = vunpack.c.l.b16 %v1621
        %v1754 = vunpack.c.h.b16 %v1621
        %v1755 = vunpack.c.l.b16 %v1622
        %v1756 = vunpack.c.l.b16 %v1623
        %v1757 = vunpack.c.h.b16 %v1623
        %v1758 = vunpack.c.l.b16 %v1624
        %v1759 = vunpack.c.l.b16 %v1625
        %v1760 = vunpack.c.h.b16 %v1625
        %v1761 = vunpack.c.l.b16 %v1626
        %v1762 = vunpack.c.l.b16 %v1627
        %v1763 = vunpack.c.h.b16 %v1627
        %v1764 = vunpack.c.l.b16 %v1628
        %v1765 = vunpack.c.l.b16 %v1629
        %v1766 = vunpack.c.h.b16 %v1629
        %v1767 = vunpack.c.l.b16 %v1630
        %v1768 = vunpack.c.l.b16 %v1631
        %v1769 = vunpack.c.h.b16 %v1631
        %v1770 = vunpack.c.l.b16 %v1632
        %v1771 = vunpack.c.l.b16 %v1633
        %v1772 = vunpack.c.h.b16 %v1633
        %v1773 = vunpack.c.l.b16 %v1634
        %v1774 = vunpack.c.l.b16 %v1635
        %v1775 = vunpack.c.h.b16 %v1635
        %v1776 = vunpack.c.l.b16 %v1636
        %v1777 = vunpack.c.l.b16 %v1637
        %v1778 = vunpack.c.h.b16 %v1637
        %v1779 = vunpack.c.l.b16 %v1638
        %v1780 = vunpack.c.l.b16 %v1639
        %v1781 = vunpack.c.h.b16 %v1639
        %v1782 = vunpack.c.l.b16 %v1640
        %v1783 = vunpack.c.l.b16 %v1641
        %v1784 = vunpack.c.h.b16 %v1641
        %v1785 = vunpack.c.l.b16 %v1642
        %v1786 = vunpack.c.l.b16 %v1643
        %v1787 = vunpack.c.h.b16 %v1643
        %v1788 = vunpack.c.l.b16 %v1644
        %v1789 = vunpack.c.l.b16 %v1645
        %v1790 = vunpack.c.h.b16 %v1645
        %v1791 = vunpack.c.l.b16 %v1646
        %v1792 = vunpack.c.l.b16 %v1647
        %v1793 = vunpack.c.h.b16 %v1647
        %v1794 = vunpack.c.l.b16 %v1648
        %v1795 = vunpack.c.l.b16 %v1649
        %v1796 = vunpack.c.h.b16 %v1649
        %v1797 = vunpack.c.l.b16 %v1650
        %v1798 = vunpack.c.l.b16 %v1651
        %v1799 = vunpack.c.h.b16 %v1651
        %v1800 = vunpack.c.l.b16 %v1652
        %v1801 = vunpack.c.l.b16 %v1653
        %v1802 = vunpack.c.h.b16 %v1653
        %v1803 = vunpack.c.l.b16 %v1654
        %v1804 = vunpack.c.l.b16 %v1655
        %v1805 = vunpack.c.h.b16 %v1655
        %v1806 = vunpack.c.l.b16 %v1656
        %v1807 = vunpack.c.l.b16 %v1657
        %v1808 = vunpack.c.h.b16 %v1657
        %v1809 = vunpack.c.l.b16 %v1658
        %v1810 = vunpack.c.l.b16 %v1659
        %v1811 = vunpack.c.h.b16 %v1659
        %v1812 = vunpack.c.l.b16 %v1660
        %v1813 = vunpack.c.l.b16 %v1661
        %v1814 = vunpack.c.h.b16 %v1661
        %v1815 = vunpack.c.l.b16 %v1662
        %v1816 = vunpack.c.l.b16 %v1663
        %v1817 = vunpack.c.h.b16 %v1663
        %v1818 = vunpack.c.l.b16 %v1664
        %v1819 = vunpack.c.l.b16 %v1665
        %v1820 = vunpack.c.h.b16 %v1665
        %v1821 = vunpack.c.l.b16 %v1666
        %v1822 = vunpack.c.l.b16 %v1667
        %v1823 = vunpack.c.h.b16 %v1667
        %v1824 = vunpack.c.l.b16 %v1668
        %v1825 = vunpack.c.l.b16 %v1669
        %v1826 = vunpack.c.h.b16 %v1669
        %v1827 = vunpack.c.l.b16 %v1670
        %v1828 = vunpack.c.l.b16 %v1671
        %v1829 = vunpack.c.h.b16 %v1671
        %v1830 = vunpack.c.l.b16 %v1672
        %v1831 = vunpack.c.l.b16 %v1673
        %v1832 = vunpack.c.h.b16 %v1673
        %v1833 = vunpack.c.l.b16 %v1674
        %v1834 = vunpack.c.l.b16 %v1675
        %v1835 = vunpack.c.h.b16 %v1675
        %v1836 = vunpack.c.l.b16 %v1676
        %v1837 = vunpack.c.l.b16 %v1677
        %v1838 = vunpack.c.h.b16 %v1677
        %v1839 = vunpack.c.l.b16 %v1678
        %v1840 = vunpack.c.l.b16 %v1679
        %v1841 = vunpack.c.h.b16 %v1679
        %v1842 = vunpack.c.l.b16 %v1680
        %v1843 = vunpack.c.l.b16 %v1681
        %v1844 = vunpack.c.h.b16 %v1681
        %v1845 = vunpack.c.l.b16 %v1682
        %v1846 = vunpack.c.l.b16 %v1683
        %v1847 = vunpack.c.h.b16 %v1683
        %v1848 = vunpack.c.l.b16 %v1684
        %v1849 = vpack.c.b16 %v1756, %v1753
        %v1850 = vpack.c.b16 %v1757, %v1754
        %v1851 = vpack.c.b16 %v1758, %v1755
        %v1852 = vpack.c.b16 %v1762, %v1759
        %v1853 = vpack.c.b16 %v1763, %v1760
        %v1854 = vpack.c.b16 %v1764, %v1761
        %v1855 = vpack.c.b16 %v1768, %v1765
        %v1856 = vpack.c.b16 %v1769, %v1766
        %v1857 = vpack.c.b16 %v1770, %v1767
        %v1858 = vpack.c.b16 %v1774, %v1771
        %v1859 = vpack.c.b16 %v1775, %v1772
        %v1860 = vpack.c.b16 %v1776, %v1773
        %v1861 = vpack.c.b16 %v1780, %v1777
        %v1862 = vpack.c.b16 %v1781, %v1778
        %v1863 = vpack.c.b16 %v1782, %v1779
        %v1864 = vpack.c.b16 %v1786, %v1783
        %v1865 = vpack.c.b16 %v1787, %v1784
        %v1866 = vpack.c.b16 %v1788, %v1785
        %v1867 = vpack.c.b16 %v1792, %v1789
        %v1868 = vpack.c.b16 %v1793, %v1790
        %v1869 = vpack.c.b16 %v1794, %v1791
        %v1870 = vpack.c.b16 %v1798, %v1795
        %v1871 = vpack.c.b16 %v1799, %v1796
        %v1872 = vpack.c.b16 %v1800, %v1797
        %v1873 = vpack.c.b16 %v1804, %v1801
        %v1874 = vpack.c.b16 %v1805, %v1802
        %v1875 = vpack.c.b16 %v1806, %v1803
        %v1876 = vpack.c.b16 %v1810, %v1807
        %v1877 = vpack.c.b16 %v1811, %v1808
        %v1878 = vpack.c.b16 %v1812, %v1809
        %v1879 = vpack.c.b16 %v1816, %v1813
        %v1880 = vpack.c.b16 %v1817, %v1814
        %v1881 = vpack.c.b16 %v1818, %v1815
        %v1882 = vpack.c.b16 %v1822, %v1819
        %v1883 = vpack.c.b16 %v1823, %v1820
        %v1884 = vpack.c.b16 %v1824, %v1821
        %v1885 = vpack.c.b16 %v1828, %v1825
        %v1886 = vpack.c.b16 %v1829, %v1826
        %v1887 = vpack.c.b16 %v1830, %v1827
        %v1888 = vpack.c.b16 %v1834, %v1831
        %v1889 = vpack.c.b16 %v1835, %v1832
        %v1890 = vpack.c.b16 %v1836, %v1833
        %v1891 = vpack.c.b16 %v1840, %v1837
        %v1892 = vpack.c.b16 %v1841, %v1838
        %v1893 = vpack.c.b16 %v1842, %v1839
        %v1894 = vpack.c.b16 %v1846, %v1843
        %v1895 = vpack.c.b16 %v1847, %v1844
        %v1896 = vpack.c.b16 %v1848, %v1845
        %1945 = vmatpush.bf16.msra.mxu0 %v1870
        %1946 = vmatpush.bf16.msra.mxu0 %v1867
        %1947 = vmatpush.bf16.msra.mxu0 %v1864
        %1948 = vmatpush.bf16.msra.mxu0 %v1861
        %1949 = vmatpush.bf16.msra.mxu0 %v1858
        %1950 = vmatpush.bf16.msra.mxu0 %v1855
        %1951 = vmatpush.bf16.msra.mxu0 %v1852
        %1952 = vmatpush.bf16.msra.mxu0 %v1849
        %1953 = vmatmul.bf16.gmra.mxu0 %v1685
        %v1954 = vpop.f32.mrf.mxu0
        %v1955 = vadd.f32 0.0, %v1954
        %v1956 = vpop.f32.mrf.mxu0
        %v1957 = vadd.f32 0.0, %v1956
        %1958 = vdwg.mxu0
        %1959 = vmatpush.bf16.msra.mxu0 %v1894
        %1960 = vmatpush.bf16.msra.mxu0 %v1891
        %1961 = vmatpush.bf16.msra.mxu0 %v1888
        %1962 = vmatpush.bf16.msra.mxu0 %v1885
        %1963 = vmatpush.bf16.msra.mxu0 %v1882
        %1964 = vmatpush.bf16.msra.mxu0 %v1879
        %1965 = vmatpush.bf16.msra.mxu0 %v1876
        %1966 = vmatpush.bf16.msra.mxu0 %v1873
        %1967 = vmatmul.bf16.gmra.mxu0 %v1686
        %v1968 = vpop.f32.mrf.mxu0
        %v1969 = vadd.f32 %v1955, %v1968
        %v1970 = vpop.f32.mrf.mxu0
        %v1971 = vadd.f32 %v1957, %v1970
        %1972 = vdwg.mxu0
        %1973 = vmatpush.bf16.msra.mxu0 %v1871
        %1974 = vmatpush.bf16.msra.mxu0 %v1868
        %1975 = vmatpush.bf16.msra.mxu0 %v1865
        %1976 = vmatpush.bf16.msra.mxu0 %v1862
        %1977 = vmatpush.bf16.msra.mxu0 %v1859
        %1978 = vmatpush.bf16.msra.mxu0 %v1856
        %1979 = vmatpush.bf16.msra.mxu0 %v1853
        %1980 = vmatpush.bf16.msra.mxu0 %v1850
        %1981 = vmatmul.bf16.gmra.mxu0 %v1685
        %v1982 = vpop.f32.mrf.mxu0
        %v1983 = vadd.f32 0.0, %v1982
        %v1984 = vpop.f32.mrf.mxu0
        %v1985 = vadd.f32 0.0, %v1984
        %1986 = vdwg.mxu0
        %1987 = vmatpush.bf16.msra.mxu0 %v1895
        %1988 = vmatpush.bf16.msra.mxu0 %v1892
        %1989 = vmatpush.bf16.msra.mxu0 %v1889
        %1990 = vmatpush.bf16.msra.mxu0 %v1886
        %1991 = vmatpush.bf16.msra.mxu0 %v1883
        %1992 = vmatpush.bf16.msra.mxu0 %v1880
        %1993 = vmatpush.bf16.msra.mxu0 %v1877
        %1994 = vmatpush.bf16.msra.mxu0 %v1874
        %1995 = vmatmul.bf16.gmra.mxu0 %v1686
        %v1996 = vpop.f32.mrf.mxu0
        %v1997 = vadd.f32 %v1983, %v1996
        %v1998 = vpop.f32.mrf.mxu0
        %v1999 = vadd.f32 %v1985, %v1998
        %2000 = vdwg.mxu0
        %2001 = vmatpush.bf16.msra.mxu0 %v1872
        %2002 = vmatpush.bf16.msra.mxu0 %v1869
        %2003 = vmatpush.bf16.msra.mxu0 %v1866
        %2004 = vmatpush.bf16.msra.mxu0 %v1863
        %2005 = vmatpush.bf16.msra.mxu0 %v1860
        %2006 = vmatpush.bf16.msra.mxu0 %v1857
        %2007 = vmatpush.bf16.msra.mxu0 %v1854
        %2008 = vmatpush.bf16.msra.mxu0 %v1851
        %2009 = vmatmul.bf16.gmra.mxu0 %v1685
        %v2010 = vpop.f32.mrf.mxu0
        %v2011 = vadd.f32 0.0, %v2010
        %v2012 = vpop.f32.mrf.mxu0
        %v2013 = vadd.f32 0.0, %v2012
        %2014 = vdwg.mxu0
        %2015 = vmatpush.bf16.msra.mxu0 %v1896
        %2016 = vmatpush.bf16.msra.mxu0 %v1893
        %2017 = vmatpush.bf16.msra.mxu0 %v1890
        %2018 = vmatpush.bf16.msra.mxu0 %v1887
        %2019 = vmatpush.bf16.msra.mxu0 %v1884
        %2020 = vmatpush.bf16.msra.mxu0 %v1881
        %2021 = vmatpush.bf16.msra.mxu0 %v1878
        %2022 = vmatpush.bf16.msra.mxu0 %v1875
        %2023 = vmatmul.bf16.gmra.mxu0 %v1686
        %v2024 = vpop.f32.mrf.mxu0
        %v2025 = vadd.f32 %v2011, %v2024
        %v2026 = vpop.f32.mrf.mxu0
        %v2027 = vadd.f32 %v2013, %v2026
        %2028 = vdwg.mxu0
        %v2029 = vadd.f32 %v1614, %v1969
        %v2030 = vadd.f32 %v1615, %v1997
        %v2031 = vadd.f32 %v1616, %v2025
        %v2032 = vadd.f32 %v1617, %v1971
        %v2033 = vadd.f32 %v1618, %v1999
        %v2034 = vadd.f32 %v1619, %v2027
        %v2035 = vld [vmem:[#allocation2 + $0x8] sm:$0xff]
        %v2036 = vld [vmem:[#allocation2 + $0x10] sm:$0xff]
        %v2037 = vld [vmem:[#allocation2 + $0x18] sm:$0x11]
        %s2038 = scalar_lea.vmem [#allocation3], 1536
        %v2039 = vld [vmem:[%s2038] sm:$0xff]
        %v2040 = vld [vmem:[%s2038 + $0x8] sm:$0xf]
        %v2041 = vld [vmem:[%s2038 + $0xc] sm:$0xff]
        %v2042 = vld [vmem:[%s2038 + $0x14] sm:$0xf]
        %v2043 = vld [vmem:[%s2038 + $0x18] sm:$0xff]
        %v2044 = vld [vmem:[%s2038 + $0x20] sm:$0xf]
        %v2045 = vld [vmem:[%s2038 + $0x24] sm:$0xff]
        %v2046 = vld [vmem:[%s2038 + $0x2c] sm:$0xf]
        %v2047 = vld [vmem:[%s2038 + $0x30] sm:$0xff]
        %v2048 = vld [vmem:[%s2038 + $0x38] sm:$0xf]
        %v2049 = vld [vmem:[%s2038 + $0x3c] sm:$0xff]
        %v2050 = vld [vmem:[%s2038 + $0x44] sm:$0xf]
        %v2051 = vld [vmem:[%s2038 + $0x48] sm:$0xff]
        %v2052 = vld [vmem:[%s2038 + $0x50] sm:$0xf]
        %v2053 = vld [vmem:[%s2038 + $0x54] sm:$0xff]
        %v2054 = vld [vmem:[%s2038 + $0x5c] sm:$0xf]
        %v2055 = vld [vmem:[%s2038 + $0x60] sm:$0xff]
        %v2056 = vld [vmem:[%s2038 + $0x68] sm:$0xf]
        %v2057 = vld [vmem:[%s2038 + $0x6c] sm:$0xff]
        %v2058 = vld [vmem:[%s2038 + $0x74] sm:$0xf]
        %v2059 = vld [vmem:[%s2038 + $0x78] sm:$0xff]
        %v2060 = vld [vmem:[%s2038 + $0x80] sm:$0xf]
        %v2061 = vld [vmem:[%s2038 + $0x84] sm:$0xff]
        %v2062 = vld [vmem:[%s2038 + $0x8c] sm:$0xf]
        %v2063 = vld [vmem:[%s2038 + $0x90] sm:$0xff]
        %v2064 = vld [vmem:[%s2038 + $0x98] sm:$0xf]
        %v2065 = vld [vmem:[%s2038 + $0x9c] sm:$0xff]
        %v2066 = vld [vmem:[%s2038 + $0xa4] sm:$0xf]
        %v2067 = vld [vmem:[%s2038 + $0xa8] sm:$0xff]
        %v2068 = vld [vmem:[%s2038 + $0xb0] sm:$0xf]
        %v2069 = vld [vmem:[%s2038 + $0xb4] sm:$0xff]
        %v2070 = vld [vmem:[%s2038 + $0xbc] sm:$0xf]
        %v2071 = vld [vmem:[%s2038 + $0xc0] sm:$0xff]
        %v2072 = vld [vmem:[%s2038 + $0xc8] sm:$0xf]
        %v2073 = vld [vmem:[%s2038 + $0xcc] sm:$0xff]
        %v2074 = vld [vmem:[%s2038 + $0xd4] sm:$0xf]
        %v2075 = vld [vmem:[%s2038 + $0xd8] sm:$0xff]
        %v2076 = vld [vmem:[%s2038 + $0xe0] sm:$0xf]
        %v2077 = vld [vmem:[%s2038 + $0xe4] sm:$0xff]
        %v2078 = vld [vmem:[%s2038 + $0xec] sm:$0xf]
        %v2079 = vld [vmem:[%s2038 + $0xf0] sm:$0xff]
        %v2080 = vld [vmem:[%s2038 + $0xf8] sm:$0xf]
        %v2081 = vld [vmem:[%s2038 + $0xfc] sm:$0xff]
        %v2082 = vld [vmem:[%s2038 + $0x104] sm:$0xf]
        %v2083 = vld [vmem:[%s2038 + $0x108] sm:$0xff]
        %v2084 = vld [vmem:[%s2038 + $0x110] sm:$0xf]
        %v2085 = vld [vmem:[%s2038 + $0x114] sm:$0xff]
        %v2086 = vld [vmem:[%s2038 + $0x11c] sm:$0xf]
        %v2087 = vld [vmem:[%s2038 + $0x120] sm:$0xff]
        %v2088 = vld [vmem:[%s2038 + $0x128] sm:$0xf]
        %v2089 = vld [vmem:[%s2038 + $0x12c] sm:$0xff]
        %v2090 = vld [vmem:[%s2038 + $0x134] sm:$0xf]
        %v2091 = vld [vmem:[%s2038 + $0x138] sm:$0xff]
        %v2092 = vld [vmem:[%s2038 + $0x140] sm:$0xf]
        %v2093 = vld [vmem:[%s2038 + $0x144] sm:$0xff]
        %v2094 = vld [vmem:[%s2038 + $0x14c] sm:$0xf]
        %v2095 = vld [vmem:[%s2038 + $0x150] sm:$0xff]
        %v2096 = vld [vmem:[%s2038 + $0x158] sm:$0xf]
        %v2097 = vld [vmem:[%s2038 + $0x15c] sm:$0xff]
        %v2098 = vld [vmem:[%s2038 + $0x164] sm:$0xf]
        %v2099 = vld [vmem:[%s2038 + $0x168] sm:$0xff]
        %v2100 = vld [vmem:[%s2038 + $0x170] sm:$0xf]
        %v2101 = vld [vmem:[%s2038 + $0x174] sm:$0xff]
        %v2102 = vld [vmem:[%s2038 + $0x17c] sm:$0xf]
        %v2106 = vunpack.c.l.b16 %v2035
        %v2107 = vunpack.c.h.b16 %v2035
        %v2108 = vunpack.c.l.b16 %v2036
        %v2109 = vunpack.c.h.b16 %v2036
        %v2110 = vunpack.c.l.b16 %v2037
        %v2111 = vunpack.c.h.b16 %v2037
        %v2112 = vpack.c.b16 %v2108, %v2106
        %v2113 = vpack.c.b16 %v2109, %v2107
        %v2114 = vpack.c.b16 %v2110, %v2110
        %v2115 = vpack.c.b16 %v2111, %v2111
        %vm2116 = vsmask.f32 7424
        %v2118 = vshrl.u32 %v2112, 16
        %v2120 = vshll.u32 %v2112, 16
        %v2122 = vrot.slane %v2120, 1
        %v2123 = vor.u32 %v2118, %v2122
        %v2125 = vshll.u32 %v2114, 16
        %v2127 = vrot.slane %v2125, 1
        %v2128 = vsel %vm2116, %v2123, %v2127
        %v2130 = vshrl.u32 %v2113, 16
        %v2132 = vshll.u32 %v2113, 16
        %v2134 = vrot.slane %v2132, 1
        %v2135 = vor.u32 %v2130, %v2134
        %v2137 = vshll.u32 %v2115, 16
        %v2139 = vrot.slane %v2137, 1
        %v2140 = vsel %vm2116, %v2135, %v2139
        %v2207 = vunpack.c.l.b16 %v2039
        %v2208 = vunpack.c.h.b16 %v2039
        %v2209 = vunpack.c.l.b16 %v2040
        %v2210 = vunpack.c.l.b16 %v2041
        %v2211 = vunpack.c.h.b16 %v2041
        %v2212 = vunpack.c.l.b16 %v2042
        %v2213 = vunpack.c.l.b16 %v2043
        %v2214 = vunpack.c.h.b16 %v2043
        %v2215 = vunpack.c.l.b16 %v2044
        %v2216 = vunpack.c.l.b16 %v2045
        %v2217 = vunpack.c.h.b16 %v2045
        %v2218 = vunpack.c.l.b16 %v2046
        %v2219 = vunpack.c.l.b16 %v2047
        %v2220 = vunpack.c.h.b16 %v2047
        %v2221 = vunpack.c.l.b16 %v2048
        %v2222 = vunpack.c.l.b16 %v2049
        %v2223 = vunpack.c.h.b16 %v2049
        %v2224 = vunpack.c.l.b16 %v2050
        %v2225 = vunpack.c.l.b16 %v2051
        %v2226 = vunpack.c.h.b16 %v2051
        %v2227 = vunpack.c.l.b16 %v2052
        %v2228 = vunpack.c.l.b16 %v2053
        %v2229 = vunpack.c.h.b16 %v2053
        %v2230 = vunpack.c.l.b16 %v2054
        %v2231 = vunpack.c.l.b16 %v2055
        %v2232 = vunpack.c.h.b16 %v2055
        %v2233 = vunpack.c.l.b16 %v2056
        %v2234 = vunpack.c.l.b16 %v2057
        %v2235 = vunpack.c.h.b16 %v2057
        %v2236 = vunpack.c.l.b16 %v2058
        %v2237 = vunpack.c.l.b16 %v2059
        %v2238 = vunpack.c.h.b16 %v2059
        %v2239 = vunpack.c.l.b16 %v2060
        %v2240 = vunpack.c.l.b16 %v2061
        %v2241 = vunpack.c.h.b16 %v2061
        %v2242 = vunpack.c.l.b16 %v2062
        %v2243 = vunpack.c.l.b16 %v2063
        %v2244 = vunpack.c.h.b16 %v2063
        %v2245 = vunpack.c.l.b16 %v2064
        %v2246 = vunpack.c.l.b16 %v2065
        %v2247 = vunpack.c.h.b16 %v2065
        %v2248 = vunpack.c.l.b16 %v2066
        %v2249 = vunpack.c.l.b16 %v2067
        %v2250 = vunpack.c.h.b16 %v2067
        %v2251 = vunpack.c.l.b16 %v2068
        %v2252 = vunpack.c.l.b16 %v2069
        %v2253 = vunpack.c.h.b16 %v2069
        %v2254 = vunpack.c.l.b16 %v2070
        %v2255 = vunpack.c.l.b16 %v2071
        %v2256 = vunpack.c.h.b16 %v2071
        %v2257 = vunpack.c.l.b16 %v2072
        %v2258 = vunpack.c.l.b16 %v2073
        %v2259 = vunpack.c.h.b16 %v2073
        %v2260 = vunpack.c.l.b16 %v2074
        %v2261 = vunpack.c.l.b16 %v2075
        %v2262 = vunpack.c.h.b16 %v2075
        %v2263 = vunpack.c.l.b16 %v2076
        %v2264 = vunpack.c.l.b16 %v2077
        %v2265 = vunpack.c.h.b16 %v2077
        %v2266 = vunpack.c.l.b16 %v2078
        %v2267 = vunpack.c.l.b16 %v2079
        %v2268 = vunpack.c.h.b16 %v2079
        %v2269 = vunpack.c.l.b16 %v2080
        %v2270 = vunpack.c.l.b16 %v2081
        %v2271 = vunpack.c.h.b16 %v2081
        %v2272 = vunpack.c.l.b16 %v2082
        %v2273 = vunpack.c.l.b16 %v2083
        %v2274 = vunpack.c.h.b16 %v2083
        %v2275 = vunpack.c.l.b16 %v2084
        %v2276 = vunpack.c.l.b16 %v2085
        %v2277 = vunpack.c.h.b16 %v2085
        %v2278 = vunpack.c.l.b16 %v2086
        %v2279 = vunpack.c.l.b16 %v2087
        %v2280 = vunpack.c.h.b16 %v2087
        %v2281 = vunpack.c.l.b16 %v2088
        %v2282 = vunpack.c.l.b16 %v2089
        %v2283 = vunpack.c.h.b16 %v2089
        %v2284 = vunpack.c.l.b16 %v2090
        %v2285 = vunpack.c.l.b16 %v2091
        %v2286 = vunpack.c.h.b16 %v2091
        %v2287 = vunpack.c.l.b16 %v2092
        %v2288 = vunpack.c.l.b16 %v2093
        %v2289 = vunpack.c.h.b16 %v2093
        %v2290 = vunpack.c.l.b16 %v2094
        %v2291 = vunpack.c.l.b16 %v2095
        %v2292 = vunpack.c.h.b16 %v2095
        %v2293 = vunpack.c.l.b16 %v2096
        %v2294 = vunpack.c.l.b16 %v2097
        %v2295 = vunpack.c.h.b16 %v2097
        %v2296 = vunpack.c.l.b16 %v2098
        %v2297 = vunpack.c.l.b16 %v2099
        %v2298 = vunpack.c.h.b16 %v2099
        %v2299 = vunpack.c.l.b16 %v2100
        %v2300 = vunpack.c.l.b16 %v2101
        %v2301 = vunpack.c.h.b16 %v2101
        %v2302 = vunpack.c.l.b16 %v2102
        %v2303 = vpack.c.b16 %v2210, %v2207
        %v2304 = vpack.c.b16 %v2211, %v2208
        %v2305 = vpack.c.b16 %v2212, %v2209
        %v2306 = vpack.c.b16 %v2216, %v2213
        %v2307 = vpack.c.b16 %v2217, %v2214
        %v2308 = vpack.c.b16 %v2218, %v2215
        %v2309 = vpack.c.b16 %v2222, %v2219
        %v2310 = vpack.c.b16 %v2223, %v2220
        %v2311 = vpack.c.b16 %v2224, %v2221
        %v2312 = vpack.c.b16 %v2228, %v2225
        %v2313 = vpack.c.b16 %v2229, %v2226
        %v2314 = vpack.c.b16 %v2230, %v2227
        %v2315 = vpack.c.b16 %v2234, %v2231
        %v2316 = vpack.c.b16 %v2235, %v2232
        %v2317 = vpack.c.b16 %v2236, %v2233
        %v2318 = vpack.c.b16 %v2240, %v2237
        %v2319 = vpack.c.b16 %v2241, %v2238
        %v2320 = vpack.c.b16 %v2242, %v2239
        %v2321 = vpack.c.b16 %v2246, %v2243
        %v2322 = vpack.c.b16 %v2247, %v2244
        %v2323 = vpack.c.b16 %v2248, %v2245
        %v2324 = vpack.c.b16 %v2252, %v2249
        %v2325 = vpack.c.b16 %v2253, %v2250
        %v2326 = vpack.c.b16 %v2254, %v2251
        %v2327 = vpack.c.b16 %v2258, %v2255
        %v2328 = vpack.c.b16 %v2259, %v2256
        %v2329 = vpack.c.b16 %v2260, %v2257
        %v2330 = vpack.c.b16 %v2264, %v2261
        %v2331 = vpack.c.b16 %v2265, %v2262
        %v2332 = vpack.c.b16 %v2266, %v2263
        %v2333 = vpack.c.b16 %v2270, %v2267
        %v2334 = vpack.c.b16 %v2271, %v2268
        %v2335 = vpack.c.b16 %v2272, %v2269
        %v2336 = vpack.c.b16 %v2276, %v2273
        %v2337 = vpack.c.b16 %v2277, %v2274
        %v2338 = vpack.c.b16 %v2278, %v2275
        %v2339 = vpack.c.b16 %v2282, %v2279
        %v2340 = vpack.c.b16 %v2283, %v2280
        %v2341 = vpack.c.b16 %v2284, %v2281
        %v2342 = vpack.c.b16 %v2288, %v2285
        %v2343 = vpack.c.b16 %v2289, %v2286
        %v2344 = vpack.c.b16 %v2290, %v2287
        %v2345 = vpack.c.b16 %v2294, %v2291
        %v2346 = vpack.c.b16 %v2295, %v2292
        %v2347 = vpack.c.b16 %v2296, %v2293
        %v2348 = vpack.c.b16 %v2300, %v2297
        %v2349 = vpack.c.b16 %v2301, %v2298
        %v2350 = vpack.c.b16 %v2302, %v2299
        %2399 = vmatpush.bf16.msra.mxu0 %v2324
        %2400 = vmatpush.bf16.msra.mxu0 %v2321
        %2401 = vmatpush.bf16.msra.mxu0 %v2318
        %2402 = vmatpush.bf16.msra.mxu0 %v2315
        %2403 = vmatpush.bf16.msra.mxu0 %v2312
        %2404 = vmatpush.bf16.msra.mxu0 %v2309
        %2405 = vmatpush.bf16.msra.mxu0 %v2306
        %2406 = vmatpush.bf16.msra.mxu0 %v2303
        %2407 = vmatmul.bf16.gmra.mxu0 %v2128
        %v2408 = vpop.f32.mrf.mxu0
        %v2409 = vadd.f32 0.0, %v2408
        %v2410 = vpop.f32.mrf.mxu0
        %v2411 = vadd.f32 0.0, %v2410
        %2412 = vdwg.mxu0
        %2413 = vmatpush.bf16.msra.mxu0 %v2348
        %2414 = vmatpush.bf16.msra.mxu0 %v2345
        %2415 = vmatpush.bf16.msra.mxu0 %v2342
        %2416 = vmatpush.bf16.msra.mxu0 %v2339
        %2417 = vmatpush.bf16.msra.mxu0 %v2336
        %2418 = vmatpush.bf16.msra.mxu0 %v2333
        %2419 = vmatpush.bf16.msra.mxu0 %v2330
        %2420 = vmatpush.bf16.msra.mxu0 %v2327
        %2421 = vmatmul.bf16.gmra.mxu0 %v2140
        %v2422 = vpop.f32.mrf.mxu0
        %v2423 = vadd.f32 %v2409, %v2422
        %v2424 = vpop.f32.mrf.mxu0
        %v2425 = vadd.f32 %v2411, %v2424
        %2426 = vdwg.mxu0
        %2427 = vmatpush.bf16.msra.mxu0 %v2325
        %2428 = vmatpush.bf16.msra.mxu0 %v2322
        %2429 = vmatpush.bf16.msra.mxu0 %v2319
        %2430 = vmatpush.bf16.msra.mxu0 %v2316
        %2431 = vmatpush.bf16.msra.mxu0 %v2313
        %2432 = vmatpush.bf16.msra.mxu0 %v2310
        %2433 = vmatpush.bf16.msra.mxu0 %v2307
        %2434 = vmatpush.bf16.msra.mxu0 %v2304
        %2435 = vmatmul.bf16.gmra.mxu0 %v2128
        %v2436 = vpop.f32.mrf.mxu0
        %v2437 = vadd.f32 0.0, %v2436
        %v2438 = vpop.f32.mrf.mxu0
        %v2439 = vadd.f32 0.0, %v2438
        %2440 = vdwg.mxu0
        %2441 = vmatpush.bf16.msra.mxu0 %v2349
        %2442 = vmatpush.bf16.msra.mxu0 %v2346
        %2443 = vmatpush.bf16.msra.mxu0 %v2343
        %2444 = vmatpush.bf16.msra.mxu0 %v2340
        %2445 = vmatpush.bf16.msra.mxu0 %v2337
        %2446 = vmatpush.bf16.msra.mxu0 %v2334
        %2447 = vmatpush.bf16.msra.mxu0 %v2331
        %2448 = vmatpush.bf16.msra.mxu0 %v2328
        %2449 = vmatmul.bf16.gmra.mxu0 %v2140
        %v2450 = vpop.f32.mrf.mxu0
        %v2451 = vadd.f32 %v2437, %v2450
        %v2452 = vpop.f32.mrf.mxu0
        %v2453 = vadd.f32 %v2439, %v2452
        %2454 = vdwg.mxu0
        %2455 = vmatpush.bf16.msra.mxu0 %v2326
        %2456 = vmatpush.bf16.msra.mxu0 %v2323
        %2457 = vmatpush.bf16.msra.mxu0 %v2320
        %2458 = vmatpush.bf16.msra.mxu0 %v2317
        %2459 = vmatpush.bf16.msra.mxu0 %v2314
        %2460 = vmatpush.bf16.msra.mxu0 %v2311
        %2461 = vmatpush.bf16.msra.mxu0 %v2308
        %2462 = vmatpush.bf16.msra.mxu0 %v2305
        %2463 = vmatmul.bf16.gmra.mxu0 %v2128
        %v2464 = vpop.f32.mrf.mxu0
        %v2465 = vadd.f32 0.0, %v2464
        %v2466 = vpop.f32.mrf.mxu0
        %v2467 = vadd.f32 0.0, %v2466
        %2468 = vdwg.mxu0
        %2469 = vmatpush.bf16.msra.mxu0 %v2350
        %2470 = vmatpush.bf16.msra.mxu0 %v2347
        %2471 = vmatpush.bf16.msra.mxu0 %v2344
        %2472 = vmatpush.bf16.msra.mxu0 %v2341
        %2473 = vmatpush.bf16.msra.mxu0 %v2338
        %2474 = vmatpush.bf16.msra.mxu0 %v2335
        %2475 = vmatpush.bf16.msra.mxu0 %v2332
        %2476 = vmatpush.bf16.msra.mxu0 %v2329
        %2477 = vmatmul.bf16.gmra.mxu0 %v2140
        %v2478 = vpop.f32.mrf.mxu0
        %v2479 = vadd.f32 %v2465, %v2478
        %v2480 = vpop.f32.mrf.mxu0
        %v2481 = vadd.f32 %v2467, %v2480
        %2482 = vdwg.mxu0
        %v2483 = vadd.f32 %v2029, %v2423
        %v2484 = vadd.f32 %v2030, %v2451
        %v2485 = vadd.f32 %v2031, %v2479
        %v2486 = vadd.f32 %v2032, %v2425
        %v2487 = vadd.f32 %v2033, %v2453
        %v2488 = vadd.f32 %v2034, %v2481
        %v2489 = vld [vmem:[#allocation2 + $0x8] sm:$0xee]
        %s2490 = scalar_lea.vmem [#allocation3], 1920
        %v2491 = vld [vmem:[%s2490] sm:$0xff]
        %v2492 = vld [vmem:[%s2490 + $0x8] sm:$0xf]
        %v2493 = vld [vmem:[%s2490 + $0xc] sm:$0xff]
        %v2494 = vld [vmem:[%s2490 + $0x14] sm:$0xf]
        %v2495 = vld [vmem:[%s2490 + $0x18] sm:$0xff]
        %v2496 = vld [vmem:[%s2490 + $0x20] sm:$0xf]
        %v2497 = vld [vmem:[%s2490 + $0x24] sm:$0xff]
        %v2498 = vld [vmem:[%s2490 + $0x2c] sm:$0xf]
        %v2499 = vld [vmem:[%s2490 + $0x30] sm:$0xff]
        %v2500 = vld [vmem:[%s2490 + $0x38] sm:$0xf]
        %v2501 = vld [vmem:[%s2490 + $0x3c] sm:$0xff]
        %v2502 = vld [vmem:[%s2490 + $0x44] sm:$0xf]
        %v2503 = vld [vmem:[%s2490 + $0x48] sm:$0xff]
        %v2504 = vld [vmem:[%s2490 + $0x50] sm:$0xf]
        %v2505 = vld [vmem:[%s2490 + $0x54] sm:$0xff]
        %v2506 = vld [vmem:[%s2490 + $0x5c] sm:$0xf]
        %v2507 = vld [vmem:[%s2490 + $0x60] sm:$0xff]
        %v2508 = vld [vmem:[%s2490 + $0x68] sm:$0xf]
        %v2509 = vld [vmem:[%s2490 + $0x6c] sm:$0xff]
        %v2510 = vld [vmem:[%s2490 + $0x74] sm:$0xf]
        %v2511 = vld [vmem:[%s2490 + $0x78] sm:$0xff]
        %v2512 = vld [vmem:[%s2490 + $0x80] sm:$0xf]
        %v2513 = vld [vmem:[%s2490 + $0x84] sm:$0xff]
        %v2514 = vld [vmem:[%s2490 + $0x8c] sm:$0xf]
        %v2515 = vld [vmem:[%s2490 + $0x90] sm:$0xff]
        %v2516 = vld [vmem:[%s2490 + $0x98] sm:$0xf]
        %v2517 = vld [vmem:[%s2490 + $0x9c] sm:$0xff]
        %v2518 = vld [vmem:[%s2490 + $0xa4] sm:$0xf]
        %v2519 = vld [vmem:[%s2490 + $0xa8] sm:$0xff]
        %v2520 = vld [vmem:[%s2490 + $0xb0] sm:$0xf]
        %v2521 = vld [vmem:[%s2490 + $0xb4] sm:$0xff]
        %v2522 = vld [vmem:[%s2490 + $0xbc] sm:$0xf]
        %v2523 = vld [vmem:[%s2490 + $0xc0] sm:$0xff]
        %v2524 = vld [vmem:[%s2490 + $0xc8] sm:$0xf]
        %v2525 = vld [vmem:[%s2490 + $0xcc] sm:$0xff]
        %v2526 = vld [vmem:[%s2490 + $0xd4] sm:$0xf]
        %v2527 = vld [vmem:[%s2490 + $0xd8] sm:$0xff]
        %v2528 = vld [vmem:[%s2490 + $0xe0] sm:$0xf]
        %v2529 = vld [vmem:[%s2490 + $0xe4] sm:$0xff]
        %v2530 = vld [vmem:[%s2490 + $0xec] sm:$0xf]
        %v2531 = vld [vmem:[%s2490 + $0xf0] sm:$0xff]
        %v2532 = vld [vmem:[%s2490 + $0xf8] sm:$0xf]
        %v2533 = vld [vmem:[%s2490 + $0xfc] sm:$0xff]
        %v2534 = vld [vmem:[%s2490 + $0x104] sm:$0xf]
        %v2535 = vld [vmem:[%s2490 + $0x108] sm:$0xff]
        %v2536 = vld [vmem:[%s2490 + $0x110] sm:$0xf]
        %v2537 = vld [vmem:[%s2490 + $0x114] sm:$0xff]
        %v2538 = vld [vmem:[%s2490 + $0x11c] sm:$0xf]
        %v2539 = vld [vmem:[%s2490 + $0x120] sm:$0xff]
        %v2540 = vld [vmem:[%s2490 + $0x128] sm:$0xf]
        %v2541 = vld [vmem:[%s2490 + $0x12c] sm:$0xff]
        %v2542 = vld [vmem:[%s2490 + $0x134] sm:$0xf]
        %v2543 = vld [vmem:[%s2490 + $0x138] sm:$0xff]
        %v2544 = vld [vmem:[%s2490 + $0x140] sm:$0xf]
        %v2545 = vld [vmem:[%s2490 + $0x144] sm:$0xff]
        %v2546 = vld [vmem:[%s2490 + $0x14c] sm:$0xf]
        %v2547 = vld [vmem:[%s2490 + $0x150] sm:$0xff]
        %v2548 = vld [vmem:[%s2490 + $0x158] sm:$0xf]
        %v2549 = vld [vmem:[%s2490 + $0x15c] sm:$0xff]
        %v2550 = vld [vmem:[%s2490 + $0x164] sm:$0xf]
        %v2551 = vld [vmem:[%s2490 + $0x168] sm:$0xff]
        %v2552 = vld [vmem:[%s2490 + $0x170] sm:$0xf]
        %v2553 = vld [vmem:[%s2490 + $0x174] sm:$0xff]
        %v2554 = vld [vmem:[%s2490 + $0x17c] sm:$0xf]
        %v2556 = vunpack.c.l.b16 %v2489
        %v2557 = vunpack.c.h.b16 %v2489
        %v2558 = vpack.c.b16 %v2108, %v2556
        %v2559 = vpack.c.b16 %v2109, %v2557
        %vm2560 = vcmask 1046528
        %v2561 = vrot.slane %v2558, 1
        %v2562 = vrot.slane %v2114, 1
        %v2563 = vsel %vm2560, %v2561, %v2562
        %v2564 = vrot.slane %v2559, 1
        %v2565 = vrot.slane %v2115, 1
        %v2566 = vsel %vm2560, %v2564, %v2565
        %v2633 = vunpack.c.l.b16 %v2491
        %v2634 = vunpack.c.h.b16 %v2491
        %v2635 = vunpack.c.l.b16 %v2492
        %v2636 = vunpack.c.l.b16 %v2493
        %v2637 = vunpack.c.h.b16 %v2493
        %v2638 = vunpack.c.l.b16 %v2494
        %v2639 = vunpack.c.l.b16 %v2495
        %v2640 = vunpack.c.h.b16 %v2495
        %v2641 = vunpack.c.l.b16 %v2496
        %v2642 = vunpack.c.l.b16 %v2497
        %v2643 = vunpack.c.h.b16 %v2497
        %v2644 = vunpack.c.l.b16 %v2498
        %v2645 = vunpack.c.l.b16 %v2499
        %v2646 = vunpack.c.h.b16 %v2499
        %v2647 = vunpack.c.l.b16 %v2500
        %v2648 = vunpack.c.l.b16 %v2501
        %v2649 = vunpack.c.h.b16 %v2501
        %v2650 = vunpack.c.l.b16 %v2502
        %v2651 = vunpack.c.l.b16 %v2503
        %v2652 = vunpack.c.h.b16 %v2503
        %v2653 = vunpack.c.l.b16 %v2504
        %v2654 = vunpack.c.l.b16 %v2505
        %v2655 = vunpack.c.h.b16 %v2505
        %v2656 = vunpack.c.l.b16 %v2506
        %v2657 = vunpack.c.l.b16 %v2507
        %v2658 = vunpack.c.h.b16 %v2507
        %v2659 = vunpack.c.l.b16 %v2508
        %v2660 = vunpack.c.l.b16 %v2509
        %v2661 = vunpack.c.h.b16 %v2509
        %v2662 = vunpack.c.l.b16 %v2510
        %v2663 = vunpack.c.l.b16 %v2511
        %v2664 = vunpack.c.h.b16 %v2511
        %v2665 = vunpack.c.l.b16 %v2512
        %v2666 = vunpack.c.l.b16 %v2513
        %v2667 = vunpack.c.h.b16 %v2513
        %v2668 = vunpack.c.l.b16 %v2514
        %v2669 = vunpack.c.l.b16 %v2515
        %v2670 = vunpack.c.h.b16 %v2515
        %v2671 = vunpack.c.l.b16 %v2516
        %v2672 = vunpack.c.l.b16 %v2517
        %v2673 = vunpack.c.h.b16 %v2517
        %v2674 = vunpack.c.l.b16 %v2518
        %v2675 = vunpack.c.l.b16 %v2519
        %v2676 = vunpack.c.h.b16 %v2519
        %v2677 = vunpack.c.l.b16 %v2520
        %v2678 = vunpack.c.l.b16 %v2521
        %v2679 = vunpack.c.h.b16 %v2521
        %v2680 = vunpack.c.l.b16 %v2522
        %v2681 = vunpack.c.l.b16 %v2523
        %v2682 = vunpack.c.h.b16 %v2523
        %v2683 = vunpack.c.l.b16 %v2524
        %v2684 = vunpack.c.l.b16 %v2525
        %v2685 = vunpack.c.h.b16 %v2525
        %v2686 = vunpack.c.l.b16 %v2526
        %v2687 = vunpack.c.l.b16 %v2527
        %v2688 = vunpack.c.h.b16 %v2527
        %v2689 = vunpack.c.l.b16 %v2528
        %v2690 = vunpack.c.l.b16 %v2529
        %v2691 = vunpack.c.h.b16 %v2529
        %v2692 = vunpack.c.l.b16 %v2530
        %v2693 = vunpack.c.l.b16 %v2531
        %v2694 = vunpack.c.h.b16 %v2531
        %v2695 = vunpack.c.l.b16 %v2532
        %v2696 = vunpack.c.l.b16 %v2533
        %v2697 = vunpack.c.h.b16 %v2533
        %v2698 = vunpack.c.l.b16 %v2534
        %v2699 = vunpack.c.l.b16 %v2535
        %v2700 = vunpack.c.h.b16 %v2535
        %v2701 = vunpack.c.l.b16 %v2536
        %v2702 = vunpack.c.l.b16 %v2537
        %v2703 = vunpack.c.h.b16 %v2537
        %v2704 = vunpack.c.l.b16 %v2538
        %v2705 = vunpack.c.l.b16 %v2539
        %v2706 = vunpack.c.h.b16 %v2539
        %v2707 = vunpack.c.l.b16 %v2540
        %v2708 = vunpack.c.l.b16 %v2541
        %v2709 = vunpack.c.h.b16 %v2541
        %v2710 = vunpack.c.l.b16 %v2542
        %v2711 = vunpack.c.l.b16 %v2543
        %v2712 = vunpack.c.h.b16 %v2543
        %v2713 = vunpack.c.l.b16 %v2544
        %v2714 = vunpack.c.l.b16 %v2545
        %v2715 = vunpack.c.h.b16 %v2545
        %v2716 = vunpack.c.l.b16 %v2546
        %v2717 = vunpack.c.l.b16 %v2547
        %v2718 = vunpack.c.h.b16 %v2547
        %v2719 = vunpack.c.l.b16 %v2548
        %v2720 = vunpack.c.l.b16 %v2549
        %v2721 = vunpack.c.h.b16 %v2549
        %v2722 = vunpack.c.l.b16 %v2550
        %v2723 = vunpack.c.l.b16 %v2551
        %v2724 = vunpack.c.h.b16 %v2551
        %v2725 = vunpack.c.l.b16 %v2552
        %v2726 = vunpack.c.l.b16 %v2553
        %v2727 = vunpack.c.h.b16 %v2553
        %v2728 = vunpack.c.l.b16 %v2554
        %v2729 = vpack.c.b16 %v2636, %v2633
        %v2730 = vpack.c.b16 %v2637, %v2634
        %v2731 = vpack.c.b16 %v2638, %v2635
        %v2732 = vpack.c.b16 %v2642, %v2639
        %v2733 = vpack.c.b16 %v2643, %v2640
        %v2734 = vpack.c.b16 %v2644, %v2641
        %v2735 = vpack.c.b16 %v2648, %v2645
        %v2736 = vpack.c.b16 %v2649, %v2646
        %v2737 = vpack.c.b16 %v2650, %v2647
        %v2738 = vpack.c.b16 %v2654, %v2651
        %v2739 = vpack.c.b16 %v2655, %v2652
        %v2740 = vpack.c.b16 %v2656, %v2653
        %v2741 = vpack.c.b16 %v2660, %v2657
        %v2742 = vpack.c.b16 %v2661, %v2658
        %v2743 = vpack.c.b16 %v2662, %v2659
        %v2744 = vpack.c.b16 %v2666, %v2663
        %v2745 = vpack.c.b16 %v2667, %v2664
        %v2746 = vpack.c.b16 %v2668, %v2665
        %v2747 = vpack.c.b16 %v2672, %v2669
        %v2748 = vpack.c.b16 %v2673, %v2670
        %v2749 = vpack.c.b16 %v2674, %v2671
        %v2750 = vpack.c.b16 %v2678, %v2675
        %v2751 = vpack.c.b16 %v2679, %v2676
        %v2752 = vpack.c.b16 %v2680, %v2677
        %v2753 = vpack.c.b16 %v2684, %v2681
        %v2754 = vpack.c.b16 %v2685, %v2682
        %v2755 = vpack.c.b16 %v2686, %v2683
        %v2756 = vpack.c.b16 %v2690, %v2687
        %v2757 = vpack.c.b16 %v2691, %v2688
        %v2758 = vpack.c.b16 %v2692, %v2689
        %v2759 = vpack.c.b16 %v2696, %v2693
        %v2760 = vpack.c.b16 %v2697, %v2694
        %v2761 = vpack.c.b16 %v2698, %v2695
        %v2762 = vpack.c.b16 %v2702, %v2699
        %v2763 = vpack.c.b16 %v2703, %v2700
        %v2764 = vpack.c.b16 %v2704, %v2701
        %v2765 = vpack.c.b16 %v2708, %v2705
        %v2766 = vpack.c.b16 %v2709, %v2706
        %v2767 = vpack.c.b16 %v2710, %v2707
        %v2768 = vpack.c.b16 %v2714, %v2711
        %v2769 = vpack.c.b16 %v2715, %v2712
        %v2770 = vpack.c.b16 %v2716, %v2713
        %v2771 = vpack.c.b16 %v2720, %v2717
        %v2772 = vpack.c.b16 %v2721, %v2718
        %v2773 = vpack.c.b16 %v2722, %v2719
        %v2774 = vpack.c.b16 %v2726, %v2723
        %v2775 = vpack.c.b16 %v2727, %v2724
        %v2776 = vpack.c.b16 %v2728, %v2725
        %2825 = vmatpush.bf16.msra.mxu0 %v2750
        %2826 = vmatpush.bf16.msra.mxu0 %v2747
        %2827 = vmatpush.bf16.msra.mxu0 %v2744
        %2828 = vmatpush.bf16.msra.mxu0 %v2741
        %2829 = vmatpush.bf16.msra.mxu0 %v2738
        %2830 = vmatpush.bf16.msra.mxu0 %v2735
        %2831 = vmatpush.bf16.msra.mxu0 %v2732
        %2832 = vmatpush.bf16.msra.mxu0 %v2729
        %2833 = vmatmul.bf16.gmra.mxu0 %v2563
        %v2834 = vpop.f32.mrf.mxu0
        %v2835 = vadd.f32 0.0, %v2834
        %v2836 = vpop.f32.mrf.mxu0
        %v2837 = vadd.f32 0.0, %v2836
        %2838 = vdwg.mxu0
        %2839 = vmatpush.bf16.msra.mxu0 %v2774
        %2840 = vmatpush.bf16.msra.mxu0 %v2771
        %2841 = vmatpush.bf16.msra.mxu0 %v2768
        %2842 = vmatpush.bf16.msra.mxu0 %v2765
        %2843 = vmatpush.bf16.msra.mxu0 %v2762
        %2844 = vmatpush.bf16.msra.mxu0 %v2759
        %2845 = vmatpush.bf16.msra.mxu0 %v2756
        %2846 = vmatpush.bf16.msra.mxu0 %v2753
        %2847 = vmatmul.bf16.gmra.mxu0 %v2566
        %v2848 = vpop.f32.mrf.mxu0
        %v2849 = vadd.f32 %v2835, %v2848
        %v2850 = vpop.f32.mrf.mxu0
        %v2851 = vadd.f32 %v2837, %v2850
        %2852 = vdwg.mxu0
        %2853 = vmatpush.bf16.msra.mxu0 %v2751
        %2854 = vmatpush.bf16.msra.mxu0 %v2748
        %2855 = vmatpush.bf16.msra.mxu0 %v2745
        %2856 = vmatpush.bf16.msra.mxu0 %v2742
        %2857 = vmatpush.bf16.msra.mxu0 %v2739
        %2858 = vmatpush.bf16.msra.mxu0 %v2736
        %2859 = vmatpush.bf16.msra.mxu0 %v2733
        %2860 = vmatpush.bf16.msra.mxu0 %v2730
        %2861 = vmatmul.bf16.gmra.mxu0 %v2563
        %v2862 = vpop.f32.mrf.mxu0
        %v2863 = vadd.f32 0.0, %v2862
        %v2864 = vpop.f32.mrf.mxu0
        %v2865 = vadd.f32 0.0, %v2864
        %2866 = vdwg.mxu0
        %2867 = vmatpush.bf16.msra.mxu0 %v2775
        %2868 = vmatpush.bf16.msra.mxu0 %v2772
        %2869 = vmatpush.bf16.msra.mxu0 %v2769
        %2870 = vmatpush.bf16.msra.mxu0 %v2766
        %2871 = vmatpush.bf16.msra.mxu0 %v2763
        %2872 = vmatpush.bf16.msra.mxu0 %v2760
        %2873 = vmatpush.bf16.msra.mxu0 %v2757
        %2874 = vmatpush.bf16.msra.mxu0 %v2754
        %2875 = vmatmul.bf16.gmra.mxu0 %v2566
        %v2876 = vpop.f32.mrf.mxu0
        %v2877 = vadd.f32 %v2863, %v2876
        %v2878 = vpop.f32.mrf.mxu0
        %v2879 = vadd.f32 %v2865, %v2878
        %2880 = vdwg.mxu0
        %2881 = vmatpush.bf16.msra.mxu0 %v2752
        %2882 = vmatpush.bf16.msra.mxu0 %v2749
        %2883 = vmatpush.bf16.msra.mxu0 %v2746
        %2884 = vmatpush.bf16.msra.mxu0 %v2743
        %2885 = vmatpush.bf16.msra.mxu0 %v2740
        %2886 = vmatpush.bf16.msra.mxu0 %v2737
        %2887 = vmatpush.bf16.msra.mxu0 %v2734
        %2888 = vmatpush.bf16.msra.mxu0 %v2731
        %2889 = vmatmul.bf16.gmra.mxu0 %v2563
        %v2890 = vpop.f32.mrf.mxu0
        %v2891 = vadd.f32 0.0, %v2890
        %v2892 = vpop.f32.mrf.mxu0
        %v2893 = vadd.f32 0.0, %v2892
        %2894 = vdwg.mxu0
        %2895 = vmatpush.bf16.msra.mxu0 %v2776
        %2896 = vmatpush.bf16.msra.mxu0 %v2773
        %2897 = vmatpush.bf16.msra.mxu0 %v2770
        %2898 = vmatpush.bf16.msra.mxu0 %v2767
        %2899 = vmatpush.bf16.msra.mxu0 %v2764
        %2900 = vmatpush.bf16.msra.mxu0 %v2761
        %2901 = vmatpush.bf16.msra.mxu0 %v2758
        %2902 = vmatpush.bf16.msra.mxu0 %v2755
        %2903 = vmatmul.bf16.gmra.mxu0 %v2566
        %v2904 = vpop.f32.mrf.mxu0
        %v2905 = vadd.f32 %v2891, %v2904
        %v2906 = vpop.f32.mrf.mxu0
        %v2907 = vadd.f32 %v2893, %v2906
        %2908 = vdwg.mxu0
        %v2909 = vadd.f32 %v2483, %v2849
        %v2910 = vadd.f32 %v2484, %v2877
        %v2911 = vadd.f32 %v2485, %v2905
        %v2912 = vadd.f32 %v2486, %v2851
        %v2913 = vadd.f32 %v2487, %v2879
        %v2914 = vadd.f32 %v2488, %v2907
        %v2915 = vld [vmem:[#allocation2 + $0x18] sm:$0x33]
        %s2916 = scalar_lea.vmem [#allocation3], 2304
        %v2917 = vld [vmem:[%s2916] sm:$0xff]
        %v2918 = vld [vmem:[%s2916 + $0x8] sm:$0xf]
        %v2919 = vld [vmem:[%s2916 + $0xc] sm:$0xff]
        %v2920 = vld [vmem:[%s2916 + $0x14] sm:$0xf]
        %v2921 = vld [vmem:[%s2916 + $0x18] sm:$0xff]
        %v2922 = vld [vmem:[%s2916 + $0x20] sm:$0xf]
        %v2923 = vld [vmem:[%s2916 + $0x24] sm:$0xff]
        %v2924 = vld [vmem:[%s2916 + $0x2c] sm:$0xf]
        %v2925 = vld [vmem:[%s2916 + $0x30] sm:$0xff]
        %v2926 = vld [vmem:[%s2916 + $0x38] sm:$0xf]
        %v2927 = vld [vmem:[%s2916 + $0x3c] sm:$0xff]
        %v2928 = vld [vmem:[%s2916 + $0x44] sm:$0xf]
        %v2929 = vld [vmem:[%s2916 + $0x48] sm:$0xff]
        %v2930 = vld [vmem:[%s2916 + $0x50] sm:$0xf]
        %v2931 = vld [vmem:[%s2916 + $0x54] sm:$0xff]
        %v2932 = vld [vmem:[%s2916 + $0x5c] sm:$0xf]
        %v2933 = vld [vmem:[%s2916 + $0x60] sm:$0xff]
        %v2934 = vld [vmem:[%s2916 + $0x68] sm:$0xf]
        %v2935 = vld [vmem:[%s2916 + $0x6c] sm:$0xff]
        %v2936 = vld [vmem:[%s2916 + $0x74] sm:$0xf]
        %v2937 = vld [vmem:[%s2916 + $0x78] sm:$0xff]
        %v2938 = vld [vmem:[%s2916 + $0x80] sm:$0xf]
        %v2939 = vld [vmem:[%s2916 + $0x84] sm:$0xff]
        %v2940 = vld [vmem:[%s2916 + $0x8c] sm:$0xf]
        %v2941 = vld [vmem:[%s2916 + $0x90] sm:$0xff]
        %v2942 = vld [vmem:[%s2916 + $0x98] sm:$0xf]
        %v2943 = vld [vmem:[%s2916 + $0x9c] sm:$0xff]
        %v2944 = vld [vmem:[%s2916 + $0xa4] sm:$0xf]
        %v2945 = vld [vmem:[%s2916 + $0xa8] sm:$0xff]
        %v2946 = vld [vmem:[%s2916 + $0xb0] sm:$0xf]
        %v2947 = vld [vmem:[%s2916 + $0xb4] sm:$0xff]
        %v2948 = vld [vmem:[%s2916 + $0xbc] sm:$0xf]
        %v2949 = vld [vmem:[%s2916 + $0xc0] sm:$0xff]
        %v2950 = vld [vmem:[%s2916 + $0xc8] sm:$0xf]
        %v2951 = vld [vmem:[%s2916 + $0xcc] sm:$0xff]
        %v2952 = vld [vmem:[%s2916 + $0xd4] sm:$0xf]
        %v2953 = vld [vmem:[%s2916 + $0xd8] sm:$0xff]
        %v2954 = vld [vmem:[%s2916 + $0xe0] sm:$0xf]
        %v2955 = vld [vmem:[%s2916 + $0xe4] sm:$0xff]
        %v2956 = vld [vmem:[%s2916 + $0xec] sm:$0xf]
        %v2957 = vld [vmem:[%s2916 + $0xf0] sm:$0xff]
        %v2958 = vld [vmem:[%s2916 + $0xf8] sm:$0xf]
        %v2959 = vld [vmem:[%s2916 + $0xfc] sm:$0xff]
        %v2960 = vld [vmem:[%s2916 + $0x104] sm:$0xf]
        %v2961 = vld [vmem:[%s2916 + $0x108] sm:$0xff]
        %v2962 = vld [vmem:[%s2916 + $0x110] sm:$0xf]
        %v2963 = vld [vmem:[%s2916 + $0x114] sm:$0xff]
        %v2964 = vld [vmem:[%s2916 + $0x11c] sm:$0xf]
        %v2965 = vld [vmem:[%s2916 + $0x120] sm:$0xff]
        %v2966 = vld [vmem:[%s2916 + $0x128] sm:$0xf]
        %v2967 = vld [vmem:[%s2916 + $0x12c] sm:$0xff]
        %v2968 = vld [vmem:[%s2916 + $0x134] sm:$0xf]
        %v2969 = vld [vmem:[%s2916 + $0x138] sm:$0xff]
        %v2970 = vld [vmem:[%s2916 + $0x140] sm:$0xf]
        %v2971 = vld [vmem:[%s2916 + $0x144] sm:$0xff]
        %v2972 = vld [vmem:[%s2916 + $0x14c] sm:$0xf]
        %v2973 = vld [vmem:[%s2916 + $0x150] sm:$0xff]
        %v2974 = vld [vmem:[%s2916 + $0x158] sm:$0xf]
        %v2975 = vld [vmem:[%s2916 + $0x15c] sm:$0xff]
        %v2976 = vld [vmem:[%s2916 + $0x164] sm:$0xf]
        %v2977 = vld [vmem:[%s2916 + $0x168] sm:$0xff]
        %v2978 = vld [vmem:[%s2916 + $0x170] sm:$0xf]
        %v2979 = vld [vmem:[%s2916 + $0x174] sm:$0xff]
        %v2980 = vld [vmem:[%s2916 + $0x17c] sm:$0xf]
        %v2982 = vunpack.c.l.b16 %v2915
        %v2983 = vunpack.c.h.b16 %v2915
        %v2984 = vpack.c.b16 %v2982, %v2982
        %v2985 = vpack.c.b16 %v2983, %v2983
        %vm2986 = vsmask.f32 6400
        %v2988 = vshrl.u32 %v2558, 16
        %v2990 = vrot.slane %v2988, 1
        %v2991 = vshll.u32 %v2558, 16
        %v2993 = vrot.slane %v2991, 2
        %v2994 = vor.u32 %v2990, %v2993
        %v2996 = vshrl.u32 %v2984, 16
        %v2998 = vrot.slane %v2996, 1
        %v2999 = vshll.u32 %v2984, 16
        %v3001 = vrot.slane %v2999, 2
        %v3002 = vor.u32 %v2998, %v3001
        %v3003 = vsel %vm2986, %v2994, %v3002
        %v3005 = vshrl.u32 %v2559, 16
        %v3007 = vrot.slane %v3005, 1
        %v3008 = vshll.u32 %v2559, 16
        %v3010 = vrot.slane %v3008, 2
        %v3011 = vor.u32 %v3007, %v3010
        %v3013 = vshrl.u32 %v2985, 16
        %v3015 = vrot.slane %v3013, 1
        %v3016 = vshll.u32 %v2985, 16
        %v3018 = vrot.slane %v3016, 2
        %v3019 = vor.u32 %v3015, %v3018
        %v3020 = vsel %vm2986, %v3011, %v3019
        %v3087 = vunpack.c.l.b16 %v2917
        %v3088 = vunpack.c.h.b16 %v2917
        %v3089 = vunpack.c.l.b16 %v2918
        %v3090 = vunpack.c.l.b16 %v2919
        %v3091 = vunpack.c.h.b16 %v2919
        %v3092 = vunpack.c.l.b16 %v2920
        %v3093 = vunpack.c.l.b16 %v2921
        %v3094 = vunpack.c.h.b16 %v2921
        %v3095 = vunpack.c.l.b16 %v2922
        %v3096 = vunpack.c.l.b16 %v2923
        %v3097 = vunpack.c.h.b16 %v2923
        %v3098 = vunpack.c.l.b16 %v2924
        %v3099 = vunpack.c.l.b16 %v2925
        %v3100 = vunpack.c.h.b16 %v2925
        %v3101 = vunpack.c.l.b16 %v2926
        %v3102 = vunpack.c.l.b16 %v2927
        %v3103 = vunpack.c.h.b16 %v2927
        %v3104 = vunpack.c.l.b16 %v2928
        %v3105 = vunpack.c.l.b16 %v2929
        %v3106 = vunpack.c.h.b16 %v2929
        %v3107 = vunpack.c.l.b16 %v2930
        %v3108 = vunpack.c.l.b16 %v2931
        %v3109 = vunpack.c.h.b16 %v2931
        %v3110 = vunpack.c.l.b16 %v2932
        %v3111 = vunpack.c.l.b16 %v2933
        %v3112 = vunpack.c.h.b16 %v2933
        %v3113 = vunpack.c.l.b16 %v2934
        %v3114 = vunpack.c.l.b16 %v2935
        %v3115 = vunpack.c.h.b16 %v2935
        %v3116 = vunpack.c.l.b16 %v2936
        %v3117 = vunpack.c.l.b16 %v2937
        %v3118 = vunpack.c.h.b16 %v2937
        %v3119 = vunpack.c.l.b16 %v2938
        %v3120 = vunpack.c.l.b16 %v2939
        %v3121 = vunpack.c.h.b16 %v2939
        %v3122 = vunpack.c.l.b16 %v2940
        %v3123 = vunpack.c.l.b16 %v2941
        %v3124 = vunpack.c.h.b16 %v2941
        %v3125 = vunpack.c.l.b16 %v2942
        %v3126 = vunpack.c.l.b16 %v2943
        %v3127 = vunpack.c.h.b16 %v2943
        %v3128 = vunpack.c.l.b16 %v2944
        %v3129 = vunpack.c.l.b16 %v2945
        %v3130 = vunpack.c.h.b16 %v2945
        %v3131 = vunpack.c.l.b16 %v2946
        %v3132 = vunpack.c.l.b16 %v2947
        %v3133 = vunpack.c.h.b16 %v2947
        %v3134 = vunpack.c.l.b16 %v2948
        %v3135 = vunpack.c.l.b16 %v2949
        %v3136 = vunpack.c.h.b16 %v2949
        %v3137 = vunpack.c.l.b16 %v2950
        %v3138 = vunpack.c.l.b16 %v2951
        %v3139 = vunpack.c.h.b16 %v2951
        %v3140 = vunpack.c.l.b16 %v2952
        %v3141 = vunpack.c.l.b16 %v2953
        %v3142 = vunpack.c.h.b16 %v2953
        %v3143 = vunpack.c.l.b16 %v2954
        %v3144 = vunpack.c.l.b16 %v2955
        %v3145 = vunpack.c.h.b16 %v2955
        %v3146 = vunpack.c.l.b16 %v2956
        %v3147 = vunpack.c.l.b16 %v2957
        %v3148 = vunpack.c.h.b16 %v2957
        %v3149 = vunpack.c.l.b16 %v2958
        %v3150 = vunpack.c.l.b16 %v2959
        %v3151 = vunpack.c.h.b16 %v2959
        %v3152 = vunpack.c.l.b16 %v2960
        %v3153 = vunpack.c.l.b16 %v2961
        %v3154 = vunpack.c.h.b16 %v2961
        %v3155 = vunpack.c.l.b16 %v2962
        %v3156 = vunpack.c.l.b16 %v2963
        %v3157 = vunpack.c.h.b16 %v2963
        %v3158 = vunpack.c.l.b16 %v2964
        %v3159 = vunpack.c.l.b16 %v2965
        %v3160 = vunpack.c.h.b16 %v2965
        %v3161 = vunpack.c.l.b16 %v2966
        %v3162 = vunpack.c.l.b16 %v2967
        %v3163 = vunpack.c.h.b16 %v2967
        %v3164 = vunpack.c.l.b16 %v2968
        %v3165 = vunpack.c.l.b16 %v2969
        %v3166 = vunpack.c.h.b16 %v2969
        %v3167 = vunpack.c.l.b16 %v2970
        %v3168 = vunpack.c.l.b16 %v2971
        %v3169 = vunpack.c.h.b16 %v2971
        %v3170 = vunpack.c.l.b16 %v2972
        %v3171 = vunpack.c.l.b16 %v2973
        %v3172 = vunpack.c.h.b16 %v2973
        %v3173 = vunpack.c.l.b16 %v2974
        %v3174 = vunpack.c.l.b16 %v2975
        %v3175 = vunpack.c.h.b16 %v2975
        %v3176 = vunpack.c.l.b16 %v2976
        %v3177 = vunpack.c.l.b16 %v2977
        %v3178 = vunpack.c.h.b16 %v2977
        %v3179 = vunpack.c.l.b16 %v2978
        %v3180 = vunpack.c.l.b16 %v2979
        %v3181 = vunpack.c.h.b16 %v2979
        %v3182 = vunpack.c.l.b16 %v2980
        %v3183 = vpack.c.b16 %v3090, %v3087
        %v3184 = vpack.c.b16 %v3091, %v3088
        %v3185 = vpack.c.b16 %v3092, %v3089
        %v3186 = vpack.c.b16 %v3096, %v3093
        %v3187 = vpack.c.b16 %v3097, %v3094
        %v3188 = vpack.c.b16 %v3098, %v3095
        %v3189 = vpack.c.b16 %v3102, %v3099
        %v3190 = vpack.c.b16 %v3103, %v3100
        %v3191 = vpack.c.b16 %v3104, %v3101
        %v3192 = vpack.c.b16 %v3108, %v3105
        %v3193 = vpack.c.b16 %v3109, %v3106
        %v3194 = vpack.c.b16 %v3110, %v3107
        %v3195 = vpack.c.b16 %v3114, %v3111
        %v3196 = vpack.c.b16 %v3115, %v3112
        %v3197 = vpack.c.b16 %v3116, %v3113
        %v3198 = vpack.c.b16 %v3120, %v3117
        %v3199 = vpack.c.b16 %v3121, %v3118
        %v3200 = vpack.c.b16 %v3122, %v3119
        %v3201 = vpack.c.b16 %v3126, %v3123
        %v3202 = vpack.c.b16 %v3127, %v3124
        %v3203 = vpack.c.b16 %v3128, %v3125
        %v3204 = vpack.c.b16 %v3132, %v3129
        %v3205 = vpack.c.b16 %v3133, %v3130
        %v3206 = vpack.c.b16 %v3134, %v3131
        %v3207 = vpack.c.b16 %v3138, %v3135
        %v3208 = vpack.c.b16 %v3139, %v3136
        %v3209 = vpack.c.b16 %v3140, %v3137
        %v3210 = vpack.c.b16 %v3144, %v3141
        %v3211 = vpack.c.b16 %v3145, %v3142
        %v3212 = vpack.c.b16 %v3146, %v3143
        %v3213 = vpack.c.b16 %v3150, %v3147
        %v3214 = vpack.c.b16 %v3151, %v3148
        %v3215 = vpack.c.b16 %v3152, %v3149
        %v3216 = vpack.c.b16 %v3156, %v3153
        %v3217 = vpack.c.b16 %v3157, %v3154
        %v3218 = vpack.c.b16 %v3158, %v3155
        %v3219 = vpack.c.b16 %v3162, %v3159
        %v3220 = vpack.c.b16 %v3163, %v3160
        %v3221 = vpack.c.b16 %v3164, %v3161
        %v3222 = vpack.c.b16 %v3168, %v3165
        %v3223 = vpack.c.b16 %v3169, %v3166
        %v3224 = vpack.c.b16 %v3170, %v3167
        %v3225 = vpack.c.b16 %v3174, %v3171
        %v3226 = vpack.c.b16 %v3175, %v3172
        %v3227 = vpack.c.b16 %v3176, %v3173
        %v3228 = vpack.c.b16 %v3180, %v3177
        %v3229 = vpack.c.b16 %v3181, %v3178
        %v3230 = vpack.c.b16 %v3182, %v3179
        %3279 = vmatpush.bf16.msra.mxu0 %v3204
        %3280 = vmatpush.bf16.msra.mxu0 %v3201
        %3281 = vmatpush.bf16.msra.mxu0 %v3198
        %3282 = vmatpush.bf16.msra.mxu0 %v3195
        %3283 = vmatpush.bf16.msra.mxu0 %v3192
        %3284 = vmatpush.bf16.msra.mxu0 %v3189
        %3285 = vmatpush.bf16.msra.mxu0 %v3186
        %3286 = vmatpush.bf16.msra.mxu0 %v3183
        %3287 = vmatmul.bf16.gmra.mxu0 %v3003
        %v3288 = vpop.f32.mrf.mxu0
        %v3289 = vadd.f32 0.0, %v3288
        %v3290 = vpop.f32.mrf.mxu0
        %v3291 = vadd.f32 0.0, %v3290
        %3292 = vdwg.mxu0
        %3293 = vmatpush.bf16.msra.mxu0 %v3228
        %3294 = vmatpush.bf16.msra.mxu0 %v3225
        %3295 = vmatpush.bf16.msra.mxu0 %v3222
        %3296 = vmatpush.bf16.msra.mxu0 %v3219
        %3297 = vmatpush.bf16.msra.mxu0 %v3216
        %3298 = vmatpush.bf16.msra.mxu0 %v3213
        %3299 = vmatpush.bf16.msra.mxu0 %v3210
        %3300 = vmatpush.bf16.msra.mxu0 %v3207
        %3301 = vmatmul.bf16.gmra.mxu0 %v3020
        %v3302 = vpop.f32.mrf.mxu0
        %v3303 = vadd.f32 %v3289, %v3302
        %v3304 = vpop.f32.mrf.mxu0
        %v3305 = vadd.f32 %v3291, %v3304
        %3306 = vdwg.mxu0
        %3307 = vmatpush.bf16.msra.mxu0 %v3205
        %3308 = vmatpush.bf16.msra.mxu0 %v3202
        %3309 = vmatpush.bf16.msra.mxu0 %v3199
        %3310 = vmatpush.bf16.msra.mxu0 %v3196
        %3311 = vmatpush.bf16.msra.mxu0 %v3193
        %3312 = vmatpush.bf16.msra.mxu0 %v3190
        %3313 = vmatpush.bf16.msra.mxu0 %v3187
        %3314 = vmatpush.bf16.msra.mxu0 %v3184
        %3315 = vmatmul.bf16.gmra.mxu0 %v3003
        %v3316 = vpop.f32.mrf.mxu0
        %v3317 = vadd.f32 0.0, %v3316
        %v3318 = vpop.f32.mrf.mxu0
        %v3319 = vadd.f32 0.0, %v3318
        %3320 = vdwg.mxu0
        %3321 = vmatpush.bf16.msra.mxu0 %v3229
        %3322 = vmatpush.bf16.msra.mxu0 %v3226
        %3323 = vmatpush.bf16.msra.mxu0 %v3223
        %3324 = vmatpush.bf16.msra.mxu0 %v3220
        %3325 = vmatpush.bf16.msra.mxu0 %v3217
        %3326 = vmatpush.bf16.msra.mxu0 %v3214
        %3327 = vmatpush.bf16.msra.mxu0 %v3211
        %3328 = vmatpush.bf16.msra.mxu0 %v3208
        %3329 = vmatmul.bf16.gmra.mxu0 %v3020
        %v3330 = vpop.f32.mrf.mxu0
        %v3331 = vadd.f32 %v3317, %v3330
        %v3332 = vpop.f32.mrf.mxu0
        %v3333 = vadd.f32 %v3319, %v3332
        %3334 = vdwg.mxu0
        %3335 = vmatpush.bf16.msra.mxu0 %v3206
        %3336 = vmatpush.bf16.msra.mxu0 %v3203
        %3337 = vmatpush.bf16.msra.mxu0 %v3200
        %3338 = vmatpush.bf16.msra.mxu0 %v3197
        %3339 = vmatpush.bf16.msra.mxu0 %v3194
        %3340 = vmatpush.bf16.msra.mxu0 %v3191
        %3341 = vmatpush.bf16.msra.mxu0 %v3188
        %3342 = vmatpush.bf16.msra.mxu0 %v3185
        %3343 = vmatmul.bf16.gmra.mxu0 %v3003
        %v3344 = vpop.f32.mrf.mxu0
        %v3345 = vadd.f32 0.0, %v3344
        %v3346 = vpop.f32.mrf.mxu0
        %v3347 = vadd.f32 0.0, %v3346
        %3348 = vdwg.mxu0
        %3349 = vmatpush.bf16.msra.mxu0 %v3230
        %3350 = vmatpush.bf16.msra.mxu0 %v3227
        %3351 = vmatpush.bf16.msra.mxu0 %v3224
        %3352 = vmatpush.bf16.msra.mxu0 %v3221
        %3353 = vmatpush.bf16.msra.mxu0 %v3218
        %3354 = vmatpush.bf16.msra.mxu0 %v3215
        %3355 = vmatpush.bf16.msra.mxu0 %v3212
        %3356 = vmatpush.bf16.msra.mxu0 %v3209
        %3357 = vmatmul.bf16.gmra.mxu0 %v3020
        %v3358 = vpop.f32.mrf.mxu0
        %v3359 = vadd.f32 %v3345, %v3358
        %v3360 = vpop.f32.mrf.mxu0
        %v3361 = vadd.f32 %v3347, %v3360
        %3362 = vdwg.mxu0
        %v3363 = vadd.f32 %v2909, %v3303
        %v3364 = vadd.f32 %v2910, %v3331
        %v3365 = vadd.f32 %v2911, %v3359
        %v3366 = vadd.f32 %v2912, %v3305
        %v3367 = vadd.f32 %v2913, %v3333
        %v3368 = vadd.f32 %v2914, %v3361
        %v3369 = vpack.c.bf16 %v3364, %v3363
        %v3370 = vpack.c.bf16 %v3365, %v3365
        %v3371 = vpack.c.bf16 %v3367, %v3366
        %v3372 = vpack.c.bf16 %v3368, %v3368
        %3373 = vst [vmem:[%s226] sm:$0xff] %v3369
        %3374 = vst [vmem:[%s226 + $0x8] sm:$0xf] %v3370
        %3375 = vst [vmem:[%s226 + $0xc] sm:$0xff] %v3371
        %3376 = vst [vmem:[%s226 + $0x14] sm:$0xf] %v3372
        %s3377 = smul.u32 2, %s21
        %p3378 = scmp.lt.s32.totalorder %s20, 1
        %s3379 = scalar_select %p3378, %s20, 1
        %p3380 = scmp.lt.s32.totalorder %s3377, 1
        %s3381 = scalar_select %p3380, %s3377, 1
        %s3382 = smul.addr %s3381, 3
        %s3383 = smul.addr %s3379, 6
        %s3384 = sadd.s32 %s3382, %s3383
        %s3385 = smul.addr %s3384, 4
        %s3386 = scalar_lea.vmem %s3, %s3385
        // Predicated region
        $region41: #{ssvm_forward_svc_infer.9} parent=31 // pred_check
          %p3387 = pneg %p116
        $region42: #{ssvm_forward_svc_infer.9} parent=31 // pred_check_branch
          %3389 = sbr.rel (%p3387) target = $region44
        $region43: #{ssvm_forward_svc_infer.9} parent=31 // pred_region
          %s3390 = smul.u32 2, %s21
        $region44: #{ssvm_forward_svc_infer.9} parent=31 // pred_fallthru
          _
      $region32: #{ssvm_forward_svc_infer.9} parent=5 // pred_fallthru
        _
      %p3391 = scmp.le.s32.totalorder 2, %s11
      // Predicated region
      $region45: #{ssvm_forward_svc_infer.9} parent=5 // pred_check
        %p3392 = pneg %p3391
      $region46: #{ssvm_forward_svc_infer.9} parent=5 // pred_check_branch
        %3394 = sbr.rel (%p3392) target = $region48
      $region47: #{ssvm_forward_svc_infer.9} parent=5 // pred_region
        %s3395 = ssub.s32 %s11, 2
        // Predicated region
        $region49: #{ssvm_forward_svc_infer.9} parent=47 // pred_check
          %p3396 = pneg %p122
        $region50: #{ssvm_forward_svc_infer.9} parent=47 // pred_check_branch
          %3398 = sbr.rel (%p3396) target = $region52
        $region51: #{ssvm_forward_svc_infer.9} parent=47 // pred_region
          %s3399 = smul.u32 2, %s23
          %p3400 = scmp.lt.s32.totalorder %s22, 1
          %s3401 = scalar_select %p3400, %s22, 1
          %p3402 = scmp.lt.s32.totalorder %s3399, 1
          %s3403 = scalar_select %p3402, %s3399, 1
          %s3404 = smul.addr %s3403, 3
          %s3405 = smul.addr %s3401, 6
          %s3406 = sadd.s32 %s3404, %s3405
          %s3407 = smul.addr %s3406, 4
          %s3408 = scalar_lea.vmem %s3, %s3407
        $region52: #{ssvm_forward_svc_infer.9} parent=47 // pred_fallthru
          _
      $region48: #{ssvm_forward_svc_infer.9} parent=5 // pred_fallthru
        _
    $region6: #{ssvm_forward_svc_infer.9} parent=1 // loop_footer
      %s15 = sadd.s32 1, %s11
    $region7: #{ssvm_forward_svc_infer.9} parent=1 // loop_footer_branch
      %10 = sbr.rel target = $region3
    $region8: #{ssvm_forward_svc_infer.9} parent=1 // loop_exit
      _
    %3409 = vsyncpa [#allocation4], 1
    %s3410 = scalar_lea.sflag [#allocation4], 1
    %3411 = vsyncpa %s3410, 1
    %3412 = vsyncpa [#allocation6], 1

// kernel: ssvm_forward_svc_infer.10
$region0: #{ssvm_forward_svc_infer.10}
  #allocation0 [shape = 'u32[]', space=smem, size = 0x4, offset = 0x4, fixed_abs, tag = 'smem constant byte address 0x4 - core index']
  #allocation1 [shape = 'u32[72,128]{1,0:T(1,128)}', space=vmem, size = 0x9000, scoped, tag = 'internal scratch']
  #allocation2 [shape = 'bf16[32,384]{1,0:T(8,128)(2,1)}', space=vmem, size = 0x6000, scoped, tag = 'scratch operand']
  %s0 = inlined_call_operand.vmem [shape: bf16[2,16,384], index: 0, kind: input, shape index: {}]
  %s1 = inlined_call_operand.vmem [shape: f32[7,384], index: 1, kind: input, shape index: {}]
  %s2 = inlined_call_operand.vmem [shape: f32[1,384], index: 2, kind: input, shape index: {}]
  %s3 = inlined_call_operand.vmem [shape: f32[1,384], index: 3, kind: input, shape index: {}]
  %s4 = inlined_call_operand.vmem [shape: f32[1,384], index: 4, kind: input, shape index: {}]
  %s5 = inlined_call_operand.vmem [shape: bf16[384,960], index: 5, kind: input, shape index: {}]
  %s6 = inlined_call_operand.vmem [shape: f32[1,960], index: 6, kind: input, shape index: {}]
  %s7 = inlined_call_operand.vmem [shape: bf16[960,384], index: 7, kind: input, shape index: {}]
  %s8 = inlined_call_operand.vmem [shape: f32[1,384], index: 8, kind: input, shape index: {}]
  %s9 = inlined_call_operand.vmem [shape: f32[1,384], index: 9, kind: input, shape index: {}]
  %s10 = inlined_call_operand.vmem [shape: bf16[2,16,384], index: 10, kind: output, shape index: {}]
  %s11 = sld [smem:[#allocation0]]
  $region73: #{ssvm_forward_svc_infer.10} parent=0
    _
  %s13 = ssub.s32 1, %s11
  %s14 = scalar_select 0, %s13, %s11
  loop: start=0, step=1, limit=4
  $region2: #{ssvm_forward_svc_infer.10} parent=0 // loop_pre_header
    _
  $region3: #{ssvm_forward_svc_infer.10} parent=0 // loop_header
    %s16 = sphi 0, %s20
    %p17 = scmp.ge.s32.totalorder %s16, 4
    %s23 = sphi 0, %s35
    %s24 = sphi 0, %s31
    %s25 = sphi 0, %s23
    %s26 = sphi 0, %s24
    %s27 = sphi 0, %s25
    %s28 = sphi 0, %s26
    %s38 = sphi 0, %s40
    %s41 = sphi 0, %s38
    %s42 = sphi 0, %s41
    %s58 = sphi 0, %s42
    %s62 = sphi 0, %s62
    %s64 = sphi 0, %s62
    %s65 = sphi 0, %s64
    %s79 = sphi 0, %s65
    %s83 = sphi 0, %s83
    %s85 = sphi 0, %s83
    %s86 = sphi 0, %s85
    %s100 = sphi 0, %s86
    %s104 = sphi 0, %s104
    %s106 = sphi 0, %s104
    %s107 = sphi 0, %s106
    %s121 = sphi 0, %s107
    %s125 = sphi 0, %s125
    %s127 = sphi 0, %s125
    %s128 = sphi 0, %s127
    %s142 = sphi 0, %s128
    %s146 = sphi 0, %s146
    %s148 = sphi 0, %s146
    %s149 = sphi 0, %s148
    %s163 = sphi 0, %s149
    %s167 = sphi 0, %s167
    %s169 = sphi 0, %s167
    %s170 = sphi 0, %s169
    %s184 = sphi 0, %s170
    %s188 = sphi 0, %s188
    %s190 = sphi 0, %s188
    %s191 = sphi 0, %s190
    %s205 = sphi 0, %s191
    %s209 = sphi 0, %s209
    %s211 = sphi 0, %s209
    %s212 = sphi 0, %s211
    %s226 = sphi 0, %s212
    %s230 = sphi 0, %s230
    %s232 = sphi 0, %s230
    %s233 = sphi 0, %s232
    %s247 = sphi 0, %s233
    %s255 = sphi 0, %s257
    %s258 = sphi 0, %s255
    %s259 = sphi 0, %s258
    %s275 = sphi 0, %s259
  $region4: #{ssvm_forward_svc_infer.10} parent=0 // loop_header_branch
    %19 = sbr.rel (%p17) target = $region8
  $region5: #{ssvm_forward_svc_infer.10} parent=0 // loop_body
    %s21 = ssub.s32 %s16, 1
    %s22 = ssub.s32 %s16, 2
    %s29 = sadd.s32 1, %s24
    %p30 = scmp.ge.s32.totalorder %s29, 1
    %s31 = scalar_select %p30, 0, %s29
    %s32 = sadd.s32 1, %s23
    %s33 = scalar_select %p30, %s32, %s23
    %p34 = scmp.ge.s32.totalorder %s33, 2
    %s35 = scalar_select %p34, 0, %s33
    %s36 = ssub.s32 %s23, %s35
    %p37 = scmp.eq.s32.totalorder %s36, 0
    %s39 = sadd.s32 %s38, 1
    %s40 = scalar_select %p37, %s38, %s39
    %p43 = pneg %p37
    %p44 = scmp.eq.s32.totalorder %s16, 1
    %p45 = por %p43, %p44
    %p46 = scmp.ne.s32.totalorder %s38, %s41
    %p47 = scmp.eq.s32.totalorder %s16, 0
    %p48 = por %p46, %p47
    %p49 = scmp.ne.s32.totalorder %s38, %s41
    %p50 = scmp.eq.s32.totalorder %s21, 1
    %p51 = por %p49, %p50
    %p52 = scmp.ne.s32.totalorder %s41, %s42
    %p53 = scmp.eq.s32.totalorder %s21, 0
    %p54 = por %p52, %p53
    %p55 = scmp.ne.s32.totalorder %s41, %s42
    %p56 = scmp.eq.s32.totalorder %s22, 1
    %p57 = por %p55, %p56
    %p59 = scmp.ne.s32.totalorder %s42, %s58
    %p60 = scmp.eq.s32.totalorder %s22, 0
    %p61 = por %p59, %p60
    %s63 = sadd.s32 %s62, 1
    %p66 = scmp.eq.s32.totalorder %s16, 1
    %p67 = scmp.ne.s32.totalorder %s62, %s64
    %p68 = scmp.eq.s32.totalorder %s16, 0
    %p69 = por %p67, %p68
    %p70 = scmp.ne.s32.totalorder %s62, %s64
    %p71 = scmp.eq.s32.totalorder %s21, 1
    %p72 = por %p70, %p71
    %p73 = scmp.ne.s32.totalorder %s64, %s65
    %p74 = scmp.eq.s32.totalorder %s21, 0
    %p75 = por %p73, %p74
    %p76 = scmp.ne.s32.totalorder %s64, %s65
    %p77 = scmp.eq.s32.totalorder %s22, 1
    %p78 = por %p76, %p77
    %p80 = scmp.ne.s32.totalorder %s65, %s79
    %p81 = scmp.eq.s32.totalorder %s22, 0
    %p82 = por %p80, %p81
    %s84 = sadd.s32 %s83, 1
    %p87 = scmp.eq.s32.totalorder %s16, 1
    %p88 = scmp.ne.s32.totalorder %s83, %s85
    %p89 = scmp.eq.s32.totalorder %s16, 0
    %p90 = por %p88, %p89
    %p91 = scmp.ne.s32.totalorder %s83, %s85
    %p92 = scmp.eq.s32.totalorder %s21, 1
    %p93 = por %p91, %p92
    %p94 = scmp.ne.s32.totalorder %s85, %s86
    %p95 = scmp.eq.s32.totalorder %s21, 0
    %p96 = por %p94, %p95
    %p97 = scmp.ne.s32.totalorder %s85, %s86
    %p98 = scmp.eq.s32.totalorder %s22, 1
    %p99 = por %p97, %p98
    %p101 = scmp.ne.s32.totalorder %s86, %s100
    %p102 = scmp.eq.s32.totalorder %s22, 0
    %p103 = por %p101, %p102
    %s105 = sadd.s32 %s104, 1
    %p108 = scmp.eq.s32.totalorder %s16, 1
    %p109 = scmp.ne.s32.totalorder %s104, %s106
    %p110 = scmp.eq.s32.totalorder %s16, 0
    %p111 = por %p109, %p110
    %p112 = scmp.ne.s32.totalorder %s104, %s106
    %p113 = scmp.eq.s32.totalorder %s21, 1
    %p114 = por %p112, %p113
    %p115 = scmp.ne.s32.totalorder %s106, %s107
    %p116 = scmp.eq.s32.totalorder %s21, 0
    %p117 = por %p115, %p116
    %p118 = scmp.ne.s32.totalorder %s106, %s107
    %p119 = scmp.eq.s32.totalorder %s22, 1
    %p120 = por %p118, %p119
    %p122 = scmp.ne.s32.totalorder %s107, %s121
    %p123 = scmp.eq.s32.totalorder %s22, 0
    %p124 = por %p122, %p123
    %s126 = sadd.s32 %s125, 1
    %p129 = scmp.eq.s32.totalorder %s16, 1
    %p130 = scmp.ne.s32.totalorder %s125, %s127
    %p131 = scmp.eq.s32.totalorder %s16, 0
    %p132 = por %p130, %p131
    %p133 = scmp.ne.s32.totalorder %s125, %s127
    %p134 = scmp.eq.s32.totalorder %s21, 1
    %p135 = por %p133, %p134
    %p136 = scmp.ne.s32.totalorder %s127, %s128
    %p137 = scmp.eq.s32.totalorder %s21, 0
    %p138 = por %p136, %p137
    %p139 = scmp.ne.s32.totalorder %s127, %s128
    %p140 = scmp.eq.s32.totalorder %s22, 1
    %p141 = por %p139, %p140
    %p143 = scmp.ne.s32.totalorder %s128, %s142
    %p144 = scmp.eq.s32.totalorder %s22, 0
    %p145 = por %p143, %p144
    %s147 = sadd.s32 %s146, 1
    %p150 = scmp.eq.s32.totalorder %s16, 1
    %p151 = scmp.ne.s32.totalorder %s146, %s148
    %p152 = scmp.eq.s32.totalorder %s16, 0
    %p153 = por %p151, %p152
    %p154 = scmp.ne.s32.totalorder %s146, %s148
    %p155 = scmp.eq.s32.totalorder %s21, 1
    %p156 = por %p154, %p155
    %p157 = scmp.ne.s32.totalorder %s148, %s149
    %p158 = scmp.eq.s32.totalorder %s21, 0
    %p159 = por %p157, %p158
    %p160 = scmp.ne.s32.totalorder %s148, %s149
    %p161 = scmp.eq.s32.totalorder %s22, 1
    %p162 = por %p160, %p161
    %p164 = scmp.ne.s32.totalorder %s149, %s163
    %p165 = scmp.eq.s32.totalorder %s22, 0
    %p166 = por %p164, %p165
    %s168 = sadd.s32 %s167, 1
    %p171 = scmp.eq.s32.totalorder %s16, 1
    %p172 = scmp.ne.s32.totalorder %s167, %s169
    %p173 = scmp.eq.s32.totalorder %s16, 0
    %p174 = por %p172, %p173
    %p175 = scmp.ne.s32.totalorder %s167, %s169
    %p176 = scmp.eq.s32.totalorder %s21, 1
    %p177 = por %p175, %p176
    %p178 = scmp.ne.s32.totalorder %s169, %s170
    %p179 = scmp.eq.s32.totalorder %s21, 0
    %p180 = por %p178, %p179
    %p181 = scmp.ne.s32.totalorder %s169, %s170
    %p182 = scmp.eq.s32.totalorder %s22, 1
    %p183 = por %p181, %p182
    %p185 = scmp.ne.s32.totalorder %s170, %s184
    %p186 = scmp.eq.s32.totalorder %s22, 0
    %p187 = por %p185, %p186
    %s189 = sadd.s32 %s188, 1
    %p192 = scmp.eq.s32.totalorder %s16, 1
    %p193 = scmp.ne.s32.totalorder %s188, %s190
    %p194 = scmp.eq.s32.totalorder %s16, 0
    %p195 = por %p193, %p194
    %p196 = scmp.ne.s32.totalorder %s188, %s190
    %p197 = scmp.eq.s32.totalorder %s21, 1
    %p198 = por %p196, %p197
    %p199 = scmp.ne.s32.totalorder %s190, %s191
    %p200 = scmp.eq.s32.totalorder %s21, 0
    %p201 = por %p199, %p200
    %p202 = scmp.ne.s32.totalorder %s190, %s191
    %p203 = scmp.eq.s32.totalorder %s22, 1
    %p204 = por %p202, %p203
    %p206 = scmp.ne.s32.totalorder %s191, %s205
    %p207 = scmp.eq.s32.totalorder %s22, 0
    %p208 = por %p206, %p207
    %s210 = sadd.s32 %s209, 1
    %p213 = scmp.eq.s32.totalorder %s16, 1
    %p214 = scmp.ne.s32.totalorder %s209, %s211
    %p215 = scmp.eq.s32.totalorder %s16, 0
    %p216 = por %p214, %p215
    %p217 = scmp.ne.s32.totalorder %s209, %s211
    %p218 = scmp.eq.s32.totalorder %s21, 1
    %p219 = por %p217, %p218
    %p220 = scmp.ne.s32.totalorder %s211, %s212
    %p221 = scmp.eq.s32.totalorder %s21, 0
    %p222 = por %p220, %p221
    %p223 = scmp.ne.s32.totalorder %s211, %s212
    %p224 = scmp.eq.s32.totalorder %s22, 1
    %p225 = por %p223, %p224
    %p227 = scmp.ne.s32.totalorder %s212, %s226
    %p228 = scmp.eq.s32.totalorder %s22, 0
    %p229 = por %p227, %p228
    %s231 = sadd.s32 %s230, 1
    %p234 = scmp.eq.s32.totalorder %s16, 1
    %p235 = scmp.ne.s32.totalorder %s230, %s232
    %p236 = scmp.eq.s32.totalorder %s16, 0
    %p237 = por %p235, %p236
    %p238 = scmp.ne.s32.totalorder %s230, %s232
    %p239 = scmp.eq.s32.totalorder %s21, 1
    %p240 = por %p238, %p239
    %p241 = scmp.ne.s32.totalorder %s232, %s233
    %p242 = scmp.eq.s32.totalorder %s21, 0
    %p243 = por %p241, %p242
    %p244 = scmp.ne.s32.totalorder %s232, %s233
    %p245 = scmp.eq.s32.totalorder %s22, 1
    %p246 = por %p244, %p245
    %p248 = scmp.ne.s32.totalorder %s233, %s247
    %p249 = scmp.eq.s32.totalorder %s22, 0
    %p250 = por %p248, %p249
    %s251 = ssub.s32 %s23, %s35
    %s252 = ssub.s32 %s24, %s31
    %s253 = sor.u32 %s251, %s252
    %p254 = scmp.eq.s32.totalorder %s253, 0
    %s256 = sadd.s32 %s255, 1
    %s257 = scalar_select %p254, %s255, %s256
    %p260 = pneg %p254
    %p261 = scmp.eq.s32.totalorder %s16, 1
    %p262 = por %p260, %p261
    %p263 = scmp.ne.s32.totalorder %s255, %s258
    %p264 = scmp.eq.s32.totalorder %s16, 0
    %p265 = por %p263, %p264
    %p266 = scmp.ne.s32.totalorder %s255, %s258
    %p267 = scmp.eq.s32.totalorder %s21, 1
    %p268 = por %p266, %p267
    %p269 = scmp.ne.s32.totalorder %s258, %s259
    %p270 = scmp.eq.s32.totalorder %s21, 0
    %p271 = por %p269, %p270
    %p272 = scmp.ne.s32.totalorder %s258, %s259
    %p273 = scmp.eq.s32.totalorder %s22, 1
    %p274 = por %p272, %p273
    %p276 = scmp.ne.s32.totalorder %s259, %s275
    %p277 = scmp.eq.s32.totalorder %s22, 0
    %p278 = por %p276, %p277
    %p279 = scmp.le.s32.totalorder 1, %s16
    %p280 = scmp.lt.s32.totalorder %s16, 3
    %p281 = pnand %p279, %p280
    %p282 = pneg %p281
    // Predicated region
    $region9: #{ssvm_forward_svc_infer.10} parent=5 // pred_check
      _
    $region10: #{ssvm_forward_svc_infer.10} parent=5 // pred_check_branch
      %284 = sbr.rel (%p281) target = $region12
    $region11: #{ssvm_forward_svc_infer.10} parent=5 // pred_region
      %s285 = ssub.s32 %s16, 1
      // Predicated region
      $region13: #{ssvm_forward_svc_infer.10} parent=11 // pred_check
        %p286 = pneg %p75
      $region14: #{ssvm_forward_svc_infer.10} parent=11 // pred_check_branch
        %288 = sbr.rel (%p286) target = $region16
      $region15: #{ssvm_forward_svc_infer.10} parent=11 // pred_region
        _
      $region16: #{ssvm_forward_svc_infer.10} parent=11 // pred_fallthru
        _
      // Predicated region
      $region17: #{ssvm_forward_svc_infer.10} parent=11 // pred_check
        %p289 = pneg %p96
      $region18: #{ssvm_forward_svc_infer.10} parent=11 // pred_check_branch
        %291 = sbr.rel (%p289) target = $region20
      $region19: #{ssvm_forward_svc_infer.10} parent=11 // pred_region
        _
      $region20: #{ssvm_forward_svc_infer.10} parent=11 // pred_fallthru
        _
      // Predicated region
      $region21: #{ssvm_forward_svc_infer.10} parent=11 // pred_check
        %p292 = pneg %p117
      $region22: #{ssvm_forward_svc_infer.10} parent=11 // pred_check_branch
        %294 = sbr.rel (%p292) target = $region24
      $region23: #{ssvm_forward_svc_infer.10} parent=11 // pred_region
        _
      $region24: #{ssvm_forward_svc_infer.10} parent=11 // pred_fallthru
        _
      // Predicated region
      $region25: #{ssvm_forward_svc_infer.10} parent=11 // pred_check
        %p295 = pneg %p138
      $region26: #{ssvm_forward_svc_infer.10} parent=11 // pred_check_branch
        %297 = sbr.rel (%p295) target = $region28
      $region27: #{ssvm_forward_svc_infer.10} parent=11 // pred_region
        _
      $region28: #{ssvm_forward_svc_infer.10} parent=11 // pred_fallthru
        _
      // Predicated region
      $region29: #{ssvm_forward_svc_infer.10} parent=11 // pred_check
        %p298 = pneg %p159
      $region30: #{ssvm_forward_svc_infer.10} parent=11 // pred_check_branch
        %300 = sbr.rel (%p298) target = $region32
      $region31: #{ssvm_forward_svc_infer.10} parent=11 // pred_region
        _
      $region32: #{ssvm_forward_svc_infer.10} parent=11 // pred_fallthru
        _
      // Predicated region
      $region33: #{ssvm_forward_svc_infer.10} parent=11 // pred_check
        %p301 = pneg %p180
      $region34: #{ssvm_forward_svc_infer.10} parent=11 // pred_check_branch
        %303 = sbr.rel (%p301) target = $region36
      $region35: #{ssvm_forward_svc_infer.10} parent=11 // pred_region
        _
      $region36: #{ssvm_forward_svc_infer.10} parent=11 // pred_fallthru
        _
      // Predicated region
      $region37: #{ssvm_forward_svc_infer.10} parent=11 // pred_check
        %p304 = pneg %p201
      $region38: #{ssvm_forward_svc_infer.10} parent=11 // pred_check_branch
        %306 = sbr.rel (%p304) target = $region40
      $region39: #{ssvm_forward_svc_infer.10} parent=11 // pred_region
        _
      $region40: #{ssvm_forward_svc_infer.10} parent=11 // pred_fallthru
        _
      // Predicated region
      $region41: #{ssvm_forward_svc_infer.10} parent=11 // pred_check
        %p307 = pneg %p222
      $region42: #{ssvm_forward_svc_infer.10} parent=11 // pred_check_branch
        %309 = sbr.rel (%p307) target = $region44
      $region43: #{ssvm_forward_svc_infer.10} parent=11 // pred_region
        _
      $region44: #{ssvm_forward_svc_infer.10} parent=11 // pred_fallthru
        _
      // Predicated region
      $region45: #{ssvm_forward_svc_infer.10} parent=11 // pred_check
        %p310 = pneg %p243
      $region46: #{ssvm_forward_svc_infer.10} parent=11 // pred_check_branch
        %312 = sbr.rel (%p310) target = $region48
      $region47: #{ssvm_forward_svc_infer.10} parent=11 // pred_region
        _
      $region48: #{ssvm_forward_svc_infer.10} parent=11 // pred_fallthru
        _
    $region12: #{ssvm_forward_svc_infer.10} parent=5 // pred_fallthru
      _
    %p313 = scmp.lt.s32.totalorder %s16, 2
    // Predicated region
    $region49: #{ssvm_forward_svc_infer.10} parent=5 // pred_check
      %p314 = pneg %p313
    $region50: #{ssvm_forward_svc_infer.10} parent=5 // pred_check_branch
      %316 = sbr.rel (%p314) target = $region52
    $region51: #{ssvm_forward_svc_infer.10} parent=5 // pred_region
      // Predicated region
      $region53: #{ssvm_forward_svc_infer.10} parent=51 // pred_check
        %p317 = pneg %p48
      $region54: #{ssvm_forward_svc_infer.10} parent=51 // pred_check_branch
        %319 = sbr.rel (%p317) target = $region56
      $region55: #{ssvm_forward_svc_infer.10} parent=51 // pred_region
        %p320 = scmp.lt.s32.totalorder %s23, 1
        %s321 = scalar_select %p320, %s23, 1
        %s322 = smul.addr %s321, 6
        %s323 = smul.addr %s322, 4
        %s324 = scalar_lea.vmem %s0, %s323
      $region56: #{ssvm_forward_svc_infer.10} parent=51 // pred_fallthru
        _
    $region52: #{ssvm_forward_svc_infer.10} parent=5 // pred_fallthru
      _
    %p325 = scmp.le.s32.totalorder 1, %s16
    %p326 = scmp.lt.s32.totalorder %s16, 3
    %p327 = pnand %p325, %p326
    %p328 = pneg %p327
    // Predicated region
    $region57: #{ssvm_forward_svc_infer.10} parent=5 // pred_check
      _
    $region58: #{ssvm_forward_svc_infer.10} parent=5 // pred_check_branch
      %330 = sbr.rel (%p327) target = $region60
    $region59: #{ssvm_forward_svc_infer.10} parent=5 // pred_region
      %s331 = ssub.s32 %s16, 1
      %p332 = scmp.lt.s32.totalorder %s25, 1
      %s333 = scalar_select %p332, %s25, 1
      %s334 = smul.addr %s333, 6
      %s335 = smul.addr %s334, 4
      %s336 = scalar_lea.vmem %s0, %s335
      %p337 = pneg %p54
      %p338 = pneg %p51
      %p339 = pneg %p75
      %p340 = pneg %p72
      %p341 = pneg %p96
      %p342 = pneg %p93
      %p343 = pneg %p117
      %p344 = pneg %p114
      %p345 = pneg %p138
      %p346 = pneg %p135
      %p347 = pneg %p159
      %p348 = pneg %p156
      %p349 = pneg %p180
      %p350 = pneg %p177
      %p351 = pneg %p201
      %p352 = pneg %p198
      %p353 = pneg %p222
      %p354 = pneg %p219
      %p355 = pneg %p243
      %p356 = pneg %p240
      %p357 = pneg %p271
      %p358 = pneg %p268
      %s359 = smul.u32 2, %s26
      %p360 = scmp.lt.s32.totalorder %s25, 1
      %s361 = scalar_select %p360, %s25, 1
      %p362 = scmp.lt.s32.totalorder %s359, 1
      %s363 = scalar_select %p362, %s359, 1
      %s364 = smul.addr %s363, 3
      %s365 = smul.addr %s361, 6
      %s366 = sadd.s32 %s364, %s365
      %s367 = smul.addr %s366, 4
      %s368 = scalar_lea.vmem %s10, %s367
      %p369 = scmp.lt.s32.totalorder %s25, 1
      %s370 = scalar_select %p369, %s25, 1
      %s371 = smul.addr %s370, 6
      %s372 = smul.addr %s371, 4
      %s373 = scalar_lea.vmem %s0, %s372
      %s374 = smul.u32 2, %s26
      %p375 = scmp.lt.s32.totalorder %s25, 1
      %s376 = scalar_select %p375, %s25, 1
      %p377 = scmp.lt.s32.totalorder %s374, 1
      %s378 = scalar_select %p377, %s374, 1
      %s379 = smul.addr %s378, 3
      %s380 = smul.addr %s376, 6
      %s381 = sadd.s32 %s379, %s380
      %s382 = smul.addr %s381, 4
      %s383 = scalar_lea.vmem %s10, %s382
      %s384 = smul.u32 2, %s26
      %s386 = smul.u32 %s26, 16
      %s387 = sshra.s32 %s386, 3
      %s388 = sand.u32 %s386, 7
      %s389 = smul.u32 %s387, 3
      %s390 = smul.addr %s389, 4
      %s391 = scalar_lea.vmem %s373, %s390
      %v392 = vld [vmem:[%s391] sm:$0xff]
      %v393 = vld [vmem:[%s391 + $0x8] sm:$0xf]
      %v394 = vld [vmem:[%s391 + $0xc] sm:$0xff]
      %v395 = vld [vmem:[%s391 + $0x14] sm:$0xf]
      %s396 = ssub.s32 %s386, 8
      %p397 = scmp.gt.s32.totalorder %s396, 0
      %s398 = scalar_select %p397, %s396, 0
      %s399 = sshra.s32 %s398, 3
      %s400 = sand.u32 %s398, 7
      %s401 = smul.u32 %s399, 3
      %s402 = smul.addr %s401, 4
      %s403 = scalar_lea.vmem %s373, %s402
      %v404 = vld [vmem:[%s403] sm:$0xff]
      %v405 = vld [vmem:[%s403 + $0x8] sm:$0xf]
      %p406 = scmp.gt.s32.totalorder %s26, 0
      %s407 = scalar_select %p406, 1, 0
      %v408 = vstv %s407
      %vm409 = vcmp.eq.s32.totalorder %v408, 1
      %v410 = vsel %vm409, %v404, 0
      %v411 = vsel %vm409, %v405, 0
      %s412 = sadd.s32 %s386, 16
      %p413 = scmp.lt.s32.totalorder %s412, 8
      %s414 = scalar_select %p413, %s412, 8
      %s415 = sshra.s32 %s414, 3
      %s416 = sand.u32 %s414, 7
      %s417 = smul.u32 %s415, 3
      %s418 = smul.addr %s417, 4
      %s419 = scalar_lea.vmem %s373, %s418
      %v420 = vld [vmem:[%s419] sm:$0xff]
      %v421 = vld [vmem:[%s419 + $0x8] sm:$0xf]
      %p422 = scmp.lt.s32.totalorder %s26, 0
      %s423 = scalar_select %p422, 1, 0
      %v424 = vstv %s423
      %vm425 = vcmp.eq.s32.totalorder %v424, 1
      %v426 = vsel %vm425, %v420, 0
      %v427 = vsel %vm425, %v421, 0
      %428 = vst [vmem:[#allocation2] sm:$0xff] %v410
      %429 = vst [vmem:[#allocation2 + $0x8] sm:$0xf] %v411
      %430 = vst [vmem:[#allocation2 + $0xc] sm:$0xff] %v392
      %431 = vst [vmem:[#allocation2 + $0x14] sm:$0xf] %v393
      %432 = vst [vmem:[#allocation2 + $0x18] sm:$0xff] %v394
      %433 = vst [vmem:[#allocation2 + $0x20] sm:$0xf] %v395
      %434 = vst [vmem:[#allocation2 + $0x24] sm:$0xff] %v426
      %435 = vst [vmem:[#allocation2 + $0x2c] sm:$0xf] %v427
      %v436 = vld [vmem:[%s2] sm:$0x7]
      %v438 = vperm.slane %v436, 0
      %v439 = vperm.slane %v436, 1
      %v440 = vperm.slane %v436, 2
      %v444 = vld [vmem:[#allocation2] sm:$0xcc]
      %v445 = vld [vmem:[#allocation2 + $0x8] sm:$0xc]
      %v446 = vld [vmem:[#allocation2 + $0xc] sm:$0xff]
      %v447 = vld [vmem:[#allocation2 + $0x14] sm:$0xf]
      %v448 = vld [vmem:[#allocation2 + $0x18] sm:$0x77]
      %v449 = vld [vmem:[#allocation2 + $0x20] sm:$0x7]
      %v450 = vunpack.c.l.bf16 %v444
      %v451 = vunpack.c.h.bf16 %v444
      %v452 = vunpack.c.l.bf16 %v445
      %v453 = vunpack.c.l.bf16 %v446
      %v454 = vunpack.c.h.bf16 %v446
      %v455 = vunpack.c.l.bf16 %v447
      %v456 = vunpack.c.l.bf16 %v448
      %v457 = vunpack.c.h.bf16 %v448
      %v458 = vunpack.c.l.bf16 %v449
      %v459 = vld [vmem:[%s1] ss:$8 sm:$0x7]
      %v461 = vperm.slane %v459, 0
      %v462 = vperm.slane %v459, 1
      %v463 = vperm.slane %v459, 2
      %v467 = vmul.f32 %v450, %v461
      %v468 = vmul.f32 %v451, %v462
      %v469 = vmul.f32 %v452, %v463
      %v470 = vmul.f32 %v453, %v461
      %v471 = vmul.f32 %v454, %v462
      %v472 = vmul.f32 %v455, %v463
      %v473 = vmul.f32 %v456, %v461
      %v474 = vmul.f32 %v457, %v462
      %v475 = vmul.f32 %v458, %v463
      %v476 = vadd.f32 %v438, %v467
      %v477 = vadd.f32 %v439, %v468
      %v478 = vadd.f32 %v440, %v469
      %v479 = vadd.f32 %v438, %v470
      %v480 = vadd.f32 %v439, %v471
      %v481 = vadd.f32 %v440, %v472
      %v482 = vadd.f32 %v438, %v473
      %v483 = vadd.f32 %v439, %v474
      %v484 = vadd.f32 %v440, %v475
      %v485 = vld [vmem:[#allocation2] sm:$0x88]
      %v486 = vld [vmem:[#allocation2 + $0x8] sm:$0x8]
      %v487 = vunpack.c.l.bf16 %v485
      %v488 = vunpack.c.h.bf16 %v485
      %v489 = vunpack.c.l.bf16 %v486
      %s490 = scalar_lea.vmem %s1, 1
      %v491 = vld [vmem:[%s490] ss:$8 sm:$0x7]
      %v493 = vperm.slane %v491, 0
      %v494 = vperm.slane %v491, 1
      %v495 = vperm.slane %v491, 2
      %v499 = vmul.f32 %v487, %v493
      %v500 = vmul.f32 %v488, %v494
      %v501 = vmul.f32 %v489, %v495
      %v502 = vmul.f32 %v453, %v493
      %v503 = vmul.f32 %v454, %v494
      %v504 = vmul.f32 %v455, %v495
      %v505 = vmul.f32 %v456, %v493
      %v506 = vmul.f32 %v457, %v494
      %v507 = vmul.f32 %v458, %v495
      %vm517 = vcmask 1046528
      %v518 = vrot.slane %v499, 1
      %v519 = vrot.slane %v502, 1
      %v520 = vsel %vm517, %v518, %v519
      %v521 = vrot.slane %v500, 1
      %v522 = vrot.slane %v503, 1
      %v523 = vsel %vm517, %v521, %v522
      %v524 = vrot.slane %v501, 1
      %v525 = vrot.slane %v504, 1
      %v526 = vsel %vm517, %v524, %v525
      %v527 = vrot.slane %v505, 1
      %v528 = vsel %vm517, %v519, %v527
      %v529 = vrot.slane %v506, 1
      %v530 = vsel %vm517, %v522, %v529
      %v531 = vrot.slane %v507, 1
      %v532 = vsel %vm517, %v525, %v531
      %v542 = vadd.f32 %v476, %v520
      %v543 = vadd.f32 %v477, %v523
      %v544 = vadd.f32 %v478, %v526
      %v545 = vadd.f32 %v479, %v528
      %v546 = vadd.f32 %v480, %v530
      %v547 = vadd.f32 %v481, %v532
      %v548 = vadd.f32 %v482, %v527
      %v549 = vadd.f32 %v483, %v529
      %v550 = vadd.f32 %v484, %v531
      %v551 = vld [vmem:[#allocation2 + $0x18] sm:$0xff]
      %v552 = vld [vmem:[#allocation2 + $0x20] sm:$0xf]
      %v553 = vunpack.c.l.bf16 %v551
      %v554 = vunpack.c.h.bf16 %v551
      %v555 = vunpack.c.l.bf16 %v552
      %s556 = scalar_lea.vmem %s1, 2
      %v557 = vld [vmem:[%s556] ss:$8 sm:$0x7]
      %v559 = vperm.slane %v557, 0
      %v560 = vperm.slane %v557, 1
      %v561 = vperm.slane %v557, 2
      %v565 = vmul.f32 %v487, %v559
      %v566 = vmul.f32 %v488, %v560
      %v567 = vmul.f32 %v489, %v561
      %v568 = vmul.f32 %v453, %v559
      %v569 = vmul.f32 %v454, %v560
      %v570 = vmul.f32 %v455, %v561
      %v571 = vmul.f32 %v553, %v559
      %v572 = vmul.f32 %v554, %v560
      %v573 = vmul.f32 %v555, %v561
      %vm583 = vcmask 1045504
      %v584 = vrot.slane %v565, 2
      %v585 = vrot.slane %v568, 2
      %v586 = vsel %vm583, %v584, %v585
      %v587 = vrot.slane %v566, 2
      %v588 = vrot.slane %v569, 2
      %v589 = vsel %vm583, %v587, %v588
      %v590 = vrot.slane %v567, 2
      %v591 = vrot.slane %v570, 2
      %v592 = vsel %vm583, %v590, %v591
      %v593 = vrot.slane %v571, 2
      %v594 = vsel %vm583, %v585, %v593
      %v595 = vrot.slane %v572, 2
      %v596 = vsel %vm583, %v588, %v595
      %v597 = vrot.slane %v573, 2
      %v598 = vsel %vm583, %v591, %v597
      %v608 = vadd.f32 %v542, %v586
      %v609 = vadd.f32 %v543, %v589
      %v610 = vadd.f32 %v544, %v592
      %v611 = vadd.f32 %v545, %v594
      %v612 = vadd.f32 %v546, %v596
      %v613 = vadd.f32 %v547, %v598
      %v614 = vadd.f32 %v548, %v593
      %v615 = vadd.f32 %v549, %v595
      %v616 = vadd.f32 %v550, %v597
      %s617 = scalar_lea.vmem %s1, 3
      %v618 = vld [vmem:[%s617] ss:$8 sm:$0x7]
      %v620 = vperm.slane %v618, 0
      %v621 = vperm.slane %v618, 1
      %v622 = vperm.slane %v618, 2
      %v626 = vmul.f32 %v453, %v620
      %v627 = vmul.f32 %v454, %v621
      %v628 = vmul.f32 %v455, %v622
      %v629 = vmul.f32 %v553, %v620
      %v630 = vmul.f32 %v554, %v621
      %v631 = vmul.f32 %v555, %v622
      %vm638 = vcmask 1044480
      %v639 = vrot.slane %v626, 3
      %v640 = vrot.slane %v627, 3
      %v641 = vrot.slane %v628, 3
      %v642 = vrot.slane %v629, 3
      %v643 = vsel %vm638, %v639, %v642
      %v644 = vrot.slane %v630, 3
      %v645 = vsel %vm638, %v640, %v644
      %v646 = vrot.slane %v631, 3
      %v647 = vsel %vm638, %v641, %v646
      %v657 = vadd.f32 %v608, %v639
      %v658 = vadd.f32 %v609, %v640
      %v659 = vadd.f32 %v610, %v641
      %v660 = vadd.f32 %v611, %v643
      %v661 = vadd.f32 %v612, %v645
      %v662 = vadd.f32 %v613, %v647
      %v663 = vadd.f32 %v614, %v642
      %v664 = vadd.f32 %v615, %v644
      %v665 = vadd.f32 %v616, %v646
      %v666 = vld [vmem:[#allocation2 + $0xc] sm:$0xff]
      %v667 = vld [vmem:[#allocation2 + $0x14] sm:$0xf]
      %v668 = vld [vmem:[#allocation2 + $0x18] sm:$0xff]
      %v669 = vld [vmem:[#allocation2 + $0x20] sm:$0xf]
      %v670 = vld [vmem:[#allocation2 + $0x24] sm:$0x11]
      %v671 = vld [vmem:[#allocation2 + $0x2c] sm:$0x1]
      %v672 = vunpack.c.l.bf16 %v666
      %v673 = vunpack.c.h.bf16 %v666
      %v674 = vunpack.c.l.bf16 %v667
      %v675 = vunpack.c.l.bf16 %v668
      %v676 = vunpack.c.h.bf16 %v668
      %v677 = vunpack.c.l.bf16 %v669
      %v678 = vunpack.c.l.bf16 %v670
      %v679 = vunpack.c.h.bf16 %v670
      %v680 = vunpack.c.l.bf16 %v671
      %s681 = scalar_lea.vmem %s1, 4
      %v682 = vld [vmem:[%s681] ss:$8 sm:$0x7]
      %v684 = vperm.slane %v682, 0
      %v685 = vperm.slane %v682, 1
      %v686 = vperm.slane %v682, 2
      %v690 = vmul.f32 %v672, %v684
      %v691 = vmul.f32 %v673, %v685
      %v692 = vmul.f32 %v674, %v686
      %v693 = vmul.f32 %v675, %v684
      %v694 = vmul.f32 %v676, %v685
      %v695 = vmul.f32 %v677, %v686
      %v696 = vmul.f32 %v678, %v684
      %v697 = vmul.f32 %v679, %v685
      %v698 = vmul.f32 %v680, %v686
      %vm708 = vcmask 1043456
      %v709 = vrot.slane %v690, 4
      %v710 = vrot.slane %v691, 4
      %v711 = vrot.slane %v692, 4
      %v712 = vrot.slane %v693, 4
      %v713 = vsel %vm708, %v709, %v712
      %v714 = vrot.slane %v694, 4
      %v715 = vsel %vm708, %v710, %v714
      %v716 = vrot.slane %v695, 4
      %v717 = vsel %vm708, %v711, %v716
      %v718 = vrot.slane %v696, 4
      %v719 = vsel %vm708, %v712, %v718
      %v720 = vrot.slane %v697, 4
      %v721 = vsel %vm708, %v714, %v720
      %v722 = vrot.slane %v698, 4
      %v723 = vsel %vm708, %v716, %v722
      %v733 = vadd.f32 %v657, %v709
      %v734 = vadd.f32 %v658, %v710
      %v735 = vadd.f32 %v659, %v711
      %v736 = vadd.f32 %v660, %v713
      %v737 = vadd.f32 %v661, %v715
      %v738 = vadd.f32 %v662, %v717
      %v739 = vadd.f32 %v663, %v719
      %v740 = vadd.f32 %v664, %v721
      %v741 = vadd.f32 %v665, %v723
      %v742 = vld [vmem:[#allocation2 + $0xc] sm:$0xee]
      %v743 = vld [vmem:[#allocation2 + $0x14] sm:$0xe]
      %v744 = vunpack.c.l.bf16 %v742
      %v745 = vunpack.c.h.bf16 %v742
      %v746 = vunpack.c.l.bf16 %v743
      %s747 = scalar_lea.vmem %s1, 5
      %v748 = vld [vmem:[%s747] ss:$8 sm:$0x7]
      %v750 = vperm.slane %v748, 0
      %v751 = vperm.slane %v748, 1
      %v752 = vperm.slane %v748, 2
      %v756 = vmul.f32 %v744, %v750
      %v757 = vmul.f32 %v745, %v751
      %v758 = vmul.f32 %v746, %v752
      %v759 = vmul.f32 %v675, %v750
      %v760 = vmul.f32 %v676, %v751
      %v761 = vmul.f32 %v677, %v752
      %v762 = vmul.f32 %v678, %v750
      %v763 = vmul.f32 %v679, %v751
      %v764 = vmul.f32 %v680, %v752
      %vm774 = vcmask 1042432
      %v775 = vrot.slane %v756, 5
      %v776 = vrot.slane %v757, 5
      %v777 = vrot.slane %v758, 5
      %v778 = vrot.slane %v759, 5
      %v779 = vsel %vm774, %v775, %v778
      %v780 = vrot.slane %v760, 5
      %v781 = vsel %vm774, %v776, %v780
      %v782 = vrot.slane %v761, 5
      %v783 = vsel %vm774, %v777, %v782
      %v784 = vrot.slane %v762, 5
      %v785 = vsel %vm774, %v778, %v784
      %v786 = vrot.slane %v763, 5
      %v787 = vsel %vm774, %v780, %v786
      %v788 = vrot.slane %v764, 5
      %v789 = vsel %vm774, %v782, %v788
      %v799 = vadd.f32 %v733, %v775
      %v800 = vadd.f32 %v734, %v776
      %v801 = vadd.f32 %v735, %v777
      %v802 = vadd.f32 %v736, %v779
      %v803 = vadd.f32 %v737, %v781
      %v804 = vadd.f32 %v738, %v783
      %v805 = vadd.f32 %v739, %v785
      %v806 = vadd.f32 %v740, %v787
      %v807 = vadd.f32 %v741, %v789
      %v808 = vld [vmem:[#allocation2 + $0x24] sm:$0x33]
      %v809 = vld [vmem:[#allocation2 + $0x2c] sm:$0x3]
      %v810 = vunpack.c.l.bf16 %v808
      %v811 = vunpack.c.h.bf16 %v808
      %v812 = vunpack.c.l.bf16 %v809
      %s813 = scalar_lea.vmem %s1, 6
      %v814 = vld [vmem:[%s813] ss:$8 sm:$0x7]
      %v816 = vperm.slane %v814, 0
      %v817 = vperm.slane %v814, 1
      %v818 = vperm.slane %v814, 2
      %v822 = vmul.f32 %v744, %v816
      %v823 = vmul.f32 %v745, %v817
      %v824 = vmul.f32 %v746, %v818
      %v825 = vmul.f32 %v675, %v816
      %v826 = vmul.f32 %v676, %v817
      %v827 = vmul.f32 %v677, %v818
      %v828 = vmul.f32 %v810, %v816
      %v829 = vmul.f32 %v811, %v817
      %v830 = vmul.f32 %v812, %v818
      %vm840 = vcmask 1041408
      %v841 = vrot.slane %v822, 6
      %v842 = vrot.slane %v823, 6
      %v843 = vrot.slane %v824, 6
      %v844 = vrot.slane %v825, 6
      %v845 = vsel %vm840, %v841, %v844
      %v846 = vrot.slane %v826, 6
      %v847 = vsel %vm840, %v842, %v846
      %v848 = vrot.slane %v827, 6
      %v849 = vsel %vm840, %v843, %v848
      %v850 = vrot.slane %v828, 6
      %v851 = vsel %vm840, %v844, %v850
      %v852 = vrot.slane %v829, 6
      %v853 = vsel %vm840, %v846, %v852
      %v854 = vrot.slane %v830, 6
      %v855 = vsel %vm840, %v848, %v854
      %v865 = vadd.f32 %v799, %v841
      %v866 = vadd.f32 %v800, %v842
      %v867 = vadd.f32 %v801, %v843
      %v868 = vadd.f32 %v802, %v845
      %v869 = vadd.f32 %v803, %v847
      %v870 = vadd.f32 %v804, %v849
      %v871 = vadd.f32 %v805, %v851
      %v872 = vadd.f32 %v806, %v853
      %v873 = vadd.f32 %v807, %v855
      %vm874 = vcmask 1047557
      %v875 = vsel %vm874, %v865, 0.0
      %v876 = vsel %vm874, %v866, 0.0
      %v877 = vadd.f32 %v875, %v876
      %v878 = vsel %vm874, %v867, 0.0
      %v879 = vadd.f32 %v877, %v878
      %880 = vadd.xlane.f32.xlu0 %v879
      %v881 = vpop.xlane.xlu0 %880
      %v882 = vadd.f32 %v868, %v869
      %v883 = vadd.f32 %v882, %v870
      %884 = vadd.xlane.f32.xlu0 %v883
      %v885 = vpop.xlane.xlu0 %884
      %v886 = vsel %vm638, %v871, 0.0
      %v887 = vsel %vm638, %v872, 0.0
      %v888 = vadd.f32 %v886, %v887
      %v889 = vsel %vm638, %v873, 0.0
      %v890 = vadd.f32 %v888, %v889
      %891 = vadd.xlane.f32.xlu0 %v890
      %v892 = vpop.xlane.xlu0 %891
      %v893 = vrcp.pop 384.0
      %v894 = vmul.f32 384.0, %v893
      %v895 = vsub.f32 1.0, %v894
      %v896 = vmul.f32 %v893, %v895
      %v897 = vadd.f32 %v893, %v896
      %vm898 = vweird.f32 %v893
      %v899 = vsel %vm898, %v893, %v897
      %v900 = vmul.f32 %v881, %v899
      %v901 = vmul.f32 %v885, %v899
      %v902 = vmul.f32 %v892, %v899
      %v903 = vsub.f32 %v865, %v900
      %v904 = vsub.f32 %v866, %v900
      %v905 = vsub.f32 %v867, %v900
      %v906 = vsub.f32 %v868, %v901
      %v907 = vsub.f32 %v869, %v901
      %v908 = vsub.f32 %v870, %v901
      %v909 = vsub.f32 %v871, %v902
      %v910 = vsub.f32 %v872, %v902
      %v911 = vsub.f32 %v873, %v902
      %v912 = vmul.f32 %v903, %v903
      %v913 = vmul.f32 %v904, %v904
      %v914 = vmul.f32 %v905, %v905
      %v915 = vmul.f32 %v906, %v906
      %v916 = vmul.f32 %v907, %v907
      %v917 = vmul.f32 %v908, %v908
      %v918 = vmul.f32 %v909, %v909
      %v919 = vmul.f32 %v910, %v910
      %v920 = vmul.f32 %v911, %v911
      %v921 = vsel %vm874, %v912, 0.0
      %v922 = vsel %vm874, %v913, 0.0
      %v923 = vadd.f32 %v921, %v922
      %v924 = vsel %vm874, %v914, 0.0
      %v925 = vadd.f32 %v923, %v924
      %926 = vadd.xlane.f32.xlu0 %v925
      %v927 = vpop.xlane.xlu0 %926
      %v928 = vadd.f32 %v915, %v916
      %v929 = vadd.f32 %v928, %v917
      %930 = vadd.xlane.f32.xlu0 %v929
      %v931 = vpop.xlane.xlu0 %930
      %v932 = vsel %vm638, %v918, 0.0
      %v933 = vsel %vm638, %v919, 0.0
      %v934 = vadd.f32 %v932, %v933
      %v935 = vsel %vm638, %v920, 0.0
      %v936 = vadd.f32 %v934, %v935
      %937 = vadd.xlane.f32.xlu0 %v936
      %v938 = vpop.xlane.xlu0 %937
      %v939 = vmul.f32 %v927, %v899
      %v940 = vmul.f32 %v931, %v899
      %v941 = vmul.f32 %v938, %v899
      %v942 = vadd.f32 %v939, 1e-06
      %v943 = vadd.f32 %v940, 1e-06
      %v944 = vadd.f32 %v941, 1e-06
      %v945 = vrsqrt.pop %v942
      %v946 = vmul.f32 %v945, %v942
      %v947 = vmul.f32 %v946, %v945
      %v948 = vmul.f32 0.5, %v947
      %v949 = vsub.f32 1.5, %v948
      %v950 = vmul.f32 %v945, %v949
      %vm951 = vweird.f32 %v942
      %vm952 = vweird.f32 %v945
      %vm953 = vmor %vm951, %vm952
      %v954 = vsel %vm953, %v945, %v950
      %v955 = vrsqrt.pop %v943
      %v956 = vmul.f32 %v955, %v943
      %v957 = vmul.f32 %v956, %v955
      %v958 = vmul.f32 0.5, %v957
      %v959 = vsub.f32 1.5, %v958
      %v960 = vmul.f32 %v955, %v959
      %vm961 = vweird.f32 %v943
      %vm962 = vweird.f32 %v955
      %vm963 = vmor %vm961, %vm962
      %v964 = vsel %vm963, %v955, %v960
      %v965 = vrsqrt.pop %v944
      %v966 = vmul.f32 %v965, %v944
      %v967 = vmul.f32 %v966, %v965
      %v968 = vmul.f32 0.5, %v967
      %v969 = vsub.f32 1.5, %v968
      %v970 = vmul.f32 %v965, %v969
      %vm971 = vweird.f32 %v944
      %vm972 = vweird.f32 %v965
      %vm973 = vmor %vm971, %vm972
      %v974 = vsel %vm973, %v965, %v970
      %v975 = vmul.f32 %v903, %v954
      %v976 = vmul.f32 %v904, %v954
      %v977 = vmul.f32 %v905, %v954
      %v978 = vmul.f32 %v906, %v964
      %v979 = vmul.f32 %v907, %v964
      %v980 = vmul.f32 %v908, %v964
      %v981 = vmul.f32 %v909, %v974
      %v982 = vmul.f32 %v910, %v974
      %v983 = vmul.f32 %v911, %v974
      %v984 = vld [vmem:[%s3] sm:$0x7]
      %v986 = vperm.slane %v984, 0
      %v987 = vperm.slane %v984, 1
      %v988 = vperm.slane %v984, 2
      %v992 = vmul.f32 %v975, %v986
      %v993 = vmul.f32 %v976, %v987
      %v994 = vmul.f32 %v977, %v988
      %v995 = vmul.f32 %v978, %v986
      %v996 = vmul.f32 %v979, %v987
      %v997 = vmul.f32 %v980, %v988
      %v998 = vmul.f32 %v981, %v986
      %v999 = vmul.f32 %v982, %v987
      %v1000 = vmul.f32 %v983, %v988
      %v1001 = vld [vmem:[%s4] sm:$0x7]
      %v1003 = vperm.slane %v1001, 0
      %v1004 = vperm.slane %v1001, 1
      %v1005 = vperm.slane %v1001, 2
      %v1009 = vadd.f32 %v992, %v1003
      %v1010 = vadd.f32 %v993, %v1004
      %v1011 = vadd.f32 %v994, %v1005
      %v1012 = vadd.f32 %v995, %v1003
      %v1013 = vadd.f32 %v996, %v1004
      %v1014 = vadd.f32 %v997, %v1005
      %v1015 = vadd.f32 %v998, %v1003
      %v1016 = vadd.f32 %v999, %v1004
      %v1017 = vadd.f32 %v1000, %v1005
      %v1018 = vld [vmem:[%s5] sm:$0xff]
      %v1019 = vld [vmem:[%s5 + $0x8] sm:$0xff]
      %v1020 = vld [vmem:[%s5 + $0x10] sm:$0xff]
      %v1021 = vld [vmem:[%s5 + $0x18] sm:$0xff]
      %v1022 = vld [vmem:[%s5 + $0x20] sm:$0xff]
      %v1023 = vld [vmem:[%s5 + $0x28] sm:$0xff]
      %v1024 = vld [vmem:[%s5 + $0x30] sm:$0xff]
      %v1025 = vld [vmem:[%s5 + $0x38] sm:$0xff]
      %v1026 = vld [vmem:[%s5 + $0x40] sm:$0xff]
      %v1027 = vld [vmem:[%s5 + $0x48] sm:$0xff]
      %v1028 = vld [vmem:[%s5 + $0x50] sm:$0xff]
      %v1029 = vld [vmem:[%s5 + $0x58] sm:$0xff]
      %v1030 = vld [vmem:[%s5 + $0x60] sm:$0xff]
      %v1031 = vld [vmem:[%s5 + $0x68] sm:$0xff]
      %v1032 = vld [vmem:[%s5 + $0x70] sm:$0xff]
      %v1033 = vld [vmem:[%s5 + $0x78] sm:$0xff]
      %v1034 = vld [vmem:[%s5 + $0x80] sm:$0xff]
      %v1035 = vld [vmem:[%s5 + $0x88] sm:$0xff]
      %v1036 = vld [vmem:[%s5 + $0x90] sm:$0xff]
      %v1037 = vld [vmem:[%s5 + $0x98] sm:$0xff]
      %v1038 = vld [vmem:[%s5 + $0xa0] sm:$0xff]
      %v1039 = vld [vmem:[%s5 + $0xa8] sm:$0xff]
      %v1040 = vld [vmem:[%s5 + $0xb0] sm:$0xff]
      %v1041 = vld [vmem:[%s5 + $0xb8] sm:$0xff]
      %v1042 = vld [vmem:[%s5 + $0xc0] sm:$0xff]
      %v1043 = vld [vmem:[%s5 + $0xc8] sm:$0xff]
      %v1044 = vld [vmem:[%s5 + $0xd0] sm:$0xff]
      %v1045 = vld [vmem:[%s5 + $0xd8] sm:$0xff]
      %v1046 = vld [vmem:[%s5 + $0xe0] sm:$0xff]
      %v1047 = vld [vmem:[%s5 + $0xe8] sm:$0xff]
      %v1048 = vld [vmem:[%s5 + $0xf0] sm:$0xff]
      %v1049 = vld [vmem:[%s5 + $0xf8] sm:$0xff]
      %v1050 = vld [vmem:[%s5 + $0x100] sm:$0xff]
      %v1051 = vld [vmem:[%s5 + $0x108] sm:$0xff]
      %v1052 = vld [vmem:[%s5 + $0x110] sm:$0xff]
      %v1053 = vld [vmem:[%s5 + $0x118] sm:$0xff]
      %v1054 = vld [vmem:[%s5 + $0x120] sm:$0xff]
      %v1055 = vld [vmem:[%s5 + $0x128] sm:$0xff]
      %v1056 = vld [vmem:[%s5 + $0x130] sm:$0xff]
      %v1057 = vld [vmem:[%s5 + $0x138] sm:$0xff]
      %v1058 = vld [vmem:[%s5 + $0x140] sm:$0xff]
      %v1059 = vld [vmem:[%s5 + $0x148] sm:$0xff]
      %v1060 = vld [vmem:[%s5 + $0x150] sm:$0xff]
      %v1061 = vld [vmem:[%s5 + $0x158] sm:$0xff]
      %v1062 = vld [vmem:[%s5 + $0x160] sm:$0xff]
      %v1063 = vld [vmem:[%s5 + $0x168] sm:$0xff]
      %v1064 = vld [vmem:[%s5 + $0x170] sm:$0xff]
      %v1065 = vld [vmem:[%s5 + $0x178] sm:$0xff]
      %v1066 = vld [vmem:[%s5 + $0x180] sm:$0xff]
      %v1067 = vld [vmem:[%s5 + $0x188] sm:$0xff]
      %v1068 = vld [vmem:[%s5 + $0x190] sm:$0xff]
      %v1069 = vld [vmem:[%s5 + $0x198] sm:$0xff]
      %v1070 = vld [vmem:[%s5 + $0x1a0] sm:$0xff]
      %v1071 = vld [vmem:[%s5 + $0x1a8] sm:$0xff]
      %v1072 = vld [vmem:[%s5 + $0x1b0] sm:$0xff]
      %v1073 = vld [vmem:[%s5 + $0x1b8] sm:$0xff]
      %v1074 = vld [vmem:[%s5 + $0x1c0] sm:$0xff]
      %v1075 = vld [vmem:[%s5 + $0x1c8] sm:$0xff]
      %v1076 = vld [vmem:[%s5 + $0x1d0] sm:$0xff]
      %v1077 = vld [vmem:[%s5 + $0x1d8] sm:$0xff]
      %v1078 = vld [vmem:[%s5 + $0x1e0] sm:$0xff]
      %v1079 = vld [vmem:[%s5 + $0x1e8] sm:$0xff]
      %v1080 = vld [vmem:[%s5 + $0x1f0] sm:$0xff]
      %v1081 = vld [vmem:[%s5 + $0x1f8] sm:$0xff]
      %v1082 = vld [vmem:[%s5 + $0x200] sm:$0xff]
      %v1083 = vld [vmem:[%s5 + $0x208] sm:$0xff]
      %v1084 = vld [vmem:[%s5 + $0x210] sm:$0xff]
      %v1085 = vld [vmem:[%s5 + $0x218] sm:$0xff]
      %v1086 = vld [vmem:[%s5 + $0x220] sm:$0xff]
      %v1087 = vld [vmem:[%s5 + $0x228] sm:$0xff]
      %v1088 = vld [vmem:[%s5 + $0x230] sm:$0xff]
      %v1089 = vld [vmem:[%s5 + $0x238] sm:$0xff]
      %v1090 = vld [vmem:[%s5 + $0x240] sm:$0xff]
      %v1091 = vld [vmem:[%s5 + $0x248] sm:$0xff]
      %v1092 = vld [vmem:[%s5 + $0x250] sm:$0xff]
      %v1093 = vld [vmem:[%s5 + $0x258] sm:$0xff]
      %v1094 = vld [vmem:[%s5 + $0x260] sm:$0xff]
      %v1095 = vld [vmem:[%s5 + $0x268] sm:$0xff]
      %v1096 = vld [vmem:[%s5 + $0x270] sm:$0xff]
      %v1097 = vld [vmem:[%s5 + $0x278] sm:$0xff]
      %v1098 = vld [vmem:[%s5 + $0x280] sm:$0xff]
      %v1099 = vld [vmem:[%s5 + $0x288] sm:$0xff]
      %v1100 = vld [vmem:[%s5 + $0x290] sm:$0xff]
      %v1101 = vld [vmem:[%s5 + $0x298] sm:$0xff]
      %v1102 = vld [vmem:[%s5 + $0x2a0] sm:$0xff]
      %v1103 = vld [vmem:[%s5 + $0x2a8] sm:$0xff]
      %v1104 = vld [vmem:[%s5 + $0x2b0] sm:$0xff]
      %v1105 = vld [vmem:[%s5 + $0x2b8] sm:$0xff]
      %v1106 = vld [vmem:[%s5 + $0x2c0] sm:$0xff]
      %v1107 = vld [vmem:[%s5 + $0x2c8] sm:$0xff]
      %v1108 = vld [vmem:[%s5 + $0x2d0] sm:$0xff]
      %v1109 = vld [vmem:[%s5 + $0x2d8] sm:$0xff]
      %v1110 = vld [vmem:[%s5 + $0x2e0] sm:$0xff]
      %v1111 = vld [vmem:[%s5 + $0x2e8] sm:$0xff]
      %v1112 = vld [vmem:[%s5 + $0x2f0] sm:$0xff]
      %v1113 = vld [vmem:[%s5 + $0x2f8] sm:$0xff]
      %v1114 = vld [vmem:[%s5 + $0x300] sm:$0xff]
      %v1115 = vld [vmem:[%s5 + $0x308] sm:$0xff]
      %v1116 = vld [vmem:[%s5 + $0x310] sm:$0xff]
      %v1117 = vld [vmem:[%s5 + $0x318] sm:$0xff]
      %v1118 = vld [vmem:[%s5 + $0x320] sm:$0xff]
      %v1119 = vld [vmem:[%s5 + $0x328] sm:$0xff]
      %v1120 = vld [vmem:[%s5 + $0x330] sm:$0xff]
      %v1121 = vld [vmem:[%s5 + $0x338] sm:$0xff]
      %v1122 = vld [vmem:[%s5 + $0x340] sm:$0xff]
      %v1123 = vld [vmem:[%s5 + $0x348] sm:$0xff]
      %v1124 = vld [vmem:[%s5 + $0x350] sm:$0xff]
      %v1125 = vld [vmem:[%s5 + $0x358] sm:$0xff]
      %v1126 = vld [vmem:[%s5 + $0x360] sm:$0xff]
      %v1127 = vld [vmem:[%s5 + $0x368] sm:$0xff]
      %v1128 = vld [vmem:[%s5 + $0x370] sm:$0xff]
      %v1129 = vld [vmem:[%s5 + $0x378] sm:$0xff]
      %v1130 = vld [vmem:[%s5 + $0x380] sm:$0xff]
      %v1131 = vld [vmem:[%s5 + $0x388] sm:$0xff]
      %v1132 = vld [vmem:[%s5 + $0x390] sm:$0xff]
      %v1133 = vld [vmem:[%s5 + $0x398] sm:$0xff]
      %v1134 = vld [vmem:[%s5 + $0x3a0] sm:$0xff]
      %v1135 = vld [vmem:[%s5 + $0x3a8] sm:$0xff]
      %v1136 = vld [vmem:[%s5 + $0x3b0] sm:$0xff]
      %v1137 = vld [vmem:[%s5 + $0x3b8] sm:$0xff]
      %v1138 = vld [vmem:[%s5 + $0x3c0] sm:$0xff]
      %v1139 = vld [vmem:[%s5 + $0x3c8] sm:$0xff]
      %v1140 = vld [vmem:[%s5 + $0x3d0] sm:$0xff]
      %v1141 = vld [vmem:[%s5 + $0x3d8] sm:$0xff]
      %v1142 = vld [vmem:[%s5 + $0x3e0] sm:$0xff]
      %v1143 = vld [vmem:[%s5 + $0x3e8] sm:$0xff]
      %v1144 = vld [vmem:[%s5 + $0x3f0] sm:$0xff]
      %v1145 = vld [vmem:[%s5 + $0x3f8] sm:$0xff]
      %v1146 = vld [vmem:[%s5 + $0x400] sm:$0xff]
      %v1147 = vld [vmem:[%s5 + $0x408] sm:$0xff]
      %v1148 = vld [vmem:[%s5 + $0x410] sm:$0xff]
      %v1149 = vld [vmem:[%s5 + $0x418] sm:$0xff]
      %v1150 = vld [vmem:[%s5 + $0x420] sm:$0xff]
      %v1151 = vld [vmem:[%s5 + $0x428] sm:$0xff]
      %v1152 = vld [vmem:[%s5 + $0x430] sm:$0xff]
      %v1153 = vld [vmem:[%s5 + $0x438] sm:$0xff]
      %v1154 = vld [vmem:[%s5 + $0x440] sm:$0xff]
      %v1155 = vld [vmem:[%s5 + $0x448] sm:$0xff]
      %v1156 = vld [vmem:[%s5 + $0x450] sm:$0xff]
      %v1157 = vld [vmem:[%s5 + $0x458] sm:$0xff]
      %v1158 = vld [vmem:[%s5 + $0x460] sm:$0xff]
      %v1159 = vld [vmem:[%s5 + $0x468] sm:$0xff]
      %v1160 = vld [vmem:[%s5 + $0x470] sm:$0xff]
      %v1161 = vld [vmem:[%s5 + $0x478] sm:$0xff]
      %v1162 = vld [vmem:[%s5 + $0x480] sm:$0xff]
      %v1163 = vld [vmem:[%s5 + $0x488] sm:$0xff]
      %v1164 = vld [vmem:[%s5 + $0x490] sm:$0xff]
      %v1165 = vld [vmem:[%s5 + $0x498] sm:$0xff]
      %v1166 = vld [vmem:[%s5 + $0x4a0] sm:$0xff]
      %v1167 = vld [vmem:[%s5 + $0x4a8] sm:$0xff]
      %v1168 = vld [vmem:[%s5 + $0x4b0] sm:$0xff]
      %v1169 = vld [vmem:[%s5 + $0x4b8] sm:$0xff]
      %v1170 = vld [vmem:[%s5 + $0x4c0] sm:$0xff]
      %v1171 = vld [vmem:[%s5 + $0x4c8] sm:$0xff]
      %v1172 = vld [vmem:[%s5 + $0x4d0] sm:$0xff]
      %v1173 = vld [vmem:[%s5 + $0x4d8] sm:$0xff]
      %v1174 = vld [vmem:[%s5 + $0x4e0] sm:$0xff]
      %v1175 = vld [vmem:[%s5 + $0x4e8] sm:$0xff]
      %v1176 = vld [vmem:[%s5 + $0x4f0] sm:$0xff]
      %v1177 = vld [vmem:[%s5 + $0x4f8] sm:$0xff]
      %v1178 = vld [vmem:[%s5 + $0x500] sm:$0xff]
      %v1179 = vld [vmem:[%s5 + $0x508] sm:$0xff]
      %v1180 = vld [vmem:[%s5 + $0x510] sm:$0xff]
      %v1181 = vld [vmem:[%s5 + $0x518] sm:$0xff]
      %v1182 = vld [vmem:[%s5 + $0x520] sm:$0xff]
      %v1183 = vld [vmem:[%s5 + $0x528] sm:$0xff]
      %v1184 = vld [vmem:[%s5 + $0x530] sm:$0xff]
      %v1185 = vld [vmem:[%s5 + $0x538] sm:$0xff]
      %v1186 = vld [vmem:[%s5 + $0x540] sm:$0xff]
      %v1187 = vld [vmem:[%s5 + $0x548] sm:$0xff]
      %v1188 = vld [vmem:[%s5 + $0x550] sm:$0xff]
      %v1189 = vld [vmem:[%s5 + $0x558] sm:$0xff]
      %v1190 = vld [vmem:[%s5 + $0x560] sm:$0xff]
      %v1191 = vld [vmem:[%s5 + $0x568] sm:$0xff]
      %v1192 = vld [vmem:[%s5 + $0x570] sm:$0xff]
      %v1193 = vld [vmem:[%s5 + $0x578] sm:$0xff]
      %v1194 = vld [vmem:[%s5 + $0x580] sm:$0xff]
      %v1195 = vld [vmem:[%s5 + $0x588] sm:$0xff]
      %v1196 = vld [vmem:[%s5 + $0x590] sm:$0xff]
      %v1197 = vld [vmem:[%s5 + $0x598] sm:$0xff]
      %v1198 = vld [vmem:[%s5 + $0x5a0] sm:$0xff]
      %v1199 = vld [vmem:[%s5 + $0x5a8] sm:$0xff]
      %v1200 = vld [vmem:[%s5 + $0x5b0] sm:$0xff]
      %v1201 = vld [vmem:[%s5 + $0x5b8] sm:$0xff]
      %v1202 = vld [vmem:[%s5 + $0x5c0] sm:$0xff]
      %v1203 = vld [vmem:[%s5 + $0x5c8] sm:$0xff]
      %v1204 = vld [vmem:[%s5 + $0x5d0] sm:$0xff]
      %v1205 = vld [vmem:[%s5 + $0x5d8] sm:$0xff]
      %v1206 = vld [vmem:[%s5 + $0x5e0] sm:$0xff]
      %v1207 = vld [vmem:[%s5 + $0x5e8] sm:$0xff]
      %v1208 = vld [vmem:[%s5 + $0x5f0] sm:$0xff]
      %v1209 = vld [vmem:[%s5 + $0x5f8] sm:$0xff]
      %v1210 = vpack.c.bf16 %v1012, %v1009
      %v1211 = vpack.c.bf16 %v1013, %v1010
      %v1212 = vpack.c.bf16 %v1014, %v1011
      %v1213 = vpack.c.bf16 %v1015, %v1015
      %v1214 = vpack.c.bf16 %v1016, %v1016
      %v1215 = vpack.c.bf16 %v1017, %v1017
      %v1216 = vld [vmem:[%s6] sm:$0xff]
      %v1218 = vperm.slane %v1216, 0
      %v1219 = vperm.slane %v1216, 1
      %v1220 = vperm.slane %v1216, 2
      %v1221 = vperm.slane %v1216, 3
      %v1222 = vperm.slane %v1216, 4
      %v1223 = vperm.slane %v1216, 5
      %v1224 = vperm.slane %v1216, 6
      %v1225 = vperm.slane %v1216, 7
      %vm1234 = vsmask.f32 5376
      %v1236 = vshrl.u32 %v1210, 16
      %v1238 = vrot.slane %v1236, 2
      %v1239 = vshll.u32 %v1210, 16
      %v1241 = vrot.slane %v1239, 3
      %v1242 = vor.u32 %v1238, %v1241
      %v1244 = vshrl.u32 %v1213, 16
      %v1246 = vrot.slane %v1244, 2
      %v1247 = vshll.u32 %v1213, 16
      %v1249 = vrot.slane %v1247, 3
      %v1250 = vor.u32 %v1246, %v1249
      %v1251 = vsel %vm1234, %v1242, %v1250
      %v1253 = vshrl.u32 %v1211, 16
      %v1255 = vrot.slane %v1253, 2
      %v1256 = vshll.u32 %v1211, 16
      %v1258 = vrot.slane %v1256, 3
      %v1259 = vor.u32 %v1255, %v1258
      %v1261 = vshrl.u32 %v1214, 16
      %v1263 = vrot.slane %v1261, 2
      %v1264 = vshll.u32 %v1214, 16
      %v1266 = vrot.slane %v1264, 3
      %v1267 = vor.u32 %v1263, %v1266
      %v1268 = vsel %vm1234, %v1259, %v1267
      %v1270 = vshrl.u32 %v1212, 16
      %v1272 = vrot.slane %v1270, 2
      %v1273 = vshll.u32 %v1212, 16
      %v1275 = vrot.slane %v1273, 3
      %v1276 = vor.u32 %v1272, %v1275
      %v1278 = vshrl.u32 %v1215, 16
      %v1280 = vrot.slane %v1278, 2
      %v1281 = vshll.u32 %v1215, 16
      %v1283 = vrot.slane %v1281, 3
      %v1284 = vor.u32 %v1280, %v1283
      %v1285 = vsel %vm1234, %v1276, %v1284
      %v1481 = vunpack.c.l.b16 %v1018
      %v1482 = vunpack.c.h.b16 %v1018
      %v1483 = vunpack.c.l.b16 %v1019
      %v1484 = vunpack.c.h.b16 %v1019
      %v1485 = vunpack.c.l.b16 %v1020
      %v1486 = vunpack.c.h.b16 %v1020
      %v1487 = vunpack.c.l.b16 %v1021
      %v1488 = vunpack.c.h.b16 %v1021
      %v1489 = vunpack.c.l.b16 %v1022
      %v1490 = vunpack.c.h.b16 %v1022
      %v1491 = vunpack.c.l.b16 %v1023
      %v1492 = vunpack.c.h.b16 %v1023
      %v1493 = vunpack.c.l.b16 %v1024
      %v1494 = vunpack.c.h.b16 %v1024
      %v1495 = vunpack.c.l.b16 %v1025
      %v1496 = vunpack.c.h.b16 %v1025
      %v1497 = vunpack.c.l.b16 %v1026
      %v1498 = vunpack.c.h.b16 %v1026
      %v1499 = vunpack.c.l.b16 %v1027
      %v1500 = vunpack.c.h.b16 %v1027
      %v1501 = vunpack.c.l.b16 %v1028
      %v1502 = vunpack.c.h.b16 %v1028
      %v1503 = vunpack.c.l.b16 %v1029
      %v1504 = vunpack.c.h.b16 %v1029
      %v1505 = vunpack.c.l.b16 %v1030
      %v1506 = vunpack.c.h.b16 %v1030
      %v1507 = vunpack.c.l.b16 %v1031
      %v1508 = vunpack.c.h.b16 %v1031
      %v1509 = vunpack.c.l.b16 %v1032
      %v1510 = vunpack.c.h.b16 %v1032
      %v1511 = vunpack.c.l.b16 %v1033
      %v1512 = vunpack.c.h.b16 %v1033
      %v1513 = vunpack.c.l.b16 %v1034
      %v1514 = vunpack.c.h.b16 %v1034
      %v1515 = vunpack.c.l.b16 %v1035
      %v1516 = vunpack.c.h.b16 %v1035
      %v1517 = vunpack.c.l.b16 %v1036
      %v1518 = vunpack.c.h.b16 %v1036
      %v1519 = vunpack.c.l.b16 %v1037
      %v1520 = vunpack.c.h.b16 %v1037
      %v1521 = vunpack.c.l.b16 %v1038
      %v1522 = vunpack.c.h.b16 %v1038
      %v1523 = vunpack.c.l.b16 %v1039
      %v1524 = vunpack.c.h.b16 %v1039
      %v1525 = vunpack.c.l.b16 %v1040
      %v1526 = vunpack.c.h.b16 %v1040
      %v1527 = vunpack.c.l.b16 %v1041
      %v1528 = vunpack.c.h.b16 %v1041
      %v1529 = vunpack.c.l.b16 %v1042
      %v1530 = vunpack.c.h.b16 %v1042
      %v1531 = vunpack.c.l.b16 %v1043
      %v1532 = vunpack.c.h.b16 %v1043
      %v1533 = vunpack.c.l.b16 %v1044
      %v1534 = vunpack.c.h.b16 %v1044
      %v1535 = vunpack.c.l.b16 %v1045
      %v1536 = vunpack.c.h.b16 %v1045
      %v1537 = vunpack.c.l.b16 %v1046
      %v1538 = vunpack.c.h.b16 %v1046
      %v1539 = vunpack.c.l.b16 %v1047
      %v1540 = vunpack.c.h.b16 %v1047
      %v1541 = vunpack.c.l.b16 %v1048
      %v1542 = vunpack.c.h.b16 %v1048
      %v1543 = vunpack.c.l.b16 %v1049
      %v1544 = vunpack.c.h.b16 %v1049
      %v1545 = vunpack.c.l.b16 %v1050
      %v1546 = vunpack.c.h.b16 %v1050
      %v1547 = vunpack.c.l.b16 %v1051
      %v1548 = vunpack.c.h.b16 %v1051
      %v1549 = vunpack.c.l.b16 %v1052
      %v1550 = vunpack.c.h.b16 %v1052
      %v1551 = vunpack.c.l.b16 %v1053
      %v1552 = vunpack.c.h.b16 %v1053
      %v1553 = vunpack.c.l.b16 %v1054
      %v1554 = vunpack.c.h.b16 %v1054
      %v1555 = vunpack.c.l.b16 %v1055
      %v1556 = vunpack.c.h.b16 %v1055
      %v1557 = vunpack.c.l.b16 %v1056
      %v1558 = vunpack.c.h.b16 %v1056
      %v1559 = vunpack.c.l.b16 %v1057
      %v1560 = vunpack.c.h.b16 %v1057
      %v1561 = vunpack.c.l.b16 %v1058
      %v1562 = vunpack.c.h.b16 %v1058
      %v1563 = vunpack.c.l.b16 %v1059
      %v1564 = vunpack.c.h.b16 %v1059
      %v1565 = vunpack.c.l.b16 %v1060
      %v1566 = vunpack.c.h.b16 %v1060
      %v1567 = vunpack.c.l.b16 %v1061
      %v1568 = vunpack.c.h.b16 %v1061
      %v1569 = vunpack.c.l.b16 %v1062
      %v1570 = vunpack.c.h.b16 %v1062
      %v1571 = vunpack.c.l.b16 %v1063
      %v1572 = vunpack.c.h.b16 %v1063
      %v1573 = vunpack.c.l.b16 %v1064
      %v1574 = vunpack.c.h.b16 %v1064
      %v1575 = vunpack.c.l.b16 %v1065
      %v1576 = vunpack.c.h.b16 %v1065
      %v1577 = vunpack.c.l.b16 %v1066
      %v1578 = vunpack.c.h.b16 %v1066
      %v1579 = vunpack.c.l.b16 %v1067
      %v1580 = vunpack.c.h.b16 %v1067
      %v1581 = vunpack.c.l.b16 %v1068
      %v1582 = vunpack.c.h.b16 %v1068
      %v1583 = vunpack.c.l.b16 %v1069
      %v1584 = vunpack.c.h.b16 %v1069
      %v1585 = vunpack.c.l.b16 %v1070
      %v1586 = vunpack.c.h.b16 %v1070
      %v1587 = vunpack.c.l.b16 %v1071
      %v1588 = vunpack.c.h.b16 %v1071
      %v1589 = vunpack.c.l.b16 %v1072
      %v1590 = vunpack.c.h.b16 %v1072
      %v1591 = vunpack.c.l.b16 %v1073
      %v1592 = vunpack.c.h.b16 %v1073
      %v1593 = vunpack.c.l.b16 %v1074
      %v1594 = vunpack.c.h.b16 %v1074
      %v1595 = vunpack.c.l.b16 %v1075
      %v1596 = vunpack.c.h.b16 %v1075
      %v1597 = vunpack.c.l.b16 %v1076
      %v1598 = vunpack.c.h.b16 %v1076
      %v1599 = vunpack.c.l.b16 %v1077
      %v1600 = vunpack.c.h.b16 %v1077
      %v1601 = vunpack.c.l.b16 %v1078
      %v1602 = vunpack.c.h.b16 %v1078
      %v1603 = vunpack.c.l.b16 %v1079
      %v1604 = vunpack.c.h.b16 %v1079
      %v1605 = vunpack.c.l.b16 %v1080
      %v1606 = vunpack.c.h.b16 %v1080
      %v1607 = vunpack.c.l.b16 %v1081
      %v1608 = vunpack.c.h.b16 %v1081
      %v1609 = vunpack.c.l.b16 %v1082
      %v1610 = vunpack.c.h.b16 %v1082
      %v1611 = vunpack.c.l.b16 %v1083
      %v1612 = vunpack.c.h.b16 %v1083
      %v1613 = vunpack.c.l.b16 %v1084
      %v1614 = vunpack.c.h.b16 %v1084
      %v1615 = vunpack.c.l.b16 %v1085
      %v1616 = vunpack.c.h.b16 %v1085
      %v1617 = vunpack.c.l.b16 %v1086
      %v1618 = vunpack.c.h.b16 %v1086
      %v1619 = vunpack.c.l.b16 %v1087
      %v1620 = vunpack.c.h.b16 %v1087
      %v1621 = vunpack.c.l.b16 %v1088
      %v1622 = vunpack.c.h.b16 %v1088
      %v1623 = vunpack.c.l.b16 %v1089
      %v1624 = vunpack.c.h.b16 %v1089
      %v1625 = vunpack.c.l.b16 %v1090
      %v1626 = vunpack.c.h.b16 %v1090
      %v1627 = vunpack.c.l.b16 %v1091
      %v1628 = vunpack.c.h.b16 %v1091
      %v1629 = vunpack.c.l.b16 %v1092
      %v1630 = vunpack.c.h.b16 %v1092
      %v1631 = vunpack.c.l.b16 %v1093
      %v1632 = vunpack.c.h.b16 %v1093
      %v1633 = vunpack.c.l.b16 %v1094
      %v1634 = vunpack.c.h.b16 %v1094
      %v1635 = vunpack.c.l.b16 %v1095
      %v1636 = vunpack.c.h.b16 %v1095
      %v1637 = vunpack.c.l.b16 %v1096
      %v1638 = vunpack.c.h.b16 %v1096
      %v1639 = vunpack.c.l.b16 %v1097
      %v1640 = vunpack.c.h.b16 %v1097
      %v1641 = vunpack.c.l.b16 %v1098
      %v1642 = vunpack.c.h.b16 %v1098
      %v1643 = vunpack.c.l.b16 %v1099
      %v1644 = vunpack.c.h.b16 %v1099
      %v1645 = vunpack.c.l.b16 %v1100
      %v1646 = vunpack.c.h.b16 %v1100
      %v1647 = vunpack.c.l.b16 %v1101
      %v1648 = vunpack.c.h.b16 %v1101
      %v1649 = vunpack.c.l.b16 %v1102
      %v1650 = vunpack.c.h.b16 %v1102
      %v1651 = vunpack.c.l.b16 %v1103
      %v1652 = vunpack.c.h.b16 %v1103
      %v1653 = vunpack.c.l.b16 %v1104
      %v1654 = vunpack.c.h.b16 %v1104
      %v1655 = vunpack.c.l.b16 %v1105
      %v1656 = vunpack.c.h.b16 %v1105
      %v1657 = vunpack.c.l.b16 %v1106
      %v1658 = vunpack.c.h.b16 %v1106
      %v1659 = vunpack.c.l.b16 %v1107
      %v1660 = vunpack.c.h.b16 %v1107
      %v1661 = vunpack.c.l.b16 %v1108
      %v1662 = vunpack.c.h.b16 %v1108
      %v1663 = vunpack.c.l.b16 %v1109
      %v1664 = vunpack.c.h.b16 %v1109
      %v1665 = vunpack.c.l.b16 %v1110
      %v1666 = vunpack.c.h.b16 %v1110
      %v1667 = vunpack.c.l.b16 %v1111
      %v1668 = vunpack.c.h.b16 %v1111
      %v1669 = vunpack.c.l.b16 %v1112
      %v1670 = vunpack.c.h.b16 %v1112
      %v1671 = vunpack.c.l.b16 %v1113
      %v1672 = vunpack.c.h.b16 %v1113
      %v1673 = vunpack.c.l.b16 %v1114
      %v1674 = vunpack.c.h.b16 %v1114
      %v1675 = vunpack.c.l.b16 %v1115
      %v1676 = vunpack.c.h.b16 %v1115
      %v1677 = vunpack.c.l.b16 %v1116
      %v1678 = vunpack.c.h.b16 %v1116
      %v1679 = vunpack.c.l.b16 %v1117
      %v1680 = vunpack.c.h.b16 %v1117
      %v1681 = vunpack.c.l.b16 %v1118
      %v1682 = vunpack.c.h.b16 %v1118
      %v1683 = vunpack.c.l.b16 %v1119
      %v1684 = vunpack.c.h.b16 %v1119
      %v1685 = vunpack.c.l.b16 %v1120
      %v1686 = vunpack.c.h.b16 %v1120
      %v1687 = vunpack.c.l.b16 %v1121
      %v1688 = vunpack.c.h.b16 %v1121
      %v1689 = vunpack.c.l.b16 %v1122
      %v1690 = vunpack.c.h.b16 %v1122
      %v1691 = vunpack.c.l.b16 %v1123
      %v1692 = vunpack.c.h.b16 %v1123
      %v1693 = vunpack.c.l.b16 %v1124
      %v1694 = vunpack.c.h.b16 %v1124
      %v1695 = vunpack.c.l.b16 %v1125
      %v1696 = vunpack.c.h.b16 %v1125
      %v1697 = vunpack.c.l.b16 %v1126
      %v1698 = vunpack.c.h.b16 %v1126
      %v1699 = vunpack.c.l.b16 %v1127
      %v1700 = vunpack.c.h.b16 %v1127
      %v1701 = vunpack.c.l.b16 %v1128
      %v1702 = vunpack.c.h.b16 %v1128
      %v1703 = vunpack.c.l.b16 %v1129
      %v1704 = vunpack.c.h.b16 %v1129
      %v1705 = vunpack.c.l.b16 %v1130
      %v1706 = vunpack.c.h.b16 %v1130
      %v1707 = vunpack.c.l.b16 %v1131
      %v1708 = vunpack.c.h.b16 %v1131
      %v1709 = vunpack.c.l.b16 %v1132
      %v1710 = vunpack.c.h.b16 %v1132
      %v1711 = vunpack.c.l.b16 %v1133
      %v1712 = vunpack.c.h.b16 %v1133
      %v1713 = vunpack.c.l.b16 %v1134
      %v1714 = vunpack.c.h.b16 %v1134
      %v1715 = vunpack.c.l.b16 %v1135
      %v1716 = vunpack.c.h.b16 %v1135
      %v1717 = vunpack.c.l.b16 %v1136
      %v1718 = vunpack.c.h.b16 %v1136
      %v1719 = vunpack.c.l.b16 %v1137
      %v1720 = vunpack.c.h.b16 %v1137
      %v1721 = vunpack.c.l.b16 %v1138
      %v1722 = vunpack.c.h.b16 %v1138
      %v1723 = vunpack.c.l.b16 %v1139
      %v1724 = vunpack.c.h.b16 %v1139
      %v1725 = vunpack.c.l.b16 %v1140
      %v1726 = vunpack.c.h.b16 %v1140
      %v1727 = vunpack.c.l.b16 %v1141
      %v1728 = vunpack.c.h.b16 %v1141
      %v1729 = vunpack.c.l.b16 %v1142
      %v1730 = vunpack.c.h.b16 %v1142
      %v1731 = vunpack.c.l.b16 %v1143
      %v1732 = vunpack.c.h.b16 %v1143
      %v1733 = vunpack.c.l.b16 %v1144
      %v1734 = vunpack.c.h.b16 %v1144
      %v1735 = vunpack.c.l.b16 %v1145
      %v1736 = vunpack.c.h.b16 %v1145
      %v1737 = vunpack.c.l.b16 %v1146
      %v1738 = vunpack.c.h.b16 %v1146
      %v1739 = vunpack.c.l.b16 %v1147
      %v1740 = vunpack.c.h.b16 %v1147
      %v1741 = vunpack.c.l.b16 %v1148
      %v1742 = vunpack.c.h.b16 %v1148
      %v1743 = vunpack.c.l.b16 %v1149
      %v1744 = vunpack.c.h.b16 %v1149
      %v1745 = vunpack.c.l.b16 %v1150
      %v1746 = vunpack.c.h.b16 %v1150
      %v1747 = vunpack.c.l.b16 %v1151
      %v1748 = vunpack.c.h.b16 %v1151
      %v1749 = vunpack.c.l.b16 %v1152
      %v1750 = vunpack.c.h.b16 %v1152
      %v1751 = vunpack.c.l.b16 %v1153
      %v1752 = vunpack.c.h.b16 %v1153
      %v1753 = vunpack.c.l.b16 %v1154
      %v1754 = vunpack.c.h.b16 %v1154
      %v1755 = vunpack.c.l.b16 %v1155
      %v1756 = vunpack.c.h.b16 %v1155
      %v1757 = vunpack.c.l.b16 %v1156
      %v1758 = vunpack.c.h.b16 %v1156
      %v1759 = vunpack.c.l.b16 %v1157
      %v1760 = vunpack.c.h.b16 %v1157
      %v1761 = vunpack.c.l.b16 %v1158
      %v1762 = vunpack.c.h.b16 %v1158
      %v1763 = vunpack.c.l.b16 %v1159
      %v1764 = vunpack.c.h.b16 %v1159
      %v1765 = vunpack.c.l.b16 %v1160
      %v1766 = vunpack.c.h.b16 %v1160
      %v1767 = vunpack.c.l.b16 %v1161
      %v1768 = vunpack.c.h.b16 %v1161
      %v1769 = vunpack.c.l.b16 %v1162
      %v1770 = vunpack.c.h.b16 %v1162
      %v1771 = vunpack.c.l.b16 %v1163
      %v1772 = vunpack.c.h.b16 %v1163
      %v1773 = vunpack.c.l.b16 %v1164
      %v1774 = vunpack.c.h.b16 %v1164
      %v1775 = vunpack.c.l.b16 %v1165
      %v1776 = vunpack.c.h.b16 %v1165
      %v1777 = vunpack.c.l.b16 %v1166
      %v1778 = vunpack.c.h.b16 %v1166
      %v1779 = vunpack.c.l.b16 %v1167
      %v1780 = vunpack.c.h.b16 %v1167
      %v1781 = vunpack.c.l.b16 %v1168
      %v1782 = vunpack.c.h.b16 %v1168
      %v1783 = vunpack.c.l.b16 %v1169
      %v1784 = vunpack.c.h.b16 %v1169
      %v1785 = vunpack.c.l.b16 %v1170
      %v1786 = vunpack.c.h.b16 %v1170
      %v1787 = vunpack.c.l.b16 %v1171
      %v1788 = vunpack.c.h.b16 %v1171
      %v1789 = vunpack.c.l.b16 %v1172
      %v1790 = vunpack.c.h.b16 %v1172
      %v1791 = vunpack.c.l.b16 %v1173
      %v1792 = vunpack.c.h.b16 %v1173
      %v1793 = vunpack.c.l.b16 %v1174
      %v1794 = vunpack.c.h.b16 %v1174
      %v1795 = vunpack.c.l.b16 %v1175
      %v1796 = vunpack.c.h.b16 %v1175
      %v1797 = vunpack.c.l.b16 %v1176
      %v1798 = vunpack.c.h.b16 %v1176
      %v1799 = vunpack.c.l.b16 %v1177
      %v1800 = vunpack.c.h.b16 %v1177
      %v1801 = vunpack.c.l.b16 %v1178
      %v1802 = vunpack.c.h.b16 %v1178
      %v1803 = vunpack.c.l.b16 %v1179
      %v1804 = vunpack.c.h.b16 %v1179
      %v1805 = vunpack.c.l.b16 %v1180
      %v1806 = vunpack.c.h.b16 %v1180
      %v1807 = vunpack.c.l.b16 %v1181
      %v1808 = vunpack.c.h.b16 %v1181
      %v1809 = vunpack.c.l.b16 %v1182
      %v1810 = vunpack.c.h.b16 %v1182
      %v1811 = vunpack.c.l.b16 %v1183
      %v1812 = vunpack.c.h.b16 %v1183
      %v1813 = vunpack.c.l.b16 %v1184
      %v1814 = vunpack.c.h.b16 %v1184
      %v1815 = vunpack.c.l.b16 %v1185
      %v1816 = vunpack.c.h.b16 %v1185
      %v1817 = vunpack.c.l.b16 %v1186
      %v1818 = vunpack.c.h.b16 %v1186
      %v1819 = vunpack.c.l.b16 %v1187
      %v1820 = vunpack.c.h.b16 %v1187
      %v1821 = vunpack.c.l.b16 %v1188
      %v1822 = vunpack.c.h.b16 %v1188
      %v1823 = vunpack.c.l.b16 %v1189
      %v1824 = vunpack.c.h.b16 %v1189
      %v1825 = vunpack.c.l.b16 %v1190
      %v1826 = vunpack.c.h.b16 %v1190
      %v1827 = vunpack.c.l.b16 %v1191
      %v1828 = vunpack.c.h.b16 %v1191
      %v1829 = vunpack.c.l.b16 %v1192
      %v1830 = vunpack.c.h.b16 %v1192
      %v1831 = vunpack.c.l.b16 %v1193
      %v1832 = vunpack.c.h.b16 %v1193
      %v1833 = vunpack.c.l.b16 %v1194
      %v1834 = vunpack.c.h.b16 %v1194
      %v1835 = vunpack.c.l.b16 %v1195
      %v1836 = vunpack.c.h.b16 %v1195
      %v1837 = vunpack.c.l.b16 %v1196
      %v1838 = vunpack.c.h.b16 %v1196
      %v1839 = vunpack.c.l.b16 %v1197
      %v1840 = vunpack.c.h.b16 %v1197
      %v1841 = vunpack.c.l.b16 %v1198
      %v1842 = vunpack.c.h.b16 %v1198
      %v1843 = vunpack.c.l.b16 %v1199
      %v1844 = vunpack.c.h.b16 %v1199
      %v1845 = vunpack.c.l.b16 %v1200
      %v1846 = vunpack.c.h.b16 %v1200
      %v1847 = vunpack.c.l.b16 %v1201
      %v1848 = vunpack.c.h.b16 %v1201
      %v1849 = vunpack.c.l.b16 %v1202
      %v1850 = vunpack.c.h.b16 %v1202
      %v1851 = vunpack.c.l.b16 %v1203
      %v1852 = vunpack.c.h.b16 %v1203
      %v1853 = vunpack.c.l.b16 %v1204
      %v1854 = vunpack.c.h.b16 %v1204
      %v1855 = vunpack.c.l.b16 %v1205
      %v1856 = vunpack.c.h.b16 %v1205
      %v1857 = vunpack.c.l.b16 %v1206
      %v1858 = vunpack.c.h.b16 %v1206
      %v1859 = vunpack.c.l.b16 %v1207
      %v1860 = vunpack.c.h.b16 %v1207
      %v1861 = vunpack.c.l.b16 %v1208
      %v1862 = vunpack.c.h.b16 %v1208
      %v1863 = vunpack.c.l.b16 %v1209
      %v1864 = vunpack.c.h.b16 %v1209
      %v1865 = vpack.c.b16 %v1489, %v1481
      %v1866 = vpack.c.b16 %v1490, %v1482
      %v1867 = vpack.c.b16 %v1491, %v1483
      %v1868 = vpack.c.b16 %v1492, %v1484
      %v1869 = vpack.c.b16 %v1493, %v1485
      %v1870 = vpack.c.b16 %v1494, %v1486
      %v1871 = vpack.c.b16 %v1495, %v1487
      %v1872 = vpack.c.b16 %v1496, %v1488
      %v1873 = vpack.c.b16 %v1505, %v1497
      %v1874 = vpack.c.b16 %v1506, %v1498
      %v1875 = vpack.c.b16 %v1507, %v1499
      %v1876 = vpack.c.b16 %v1508, %v1500
      %v1877 = vpack.c.b16 %v1509, %v1501
      %v1878 = vpack.c.b16 %v1510, %v1502
      %v1879 = vpack.c.b16 %v1511, %v1503
      %v1880 = vpack.c.b16 %v1512, %v1504
      %v1881 = vpack.c.b16 %v1521, %v1513
      %v1882 = vpack.c.b16 %v1522, %v1514
      %v1883 = vpack.c.b16 %v1523, %v1515
      %v1884 = vpack.c.b16 %v1524, %v1516
      %v1885 = vpack.c.b16 %v1525, %v1517
      %v1886 = vpack.c.b16 %v1526, %v1518
      %v1887 = vpack.c.b16 %v1527, %v1519
      %v1888 = vpack.c.b16 %v1528, %v1520
      %v1889 = vpack.c.b16 %v1537, %v1529
      %v1890 = vpack.c.b16 %v1538, %v1530
      %v1891 = vpack.c.b16 %v1539, %v1531
      %v1892 = vpack.c.b16 %v1540, %v1532
      %v1893 = vpack.c.b16 %v1541, %v1533
      %v1894 = vpack.c.b16 %v1542, %v1534
      %v1895 = vpack.c.b16 %v1543, %v1535
      %v1896 = vpack.c.b16 %v1544, %v1536
      %v1897 = vpack.c.b16 %v1553, %v1545
      %v1898 = vpack.c.b16 %v1554, %v1546
      %v1899 = vpack.c.b16 %v1555, %v1547
      %v1900 = vpack.c.b16 %v1556, %v1548
      %v1901 = vpack.c.b16 %v1557, %v1549
      %v1902 = vpack.c.b16 %v1558, %v1550
      %v1903 = vpack.c.b16 %v1559, %v1551
      %v1904 = vpack.c.b16 %v1560, %v1552
      %v1905 = vpack.c.b16 %v1569, %v1561
      %v1906 = vpack.c.b16 %v1570, %v1562
      %v1907 = vpack.c.b16 %v1571, %v1563
      %v1908 = vpack.c.b16 %v1572, %v1564
      %v1909 = vpack.c.b16 %v1573, %v1565
      %v1910 = vpack.c.b16 %v1574, %v1566
      %v1911 = vpack.c.b16 %v1575, %v1567
      %v1912 = vpack.c.b16 %v1576, %v1568
      %v1913 = vpack.c.b16 %v1585, %v1577
      %v1914 = vpack.c.b16 %v1586, %v1578
      %v1915 = vpack.c.b16 %v1587, %v1579
      %v1916 = vpack.c.b16 %v1588, %v1580
      %v1917 = vpack.c.b16 %v1589, %v1581
      %v1918 = vpack.c.b16 %v1590, %v1582
      %v1919 = vpack.c.b16 %v1591, %v1583
      %v1920 = vpack.c.b16 %v1592, %v1584
      %v1921 = vpack.c.b16 %v1601, %v1593
      %v1922 = vpack.c.b16 %v1602, %v1594
      %v1923 = vpack.c.b16 %v1603, %v1595
      %v1924 = vpack.c.b16 %v1604, %v1596
      %v1925 = vpack.c.b16 %v1605, %v1597
      %v1926 = vpack.c.b16 %v1606, %v1598
      %v1927 = vpack.c.b16 %v1607, %v1599
      %v1928 = vpack.c.b16 %v1608, %v1600
      %v1929 = vpack.c.b16 %v1617, %v1609
      %v1930 = vpack.c.b16 %v1618, %v1610
      %v1931 = vpack.c.b16 %v1619, %v1611
      %v1932 = vpack.c.b16 %v1620, %v1612
      %v1933 = vpack.c.b16 %v1621, %v1613
      %v1934 = vpack.c.b16 %v1622, %v1614
      %v1935 = vpack.c.b16 %v1623, %v1615
      %v1936 = vpack.c.b16 %v1624, %v1616
      %v1937 = vpack.c.b16 %v1633, %v1625
      %v1938 = vpack.c.b16 %v1634, %v1626
      %v1939 = vpack.c.b16 %v1635, %v1627
      %v1940 = vpack.c.b16 %v1636, %v1628
      %v1941 = vpack.c.b16 %v1637, %v1629
      %v1942 = vpack.c.b16 %v1638, %v1630
      %v1943 = vpack.c.b16 %v1639, %v1631
      %v1944 = vpack.c.b16 %v1640, %v1632
      %v1945 = vpack.c.b16 %v1649, %v1641
      %v1946 = vpack.c.b16 %v1650, %v1642
      %v1947 = vpack.c.b16 %v1651, %v1643
      %v1948 = vpack.c.b16 %v1652, %v1644
      %v1949 = vpack.c.b16 %v1653, %v1645
      %v1950 = vpack.c.b16 %v1654, %v1646
      %v1951 = vpack.c.b16 %v1655, %v1647
      %v1952 = vpack.c.b16 %v1656, %v1648
      %v1953 = vpack.c.b16 %v1665, %v1657
      %v1954 = vpack.c.b16 %v1666, %v1658
      %v1955 = vpack.c.b16 %v1667, %v1659
      %v1956 = vpack.c.b16 %v1668, %v1660
      %v1957 = vpack.c.b16 %v1669, %v1661
      %v1958 = vpack.c.b16 %v1670, %v1662
      %v1959 = vpack.c.b16 %v1671, %v1663
      %v1960 = vpack.c.b16 %v1672, %v1664
      %v1961 = vpack.c.b16 %v1681, %v1673
      %v1962 = vpack.c.b16 %v1682, %v1674
      %v1963 = vpack.c.b16 %v1683, %v1675
      %v1964 = vpack.c.b16 %v1684, %v1676
      %v1965 = vpack.c.b16 %v1685, %v1677
      %v1966 = vpack.c.b16 %v1686, %v1678
      %v1967 = vpack.c.b16 %v1687, %v1679
      %v1968 = vpack.c.b16 %v1688, %v1680
      %v1969 = vpack.c.b16 %v1697, %v1689
      %v1970 = vpack.c.b16 %v1698, %v1690
      %v1971 = vpack.c.b16 %v1699, %v1691
      %v1972 = vpack.c.b16 %v1700, %v1692
      %v1973 = vpack.c.b16 %v1701, %v1693
      %v1974 = vpack.c.b16 %v1702, %v1694
      %v1975 = vpack.c.b16 %v1703, %v1695
      %v1976 = vpack.c.b16 %v1704, %v1696
      %v1977 = vpack.c.b16 %v1713, %v1705
      %v1978 = vpack.c.b16 %v1714, %v1706
      %v1979 = vpack.c.b16 %v1715, %v1707
      %v1980 = vpack.c.b16 %v1716, %v1708
      %v1981 = vpack.c.b16 %v1717, %v1709
      %v1982 = vpack.c.b16 %v1718, %v1710
      %v1983 = vpack.c.b16 %v1719, %v1711
      %v1984 = vpack.c.b16 %v1720, %v1712
      %v1985 = vpack.c.b16 %v1729, %v1721
      %v1986 = vpack.c.b16 %v1730, %v1722
      %v1987 = vpack.c.b16 %v1731, %v1723
      %v1988 = vpack.c.b16 %v1732, %v1724
      %v1989 = vpack.c.b16 %v1733, %v1725
      %v1990 = vpack.c.b16 %v1734, %v1726
      %v1991 = vpack.c.b16 %v1735, %v1727
      %v1992 = vpack.c.b16 %v1736, %v1728
      %v1993 = vpack.c.b16 %v1745, %v1737
      %v1994 = vpack.c.b16 %v1746, %v1738
      %v1995 = vpack.c.b16 %v1747, %v1739
      %v1996 = vpack.c.b16 %v1748, %v1740
      %v1997 = vpack.c.b16 %v1749, %v1741
      %v1998 = vpack.c.b16 %v1750, %v1742
      %v1999 = vpack.c.b16 %v1751, %v1743
      %v2000 = vpack.c.b16 %v1752, %v1744
      %v2001 = vpack.c.b16 %v1761, %v1753
      %v2002 = vpack.c.b16 %v1762, %v1754
      %v2003 = vpack.c.b16 %v1763, %v1755
      %v2004 = vpack.c.b16 %v1764, %v1756
      %v2005 = vpack.c.b16 %v1765, %v1757
      %v2006 = vpack.c.b16 %v1766, %v1758
      %v2007 = vpack.c.b16 %v1767, %v1759
      %v2008 = vpack.c.b16 %v1768, %v1760
      %v2009 = vpack.c.b16 %v1777, %v1769
      %v2010 = vpack.c.b16 %v1778, %v1770
      %v2011 = vpack.c.b16 %v1779, %v1771
      %v2012 = vpack.c.b16 %v1780, %v1772
      %v2013 = vpack.c.b16 %v1781, %v1773
      %v2014 = vpack.c.b16 %v1782, %v1774
      %v2015 = vpack.c.b16 %v1783, %v1775
      %v2016 = vpack.c.b16 %v1784, %v1776
      %v2017 = vpack.c.b16 %v1793, %v1785
      %v2018 = vpack.c.b16 %v1794, %v1786
      %v2019 = vpack.c.b16 %v1795, %v1787
      %v2020 = vpack.c.b16 %v1796, %v1788
      %v2021 = vpack.c.b16 %v1797, %v1789
      %v2022 = vpack.c.b16 %v1798, %v1790
      %v2023 = vpack.c.b16 %v1799, %v1791
      %v2024 = vpack.c.b16 %v1800, %v1792
      %v2025 = vpack.c.b16 %v1809, %v1801
      %v2026 = vpack.c.b16 %v1810, %v1802
      %v2027 = vpack.c.b16 %v1811, %v1803
      %v2028 = vpack.c.b16 %v1812, %v1804
      %v2029 = vpack.c.b16 %v1813, %v1805
      %v2030 = vpack.c.b16 %v1814, %v1806
      %v2031 = vpack.c.b16 %v1815, %v1807
      %v2032 = vpack.c.b16 %v1816, %v1808
      %v2033 = vpack.c.b16 %v1825, %v1817
      %v2034 = vpack.c.b16 %v1826, %v1818
      %v2035 = vpack.c.b16 %v1827, %v1819
      %v2036 = vpack.c.b16 %v1828, %v1820
      %v2037 = vpack.c.b16 %v1829, %v1821
      %v2038 = vpack.c.b16 %v1830, %v1822
      %v2039 = vpack.c.b16 %v1831, %v1823
      %v2040 = vpack.c.b16 %v1832, %v1824
      %v2041 = vpack.c.b16 %v1841, %v1833
      %v2042 = vpack.c.b16 %v1842, %v1834
      %v2043 = vpack.c.b16 %v1843, %v1835
      %v2044 = vpack.c.b16 %v1844, %v1836
      %v2045 = vpack.c.b16 %v1845, %v1837
      %v2046 = vpack.c.b16 %v1846, %v1838
      %v2047 = vpack.c.b16 %v1847, %v1839
      %v2048 = vpack.c.b16 %v1848, %v1840
      %v2049 = vpack.c.b16 %v1857, %v1849
      %v2050 = vpack.c.b16 %v1858, %v1850
      %v2051 = vpack.c.b16 %v1859, %v1851
      %v2052 = vpack.c.b16 %v1860, %v1852
      %v2053 = vpack.c.b16 %v1861, %v1853
      %v2054 = vpack.c.b16 %v1862, %v1854
      %v2055 = vpack.c.b16 %v1863, %v1855
      %v2056 = vpack.c.b16 %v1864, %v1856
      %2249 = vmatpush.bf16.msra.mxu0 %v1921
      %2250 = vmatpush.bf16.msra.mxu0 %v1913
      %2251 = vmatpush.bf16.msra.mxu0 %v1905
      %2252 = vmatpush.bf16.msra.mxu0 %v1897
      %2253 = vmatpush.bf16.msra.mxu0 %v1889
      %2254 = vmatpush.bf16.msra.mxu0 %v1881
      %2255 = vmatpush.bf16.msra.mxu0 %v1873
      %2256 = vmatpush.bf16.msra.mxu0 %v1865
      %2257 = vmatmul.bf16.gmra.mxu0 %v1251
      %v2258 = vpop.f32.mrf.mxu0
      %v2259 = vadd.f32 %v1218, %v2258
      %v2260 = vpop.f32.mrf.mxu0
      %v2261 = vadd.f32 %v1218, %v2260
      %2262 = vdwg.mxu0
      %2263 = vmatpush.bf16.msra.mxu0 %v1985
      %2264 = vmatpush.bf16.msra.mxu0 %v1977
      %2265 = vmatpush.bf16.msra.mxu0 %v1969
      %2266 = vmatpush.bf16.msra.mxu0 %v1961
      %2267 = vmatpush.bf16.msra.mxu0 %v1953
      %2268 = vmatpush.bf16.msra.mxu0 %v1945
      %2269 = vmatpush.bf16.msra.mxu0 %v1937
      %2270 = vmatpush.bf16.msra.mxu0 %v1929
      %2271 = vmatmul.bf16.gmra.mxu0 %v1268
      %v2272 = vpop.f32.mrf.mxu0
      %v2273 = vadd.f32 %v2259, %v2272
      %v2274 = vpop.f32.mrf.mxu0
      %v2275 = vadd.f32 %v2261, %v2274
      %2276 = vdwg.mxu0
      %2277 = vmatpush.bf16.msra.mxu0 %v2049
      %2278 = vmatpush.bf16.msra.mxu0 %v2041
      %2279 = vmatpush.bf16.msra.mxu0 %v2033
      %2280 = vmatpush.bf16.msra.mxu0 %v2025
      %2281 = vmatpush.bf16.msra.mxu0 %v2017
      %2282 = vmatpush.bf16.msra.mxu0 %v2009
      %2283 = vmatpush.bf16.msra.mxu0 %v2001
      %2284 = vmatpush.bf16.msra.mxu0 %v1993
      %2285 = vmatmul.bf16.gmra.mxu0 %v1285
      %v2286 = vpop.f32.mrf.mxu0
      %v2287 = vadd.f32 %v2273, %v2286
      %v2288 = vpop.f32.mrf.mxu0
      %v2289 = vadd.f32 %v2275, %v2288
      %2290 = vdwg.mxu0
      %2291 = vmatpush.bf16.msra.mxu0 %v1922
      %2292 = vmatpush.bf16.msra.mxu0 %v1914
      %2293 = vmatpush.bf16.msra.mxu0 %v1906
      %2294 = vmatpush.bf16.msra.mxu0 %v1898
      %2295 = vmatpush.bf16.msra.mxu0 %v1890
      %2296 = vmatpush.bf16.msra.mxu0 %v1882
      %2297 = vmatpush.bf16.msra.mxu0 %v1874
      %2298 = vmatpush.bf16.msra.mxu0 %v1866
      %2299 = vmatmul.bf16.gmra.mxu0 %v1251
      %v2300 = vpop.f32.mrf.mxu0
      %v2301 = vadd.f32 %v1219, %v2300
      %v2302 = vpop.f32.mrf.mxu0
      %v2303 = vadd.f32 %v1219, %v2302
      %2304 = vdwg.mxu0
      %2305 = vmatpush.bf16.msra.mxu0 %v1986
      %2306 = vmatpush.bf16.msra.mxu0 %v1978
      %2307 = vmatpush.bf16.msra.mxu0 %v1970
      %2308 = vmatpush.bf16.msra.mxu0 %v1962
      %2309 = vmatpush.bf16.msra.mxu0 %v1954
      %2310 = vmatpush.bf16.msra.mxu0 %v1946
      %2311 = vmatpush.bf16.msra.mxu0 %v1938
      %2312 = vmatpush.bf16.msra.mxu0 %v1930
      %2313 = vmatmul.bf16.gmra.mxu0 %v1268
      %v2314 = vpop.f32.mrf.mxu0
      %v2315 = vadd.f32 %v2301, %v2314
      %v2316 = vpop.f32.mrf.mxu0
      %v2317 = vadd.f32 %v2303, %v2316
      %2318 = vdwg.mxu0
      %2319 = vmatpush.bf16.msra.mxu0 %v2050
      %2320 = vmatpush.bf16.msra.mxu0 %v2042
      %2321 = vmatpush.bf16.msra.mxu0 %v2034
      %2322 = vmatpush.bf16.msra.mxu0 %v2026
      %2323 = vmatpush.bf16.msra.mxu0 %v2018
      %2324 = vmatpush.bf16.msra.mxu0 %v2010
      %2325 = vmatpush.bf16.msra.mxu0 %v2002
      %2326 = vmatpush.bf16.msra.mxu0 %v1994
      %2327 = vmatmul.bf16.gmra.mxu0 %v1285
      %v2328 = vpop.f32.mrf.mxu0
      %v2329 = vadd.f32 %v2315, %v2328
      %v2330 = vpop.f32.mrf.mxu0
      %v2331 = vadd.f32 %v2317, %v2330
      %2332 = vdwg.mxu0
      %2333 = vmatpush.bf16.msra.mxu0 %v1923
      %2334 = vmatpush.bf16.msra.mxu0 %v1915
      %2335 = vmatpush.bf16.msra.mxu0 %v1907
      %2336 = vmatpush.bf16.msra.mxu0 %v1899
      %2337 = vmatpush.bf16.msra.mxu0 %v1891
      %2338 = vmatpush.bf16.msra.mxu0 %v1883
      %2339 = vmatpush.bf16.msra.mxu0 %v1875
      %2340 = vmatpush.bf16.msra.mxu0 %v1867
      %2341 = vmatmul.bf16.gmra.mxu0 %v1251
      %v2342 = vpop.f32.mrf.mxu0
      %v2343 = vadd.f32 %v1220, %v2342
      %v2344 = vpop.f32.mrf.mxu0
      %v2345 = vadd.f32 %v1220, %v2344
      %2346 = vdwg.mxu0
      %2347 = vmatpush.bf16.msra.mxu0 %v1987
      %2348 = vmatpush.bf16.msra.mxu0 %v1979
      %2349 = vmatpush.bf16.msra.mxu0 %v1971
      %2350 = vmatpush.bf16.msra.mxu0 %v1963
      %2351 = vmatpush.bf16.msra.mxu0 %v1955
      %2352 = vmatpush.bf16.msra.mxu0 %v1947
      %2353 = vmatpush.bf16.msra.mxu0 %v1939
      %2354 = vmatpush.bf16.msra.mxu0 %v1931
      %2355 = vmatmul.bf16.gmra.mxu0 %v1268
      %v2356 = vpop.f32.mrf.mxu0
      %v2357 = vadd.f32 %v2343, %v2356
      %v2358 = vpop.f32.mrf.mxu0
      %v2359 = vadd.f32 %v2345, %v2358
      %2360 = vdwg.mxu0
      %2361 = vmatpush.bf16.msra.mxu0 %v2051
      %2362 = vmatpush.bf16.msra.mxu0 %v2043
      %2363 = vmatpush.bf16.msra.mxu0 %v2035
      %2364 = vmatpush.bf16.msra.mxu0 %v2027
      %2365 = vmatpush.bf16.msra.mxu0 %v2019
      %2366 = vmatpush.bf16.msra.mxu0 %v2011
      %2367 = vmatpush.bf16.msra.mxu0 %v2003
      %2368 = vmatpush.bf16.msra.mxu0 %v1995
      %2369 = vmatmul.bf16.gmra.mxu0 %v1285
      %v2370 = vpop.f32.mrf.mxu0
      %v2371 = vadd.f32 %v2357, %v2370
      %v2372 = vpop.f32.mrf.mxu0
      %v2373 = vadd.f32 %v2359, %v2372
      %2374 = vdwg.mxu0
      %2375 = vmatpush.bf16.msra.mxu0 %v1924
      %2376 = vmatpush.bf16.msra.mxu0 %v1916
      %2377 = vmatpush.bf16.msra.mxu0 %v1908
      %2378 = vmatpush.bf16.msra.mxu0 %v1900
      %2379 = vmatpush.bf16.msra.mxu0 %v1892
      %2380 = vmatpush.bf16.msra.mxu0 %v1884
      %2381 = vmatpush.bf16.msra.mxu0 %v1876
      %2382 = vmatpush.bf16.msra.mxu0 %v1868
      %2383 = vmatmul.bf16.gmra.mxu0 %v1251
      %v2384 = vpop.f32.mrf.mxu0
      %v2385 = vadd.f32 %v1221, %v2384
      %v2386 = vpop.f32.mrf.mxu0
      %v2387 = vadd.f32 %v1221, %v2386
      %2388 = vdwg.mxu0
      %2389 = vmatpush.bf16.msra.mxu0 %v1988
      %2390 = vmatpush.bf16.msra.mxu0 %v1980
      %2391 = vmatpush.bf16.msra.mxu0 %v1972
      %2392 = vmatpush.bf16.msra.mxu0 %v1964
      %2393 = vmatpush.bf16.msra.mxu0 %v1956
      %2394 = vmatpush.bf16.msra.mxu0 %v1948
      %2395 = vmatpush.bf16.msra.mxu0 %v1940
      %2396 = vmatpush.bf16.msra.mxu0 %v1932
      %2397 = vmatmul.bf16.gmra.mxu0 %v1268
      %v2398 = vpop.f32.mrf.mxu0
      %v2399 = vadd.f32 %v2385, %v2398
      %v2400 = vpop.f32.mrf.mxu0
      %v2401 = vadd.f32 %v2387, %v2400
      %2402 = vdwg.mxu0
      %2403 = vmatpush.bf16.msra.mxu0 %v2052
      %2404 = vmatpush.bf16.msra.mxu0 %v2044
      %2405 = vmatpush.bf16.msra.mxu0 %v2036
      %2406 = vmatpush.bf16.msra.mxu0 %v2028
      %2407 = vmatpush.bf16.msra.mxu0 %v2020
      %2408 = vmatpush.bf16.msra.mxu0 %v2012
      %2409 = vmatpush.bf16.msra.mxu0 %v2004
      %2410 = vmatpush.bf16.msra.mxu0 %v1996
      %2411 = vmatmul.bf16.gmra.mxu0 %v1285
      %v2412 = vpop.f32.mrf.mxu0
      %v2413 = vadd.f32 %v2399, %v2412
      %v2414 = vpop.f32.mrf.mxu0
      %v2415 = vadd.f32 %v2401, %v2414
      %2416 = vdwg.mxu0
      %2417 = vmatpush.bf16.msra.mxu0 %v1925
      %2418 = vmatpush.bf16.msra.mxu0 %v1917
      %2419 = vmatpush.bf16.msra.mxu0 %v1909
      %2420 = vmatpush.bf16.msra.mxu0 %v1901
      %2421 = vmatpush.bf16.msra.mxu0 %v1893
      %2422 = vmatpush.bf16.msra.mxu0 %v1885
      %2423 = vmatpush.bf16.msra.mxu0 %v1877
      %2424 = vmatpush.bf16.msra.mxu0 %v1869
      %2425 = vmatmul.bf16.gmra.mxu0 %v1251
      %v2426 = vpop.f32.mrf.mxu0
      %v2427 = vadd.f32 %v1222, %v2426
      %v2428 = vpop.f32.mrf.mxu0
      %v2429 = vadd.f32 %v1222, %v2428
      %2430 = vdwg.mxu0
      %2431 = vmatpush.bf16.msra.mxu0 %v1989
      %2432 = vmatpush.bf16.msra.mxu0 %v1981
      %2433 = vmatpush.bf16.msra.mxu0 %v1973
      %2434 = vmatpush.bf16.msra.mxu0 %v1965
      %2435 = vmatpush.bf16.msra.mxu0 %v1957
      %2436 = vmatpush.bf16.msra.mxu0 %v1949
      %2437 = vmatpush.bf16.msra.mxu0 %v1941
      %2438 = vmatpush.bf16.msra.mxu0 %v1933
      %2439 = vmatmul.bf16.gmra.mxu0 %v1268
      %v2440 = vpop.f32.mrf.mxu0
      %v2441 = vadd.f32 %v2427, %v2440
      %v2442 = vpop.f32.mrf.mxu0
      %v2443 = vadd.f32 %v2429, %v2442
      %2444 = vdwg.mxu0
      %2445 = vmatpush.bf16.msra.mxu0 %v2053
      %2446 = vmatpush.bf16.msra.mxu0 %v2045
      %2447 = vmatpush.bf16.msra.mxu0 %v2037
      %2448 = vmatpush.bf16.msra.mxu0 %v2029
      %2449 = vmatpush.bf16.msra.mxu0 %v2021
      %2450 = vmatpush.bf16.msra.mxu0 %v2013
      %2451 = vmatpush.bf16.msra.mxu0 %v2005
      %2452 = vmatpush.bf16.msra.mxu0 %v1997
      %2453 = vmatmul.bf16.gmra.mxu0 %v1285
      %v2454 = vpop.f32.mrf.mxu0
      %v2455 = vadd.f32 %v2441, %v2454
      %v2456 = vpop.f32.mrf.mxu0
      %v2457 = vadd.f32 %v2443, %v2456
      %2458 = vdwg.mxu0
      %2459 = vmatpush.bf16.msra.mxu0 %v1926
      %2460 = vmatpush.bf16.msra.mxu0 %v1918
      %2461 = vmatpush.bf16.msra.mxu0 %v1910
      %2462 = vmatpush.bf16.msra.mxu0 %v1902
      %2463 = vmatpush.bf16.msra.mxu0 %v1894
      %2464 = vmatpush.bf16.msra.mxu0 %v1886
      %2465 = vmatpush.bf16.msra.mxu0 %v1878
      %2466 = vmatpush.bf16.msra.mxu0 %v1870
      %2467 = vmatmul.bf16.gmra.mxu0 %v1251
      %v2468 = vpop.f32.mrf.mxu0
      %v2469 = vadd.f32 %v1223, %v2468
      %v2470 = vpop.f32.mrf.mxu0
      %v2471 = vadd.f32 %v1223, %v2470
      %2472 = vdwg.mxu0
      %2473 = vmatpush.bf16.msra.mxu0 %v1990
      %2474 = vmatpush.bf16.msra.mxu0 %v1982
      %2475 = vmatpush.bf16.msra.mxu0 %v1974
      %2476 = vmatpush.bf16.msra.mxu0 %v1966
      %2477 = vmatpush.bf16.msra.mxu0 %v1958
      %2478 = vmatpush.bf16.msra.mxu0 %v1950
      %2479 = vmatpush.bf16.msra.mxu0 %v1942
      %2480 = vmatpush.bf16.msra.mxu0 %v1934
      %2481 = vmatmul.bf16.gmra.mxu0 %v1268
      %v2482 = vpop.f32.mrf.mxu0
      %v2483 = vadd.f32 %v2469, %v2482
      %v2484 = vpop.f32.mrf.mxu0
      %v2485 = vadd.f32 %v2471, %v2484
      %2486 = vdwg.mxu0
      %2487 = vmatpush.bf16.msra.mxu0 %v2054
      %2488 = vmatpush.bf16.msra.mxu0 %v2046
      %2489 = vmatpush.bf16.msra.mxu0 %v2038
      %2490 = vmatpush.bf16.msra.mxu0 %v2030
      %2491 = vmatpush.bf16.msra.mxu0 %v2022
      %2492 = vmatpush.bf16.msra.mxu0 %v2014
      %2493 = vmatpush.bf16.msra.mxu0 %v2006
      %2494 = vmatpush.bf16.msra.mxu0 %v1998
      %2495 = vmatmul.bf16.gmra.mxu0 %v1285
      %v2496 = vpop.f32.mrf.mxu0
      %v2497 = vadd.f32 %v2483, %v2496
      %v2498 = vpop.f32.mrf.mxu0
      %v2499 = vadd.f32 %v2485, %v2498
      %2500 = vdwg.mxu0
      %2501 = vmatpush.bf16.msra.mxu0 %v1927
      %2502 = vmatpush.bf16.msra.mxu0 %v1919
      %2503 = vmatpush.bf16.msra.mxu0 %v1911
      %2504 = vmatpush.bf16.msra.mxu0 %v1903
      %2505 = vmatpush.bf16.msra.mxu0 %v1895
      %2506 = vmatpush.bf16.msra.mxu0 %v1887
      %2507 = vmatpush.bf16.msra.mxu0 %v1879
      %2508 = vmatpush.bf16.msra.mxu0 %v1871
      %2509 = vmatmul.bf16.gmra.mxu0 %v1251
      %v2510 = vpop.f32.mrf.mxu0
      %v2511 = vadd.f32 %v1224, %v2510
      %v2512 = vpop.f32.mrf.mxu0
      %v2513 = vadd.f32 %v1224, %v2512
      %2514 = vdwg.mxu0
      %2515 = vmatpush.bf16.msra.mxu0 %v1991
      %2516 = vmatpush.bf16.msra.mxu0 %v1983
      %2517 = vmatpush.bf16.msra.mxu0 %v1975
      %2518 = vmatpush.bf16.msra.mxu0 %v1967
      %2519 = vmatpush.bf16.msra.mxu0 %v1959
      %2520 = vmatpush.bf16.msra.mxu0 %v1951
      %2521 = vmatpush.bf16.msra.mxu0 %v1943
      %2522 = vmatpush.bf16.msra.mxu0 %v1935
      %2523 = vmatmul.bf16.gmra.mxu0 %v1268
      %v2524 = vpop.f32.mrf.mxu0
      %v2525 = vadd.f32 %v2511, %v2524
      %v2526 = vpop.f32.mrf.mxu0
      %v2527 = vadd.f32 %v2513, %v2526
      %2528 = vdwg.mxu0
      %2529 = vmatpush.bf16.msra.mxu0 %v2055
      %2530 = vmatpush.bf16.msra.mxu0 %v2047
      %2531 = vmatpush.bf16.msra.mxu0 %v2039
      %2532 = vmatpush.bf16.msra.mxu0 %v2031
      %2533 = vmatpush.bf16.msra.mxu0 %v2023
      %2534 = vmatpush.bf16.msra.mxu0 %v2015
      %2535 = vmatpush.bf16.msra.mxu0 %v2007
      %2536 = vmatpush.bf16.msra.mxu0 %v1999
      %2537 = vmatmul.bf16.gmra.mxu0 %v1285
      %v2538 = vpop.f32.mrf.mxu0
      %v2539 = vadd.f32 %v2525, %v2538
      %v2540 = vpop.f32.mrf.mxu0
      %v2541 = vadd.f32 %v2527, %v2540
      %2542 = vdwg.mxu0
      %2543 = vmatpush.bf16.msra.mxu0 %v1928
      %2544 = vmatpush.bf16.msra.mxu0 %v1920
      %2545 = vmatpush.bf16.msra.mxu0 %v1912
      %2546 = vmatpush.bf16.msra.mxu0 %v1904
      %2547 = vmatpush.bf16.msra.mxu0 %v1896
      %2548 = vmatpush.bf16.msra.mxu0 %v1888
      %2549 = vmatpush.bf16.msra.mxu0 %v1880
      %2550 = vmatpush.bf16.msra.mxu0 %v1872
      %2551 = vmatmul.bf16.gmra.mxu0 %v1251
      %v2552 = vpop.f32.mrf.mxu0
      %v2553 = vadd.f32 %v1225, %v2552
      %v2554 = vpop.f32.mrf.mxu0
      %v2555 = vadd.f32 %v1225, %v2554
      %2556 = vdwg.mxu0
      %2557 = vmatpush.bf16.msra.mxu0 %v1992
      %2558 = vmatpush.bf16.msra.mxu0 %v1984
      %2559 = vmatpush.bf16.msra.mxu0 %v1976
      %2560 = vmatpush.bf16.msra.mxu0 %v1968
      %2561 = vmatpush.bf16.msra.mxu0 %v1960
      %2562 = vmatpush.bf16.msra.mxu0 %v1952
      %2563 = vmatpush.bf16.msra.mxu0 %v1944
      %2564 = vmatpush.bf16.msra.mxu0 %v1936
      %2565 = vmatmul.bf16.gmra.mxu0 %v1268
      %v2566 = vpop.f32.mrf.mxu0
      %v2567 = vadd.f32 %v2553, %v2566
      %v2568 = vpop.f32.mrf.mxu0
      %v2569 = vadd.f32 %v2555, %v2568
      %2570 = vdwg.mxu0
      %2571 = vmatpush.bf16.msra.mxu0 %v2056
      %2572 = vmatpush.bf16.msra.mxu0 %v2048
      %2573 = vmatpush.bf16.msra.mxu0 %v2040
      %2574 = vmatpush.bf16.msra.mxu0 %v2032
      %2575 = vmatpush.bf16.msra.mxu0 %v2024
      %2576 = vmatpush.bf16.msra.mxu0 %v2016
      %2577 = vmatpush.bf16.msra.mxu0 %v2008
      %2578 = vmatpush.bf16.msra.mxu0 %v2000
      %2579 = vmatmul.bf16.gmra.mxu0 %v1285
      %v2580 = vpop.f32.mrf.mxu0
      %v2581 = vadd.f32 %v2567, %v2580
      %v2582 = vpop.f32.mrf.mxu0
      %v2583 = vadd.f32 %v2569, %v2582
      %2584 = vdwg.mxu0
      %v2585 = vmul.f32 %v2287, 0.5
      %v2586 = vmul.f32 %v2329, 0.5
      %v2587 = vmul.f32 %v2371, 0.5
      %v2588 = vmul.f32 %v2413, 0.5
      %v2589 = vmul.f32 %v2455, 0.5
      %v2590 = vmul.f32 %v2497, 0.5
      %v2591 = vmul.f32 %v2539, 0.5
      %v2592 = vmul.f32 %v2581, 0.5
      %v2593 = vmul.f32 %v2289, 0.5
      %v2594 = vmul.f32 %v2331, 0.5
      %v2595 = vmul.f32 %v2373, 0.5
      %v2596 = vmul.f32 %v2415, 0.5
      %v2597 = vmul.f32 %v2457, 0.5
      %v2598 = vmul.f32 %v2499, 0.5
      %v2599 = vmul.f32 %v2541, 0.5
      %v2600 = vmul.f32 %v2583, 0.5
      %v2601 = vmul.f32 %v2287, %v2287
      %v2602 = vmul.f32 %v2329, %v2329
      %v2603 = vmul.f32 %v2371, %v2371
      %v2604 = vmul.f32 %v2413, %v2413
      %v2605 = vmul.f32 %v2455, %v2455
      %v2606 = vmul.f32 %v2497, %v2497
      %v2607 = vmul.f32 %v2539, %v2539
      %v2608 = vmul.f32 %v2581, %v2581
      %v2609 = vmul.f32 %v2289, %v2289
      %v2610 = vmul.f32 %v2331, %v2331
      %v2611 = vmul.f32 %v2373, %v2373
      %v2612 = vmul.f32 %v2415, %v2415
      %v2613 = vmul.f32 %v2457, %v2457
      %v2614 = vmul.f32 %v2499, %v2499
      %v2615 = vmul.f32 %v2541, %v2541
      %v2616 = vmul.f32 %v2583, %v2583
      %v2617 = vmul.f32 %v2601, %v2287
      %v2618 = vmul.f32 %v2602, %v2329
      %v2619 = vmul.f32 %v2603, %v2371
      %v2620 = vmul.f32 %v2604, %v2413
      %v2621 = vmul.f32 %v2605, %v2455
      %v2622 = vmul.f32 %v2606, %v2497
      %v2623 = vmul.f32 %v2607, %v2539
      %v2624 = vmul.f32 %v2608, %v2581
      %v2625 = vmul.f32 %v2609, %v2289
      %v2626 = vmul.f32 %v2610, %v2331
      %v2627 = vmul.f32 %v2611, %v2373
      %v2628 = vmul.f32 %v2612, %v2415
      %v2629 = vmul.f32 %v2613, %v2457
      %v2630 = vmul.f32 %v2614, %v2499
      %v2631 = vmul.f32 %v2615, %v2541
      %v2632 = vmul.f32 %v2616, %v2583
      %v2633 = vmul.f32 %v2617, 0.044715
      %v2634 = vmul.f32 %v2618, 0.044715
      %v2635 = vmul.f32 %v2619, 0.044715
      %v2636 = vmul.f32 %v2620, 0.044715
      %v2637 = vmul.f32 %v2621, 0.044715
      %v2638 = vmul.f32 %v2622, 0.044715
      %v2639 = vmul.f32 %v2623, 0.044715
      %v2640 = vmul.f32 %v2624, 0.044715
      %v2641 = vmul.f32 %v2625, 0.044715
      %v2642 = vmul.f32 %v2626, 0.044715
      %v2643 = vmul.f32 %v2627, 0.044715
      %v2644 = vmul.f32 %v2628, 0.044715
      %v2645 = vmul.f32 %v2629, 0.044715
      %v2646 = vmul.f32 %v2630, 0.044715
      %v2647 = vmul.f32 %v2631, 0.044715
      %v2648 = vmul.f32 %v2632, 0.044715
      %v2649 = vadd.f32 %v2287, %v2633
      %v2650 = vadd.f32 %v2329, %v2634
      %v2651 = vadd.f32 %v2371, %v2635
      %v2652 = vadd.f32 %v2413, %v2636
      %v2653 = vadd.f32 %v2455, %v2637
      %v2654 = vadd.f32 %v2497, %v2638
      %v2655 = vadd.f32 %v2539, %v2639
      %v2656 = vadd.f32 %v2581, %v2640
      %v2657 = vadd.f32 %v2289, %v2641
      %v2658 = vadd.f32 %v2331, %v2642
      %v2659 = vadd.f32 %v2373, %v2643
      %v2660 = vadd.f32 %v2415, %v2644
      %v2661 = vadd.f32 %v2457, %v2645
      %v2662 = vadd.f32 %v2499, %v2646
      %v2663 = vadd.f32 %v2541, %v2647
      %v2664 = vadd.f32 %v2583, %v2648
      %v2665 = vmul.f32 %v2649, 0.7978846
      %v2666 = vmul.f32 %v2650, 0.7978846
      %v2667 = vmul.f32 %v2651, 0.7978846
      %v2668 = vmul.f32 %v2652, 0.7978846
      %v2669 = vmul.f32 %v2653, 0.7978846
      %v2670 = vmul.f32 %v2654, 0.7978846
      %v2671 = vmul.f32 %v2655, 0.7978846
      %v2672 = vmul.f32 %v2656, 0.7978846
      %v2673 = vmul.f32 %v2657, 0.7978846
      %v2674 = vmul.f32 %v2658, 0.7978846
      %v2675 = vmul.f32 %v2659, 0.7978846
      %v2676 = vmul.f32 %v2660, 0.7978846
      %v2677 = vmul.f32 %v2661, 0.7978846
      %v2678 = vmul.f32 %v2662, 0.7978846
      %v2679 = vmul.f32 %v2663, 0.7978846
      %v2680 = vmul.f32 %v2664, 0.7978846
      %v2681 = vtanh.pop %v2665
      %v2682 = vtanh.pop %v2666
      %v2683 = vtanh.pop %v2667
      %v2684 = vtanh.pop %v2668
      %v2685 = vtanh.pop %v2669
      %v2686 = vtanh.pop %v2670
      %v2687 = vtanh.pop %v2671
      %v2688 = vtanh.pop %v2672
      %v2689 = vtanh.pop %v2673
      %v2690 = vtanh.pop %v2674
      %v2691 = vtanh.pop %v2675
      %v2692 = vtanh.pop %v2676
      %v2693 = vtanh.pop %v2677
      %v2694 = vtanh.pop %v2678
      %v2695 = vtanh.pop %v2679
      %v2696 = vtanh.pop %v2680
      %v2697 = vadd.f32 %v2681, 1.0
      %v2698 = vadd.f32 %v2682, 1.0
      %v2699 = vadd.f32 %v2683, 1.0
      %v2700 = vadd.f32 %v2684, 1.0
      %v2701 = vadd.f32 %v2685, 1.0
      %v2702 = vadd.f32 %v2686, 1.0
      %v2703 = vadd.f32 %v2687, 1.0
      %v2704 = vadd.f32 %v2688, 1.0
      %v2705 = vadd.f32 %v2689, 1.0
      %v2706 = vadd.f32 %v2690, 1.0
      %v2707 = vadd.f32 %v2691, 1.0
      %v2708 = vadd.f32 %v2692, 1.0
      %v2709 = vadd.f32 %v2693, 1.0
      %v2710 = vadd.f32 %v2694, 1.0
      %v2711 = vadd.f32 %v2695, 1.0
      %v2712 = vadd.f32 %v2696, 1.0
      %v2713 = vmul.f32 %v2585, %v2697
      %v2714 = vmul.f32 %v2586, %v2698
      %v2715 = vmul.f32 %v2587, %v2699
      %v2716 = vmul.f32 %v2588, %v2700
      %v2717 = vmul.f32 %v2589, %v2701
      %v2718 = vmul.f32 %v2590, %v2702
      %v2719 = vmul.f32 %v2591, %v2703
      %v2720 = vmul.f32 %v2592, %v2704
      %v2721 = vmul.f32 %v2593, %v2705
      %v2722 = vmul.f32 %v2594, %v2706
      %v2723 = vmul.f32 %v2595, %v2707
      %v2724 = vmul.f32 %v2596, %v2708
      %v2725 = vmul.f32 %v2597, %v2709
      %v2726 = vmul.f32 %v2598, %v2710
      %v2727 = vmul.f32 %v2599, %v2711
      %v2728 = vmul.f32 %v2600, %v2712
      %v2729 = vld [vmem:[%s7] sm:$0xff]
      %v2730 = vld [vmem:[%s7 + $0x8] sm:$0xf]
      %v2731 = vld [vmem:[%s7 + $0xc] sm:$0xff]
      %v2732 = vld [vmem:[%s7 + $0x14] sm:$0xf]
      %v2733 = vld [vmem:[%s7 + $0x18] sm:$0xff]
      %v2734 = vld [vmem:[%s7 + $0x20] sm:$0xf]
      %v2735 = vld [vmem:[%s7 + $0x24] sm:$0xff]
      %v2736 = vld [vmem:[%s7 + $0x2c] sm:$0xf]
      %v2737 = vld [vmem:[%s7 + $0x30] sm:$0xff]
      %v2738 = vld [vmem:[%s7 + $0x38] sm:$0xf]
      %v2739 = vld [vmem:[%s7 + $0x3c] sm:$0xff]
      %v2740 = vld [vmem:[%s7 + $0x44] sm:$0xf]
      %v2741 = vld [vmem:[%s7 + $0x48] sm:$0xff]
      %v2742 = vld [vmem:[%s7 + $0x50] sm:$0xf]
      %v2743 = vld [vmem:[%s7 + $0x54] sm:$0xff]
      %v2744 = vld [vmem:[%s7 + $0x5c] sm:$0xf]
      %v2745 = vld [vmem:[%s7 + $0x60] sm:$0xff]
      %v2746 = vld [vmem:[%s7 + $0x68] sm:$0xf]
      %v2747 = vld [vmem:[%s7 + $0x6c] sm:$0xff]
      %v2748 = vld [vmem:[%s7 + $0x74] sm:$0xf]
      %v2749 = vld [vmem:[%s7 + $0x78] sm:$0xff]
      %v2750 = vld [vmem:[%s7 + $0x80] sm:$0xf]
      %v2751 = vld [vmem:[%s7 + $0x84] sm:$0xff]
      %v2752 = vld [vmem:[%s7 + $0x8c] sm:$0xf]
      %v2753 = vld [vmem:[%s7 + $0x90] sm:$0xff]
      %v2754 = vld [vmem:[%s7 + $0x98] sm:$0xf]
      %v2755 = vld [vmem:[%s7 + $0x9c] sm:$0xff]
      %v2756 = vld [vmem:[%s7 + $0xa4] sm:$0xf]
      %v2757 = vld [vmem:[%s7 + $0xa8] sm:$0xff]
      %v2758 = vld [vmem:[%s7 + $0xb0] sm:$0xf]
      %v2759 = vld [vmem:[%s7 + $0xb4] sm:$0xff]
      %v2760 = vld [vmem:[%s7 + $0xbc] sm:$0xf]
      %v2761 = vld [vmem:[%s7 + $0xc0] sm:$0xff]
      %v2762 = vld [vmem:[%s7 + $0xc8] sm:$0xf]
      %v2763 = vld [vmem:[%s7 + $0xcc] sm:$0xff]
      %v2764 = vld [vmem:[%s7 + $0xd4] sm:$0xf]
      %v2765 = vld [vmem:[%s7 + $0xd8] sm:$0xff]
      %v2766 = vld [vmem:[%s7 + $0xe0] sm:$0xf]
      %v2767 = vld [vmem:[%s7 + $0xe4] sm:$0xff]
      %v2768 = vld [vmem:[%s7 + $0xec] sm:$0xf]
      %v2769 = vld [vmem:[%s7 + $0xf0] sm:$0xff]
      %v2770 = vld [vmem:[%s7 + $0xf8] sm:$0xf]
      %v2771 = vld [vmem:[%s7 + $0xfc] sm:$0xff]
      %v2772 = vld [vmem:[%s7 + $0x104] sm:$0xf]
      %v2773 = vld [vmem:[%s7 + $0x108] sm:$0xff]
      %v2774 = vld [vmem:[%s7 + $0x110] sm:$0xf]
      %v2775 = vld [vmem:[%s7 + $0x114] sm:$0xff]
      %v2776 = vld [vmem:[%s7 + $0x11c] sm:$0xf]
      %v2777 = vld [vmem:[%s7 + $0x120] sm:$0xff]
      %v2778 = vld [vmem:[%s7 + $0x128] sm:$0xf]
      %v2779 = vld [vmem:[%s7 + $0x12c] sm:$0xff]
      %v2780 = vld [vmem:[%s7 + $0x134] sm:$0xf]
      %v2781 = vld [vmem:[%s7 + $0x138] sm:$0xff]
      %v2782 = vld [vmem:[%s7 + $0x140] sm:$0xf]
      %v2783 = vld [vmem:[%s7 + $0x144] sm:$0xff]
      %v2784 = vld [vmem:[%s7 + $0x14c] sm:$0xf]
      %v2785 = vld [vmem:[%s7 + $0x150] sm:$0xff]
      %v2786 = vld [vmem:[%s7 + $0x158] sm:$0xf]
      %v2787 = vld [vmem:[%s7 + $0x15c] sm:$0xff]
      %v2788 = vld [vmem:[%s7 + $0x164] sm:$0xf]
      %v2789 = vld [vmem:[%s7 + $0x168] sm:$0xff]
      %v2790 = vld [vmem:[%s7 + $0x170] sm:$0xf]
      %v2791 = vld [vmem:[%s7 + $0x174] sm:$0xff]
      %v2792 = vld [vmem:[%s7 + $0x17c] sm:$0xf]
      %v2793 = vld [vmem:[%s7 + $0x180] sm:$0xff]
      %v2794 = vld [vmem:[%s7 + $0x188] sm:$0xf]
      %v2795 = vld [vmem:[%s7 + $0x18c] sm:$0xff]
      %v2796 = vld [vmem:[%s7 + $0x194] sm:$0xf]
      %v2797 = vld [vmem:[%s7 + $0x198] sm:$0xff]
      %v2798 = vld [vmem:[%s7 + $0x1a0] sm:$0xf]
      %v2799 = vld [vmem:[%s7 + $0x1a4] sm:$0xff]
      %v2800 = vld [vmem:[%s7 + $0x1ac] sm:$0xf]
      %v2801 = vld [vmem:[%s7 + $0x1b0] sm:$0xff]
      %v2802 = vld [vmem:[%s7 + $0x1b8] sm:$0xf]
      %v2803 = vld [vmem:[%s7 + $0x1bc] sm:$0xff]
      %v2804 = vld [vmem:[%s7 + $0x1c4] sm:$0xf]
      %v2805 = vld [vmem:[%s7 + $0x1c8] sm:$0xff]
      %v2806 = vld [vmem:[%s7 + $0x1d0] sm:$0xf]
      %v2807 = vld [vmem:[%s7 + $0x1d4] sm:$0xff]
      %v2808 = vld [vmem:[%s7 + $0x1dc] sm:$0xf]
      %v2809 = vld [vmem:[%s7 + $0x1e0] sm:$0xff]
      %v2810 = vld [vmem:[%s7 + $0x1e8] sm:$0xf]
      %v2811 = vld [vmem:[%s7 + $0x1ec] sm:$0xff]
      %v2812 = vld [vmem:[%s7 + $0x1f4] sm:$0xf]
      %v2813 = vld [vmem:[%s7 + $0x1f8] sm:$0xff]
      %v2814 = vld [vmem:[%s7 + $0x200] sm:$0xf]
      %v2815 = vld [vmem:[%s7 + $0x204] sm:$0xff]
      %v2816 = vld [vmem:[%s7 + $0x20c] sm:$0xf]
      %v2817 = vld [vmem:[%s7 + $0x210] sm:$0xff]
      %v2818 = vld [vmem:[%s7 + $0x218] sm:$0xf]
      %v2819 = vld [vmem:[%s7 + $0x21c] sm:$0xff]
      %v2820 = vld [vmem:[%s7 + $0x224] sm:$0xf]
      %v2821 = vld [vmem:[%s7 + $0x228] sm:$0xff]
      %v2822 = vld [vmem:[%s7 + $0x230] sm:$0xf]
      %v2823 = vld [vmem:[%s7 + $0x234] sm:$0xff]
      %v2824 = vld [vmem:[%s7 + $0x23c] sm:$0xf]
      %v2825 = vld [vmem:[%s7 + $0x240] sm:$0xff]
      %v2826 = vld [vmem:[%s7 + $0x248] sm:$0xf]
      %v2827 = vld [vmem:[%s7 + $0x24c] sm:$0xff]
      %v2828 = vld [vmem:[%s7 + $0x254] sm:$0xf]
      %v2829 = vld [vmem:[%s7 + $0x258] sm:$0xff]
      %v2830 = vld [vmem:[%s7 + $0x260] sm:$0xf]
      %v2831 = vld [vmem:[%s7 + $0x264] sm:$0xff]
      %v2832 = vld [vmem:[%s7 + $0x26c] sm:$0xf]
      %v2833 = vld [vmem:[%s7 + $0x270] sm:$0xff]
      %v2834 = vld [vmem:[%s7 + $0x278] sm:$0xf]
      %v2835 = vld [vmem:[%s7 + $0x27c] sm:$0xff]
      %v2836 = vld [vmem:[%s7 + $0x284] sm:$0xf]
      %v2837 = vld [vmem:[%s7 + $0x288] sm:$0xff]
      %v2838 = vld [vmem:[%s7 + $0x290] sm:$0xf]
      %v2839 = vld [vmem:[%s7 + $0x294] sm:$0xff]
      %v2840 = vld [vmem:[%s7 + $0x29c] sm:$0xf]
      %v2841 = vld [vmem:[%s7 + $0x2a0] sm:$0xff]
      %v2842 = vld [vmem:[%s7 + $0x2a8] sm:$0xf]
      %v2843 = vld [vmem:[%s7 + $0x2ac] sm:$0xff]
      %v2844 = vld [vmem:[%s7 + $0x2b4] sm:$0xf]
      %v2845 = vld [vmem:[%s7 + $0x2b8] sm:$0xff]
      %v2846 = vld [vmem:[%s7 + $0x2c0] sm:$0xf]
      %v2847 = vld [vmem:[%s7 + $0x2c4] sm:$0xff]
      %v2848 = vld [vmem:[%s7 + $0x2cc] sm:$0xf]
      %v2849 = vld [vmem:[%s7 + $0x2d0] sm:$0xff]
      %v2850 = vld [vmem:[%s7 + $0x2d8] sm:$0xf]
      %v2851 = vld [vmem:[%s7 + $0x2dc] sm:$0xff]
      %v2852 = vld [vmem:[%s7 + $0x2e4] sm:$0xf]
      %v2853 = vld [vmem:[%s7 + $0x2e8] sm:$0xff]
      %v2854 = vld [vmem:[%s7 + $0x2f0] sm:$0xf]
      %v2855 = vld [vmem:[%s7 + $0x2f4] sm:$0xff]
      %v2856 = vld [vmem:[%s7 + $0x2fc] sm:$0xf]
      %v2857 = vld [vmem:[%s7 + $0x300] sm:$0xff]
      %v2858 = vld [vmem:[%s7 + $0x308] sm:$0xf]
      %v2859 = vld [vmem:[%s7 + $0x30c] sm:$0xff]
      %v2860 = vld [vmem:[%s7 + $0x314] sm:$0xf]
      %v2861 = vld [vmem:[%s7 + $0x318] sm:$0xff]
      %v2862 = vld [vmem:[%s7 + $0x320] sm:$0xf]
      %v2863 = vld [vmem:[%s7 + $0x324] sm:$0xff]
      %v2864 = vld [vmem:[%s7 + $0x32c] sm:$0xf]
      %v2865 = vld [vmem:[%s7 + $0x330] sm:$0xff]
      %v2866 = vld [vmem:[%s7 + $0x338] sm:$0xf]
      %v2867 = vld [vmem:[%s7 + $0x33c] sm:$0xff]
      %v2868 = vld [vmem:[%s7 + $0x344] sm:$0xf]
      %v2869 = vld [vmem:[%s7 + $0x348] sm:$0xff]
      %v2870 = vld [vmem:[%s7 + $0x350] sm:$0xf]
      %v2871 = vld [vmem:[%s7 + $0x354] sm:$0xff]
      %v2872 = vld [vmem:[%s7 + $0x35c] sm:$0xf]
      %v2873 = vld [vmem:[%s7 + $0x360] sm:$0xff]
      %v2874 = vld [vmem:[%s7 + $0x368] sm:$0xf]
      %v2875 = vld [vmem:[%s7 + $0x36c] sm:$0xff]
      %v2876 = vld [vmem:[%s7 + $0x374] sm:$0xf]
      %v2877 = vld [vmem:[%s7 + $0x378] sm:$0xff]
      %v2878 = vld [vmem:[%s7 + $0x380] sm:$0xf]
      %v2879 = vld [vmem:[%s7 + $0x384] sm:$0xff]
      %v2880 = vld [vmem:[%s7 + $0x38c] sm:$0xf]
      %v2881 = vld [vmem:[%s7 + $0x390] sm:$0xff]
      %v2882 = vld [vmem:[%s7 + $0x398] sm:$0xf]
      %v2883 = vld [vmem:[%s7 + $0x39c] sm:$0xff]
      %v2884 = vld [vmem:[%s7 + $0x3a4] sm:$0xf]
      %v2885 = vld [vmem:[%s7 + $0x3a8] sm:$0xff]
      %v2886 = vld [vmem:[%s7 + $0x3b0] sm:$0xf]
      %v2887 = vld [vmem:[%s7 + $0x3b4] sm:$0xff]
      %v2888 = vld [vmem:[%s7 + $0x3bc] sm:$0xf]
      %v2889 = vld [vmem:[%s7 + $0x3c0] sm:$0xff]
      %v2890 = vld [vmem:[%s7 + $0x3c8] sm:$0xf]
      %v2891 = vld [vmem:[%s7 + $0x3cc] sm:$0xff]
      %v2892 = vld [vmem:[%s7 + $0x3d4] sm:$0xf]
      %v2893 = vld [vmem:[%s7 + $0x3d8] sm:$0xff]
      %v2894 = vld [vmem:[%s7 + $0x3e0] sm:$0xf]
      %v2895 = vld [vmem:[%s7 + $0x3e4] sm:$0xff]
      %v2896 = vld [vmem:[%s7 + $0x3ec] sm:$0xf]
      %v2897 = vld [vmem:[%s7 + $0x3f0] sm:$0xff]
      %v2898 = vld [vmem:[%s7 + $0x3f8] sm:$0xf]
      %v2899 = vld [vmem:[%s7 + $0x3fc] sm:$0xff]
      %v2900 = vld [vmem:[%s7 + $0x404] sm:$0xf]
      %v2901 = vld [vmem:[%s7 + $0x408] sm:$0xff]
      %v2902 = vld [vmem:[%s7 + $0x410] sm:$0xf]
      %v2903 = vld [vmem:[%s7 + $0x414] sm:$0xff]
      %v2904 = vld [vmem:[%s7 + $0x41c] sm:$0xf]
      %v2905 = vld [vmem:[%s7 + $0x420] sm:$0xff]
      %v2906 = vld [vmem:[%s7 + $0x428] sm:$0xf]
      %v2907 = vld [vmem:[%s7 + $0x42c] sm:$0xff]
      %v2908 = vld [vmem:[%s7 + $0x434] sm:$0xf]
      %v2909 = vld [vmem:[%s7 + $0x438] sm:$0xff]
      %v2910 = vld [vmem:[%s7 + $0x440] sm:$0xf]
      %v2911 = vld [vmem:[%s7 + $0x444] sm:$0xff]
      %v2912 = vld [vmem:[%s7 + $0x44c] sm:$0xf]
      %v2913 = vld [vmem:[%s7 + $0x450] sm:$0xff]
      %v2914 = vld [vmem:[%s7 + $0x458] sm:$0xf]
      %v2915 = vld [vmem:[%s7 + $0x45c] sm:$0xff]
      %v2916 = vld [vmem:[%s7 + $0x464] sm:$0xf]
      %v2917 = vld [vmem:[%s7 + $0x468] sm:$0xff]
      %v2918 = vld [vmem:[%s7 + $0x470] sm:$0xf]
      %v2919 = vld [vmem:[%s7 + $0x474] sm:$0xff]
      %v2920 = vld [vmem:[%s7 + $0x47c] sm:$0xf]
      %v2921 = vld [vmem:[%s7 + $0x480] sm:$0xff]
      %v2922 = vld [vmem:[%s7 + $0x488] sm:$0xf]
      %v2923 = vld [vmem:[%s7 + $0x48c] sm:$0xff]
      %v2924 = vld [vmem:[%s7 + $0x494] sm:$0xf]
      %v2925 = vld [vmem:[%s7 + $0x498] sm:$0xff]
      %v2926 = vld [vmem:[%s7 + $0x4a0] sm:$0xf]
      %v2927 = vld [vmem:[%s7 + $0x4a4] sm:$0xff]
      %v2928 = vld [vmem:[%s7 + $0x4ac] sm:$0xf]
      %v2929 = vld [vmem:[%s7 + $0x4b0] sm:$0xff]
      %v2930 = vld [vmem:[%s7 + $0x4b8] sm:$0xf]
      %v2931 = vld [vmem:[%s7 + $0x4bc] sm:$0xff]
      %v2932 = vld [vmem:[%s7 + $0x4c4] sm:$0xf]
      %v2933 = vld [vmem:[%s7 + $0x4c8] sm:$0xff]
      %v2934 = vld [vmem:[%s7 + $0x4d0] sm:$0xf]
      %v2935 = vld [vmem:[%s7 + $0x4d4] sm:$0xff]
      %v2936 = vld [vmem:[%s7 + $0x4dc] sm:$0xf]
      %v2937 = vld [vmem:[%s7 + $0x4e0] sm:$0xff]
      %v2938 = vld [vmem:[%s7 + $0x4e8] sm:$0xf]
      %v2939 = vld [vmem:[%s7 + $0x4ec] sm:$0xff]
      %v2940 = vld [vmem:[%s7 + $0x4f4] sm:$0xf]
      %v2941 = vld [vmem:[%s7 + $0x4f8] sm:$0xff]
      %v2942 = vld [vmem:[%s7 + $0x500] sm:$0xf]
      %v2943 = vld [vmem:[%s7 + $0x504] sm:$0xff]
      %v2944 = vld [vmem:[%s7 + $0x50c] sm:$0xf]
      %v2945 = vld [vmem:[%s7 + $0x510] sm:$0xff]
      %v2946 = vld [vmem:[%s7 + $0x518] sm:$0xf]
      %v2947 = vld [vmem:[%s7 + $0x51c] sm:$0xff]
      %v2948 = vld [vmem:[%s7 + $0x524] sm:$0xf]
      %v2949 = vld [vmem:[%s7 + $0x528] sm:$0xff]
      %v2950 = vld [vmem:[%s7 + $0x530] sm:$0xf]
      %v2951 = vld [vmem:[%s7 + $0x534] sm:$0xff]
      %v2952 = vld [vmem:[%s7 + $0x53c] sm:$0xf]
      %v2953 = vld [vmem:[%s7 + $0x540] sm:$0xff]
      %v2954 = vld [vmem:[%s7 + $0x548] sm:$0xf]
      %v2955 = vld [vmem:[%s7 + $0x54c] sm:$0xff]
      %v2956 = vld [vmem:[%s7 + $0x554] sm:$0xf]
      %v2957 = vld [vmem:[%s7 + $0x558] sm:$0xff]
      %v2958 = vld [vmem:[%s7 + $0x560] sm:$0xf]
      %v2959 = vld [vmem:[%s7 + $0x564] sm:$0xff]
      %v2960 = vld [vmem:[%s7 + $0x56c] sm:$0xf]
      %v2961 = vld [vmem:[%s7 + $0x570] sm:$0xff]
      %v2962 = vld [vmem:[%s7 + $0x578] sm:$0xf]
      %v2963 = vld [vmem:[%s7 + $0x57c] sm:$0xff]
      %v2964 = vld [vmem:[%s7 + $0x584] sm:$0xf]
      %v2965 = vld [vmem:[%s7 + $0x588] sm:$0xff]
      %v2966 = vld [vmem:[%s7 + $0x590] sm:$0xf]
      %v2967 = vld [vmem:[%s7 + $0x594] sm:$0xff]
      %v2968 = vld [vmem:[%s7 + $0x59c] sm:$0xf]
      %v2969 = vpack.c.bf16 %v2721, %v2713
      %v2970 = vpack.c.bf16 %v2722, %v2714
      %v2971 = vpack.c.bf16 %v2723, %v2715
      %v2972 = vpack.c.bf16 %v2724, %v2716
      %v2973 = vpack.c.bf16 %v2725, %v2717
      %v2974 = vpack.c.bf16 %v2726, %v2718
      %v2975 = vpack.c.bf16 %v2727, %v2719
      %v2976 = vpack.c.bf16 %v2728, %v2720
      %v2977 = vld [vmem:[%s8] sm:$0x7]
      %v2979 = vperm.slane %v2977, 0
      %v2980 = vperm.slane %v2977, 1
      %v2981 = vperm.slane %v2977, 2
      %v3225 = vunpack.c.l.b16 %v2729
      %v3226 = vunpack.c.h.b16 %v2729
      %v3227 = vunpack.c.l.b16 %v2730
      %v3228 = vunpack.c.l.b16 %v2731
      %v3229 = vunpack.c.h.b16 %v2731
      %v3230 = vunpack.c.l.b16 %v2732
      %v3231 = vunpack.c.l.b16 %v2733
      %v3232 = vunpack.c.h.b16 %v2733
      %v3233 = vunpack.c.l.b16 %v2734
      %v3234 = vunpack.c.l.b16 %v2735
      %v3235 = vunpack.c.h.b16 %v2735
      %v3236 = vunpack.c.l.b16 %v2736
      %v3237 = vunpack.c.l.b16 %v2737
      %v3238 = vunpack.c.h.b16 %v2737
      %v3239 = vunpack.c.l.b16 %v2738
      %v3240 = vunpack.c.l.b16 %v2739
      %v3241 = vunpack.c.h.b16 %v2739
      %v3242 = vunpack.c.l.b16 %v2740
      %v3243 = vunpack.c.l.b16 %v2741
      %v3244 = vunpack.c.h.b16 %v2741
      %v3245 = vunpack.c.l.b16 %v2742
      %v3246 = vunpack.c.l.b16 %v2743
      %v3247 = vunpack.c.h.b16 %v2743
      %v3248 = vunpack.c.l.b16 %v2744
      %v3249 = vunpack.c.l.b16 %v2745
      %v3250 = vunpack.c.h.b16 %v2745
      %v3251 = vunpack.c.l.b16 %v2746
      %v3252 = vunpack.c.l.b16 %v2747
      %v3253 = vunpack.c.h.b16 %v2747
      %v3254 = vunpack.c.l.b16 %v2748
      %v3255 = vunpack.c.l.b16 %v2749
      %v3256 = vunpack.c.h.b16 %v2749
      %v3257 = vunpack.c.l.b16 %v2750
      %v3258 = vunpack.c.l.b16 %v2751
      %v3259 = vunpack.c.h.b16 %v2751
      %v3260 = vunpack.c.l.b16 %v2752
      %v3261 = vunpack.c.l.b16 %v2753
      %v3262 = vunpack.c.h.b16 %v2753
      %v3263 = vunpack.c.l.b16 %v2754
      %v3264 = vunpack.c.l.b16 %v2755
      %v3265 = vunpack.c.h.b16 %v2755
      %v3266 = vunpack.c.l.b16 %v2756
      %v3267 = vunpack.c.l.b16 %v2757
      %v3268 = vunpack.c.h.b16 %v2757
      %v3269 = vunpack.c.l.b16 %v2758
      %v3270 = vunpack.c.l.b16 %v2759
      %v3271 = vunpack.c.h.b16 %v2759
      %v3272 = vunpack.c.l.b16 %v2760
      %v3273 = vunpack.c.l.b16 %v2761
      %v3274 = vunpack.c.h.b16 %v2761
      %v3275 = vunpack.c.l.b16 %v2762
      %v3276 = vunpack.c.l.b16 %v2763
      %v3277 = vunpack.c.h.b16 %v2763
      %v3278 = vunpack.c.l.b16 %v2764
      %v3279 = vunpack.c.l.b16 %v2765
      %v3280 = vunpack.c.h.b16 %v2765
      %v3281 = vunpack.c.l.b16 %v2766
      %v3282 = vunpack.c.l.b16 %v2767
      %v3283 = vunpack.c.h.b16 %v2767
      %v3284 = vunpack.c.l.b16 %v2768
      %v3285 = vunpack.c.l.b16 %v2769
      %v3286 = vunpack.c.h.b16 %v2769
      %v3287 = vunpack.c.l.b16 %v2770
      %v3288 = vunpack.c.l.b16 %v2771
      %v3289 = vunpack.c.h.b16 %v2771
      %v3290 = vunpack.c.l.b16 %v2772
      %v3291 = vunpack.c.l.b16 %v2773
      %v3292 = vunpack.c.h.b16 %v2773
      %v3293 = vunpack.c.l.b16 %v2774
      %v3294 = vunpack.c.l.b16 %v2775
      %v3295 = vunpack.c.h.b16 %v2775
      %v3296 = vunpack.c.l.b16 %v2776
      %v3297 = vunpack.c.l.b16 %v2777
      %v3298 = vunpack.c.h.b16 %v2777
      %v3299 = vunpack.c.l.b16 %v2778
      %v3300 = vunpack.c.l.b16 %v2779
      %v3301 = vunpack.c.h.b16 %v2779
      %v3302 = vunpack.c.l.b16 %v2780
      %v3303 = vunpack.c.l.b16 %v2781
      %v3304 = vunpack.c.h.b16 %v2781
      %v3305 = vunpack.c.l.b16 %v2782
      %v3306 = vunpack.c.l.b16 %v2783
      %v3307 = vunpack.c.h.b16 %v2783
      %v3308 = vunpack.c.l.b16 %v2784
      %v3309 = vunpack.c.l.b16 %v2785
      %v3310 = vunpack.c.h.b16 %v2785
      %v3311 = vunpack.c.l.b16 %v2786
      %v3312 = vunpack.c.l.b16 %v2787
      %v3313 = vunpack.c.h.b16 %v2787
      %v3314 = vunpack.c.l.b16 %v2788
      %v3315 = vunpack.c.l.b16 %v2789
      %v3316 = vunpack.c.h.b16 %v2789
      %v3317 = vunpack.c.l.b16 %v2790
      %v3318 = vunpack.c.l.b16 %v2791
      %v3319 = vunpack.c.h.b16 %v2791
      %v3320 = vunpack.c.l.b16 %v2792
      %v3321 = vunpack.c.l.b16 %v2793
      %v3322 = vunpack.c.h.b16 %v2793
      %v3323 = vunpack.c.l.b16 %v2794
      %v3324 = vunpack.c.l.b16 %v2795
      %v3325 = vunpack.c.h.b16 %v2795
      %v3326 = vunpack.c.l.b16 %v2796
      %v3327 = vunpack.c.l.b16 %v2797
      %v3328 = vunpack.c.h.b16 %v2797
      %v3329 = vunpack.c.l.b16 %v2798
      %v3330 = vunpack.c.l.b16 %v2799
      %v3331 = vunpack.c.h.b16 %v2799
      %v3332 = vunpack.c.l.b16 %v2800
      %v3333 = vunpack.c.l.b16 %v2801
      %v3334 = vunpack.c.h.b16 %v2801
      %v3335 = vunpack.c.l.b16 %v2802
      %v3336 = vunpack.c.l.b16 %v2803
      %v3337 = vunpack.c.h.b16 %v2803
      %v3338 = vunpack.c.l.b16 %v2804
      %v3339 = vunpack.c.l.b16 %v2805
      %v3340 = vunpack.c.h.b16 %v2805
      %v3341 = vunpack.c.l.b16 %v2806
      %v3342 = vunpack.c.l.b16 %v2807
      %v3343 = vunpack.c.h.b16 %v2807
      %v3344 = vunpack.c.l.b16 %v2808
      %v3345 = vunpack.c.l.b16 %v2809
      %v3346 = vunpack.c.h.b16 %v2809
      %v3347 = vunpack.c.l.b16 %v2810
      %v3348 = vunpack.c.l.b16 %v2811
      %v3349 = vunpack.c.h.b16 %v2811
      %v3350 = vunpack.c.l.b16 %v2812
      %v3351 = vunpack.c.l.b16 %v2813
      %v3352 = vunpack.c.h.b16 %v2813
      %v3353 = vunpack.c.l.b16 %v2814
      %v3354 = vunpack.c.l.b16 %v2815
      %v3355 = vunpack.c.h.b16 %v2815
      %v3356 = vunpack.c.l.b16 %v2816
      %v3357 = vunpack.c.l.b16 %v2817
      %v3358 = vunpack.c.h.b16 %v2817
      %v3359 = vunpack.c.l.b16 %v2818
      %v3360 = vunpack.c.l.b16 %v2819
      %v3361 = vunpack.c.h.b16 %v2819
      %v3362 = vunpack.c.l.b16 %v2820
      %v3363 = vunpack.c.l.b16 %v2821
      %v3364 = vunpack.c.h.b16 %v2821
      %v3365 = vunpack.c.l.b16 %v2822
      %v3366 = vunpack.c.l.b16 %v2823
      %v3367 = vunpack.c.h.b16 %v2823
      %v3368 = vunpack.c.l.b16 %v2824
      %v3369 = vunpack.c.l.b16 %v2825
      %v3370 = vunpack.c.h.b16 %v2825
      %v3371 = vunpack.c.l.b16 %v2826
      %v3372 = vunpack.c.l.b16 %v2827
      %v3373 = vunpack.c.h.b16 %v2827
      %v3374 = vunpack.c.l.b16 %v2828
      %v3375 = vunpack.c.l.b16 %v2829
      %v3376 = vunpack.c.h.b16 %v2829
      %v3377 = vunpack.c.l.b16 %v2830
      %v3378 = vunpack.c.l.b16 %v2831
      %v3379 = vunpack.c.h.b16 %v2831
      %v3380 = vunpack.c.l.b16 %v2832
      %v3381 = vunpack.c.l.b16 %v2833
      %v3382 = vunpack.c.h.b16 %v2833
      %v3383 = vunpack.c.l.b16 %v2834
      %v3384 = vunpack.c.l.b16 %v2835
      %v3385 = vunpack.c.h.b16 %v2835
      %v3386 = vunpack.c.l.b16 %v2836
      %v3387 = vunpack.c.l.b16 %v2837
      %v3388 = vunpack.c.h.b16 %v2837
      %v3389 = vunpack.c.l.b16 %v2838
      %v3390 = vunpack.c.l.b16 %v2839
      %v3391 = vunpack.c.h.b16 %v2839
      %v3392 = vunpack.c.l.b16 %v2840
      %v3393 = vunpack.c.l.b16 %v2841
      %v3394 = vunpack.c.h.b16 %v2841
      %v3395 = vunpack.c.l.b16 %v2842
      %v3396 = vunpack.c.l.b16 %v2843
      %v3397 = vunpack.c.h.b16 %v2843
      %v3398 = vunpack.c.l.b16 %v2844
      %v3399 = vunpack.c.l.b16 %v2845
      %v3400 = vunpack.c.h.b16 %v2845
      %v3401 = vunpack.c.l.b16 %v2846
      %v3402 = vunpack.c.l.b16 %v2847
      %v3403 = vunpack.c.h.b16 %v2847
      %v3404 = vunpack.c.l.b16 %v2848
      %v3405 = vunpack.c.l.b16 %v2849
      %v3406 = vunpack.c.h.b16 %v2849
      %v3407 = vunpack.c.l.b16 %v2850
      %v3408 = vunpack.c.l.b16 %v2851
      %v3409 = vunpack.c.h.b16 %v2851
      %v3410 = vunpack.c.l.b16 %v2852
      %v3411 = vunpack.c.l.b16 %v2853
      %v3412 = vunpack.c.h.b16 %v2853
      %v3413 = vunpack.c.l.b16 %v2854
      %v3414 = vunpack.c.l.b16 %v2855
      %v3415 = vunpack.c.h.b16 %v2855
      %v3416 = vunpack.c.l.b16 %v2856
      %v3417 = vunpack.c.l.b16 %v2857
      %v3418 = vunpack.c.h.b16 %v2857
      %v3419 = vunpack.c.l.b16 %v2858
      %v3420 = vunpack.c.l.b16 %v2859
      %v3421 = vunpack.c.h.b16 %v2859
      %v3422 = vunpack.c.l.b16 %v2860
      %v3423 = vunpack.c.l.b16 %v2861
      %v3424 = vunpack.c.h.b16 %v2861
      %v3425 = vunpack.c.l.b16 %v2862
      %v3426 = vunpack.c.l.b16 %v2863
      %v3427 = vunpack.c.h.b16 %v2863
      %v3428 = vunpack.c.l.b16 %v2864
      %v3429 = vunpack.c.l.b16 %v2865
      %v3430 = vunpack.c.h.b16 %v2865
      %v3431 = vunpack.c.l.b16 %v2866
      %v3432 = vunpack.c.l.b16 %v2867
      %v3433 = vunpack.c.h.b16 %v2867
      %v3434 = vunpack.c.l.b16 %v2868
      %v3435 = vunpack.c.l.b16 %v2869
      %v3436 = vunpack.c.h.b16 %v2869
      %v3437 = vunpack.c.l.b16 %v2870
      %v3438 = vunpack.c.l.b16 %v2871
      %v3439 = vunpack.c.h.b16 %v2871
      %v3440 = vunpack.c.l.b16 %v2872
      %v3441 = vunpack.c.l.b16 %v2873
      %v3442 = vunpack.c.h.b16 %v2873
      %v3443 = vunpack.c.l.b16 %v2874
      %v3444 = vunpack.c.l.b16 %v2875
      %v3445 = vunpack.c.h.b16 %v2875
      %v3446 = vunpack.c.l.b16 %v2876
      %v3447 = vunpack.c.l.b16 %v2877
      %v3448 = vunpack.c.h.b16 %v2877
      %v3449 = vunpack.c.l.b16 %v2878
      %v3450 = vunpack.c.l.b16 %v2879
      %v3451 = vunpack.c.h.b16 %v2879
      %v3452 = vunpack.c.l.b16 %v2880
      %v3453 = vunpack.c.l.b16 %v2881
      %v3454 = vunpack.c.h.b16 %v2881
      %v3455 = vunpack.c.l.b16 %v2882
      %v3456 = vunpack.c.l.b16 %v2883
      %v3457 = vunpack.c.h.b16 %v2883
      %v3458 = vunpack.c.l.b16 %v2884
      %v3459 = vunpack.c.l.b16 %v2885
      %v3460 = vunpack.c.h.b16 %v2885
      %v3461 = vunpack.c.l.b16 %v2886
      %v3462 = vunpack.c.l.b16 %v2887
      %v3463 = vunpack.c.h.b16 %v2887
      %v3464 = vunpack.c.l.b16 %v2888
      %v3465 = vunpack.c.l.b16 %v2889
      %v3466 = vunpack.c.h.b16 %v2889
      %v3467 = vunpack.c.l.b16 %v2890
      %v3468 = vunpack.c.l.b16 %v2891
      %v3469 = vunpack.c.h.b16 %v2891
      %v3470 = vunpack.c.l.b16 %v2892
      %v3471 = vunpack.c.l.b16 %v2893
      %v3472 = vunpack.c.h.b16 %v2893
      %v3473 = vunpack.c.l.b16 %v2894
      %v3474 = vunpack.c.l.b16 %v2895
      %v3475 = vunpack.c.h.b16 %v2895
      %v3476 = vunpack.c.l.b16 %v2896
      %v3477 = vunpack.c.l.b16 %v2897
      %v3478 = vunpack.c.h.b16 %v2897
      %v3479 = vunpack.c.l.b16 %v2898
      %v3480 = vunpack.c.l.b16 %v2899
      %v3481 = vunpack.c.h.b16 %v2899
      %v3482 = vunpack.c.l.b16 %v2900
      %v3483 = vunpack.c.l.b16 %v2901
      %v3484 = vunpack.c.h.b16 %v2901
      %v3485 = vunpack.c.l.b16 %v2902
      %v3486 = vunpack.c.l.b16 %v2903
      %v3487 = vunpack.c.h.b16 %v2903
      %v3488 = vunpack.c.l.b16 %v2904
      %v3489 = vunpack.c.l.b16 %v2905
      %v3490 = vunpack.c.h.b16 %v2905
      %v3491 = vunpack.c.l.b16 %v2906
      %v3492 = vunpack.c.l.b16 %v2907
      %v3493 = vunpack.c.h.b16 %v2907
      %v3494 = vunpack.c.l.b16 %v2908
      %v3495 = vunpack.c.l.b16 %v2909
      %v3496 = vunpack.c.h.b16 %v2909
      %v3497 = vunpack.c.l.b16 %v2910
      %v3498 = vunpack.c.l.b16 %v2911
      %v3499 = vunpack.c.h.b16 %v2911
      %v3500 = vunpack.c.l.b16 %v2912
      %v3501 = vunpack.c.l.b16 %v2913
      %v3502 = vunpack.c.h.b16 %v2913
      %v3503 = vunpack.c.l.b16 %v2914
      %v3504 = vunpack.c.l.b16 %v2915
      %v3505 = vunpack.c.h.b16 %v2915
      %v3506 = vunpack.c.l.b16 %v2916
      %v3507 = vunpack.c.l.b16 %v2917
      %v3508 = vunpack.c.h.b16 %v2917
      %v3509 = vunpack.c.l.b16 %v2918
      %v3510 = vunpack.c.l.b16 %v2919
      %v3511 = vunpack.c.h.b16 %v2919
      %v3512 = vunpack.c.l.b16 %v2920
      %v3513 = vunpack.c.l.b16 %v2921
      %v3514 = vunpack.c.h.b16 %v2921
      %v3515 = vunpack.c.l.b16 %v2922
      %v3516 = vunpack.c.l.b16 %v2923
      %v3517 = vunpack.c.h.b16 %v2923
      %v3518 = vunpack.c.l.b16 %v2924
      %v3519 = vunpack.c.l.b16 %v2925
      %v3520 = vunpack.c.h.b16 %v2925
      %v3521 = vunpack.c.l.b16 %v2926
      %v3522 = vunpack.c.l.b16 %v2927
      %v3523 = vunpack.c.h.b16 %v2927
      %v3524 = vunpack.c.l.b16 %v2928
      %v3525 = vunpack.c.l.b16 %v2929
      %v3526 = vunpack.c.h.b16 %v2929
      %v3527 = vunpack.c.l.b16 %v2930
      %v3528 = vunpack.c.l.b16 %v2931
      %v3529 = vunpack.c.h.b16 %v2931
      %v3530 = vunpack.c.l.b16 %v2932
      %v3531 = vunpack.c.l.b16 %v2933
      %v3532 = vunpack.c.h.b16 %v2933
      %v3533 = vunpack.c.l.b16 %v2934
      %v3534 = vunpack.c.l.b16 %v2935
      %v3535 = vunpack.c.h.b16 %v2935
      %v3536 = vunpack.c.l.b16 %v2936
      %v3537 = vunpack.c.l.b16 %v2937
      %v3538 = vunpack.c.h.b16 %v2937
      %v3539 = vunpack.c.l.b16 %v2938
      %v3540 = vunpack.c.l.b16 %v2939
      %v3541 = vunpack.c.h.b16 %v2939
      %v3542 = vunpack.c.l.b16 %v2940
      %v3543 = vunpack.c.l.b16 %v2941
      %v3544 = vunpack.c.h.b16 %v2941
      %v3545 = vunpack.c.l.b16 %v2942
      %v3546 = vunpack.c.l.b16 %v2943
      %v3547 = vunpack.c.h.b16 %v2943
      %v3548 = vunpack.c.l.b16 %v2944
      %v3549 = vunpack.c.l.b16 %v2945
      %v3550 = vunpack.c.h.b16 %v2945
      %v3551 = vunpack.c.l.b16 %v2946
      %v3552 = vunpack.c.l.b16 %v2947
      %v3553 = vunpack.c.h.b16 %v2947
      %v3554 = vunpack.c.l.b16 %v2948
      %v3555 = vunpack.c.l.b16 %v2949
      %v3556 = vunpack.c.h.b16 %v2949
      %v3557 = vunpack.c.l.b16 %v2950
      %v3558 = vunpack.c.l.b16 %v2951
      %v3559 = vunpack.c.h.b16 %v2951
      %v3560 = vunpack.c.l.b16 %v2952
      %v3561 = vunpack.c.l.b16 %v2953
      %v3562 = vunpack.c.h.b16 %v2953
      %v3563 = vunpack.c.l.b16 %v2954
      %v3564 = vunpack.c.l.b16 %v2955
      %v3565 = vunpack.c.h.b16 %v2955
      %v3566 = vunpack.c.l.b16 %v2956
      %v3567 = vunpack.c.l.b16 %v2957
      %v3568 = vunpack.c.h.b16 %v2957
      %v3569 = vunpack.c.l.b16 %v2958
      %v3570 = vunpack.c.l.b16 %v2959
      %v3571 = vunpack.c.h.b16 %v2959
      %v3572 = vunpack.c.l.b16 %v2960
      %v3573 = vunpack.c.l.b16 %v2961
      %v3574 = vunpack.c.h.b16 %v2961
      %v3575 = vunpack.c.l.b16 %v2962
      %v3576 = vunpack.c.l.b16 %v2963
      %v3577 = vunpack.c.h.b16 %v2963
      %v3578 = vunpack.c.l.b16 %v2964
      %v3579 = vunpack.c.l.b16 %v2965
      %v3580 = vunpack.c.h.b16 %v2965
      %v3581 = vunpack.c.l.b16 %v2966
      %v3582 = vunpack.c.l.b16 %v2967
      %v3583 = vunpack.c.h.b16 %v2967
      %v3584 = vunpack.c.l.b16 %v2968
      %v3585 = vpack.c.b16 %v3228, %v3225
      %v3586 = vpack.c.b16 %v3229, %v3226
      %v3587 = vpack.c.b16 %v3230, %v3227
      %v3588 = vpack.c.b16 %v3234, %v3231
      %v3589 = vpack.c.b16 %v3235, %v3232
      %v3590 = vpack.c.b16 %v3236, %v3233
      %v3591 = vpack.c.b16 %v3240, %v3237
      %v3592 = vpack.c.b16 %v3241, %v3238
      %v3593 = vpack.c.b16 %v3242, %v3239
      %v3594 = vpack.c.b16 %v3246, %v3243
      %v3595 = vpack.c.b16 %v3247, %v3244
      %v3596 = vpack.c.b16 %v3248, %v3245
      %v3597 = vpack.c.b16 %v3252, %v3249
      %v3598 = vpack.c.b16 %v3253, %v3250
      %v3599 = vpack.c.b16 %v3254, %v3251
      %v3600 = vpack.c.b16 %v3258, %v3255
      %v3601 = vpack.c.b16 %v3259, %v3256
      %v3602 = vpack.c.b16 %v3260, %v3257
      %v3603 = vpack.c.b16 %v3264, %v3261
      %v3604 = vpack.c.b16 %v3265, %v3262
      %v3605 = vpack.c.b16 %v3266, %v3263
      %v3606 = vpack.c.b16 %v3270, %v3267
      %v3607 = vpack.c.b16 %v3271, %v3268
      %v3608 = vpack.c.b16 %v3272, %v3269
      %v3609 = vpack.c.b16 %v3276, %v3273
      %v3610 = vpack.c.b16 %v3277, %v3274
      %v3611 = vpack.c.b16 %v3278, %v3275
      %v3612 = vpack.c.b16 %v3282, %v3279
      %v3613 = vpack.c.b16 %v3283, %v3280
      %v3614 = vpack.c.b16 %v3284, %v3281
      %v3615 = vpack.c.b16 %v3288, %v3285
      %v3616 = vpack.c.b16 %v3289, %v3286
      %v3617 = vpack.c.b16 %v3290, %v3287
      %v3618 = vpack.c.b16 %v3294, %v3291
      %v3619 = vpack.c.b16 %v3295, %v3292
      %v3620 = vpack.c.b16 %v3296, %v3293
      %v3621 = vpack.c.b16 %v3300, %v3297
      %v3622 = vpack.c.b16 %v3301, %v3298
      %v3623 = vpack.c.b16 %v3302, %v3299
      %v3624 = vpack.c.b16 %v3306, %v3303
      %v3625 = vpack.c.b16 %v3307, %v3304
      %v3626 = vpack.c.b16 %v3308, %v3305
      %v3627 = vpack.c.b16 %v3312, %v3309
      %v3628 = vpack.c.b16 %v3313, %v3310
      %v3629 = vpack.c.b16 %v3314, %v3311
      %v3630 = vpack.c.b16 %v3318, %v3315
      %v3631 = vpack.c.b16 %v3319, %v3316
      %v3632 = vpack.c.b16 %v3320, %v3317
      %v3633 = vpack.c.b16 %v3324, %v3321
      %v3634 = vpack.c.b16 %v3325, %v3322
      %v3635 = vpack.c.b16 %v3326, %v3323
      %v3636 = vpack.c.b16 %v3330, %v3327
      %v3637 = vpack.c.b16 %v3331, %v3328
      %v3638 = vpack.c.b16 %v3332, %v3329
      %v3639 = vpack.c.b16 %v3336, %v3333
      %v3640 = vpack.c.b16 %v3337, %v3334
      %v3641 = vpack.c.b16 %v3338, %v3335
      %v3642 = vpack.c.b16 %v3342, %v3339
      %v3643 = vpack.c.b16 %v3343, %v3340
      %v3644 = vpack.c.b16 %v3344, %v3341
      %v3645 = vpack.c.b16 %v3348, %v3345
      %v3646 = vpack.c.b16 %v3349, %v3346
      %v3647 = vpack.c.b16 %v3350, %v3347
      %v3648 = vpack.c.b16 %v3354, %v3351
      %v3649 = vpack.c.b16 %v3355, %v3352
      %v3650 = vpack.c.b16 %v3356, %v3353
      %v3651 = vpack.c.b16 %v3360, %v3357
      %v3652 = vpack.c.b16 %v3361, %v3358
      %v3653 = vpack.c.b16 %v3362, %v3359
      %v3654 = vpack.c.b16 %v3366, %v3363
      %v3655 = vpack.c.b16 %v3367, %v3364
      %v3656 = vpack.c.b16 %v3368, %v3365
      %v3657 = vpack.c.b16 %v3372, %v3369
      %v3658 = vpack.c.b16 %v3373, %v3370
      %v3659 = vpack.c.b16 %v3374, %v3371
      %v3660 = vpack.c.b16 %v3378, %v3375
      %v3661 = vpack.c.b16 %v3379, %v3376
      %v3662 = vpack.c.b16 %v3380, %v3377
      %v3663 = vpack.c.b16 %v3384, %v3381
      %v3664 = vpack.c.b16 %v3385, %v3382
      %v3665 = vpack.c.b16 %v3386, %v3383
      %v3666 = vpack.c.b16 %v3390, %v3387
      %v3667 = vpack.c.b16 %v3391, %v3388
      %v3668 = vpack.c.b16 %v3392, %v3389
      %v3669 = vpack.c.b16 %v3396, %v3393
      %v3670 = vpack.c.b16 %v3397, %v3394
      %v3671 = vpack.c.b16 %v3398, %v3395
      %v3672 = vpack.c.b16 %v3402, %v3399
      %v3673 = vpack.c.b16 %v3403, %v3400
      %v3674 = vpack.c.b16 %v3404, %v3401
      %v3675 = vpack.c.b16 %v3408, %v3405
      %v3676 = vpack.c.b16 %v3409, %v3406
      %v3677 = vpack.c.b16 %v3410, %v3407
      %v3678 = vpack.c.b16 %v3414, %v3411
      %v3679 = vpack.c.b16 %v3415, %v3412
      %v3680 = vpack.c.b16 %v3416, %v3413
      %v3681 = vpack.c.b16 %v3420, %v3417
      %v3682 = vpack.c.b16 %v3421, %v3418
      %v3683 = vpack.c.b16 %v3422, %v3419
      %v3684 = vpack.c.b16 %v3426, %v3423
      %v3685 = vpack.c.b16 %v3427, %v3424
      %v3686 = vpack.c.b16 %v3428, %v3425
      %v3687 = vpack.c.b16 %v3432, %v3429
      %v3688 = vpack.c.b16 %v3433, %v3430
      %v3689 = vpack.c.b16 %v3434, %v3431
      %v3690 = vpack.c.b16 %v3438, %v3435
      %v3691 = vpack.c.b16 %v3439, %v3436
      %v3692 = vpack.c.b16 %v3440, %v3437
      %v3693 = vpack.c.b16 %v3444, %v3441
      %v3694 = vpack.c.b16 %v3445, %v3442
      %v3695 = vpack.c.b16 %v3446, %v3443
      %v3696 = vpack.c.b16 %v3450, %v3447
      %v3697 = vpack.c.b16 %v3451, %v3448
      %v3698 = vpack.c.b16 %v3452, %v3449
      %v3699 = vpack.c.b16 %v3456, %v3453
      %v3700 = vpack.c.b16 %v3457, %v3454
      %v3701 = vpack.c.b16 %v3458, %v3455
      %v3702 = vpack.c.b16 %v3462, %v3459
      %v3703 = vpack.c.b16 %v3463, %v3460
      %v3704 = vpack.c.b16 %v3464, %v3461
      %v3705 = vpack.c.b16 %v3468, %v3465
      %v3706 = vpack.c.b16 %v3469, %v3466
      %v3707 = vpack.c.b16 %v3470, %v3467
      %v3708 = vpack.c.b16 %v3474, %v3471
      %v3709 = vpack.c.b16 %v3475, %v3472
      %v3710 = vpack.c.b16 %v3476, %v3473
      %v3711 = vpack.c.b16 %v3480, %v3477
      %v3712 = vpack.c.b16 %v3481, %v3478
      %v3713 = vpack.c.b16 %v3482, %v3479
      %v3714 = vpack.c.b16 %v3486, %v3483
      %v3715 = vpack.c.b16 %v3487, %v3484
      %v3716 = vpack.c.b16 %v3488, %v3485
      %v3717 = vpack.c.b16 %v3492, %v3489
      %v3718 = vpack.c.b16 %v3493, %v3490
      %v3719 = vpack.c.b16 %v3494, %v3491
      %v3720 = vpack.c.b16 %v3498, %v3495
      %v3721 = vpack.c.b16 %v3499, %v3496
      %v3722 = vpack.c.b16 %v3500, %v3497
      %v3723 = vpack.c.b16 %v3504, %v3501
      %v3724 = vpack.c.b16 %v3505, %v3502
      %v3725 = vpack.c.b16 %v3506, %v3503
      %v3726 = vpack.c.b16 %v3510, %v3507
      %v3727 = vpack.c.b16 %v3511, %v3508
      %v3728 = vpack.c.b16 %v3512, %v3509
      %v3729 = vpack.c.b16 %v3516, %v3513
      %v3730 = vpack.c.b16 %v3517, %v3514
      %v3731 = vpack.c.b16 %v3518, %v3515
      %v3732 = vpack.c.b16 %v3522, %v3519
      %v3733 = vpack.c.b16 %v3523, %v3520
      %v3734 = vpack.c.b16 %v3524, %v3521
      %v3735 = vpack.c.b16 %v3528, %v3525
      %v3736 = vpack.c.b16 %v3529, %v3526
      %v3737 = vpack.c.b16 %v3530, %v3527
      %v3738 = vpack.c.b16 %v3534, %v3531
      %v3739 = vpack.c.b16 %v3535, %v3532
      %v3740 = vpack.c.b16 %v3536, %v3533
      %v3741 = vpack.c.b16 %v3540, %v3537
      %v3742 = vpack.c.b16 %v3541, %v3538
      %v3743 = vpack.c.b16 %v3542, %v3539
      %v3744 = vpack.c.b16 %v3546, %v3543
      %v3745 = vpack.c.b16 %v3547, %v3544
      %v3746 = vpack.c.b16 %v3548, %v3545
      %v3747 = vpack.c.b16 %v3552, %v3549
      %v3748 = vpack.c.b16 %v3553, %v3550
      %v3749 = vpack.c.b16 %v3554, %v3551
      %v3750 = vpack.c.b16 %v3558, %v3555
      %v3751 = vpack.c.b16 %v3559, %v3556
      %v3752 = vpack.c.b16 %v3560, %v3557
      %v3753 = vpack.c.b16 %v3564, %v3561
      %v3754 = vpack.c.b16 %v3565, %v3562
      %v3755 = vpack.c.b16 %v3566, %v3563
      %v3756 = vpack.c.b16 %v3570, %v3567
      %v3757 = vpack.c.b16 %v3571, %v3568
      %v3758 = vpack.c.b16 %v3572, %v3569
      %v3759 = vpack.c.b16 %v3576, %v3573
      %v3760 = vpack.c.b16 %v3577, %v3574
      %v3761 = vpack.c.b16 %v3578, %v3575
      %v3762 = vpack.c.b16 %v3582, %v3579
      %v3763 = vpack.c.b16 %v3583, %v3580
      %v3764 = vpack.c.b16 %v3584, %v3581
      %vm3945 = vcmask 523264
      %v3947 = vsel %vm3945, %v2976, 0
      %3949 = vmatpush.bf16.msra.mxu0 %v3606
      %3950 = vmatpush.bf16.msra.mxu0 %v3603
      %3951 = vmatpush.bf16.msra.mxu0 %v3600
      %3952 = vmatpush.bf16.msra.mxu0 %v3597
      %3953 = vmatpush.bf16.msra.mxu0 %v3594
      %3954 = vmatpush.bf16.msra.mxu0 %v3591
      %3955 = vmatpush.bf16.msra.mxu0 %v3588
      %3956 = vmatpush.bf16.msra.mxu0 %v3585
      %3957 = vmatmul.bf16.gmra.mxu0 %v2969
      %v3958 = vpop.f32.mrf.mxu0
      %v3959 = vadd.f32 %v2979, %v3958
      %v3960 = vpop.f32.mrf.mxu0
      %v3961 = vadd.f32 %v2979, %v3960
      %3962 = vdwg.mxu0
      %3963 = vmatpush.bf16.msra.mxu0 %v3630
      %3964 = vmatpush.bf16.msra.mxu0 %v3627
      %3965 = vmatpush.bf16.msra.mxu0 %v3624
      %3966 = vmatpush.bf16.msra.mxu0 %v3621
      %3967 = vmatpush.bf16.msra.mxu0 %v3618
      %3968 = vmatpush.bf16.msra.mxu0 %v3615
      %3969 = vmatpush.bf16.msra.mxu0 %v3612
      %3970 = vmatpush.bf16.msra.mxu0 %v3609
      %3971 = vmatmul.bf16.gmra.mxu0 %v2970
      %v3972 = vpop.f32.mrf.mxu0
      %v3973 = vadd.f32 %v3959, %v3972
      %v3974 = vpop.f32.mrf.mxu0
      %v3975 = vadd.f32 %v3961, %v3974
      %3976 = vdwg.mxu0
      %3977 = vmatpush.bf16.msra.mxu0 %v3654
      %3978 = vmatpush.bf16.msra.mxu0 %v3651
      %3979 = vmatpush.bf16.msra.mxu0 %v3648
      %3980 = vmatpush.bf16.msra.mxu0 %v3645
      %3981 = vmatpush.bf16.msra.mxu0 %v3642
      %3982 = vmatpush.bf16.msra.mxu0 %v3639
      %3983 = vmatpush.bf16.msra.mxu0 %v3636
      %3984 = vmatpush.bf16.msra.mxu0 %v3633
      %3985 = vmatmul.bf16.gmra.mxu0 %v2971
      %v3986 = vpop.f32.mrf.mxu0
      %v3987 = vadd.f32 %v3973, %v3986
      %v3988 = vpop.f32.mrf.mxu0
      %v3989 = vadd.f32 %v3975, %v3988
      %3990 = vdwg.mxu0
      %3991 = vmatpush.bf16.msra.mxu0 %v3678
      %3992 = vmatpush.bf16.msra.mxu0 %v3675
      %3993 = vmatpush.bf16.msra.mxu0 %v3672
      %3994 = vmatpush.bf16.msra.mxu0 %v3669
      %3995 = vmatpush.bf16.msra.mxu0 %v3666
      %3996 = vmatpush.bf16.msra.mxu0 %v3663
      %3997 = vmatpush.bf16.msra.mxu0 %v3660
      %3998 = vmatpush.bf16.msra.mxu0 %v3657
      %3999 = vmatmul.bf16.gmra.mxu0 %v2972
      %v4000 = vpop.f32.mrf.mxu0
      %v4001 = vadd.f32 %v3987, %v4000
      %v4002 = vpop.f32.mrf.mxu0
      %v4003 = vadd.f32 %v3989, %v4002
      %4004 = vdwg.mxu0
      %4005 = vmatpush.bf16.msra.mxu0 %v3702
      %4006 = vmatpush.bf16.msra.mxu0 %v3699
      %4007 = vmatpush.bf16.msra.mxu0 %v3696
      %4008 = vmatpush.bf16.msra.mxu0 %v3693
      %4009 = vmatpush.bf16.msra.mxu0 %v3690
      %4010 = vmatpush.bf16.msra.mxu0 %v3687
      %4011 = vmatpush.bf16.msra.mxu0 %v3684
      %4012 = vmatpush.bf16.msra.mxu0 %v3681
      %4013 = vmatmul.bf16.gmra.mxu0 %v2973
      %v4014 = vpop.f32.mrf.mxu0
      %v4015 = vadd.f32 %v4001, %v4014
      %v4016 = vpop.f32.mrf.mxu0
      %v4017 = vadd.f32 %v4003, %v4016
      %4018 = vdwg.mxu0
      %4019 = vmatpush.bf16.msra.mxu0 %v3726
      %4020 = vmatpush.bf16.msra.mxu0 %v3723
      %4021 = vmatpush.bf16.msra.mxu0 %v3720
      %4022 = vmatpush.bf16.msra.mxu0 %v3717
      %4023 = vmatpush.bf16.msra.mxu0 %v3714
      %4024 = vmatpush.bf16.msra.mxu0 %v3711
      %4025 = vmatpush.bf16.msra.mxu0 %v3708
      %4026 = vmatpush.bf16.msra.mxu0 %v3705
      %4027 = vmatmul.bf16.gmra.mxu0 %v2974
      %v4028 = vpop.f32.mrf.mxu0
      %v4029 = vadd.f32 %v4015, %v4028
      %v4030 = vpop.f32.mrf.mxu0
      %v4031 = vadd.f32 %v4017, %v4030
      %4032 = vdwg.mxu0
      %4033 = vmatpush.bf16.msra.mxu0 %v3750
      %4034 = vmatpush.bf16.msra.mxu0 %v3747
      %4035 = vmatpush.bf16.msra.mxu0 %v3744
      %4036 = vmatpush.bf16.msra.mxu0 %v3741
      %4037 = vmatpush.bf16.msra.mxu0 %v3738
      %4038 = vmatpush.bf16.msra.mxu0 %v3735
      %4039 = vmatpush.bf16.msra.mxu0 %v3732
      %4040 = vmatpush.bf16.msra.mxu0 %v3729
      %4041 = vmatmul.bf16.gmra.mxu0 %v2975
      %v4042 = vpop.f32.mrf.mxu0
      %v4043 = vadd.f32 %v4029, %v4042
      %v4044 = vpop.f32.mrf.mxu0
      %v4045 = vadd.f32 %v4031, %v4044
      %4046 = vdwg.mxu0
      %4047 = vmatpush.bf16.msra.mxu0 0
      %4048 = vmatpush.bf16.msra.mxu0 0
      %4049 = vmatpush.bf16.msra.mxu0 0
      %4050 = vmatpush.bf16.msra.mxu0 0
      %4051 = vmatpush.bf16.msra.mxu0 %v3762
      %4052 = vmatpush.bf16.msra.mxu0 %v3759
      %4053 = vmatpush.bf16.msra.mxu0 %v3756
      %4054 = vmatpush.bf16.msra.mxu0 %v3753
      %4055 = vmatmul.bf16.gmra.mxu0 %v3947
      %v4056 = vpop.f32.mrf.mxu0
      %v4057 = vadd.f32 %v4043, %v4056
      %v4058 = vpop.f32.mrf.mxu0
      %v4059 = vadd.f32 %v4045, %v4058
      %4060 = vdwg.mxu0
      %4061 = vmatpush.bf16.msra.mxu0 %v3607
      %4062 = vmatpush.bf16.msra.mxu0 %v3604
      %4063 = vmatpush.bf16.msra.mxu0 %v3601
      %4064 = vmatpush.bf16.msra.mxu0 %v3598
      %4065 = vmatpush.bf16.msra.mxu0 %v3595
      %4066 = vmatpush.bf16.msra.mxu0 %v3592
      %4067 = vmatpush.bf16.msra.mxu0 %v3589
      %4068 = vmatpush.bf16.msra.mxu0 %v3586
      %4069 = vmatmul.bf16.gmra.mxu0 %v2969
      %v4070 = vpop.f32.mrf.mxu0
      %v4071 = vadd.f32 %v2980, %v4070
      %v4072 = vpop.f32.mrf.mxu0
      %v4073 = vadd.f32 %v2980, %v4072
      %4074 = vdwg.mxu0
      %4075 = vmatpush.bf16.msra.mxu0 %v3631
      %4076 = vmatpush.bf16.msra.mxu0 %v3628
      %4077 = vmatpush.bf16.msra.mxu0 %v3625
      %4078 = vmatpush.bf16.msra.mxu0 %v3622
      %4079 = vmatpush.bf16.msra.mxu0 %v3619
      %4080 = vmatpush.bf16.msra.mxu0 %v3616
      %4081 = vmatpush.bf16.msra.mxu0 %v3613
      %4082 = vmatpush.bf16.msra.mxu0 %v3610
      %4083 = vmatmul.bf16.gmra.mxu0 %v2970
      %v4084 = vpop.f32.mrf.mxu0
      %v4085 = vadd.f32 %v4071, %v4084
      %v4086 = vpop.f32.mrf.mxu0
      %v4087 = vadd.f32 %v4073, %v4086
      %4088 = vdwg.mxu0
      %4089 = vmatpush.bf16.msra.mxu0 %v3655
      %4090 = vmatpush.bf16.msra.mxu0 %v3652
      %4091 = vmatpush.bf16.msra.mxu0 %v3649
      %4092 = vmatpush.bf16.msra.mxu0 %v3646
      %4093 = vmatpush.bf16.msra.mxu0 %v3643
      %4094 = vmatpush.bf16.msra.mxu0 %v3640
      %4095 = vmatpush.bf16.msra.mxu0 %v3637
      %4096 = vmatpush.bf16.msra.mxu0 %v3634
      %4097 = vmatmul.bf16.gmra.mxu0 %v2971
      %v4098 = vpop.f32.mrf.mxu0
      %v4099 = vadd.f32 %v4085, %v4098
      %v4100 = vpop.f32.mrf.mxu0
      %v4101 = vadd.f32 %v4087, %v4100
      %4102 = vdwg.mxu0
      %4103 = vmatpush.bf16.msra.mxu0 %v3679
      %4104 = vmatpush.bf16.msra.mxu0 %v3676
      %4105 = vmatpush.bf16.msra.mxu0 %v3673
      %4106 = vmatpush.bf16.msra.mxu0 %v3670
      %4107 = vmatpush.bf16.msra.mxu0 %v3667
      %4108 = vmatpush.bf16.msra.mxu0 %v3664
      %4109 = vmatpush.bf16.msra.mxu0 %v3661
      %4110 = vmatpush.bf16.msra.mxu0 %v3658
      %4111 = vmatmul.bf16.gmra.mxu0 %v2972
      %v4112 = vpop.f32.mrf.mxu0
      %v4113 = vadd.f32 %v4099, %v4112
      %v4114 = vpop.f32.mrf.mxu0
      %v4115 = vadd.f32 %v4101, %v4114
      %4116 = vdwg.mxu0
      %4117 = vmatpush.bf16.msra.mxu0 %v3703
      %4118 = vmatpush.bf16.msra.mxu0 %v3700
      %4119 = vmatpush.bf16.msra.mxu0 %v3697
      %4120 = vmatpush.bf16.msra.mxu0 %v3694
      %4121 = vmatpush.bf16.msra.mxu0 %v3691
      %4122 = vmatpush.bf16.msra.mxu0 %v3688
      %4123 = vmatpush.bf16.msra.mxu0 %v3685
      %4124 = vmatpush.bf16.msra.mxu0 %v3682
      %4125 = vmatmul.bf16.gmra.mxu0 %v2973
      %v4126 = vpop.f32.mrf.mxu0
      %v4127 = vadd.f32 %v4113, %v4126
      %v4128 = vpop.f32.mrf.mxu0
      %v4129 = vadd.f32 %v4115, %v4128
      %4130 = vdwg.mxu0
      %4131 = vmatpush.bf16.msra.mxu0 %v3727
      %4132 = vmatpush.bf16.msra.mxu0 %v3724
      %4133 = vmatpush.bf16.msra.mxu0 %v3721
      %4134 = vmatpush.bf16.msra.mxu0 %v3718
      %4135 = vmatpush.bf16.msra.mxu0 %v3715
      %4136 = vmatpush.bf16.msra.mxu0 %v3712
      %4137 = vmatpush.bf16.msra.mxu0 %v3709
      %4138 = vmatpush.bf16.msra.mxu0 %v3706
      %4139 = vmatmul.bf16.gmra.mxu0 %v2974
      %v4140 = vpop.f32.mrf.mxu0
      %v4141 = vadd.f32 %v4127, %v4140
      %v4142 = vpop.f32.mrf.mxu0
      %v4143 = vadd.f32 %v4129, %v4142
      %4144 = vdwg.mxu0
      %4145 = vmatpush.bf16.msra.mxu0 %v3751
      %4146 = vmatpush.bf16.msra.mxu0 %v3748
      %4147 = vmatpush.bf16.msra.mxu0 %v3745
      %4148 = vmatpush.bf16.msra.mxu0 %v3742
      %4149 = vmatpush.bf16.msra.mxu0 %v3739
      %4150 = vmatpush.bf16.msra.mxu0 %v3736
      %4151 = vmatpush.bf16.msra.mxu0 %v3733
      %4152 = vmatpush.bf16.msra.mxu0 %v3730
      %4153 = vmatmul.bf16.gmra.mxu0 %v2975
      %v4154 = vpop.f32.mrf.mxu0
      %v4155 = vadd.f32 %v4141, %v4154
      %v4156 = vpop.f32.mrf.mxu0
      %v4157 = vadd.f32 %v4143, %v4156
      %4158 = vdwg.mxu0
      %4159 = vmatpush.bf16.msra.mxu0 0
      %4160 = vmatpush.bf16.msra.mxu0 0
      %4161 = vmatpush.bf16.msra.mxu0 0
      %4162 = vmatpush.bf16.msra.mxu0 0
      %4163 = vmatpush.bf16.msra.mxu0 %v3763
      %4164 = vmatpush.bf16.msra.mxu0 %v3760
      %4165 = vmatpush.bf16.msra.mxu0 %v3757
      %4166 = vmatpush.bf16.msra.mxu0 %v3754
      %4167 = vmatmul.bf16.gmra.mxu0 %v3947
      %v4168 = vpop.f32.mrf.mxu0
      %v4169 = vadd.f32 %v4155, %v4168
      %v4170 = vpop.f32.mrf.mxu0
      %v4171 = vadd.f32 %v4157, %v4170
      %4172 = vdwg.mxu0
      %4173 = vmatpush.bf16.msra.mxu0 %v3608
      %4174 = vmatpush.bf16.msra.mxu0 %v3605
      %4175 = vmatpush.bf16.msra.mxu0 %v3602
      %4176 = vmatpush.bf16.msra.mxu0 %v3599
      %4177 = vmatpush.bf16.msra.mxu0 %v3596
      %4178 = vmatpush.bf16.msra.mxu0 %v3593
      %4179 = vmatpush.bf16.msra.mxu0 %v3590
      %4180 = vmatpush.bf16.msra.mxu0 %v3587
      %4181 = vmatmul.bf16.gmra.mxu0 %v2969
      %v4182 = vpop.f32.mrf.mxu0
      %v4183 = vadd.f32 %v2981, %v4182
      %v4184 = vpop.f32.mrf.mxu0
      %v4185 = vadd.f32 %v2981, %v4184
      %4186 = vdwg.mxu0
      %4187 = vmatpush.bf16.msra.mxu0 %v3632
      %4188 = vmatpush.bf16.msra.mxu0 %v3629
      %4189 = vmatpush.bf16.msra.mxu0 %v3626
      %4190 = vmatpush.bf16.msra.mxu0 %v3623
      %4191 = vmatpush.bf16.msra.mxu0 %v3620
      %4192 = vmatpush.bf16.msra.mxu0 %v3617
      %4193 = vmatpush.bf16.msra.mxu0 %v3614
      %4194 = vmatpush.bf16.msra.mxu0 %v3611
      %4195 = vmatmul.bf16.gmra.mxu0 %v2970
      %v4196 = vpop.f32.mrf.mxu0
      %v4197 = vadd.f32 %v4183, %v4196
      %v4198 = vpop.f32.mrf.mxu0
      %v4199 = vadd.f32 %v4185, %v4198
      %4200 = vdwg.mxu0
      %4201 = vmatpush.bf16.msra.mxu0 %v3656
      %4202 = vmatpush.bf16.msra.mxu0 %v3653
      %4203 = vmatpush.bf16.msra.mxu0 %v3650
      %4204 = vmatpush.bf16.msra.mxu0 %v3647
      %4205 = vmatpush.bf16.msra.mxu0 %v3644
      %4206 = vmatpush.bf16.msra.mxu0 %v3641
      %4207 = vmatpush.bf16.msra.mxu0 %v3638
      %4208 = vmatpush.bf16.msra.mxu0 %v3635
      %4209 = vmatmul.bf16.gmra.mxu0 %v2971
      %v4210 = vpop.f32.mrf.mxu0
      %v4211 = vadd.f32 %v4197, %v4210
      %v4212 = vpop.f32.mrf.mxu0
      %v4213 = vadd.f32 %v4199, %v4212
      %4214 = vdwg.mxu0
      %4215 = vmatpush.bf16.msra.mxu0 %v3680
      %4216 = vmatpush.bf16.msra.mxu0 %v3677
      %4217 = vmatpush.bf16.msra.mxu0 %v3674
      %4218 = vmatpush.bf16.msra.mxu0 %v3671
      %4219 = vmatpush.bf16.msra.mxu0 %v3668
      %4220 = vmatpush.bf16.msra.mxu0 %v3665
      %4221 = vmatpush.bf16.msra.mxu0 %v3662
      %4222 = vmatpush.bf16.msra.mxu0 %v3659
      %4223 = vmatmul.bf16.gmra.mxu0 %v2972
      %v4224 = vpop.f32.mrf.mxu0
      %v4225 = vadd.f32 %v4211, %v4224
      %v4226 = vpop.f32.mrf.mxu0
      %v4227 = vadd.f32 %v4213, %v4226
      %4228 = vdwg.mxu0
      %4229 = vmatpush.bf16.msra.mxu0 %v3704
      %4230 = vmatpush.bf16.msra.mxu0 %v3701
      %4231 = vmatpush.bf16.msra.mxu0 %v3698
      %4232 = vmatpush.bf16.msra.mxu0 %v3695
      %4233 = vmatpush.bf16.msra.mxu0 %v3692
      %4234 = vmatpush.bf16.msra.mxu0 %v3689
      %4235 = vmatpush.bf16.msra.mxu0 %v3686
      %4236 = vmatpush.bf16.msra.mxu0 %v3683
      %4237 = vmatmul.bf16.gmra.mxu0 %v2973
      %v4238 = vpop.f32.mrf.mxu0
      %v4239 = vadd.f32 %v4225, %v4238
      %v4240 = vpop.f32.mrf.mxu0
      %v4241 = vadd.f32 %v4227, %v4240
      %4242 = vdwg.mxu0
      %4243 = vmatpush.bf16.msra.mxu0 %v3728
      %4244 = vmatpush.bf16.msra.mxu0 %v3725
      %4245 = vmatpush.bf16.msra.mxu0 %v3722
      %4246 = vmatpush.bf16.msra.mxu0 %v3719
      %4247 = vmatpush.bf16.msra.mxu0 %v3716
      %4248 = vmatpush.bf16.msra.mxu0 %v3713
      %4249 = vmatpush.bf16.msra.mxu0 %v3710
      %4250 = vmatpush.bf16.msra.mxu0 %v3707
      %4251 = vmatmul.bf16.gmra.mxu0 %v2974
      %v4252 = vpop.f32.mrf.mxu0
      %v4253 = vadd.f32 %v4239, %v4252
      %v4254 = vpop.f32.mrf.mxu0
      %v4255 = vadd.f32 %v4241, %v4254
      %4256 = vdwg.mxu0
      %4257 = vmatpush.bf16.msra.mxu0 %v3752
      %4258 = vmatpush.bf16.msra.mxu0 %v3749
      %4259 = vmatpush.bf16.msra.mxu0 %v3746
      %4260 = vmatpush.bf16.msra.mxu0 %v3743
      %4261 = vmatpush.bf16.msra.mxu0 %v3740
      %4262 = vmatpush.bf16.msra.mxu0 %v3737
      %4263 = vmatpush.bf16.msra.mxu0 %v3734
      %4264 = vmatpush.bf16.msra.mxu0 %v3731
      %4265 = vmatmul.bf16.gmra.mxu0 %v2975
      %v4266 = vpop.f32.mrf.mxu0
      %v4267 = vadd.f32 %v4253, %v4266
      %v4268 = vpop.f32.mrf.mxu0
      %v4269 = vadd.f32 %v4255, %v4268
      %4270 = vdwg.mxu0
      %4271 = vmatpush.bf16.msra.mxu0 0
      %4272 = vmatpush.bf16.msra.mxu0 0
      %4273 = vmatpush.bf16.msra.mxu0 0
      %4274 = vmatpush.bf16.msra.mxu0 0
      %4275 = vmatpush.bf16.msra.mxu0 %v3764
      %4276 = vmatpush.bf16.msra.mxu0 %v3761
      %4277 = vmatpush.bf16.msra.mxu0 %v3758
      %4278 = vmatpush.bf16.msra.mxu0 %v3755
      %4279 = vmatmul.bf16.gmra.mxu0 %v3947
      %v4280 = vpop.f32.mrf.mxu0
      %v4281 = vadd.f32 %v4267, %v4280
      %v4282 = vpop.f32.mrf.mxu0
      %v4283 = vadd.f32 %v4269, %v4282
      %4284 = vdwg.mxu0
      %v4285 = vld [vmem:[%s9] sm:$0x7]
      %v4287 = vperm.slane %v4285, 0
      %v4288 = vperm.slane %v4285, 1
      %v4289 = vperm.slane %v4285, 2
      %v4293 = vmul.f32 %v4287, %v4057
      %v4294 = vmul.f32 %v4288, %v4169
      %v4295 = vmul.f32 %v4289, %v4281
      %v4296 = vmul.f32 %v4287, %v4059
      %v4297 = vmul.f32 %v4288, %v4171
      %v4298 = vmul.f32 %v4289, %v4283
      %v4299 = vadd.f32 %v453, %v4293
      %v4300 = vadd.f32 %v454, %v4294
      %v4301 = vadd.f32 %v455, %v4295
      %v4302 = vadd.f32 %v553, %v4296
      %v4303 = vadd.f32 %v554, %v4297
      %v4304 = vadd.f32 %v555, %v4298
      %v4305 = vpack.c.bf16 %v4300, %v4299
      %v4306 = vpack.c.bf16 %v4301, %v4301
      %v4307 = vpack.c.bf16 %v4303, %v4302
      %v4308 = vpack.c.bf16 %v4304, %v4304
      %4309 = vst [vmem:[%s383] sm:$0xff] %v4305
      %4310 = vst [vmem:[%s383 + $0x8] sm:$0xf] %v4306
      %4311 = vst [vmem:[%s383 + $0xc] sm:$0xff] %v4307
      %4312 = vst [vmem:[%s383 + $0x14] sm:$0xf] %v4308
      %s4313 = smul.u32 2, %s26
      %p4314 = scmp.lt.s32.totalorder %s25, 1
      %s4315 = scalar_select %p4314, %s25, 1
      %p4316 = scmp.lt.s32.totalorder %s4313, 1
      %s4317 = scalar_select %p4316, %s4313, 1
      %s4318 = smul.addr %s4317, 3
      %s4319 = smul.addr %s4315, 6
      %s4320 = sadd.s32 %s4318, %s4319
      %s4321 = smul.addr %s4320, 4
      %s4322 = scalar_lea.vmem %s10, %s4321
      // Predicated region
      $region61: #{ssvm_forward_svc_infer.10} parent=59 // pred_check
        %p4323 = pneg %p268
      $region62: #{ssvm_forward_svc_infer.10} parent=59 // pred_check_branch
        %4325 = sbr.rel (%p4323) target = $region64
      $region63: #{ssvm_forward_svc_infer.10} parent=59 // pred_region
        %s4326 = smul.u32 2, %s26
      $region64: #{ssvm_forward_svc_infer.10} parent=59 // pred_fallthru
        _
    $region60: #{ssvm_forward_svc_infer.10} parent=5 // pred_fallthru
      _
    %p4327 = scmp.le.s32.totalorder 2, %s16
    // Predicated region
    $region65: #{ssvm_forward_svc_infer.10} parent=5 // pred_check
      %p4328 = pneg %p4327
    $region66: #{ssvm_forward_svc_infer.10} parent=5 // pred_check_branch
      %4330 = sbr.rel (%p4328) target = $region68
    $region67: #{ssvm_forward_svc_infer.10} parent=5 // pred_region
      %s4331 = ssub.s32 %s16, 2
      // Predicated region
      $region69: #{ssvm_forward_svc_infer.10} parent=67 // pred_check
        %p4332 = pneg %p274
      $region70: #{ssvm_forward_svc_infer.10} parent=67 // pred_check_branch
        %4334 = sbr.rel (%p4332) target = $region72
      $region71: #{ssvm_forward_svc_infer.10} parent=67 // pred_region
        %s4335 = smul.u32 2, %s28
        %p4336 = scmp.lt.s32.totalorder %s27, 1
        %s4337 = scalar_select %p4336, %s27, 1
        %p4338 = scmp.lt.s32.totalorder %s4335, 1
        %s4339 = scalar_select %p4338, %s4335, 1
        %s4340 = smul.addr %s4339, 3
        %s4341 = smul.addr %s4337, 6
        %s4342 = sadd.s32 %s4340, %s4341
        %s4343 = smul.addr %s4342, 4
        %s4344 = scalar_lea.vmem %s10, %s4343
      $region72: #{ssvm_forward_svc_infer.10} parent=67 // pred_fallthru
        _
    $region68: #{ssvm_forward_svc_infer.10} parent=5 // pred_fallthru
      _
  $region6: #{ssvm_forward_svc_infer.10} parent=0 // loop_footer
    %s20 = sadd.s32 1, %s16
  $region7: #{ssvm_forward_svc_infer.10} parent=0 // loop_footer_branch
    %15 = sbr.rel target = $region3
  $region8: #{ssvm_forward_svc_infer.10} parent=0 // loop_exit
    _

// kernel: ssvm_forward_svc_infer.15
$region0: #{ssvm_forward_svc_infer.15}
  #allocation0 [shape = 'u32[]', space=smem, size = 0x4, offset = 0x4, fixed_abs, tag = 'smem constant byte address 0x4 - core index']
  #allocation1 [shape = 'u32[72,128]{1,0:T(1,128)}', space=vmem, size = 0x9000, scoped, tag = 'internal scratch']
  #allocation2 [shape = 'bf16[32,384]{1,0:T(8,128)(2,1)}', space=vmem, size = 0x6000, scoped, tag = 'scratch operand']
  %s0 = inlined_call_operand.vmem [shape: bf16[2,16,384], index: 0, kind: input, shape index: {}]
  %s1 = inlined_call_operand.vmem [shape: bf16[7,384,128], index: 1, kind: input, shape index: {}]
  %s2 = inlined_call_operand.vmem [shape: f32[1,128], index: 2, kind: input, shape index: {}]
  %s3 = inlined_call_operand.vmem [shape: f32[2,16,1], index: 3, kind: input, shape index: {}]
  %s4 = inlined_call_operand.hbm [shape: f32[2,16,128], index: 4, kind: output, shape index: {}]
  %s5 = sld [smem:[#allocation0]]
  $region49: #{ssvm_forward_svc_infer.15} parent=0
    _
  %s7 = ssub.s32 1, %s5
  %s8 = scalar_select 0, %s7, %s5
  $region1: #{ssvm_forward_svc_infer.15} parent=0
    #allocation3 [shape = 'u8[16384]{0}', space=vmem, size = 0x4000, scoped, tag = 'output window, operand 0']
    #allocation4 [shape = 's32[2]{0}', space=sflag, size = 0x8, scoped, tag = 'scoped memory for ssvm_forward_svc_infer.15']
    %9 = vsyncpa [#allocation4], 0
    %s10 = scalar_lea.sflag [#allocation4], 1
    %11 = vsyncpa %s10, 0
    loop: start=0, step=1, limit=4
    $region2: #{ssvm_forward_svc_infer.15} parent=1 // loop_pre_header
      _
    $region3: #{ssvm_forward_svc_infer.15} parent=1 // loop_header
      %s13 = sphi 0, %s17
      %p14 = scmp.ge.s32.totalorder %s13, 4
      %s20 = sphi 0, %s32
      %s21 = sphi 0, %s28
      %s22 = sphi 0, %s20
      %s23 = sphi 0, %s21
      %s24 = sphi 0, %s22
      %s25 = sphi 0, %s23
      %s35 = sphi 0, %s37
      %s38 = sphi 0, %s35
      %s39 = sphi 0, %s38
      %s55 = sphi 0, %s39
      %s59 = sphi 0, %s59
      %s61 = sphi 0, %s59
      %s62 = sphi 0, %s61
      %s76 = sphi 0, %s62
      %s80 = sphi 0, %s80
      %s82 = sphi 0, %s80
      %s83 = sphi 0, %s82
      %s97 = sphi 0, %s83
      %s105 = sphi 0, %s107
      %s108 = sphi 0, %s105
      %s109 = sphi 0, %s108
      %s125 = sphi 0, %s109
      %s133 = sphi 0, %s135
      %s136 = sphi 0, %s133
      %s137 = sphi 0, %s136
      %s153 = sphi 0, %s137
    $region4: #{ssvm_forward_svc_infer.15} parent=1 // loop_header_branch
      %16 = sbr.rel (%p14) target = $region8
    $region5: #{ssvm_forward_svc_infer.15} parent=1 // loop_body
      %s18 = ssub.s32 %s13, 1
      %s19 = ssub.s32 %s13, 2
      %s26 = sadd.s32 1, %s21
      %p27 = scmp.ge.s32.totalorder %s26, 1
      %s28 = scalar_select %p27, 0, %s26
      %s29 = sadd.s32 1, %s20
      %s30 = scalar_select %p27, %s29, %s20
      %p31 = scmp.ge.s32.totalorder %s30, 2
      %s32 = scalar_select %p31, 0, %s30
      %s33 = ssub.s32 %s20, %s32
      %p34 = scmp.eq.s32.totalorder %s33, 0
      %s36 = sadd.s32 %s35, 1
      %s37 = scalar_select %p34, %s35, %s36
      %p40 = pneg %p34
      %p41 = scmp.eq.s32.totalorder %s13, 1
      %p42 = por %p40, %p41
      %p43 = scmp.ne.s32.totalorder %s35, %s38
      %p44 = scmp.eq.s32.totalorder %s13, 0
      %p45 = por %p43, %p44
      %p46 = scmp.ne.s32.totalorder %s35, %s38
      %p47 = scmp.eq.s32.totalorder %s18, 1
      %p48 = por %p46, %p47
      %p49 = scmp.ne.s32.totalorder %s38, %s39
      %p50 = scmp.eq.s32.totalorder %s18, 0
      %p51 = por %p49, %p50
      %p52 = scmp.ne.s32.totalorder %s38, %s39
      %p53 = scmp.eq.s32.totalorder %s19, 1
      %p54 = por %p52, %p53
      %p56 = scmp.ne.s32.totalorder %s39, %s55
      %p57 = scmp.eq.s32.totalorder %s19, 0
      %p58 = por %p56, %p57
      %s60 = sadd.s32 %s59, 1
      %p63 = scmp.eq.s32.totalorder %s13, 1
      %p64 = scmp.ne.s32.totalorder %s59, %s61
      %p65 = scmp.eq.s32.totalorder %s13, 0
      %p66 = por %p64, %p65
      %p67 = scmp.ne.s32.totalorder %s59, %s61
      %p68 = scmp.eq.s32.totalorder %s18, 1
      %p69 = por %p67, %p68
      %p70 = scmp.ne.s32.totalorder %s61, %s62
      %p71 = scmp.eq.s32.totalorder %s18, 0
      %p72 = por %p70, %p71
      %p73 = scmp.ne.s32.totalorder %s61, %s62
      %p74 = scmp.eq.s32.totalorder %s19, 1
      %p75 = por %p73, %p74
      %p77 = scmp.ne.s32.totalorder %s62, %s76
      %p78 = scmp.eq.s32.totalorder %s19, 0
      %p79 = por %p77, %p78
      %s81 = sadd.s32 %s80, 1
      %p84 = scmp.eq.s32.totalorder %s13, 1
      %p85 = scmp.ne.s32.totalorder %s80, %s82
      %p86 = scmp.eq.s32.totalorder %s13, 0
      %p87 = por %p85, %p86
      %p88 = scmp.ne.s32.totalorder %s80, %s82
      %p89 = scmp.eq.s32.totalorder %s18, 1
      %p90 = por %p88, %p89
      %p91 = scmp.ne.s32.totalorder %s82, %s83
      %p92 = scmp.eq.s32.totalorder %s18, 0
      %p93 = por %p91, %p92
      %p94 = scmp.ne.s32.totalorder %s82, %s83
      %p95 = scmp.eq.s32.totalorder %s19, 1
      %p96 = por %p94, %p95
      %p98 = scmp.ne.s32.totalorder %s83, %s97
      %p99 = scmp.eq.s32.totalorder %s19, 0
      %p100 = por %p98, %p99
      %s101 = ssub.s32 %s20, %s32
      %s102 = ssub.s32 %s21, %s28
      %s103 = sor.u32 %s101, %s102
      %p104 = scmp.eq.s32.totalorder %s103, 0
      %s106 = sadd.s32 %s105, 1
      %s107 = scalar_select %p104, %s105, %s106
      %p110 = pneg %p104
      %p111 = scmp.eq.s32.totalorder %s13, 1
      %p112 = por %p110, %p111
      %p113 = scmp.ne.s32.totalorder %s105, %s108
      %p114 = scmp.eq.s32.totalorder %s13, 0
      %p115 = por %p113, %p114
      %p116 = scmp.ne.s32.totalorder %s105, %s108
      %p117 = scmp.eq.s32.totalorder %s18, 1
      %p118 = por %p116, %p117
      %p119 = scmp.ne.s32.totalorder %s108, %s109
      %p120 = scmp.eq.s32.totalorder %s18, 0
      %p121 = por %p119, %p120
      %p122 = scmp.ne.s32.totalorder %s108, %s109
      %p123 = scmp.eq.s32.totalorder %s19, 1
      %p124 = por %p122, %p123
      %p126 = scmp.ne.s32.totalorder %s109, %s125
      %p127 = scmp.eq.s32.totalorder %s19, 0
      %p128 = por %p126, %p127
      %s129 = ssub.s32 %s20, %s32
      %s130 = ssub.s32 %s21, %s28
      %s131 = sor.u32 %s129, %s130
      %p132 = scmp.eq.s32.totalorder %s131, 0
      %s134 = sadd.s32 %s133, 1
      %s135 = scalar_select %p132, %s133, %s134
      %p138 = pneg %p132
      %p139 = scmp.eq.s32.totalorder %s13, 1
      %p140 = por %p138, %p139
      %p141 = scmp.ne.s32.totalorder %s133, %s136
      %p142 = scmp.eq.s32.totalorder %s13, 0
      %p143 = por %p141, %p142
      %p144 = scmp.ne.s32.totalorder %s133, %s136
      %p145 = scmp.eq.s32.totalorder %s18, 1
      %p146 = por %p144, %p145
      %p147 = scmp.ne.s32.totalorder %s136, %s137
      %p148 = scmp.eq.s32.totalorder %s18, 0
      %p149 = por %p147, %p148
      %p150 = scmp.ne.s32.totalorder %s136, %s137
      %p151 = scmp.eq.s32.totalorder %s19, 1
      %p152 = por %p150, %p151
      %p154 = scmp.ne.s32.totalorder %s137, %s153
      %p155 = scmp.eq.s32.totalorder %s19, 0
      %p156 = por %p154, %p155
      %p157 = scmp.le.s32.totalorder 1, %s13
      %p158 = scmp.lt.s32.totalorder %s13, 3
      %p159 = pnand %p157, %p158
      %p160 = pneg %p159
      // Predicated region
      $region9: #{ssvm_forward_svc_infer.15} parent=5 // pred_check
        _
      $region10: #{ssvm_forward_svc_infer.15} parent=5 // pred_check_branch
        %162 = sbr.rel (%p159) target = $region12
      $region11: #{ssvm_forward_svc_infer.15} parent=5 // pred_region
        %s163 = ssub.s32 %s13, 1
        // Predicated region
        $region13: #{ssvm_forward_svc_infer.15} parent=11 // pred_check
          %p164 = pneg %p72
        $region14: #{ssvm_forward_svc_infer.15} parent=11 // pred_check_branch
          %166 = sbr.rel (%p164) target = $region16
        $region15: #{ssvm_forward_svc_infer.15} parent=11 // pred_region
          _
        $region16: #{ssvm_forward_svc_infer.15} parent=11 // pred_fallthru
          _
        // Predicated region
        $region17: #{ssvm_forward_svc_infer.15} parent=11 // pred_check
          %p167 = pneg %p93
        $region18: #{ssvm_forward_svc_infer.15} parent=11 // pred_check_branch
          %169 = sbr.rel (%p167) target = $region20
        $region19: #{ssvm_forward_svc_infer.15} parent=11 // pred_region
          _
        $region20: #{ssvm_forward_svc_infer.15} parent=11 // pred_fallthru
          _
      $region12: #{ssvm_forward_svc_infer.15} parent=5 // pred_fallthru
        _
      %p170 = scmp.lt.s32.totalorder %s13, 2
      // Predicated region
      $region21: #{ssvm_forward_svc_infer.15} parent=5 // pred_check
        %p171 = pneg %p170
      $region22: #{ssvm_forward_svc_infer.15} parent=5 // pred_check_branch
        %173 = sbr.rel (%p171) target = $region24
      $region23: #{ssvm_forward_svc_infer.15} parent=5 // pred_region
        // Predicated region
        $region25: #{ssvm_forward_svc_infer.15} parent=23 // pred_check
          %p174 = pneg %p45
        $region26: #{ssvm_forward_svc_infer.15} parent=23 // pred_check_branch
          %176 = sbr.rel (%p174) target = $region28
        $region27: #{ssvm_forward_svc_infer.15} parent=23 // pred_region
          %p177 = scmp.lt.s32.totalorder %s20, 1
          %s178 = scalar_select %p177, %s20, 1
          %s179 = smul.addr %s178, 6
          %s180 = smul.addr %s179, 4
          %s181 = scalar_lea.vmem %s0, %s180
        $region28: #{ssvm_forward_svc_infer.15} parent=23 // pred_fallthru
          _
        // Predicated region
        $region29: #{ssvm_forward_svc_infer.15} parent=23 // pred_check
          %p182 = pneg %p115
        $region30: #{ssvm_forward_svc_infer.15} parent=23 // pred_check_branch
          %184 = sbr.rel (%p182) target = $region32
        $region31: #{ssvm_forward_svc_infer.15} parent=23 // pred_region
          %s185 = smul.u32 2, %s21
          %p186 = scmp.lt.s32.totalorder %s20, 1
          %s187 = scalar_select %p186, %s20, 1
          %p188 = scmp.lt.s32.totalorder %s185, 1
          %s189 = scalar_select %p188, %s185, 1
          %s190 = smul.addr %s187, 2
          %s191 = sadd.s32 %s189, %s190
          %s192 = smul.addr %s191, 8
          %s193 = scalar_lea.vmem %s3, %s192
          %s194 = smul.u32 2, %s21
        $region32: #{ssvm_forward_svc_infer.15} parent=23 // pred_fallthru
          _
      $region24: #{ssvm_forward_svc_infer.15} parent=5 // pred_fallthru
        _
      %p195 = scmp.le.s32.totalorder 1, %s13
      %p196 = scmp.lt.s32.totalorder %s13, 3
      %p197 = pnand %p195, %p196
      %p198 = pneg %p197
      // Predicated region
      $region33: #{ssvm_forward_svc_infer.15} parent=5 // pred_check
        _
      $region34: #{ssvm_forward_svc_infer.15} parent=5 // pred_check_branch
        %200 = sbr.rel (%p197) target = $region36
      $region35: #{ssvm_forward_svc_infer.15} parent=5 // pred_region
        %s201 = ssub.s32 %s13, 1
        %p202 = scmp.lt.s32.totalorder %s22, 1
        %s203 = scalar_select %p202, %s22, 1
        %s204 = smul.addr %s203, 6
        %s205 = smul.addr %s204, 4
        %s206 = scalar_lea.vmem %s0, %s205
        %p207 = pneg %p51
        %p208 = pneg %p48
        %p209 = pneg %p72
        %p210 = pneg %p69
        %p211 = pneg %p93
        %p212 = pneg %p90
        %s213 = smul.u32 2, %s23
        %p214 = scmp.lt.s32.totalorder %s22, 1
        %s215 = scalar_select %p214, %s22, 1
        %p216 = scmp.lt.s32.totalorder %s213, 1
        %s217 = scalar_select %p216, %s213, 1
        %s218 = smul.addr %s215, 2
        %s219 = sadd.s32 %s217, %s218
        %s220 = smul.addr %s219, 8
        %s221 = scalar_lea.vmem %s3, %s220
        %p222 = pneg %p121
        %p223 = pneg %p118
        %p224 = pneg %p149
        %p225 = pneg %p146
        %s226 = sand.u32 %s136, 1
        %s227 = scalar_lea.sflag [#allocation4], %s226
        %s228 = sand.u32 %s136, 1
        %s229 = smul.addr %s228, 16
        %s230 = scalar_lea.vmem [#allocation3], %s229
        %p231 = scmp.lt.s32.totalorder %s22, 1
        %s232 = scalar_select %p231, %s22, 1
        %s233 = smul.addr %s232, 6
        %s234 = smul.addr %s233, 4
        %s235 = scalar_lea.vmem %s0, %s234
        %s236 = smul.u32 2, %s23
        %p237 = scmp.lt.s32.totalorder %s22, 1
        %s238 = scalar_select %p237, %s22, 1
        %p239 = scmp.lt.s32.totalorder %s236, 1
        %s240 = scalar_select %p239, %s236, 1
        %s241 = smul.addr %s238, 2
        %s242 = sadd.s32 %s240, %s241
        %s243 = smul.addr %s242, 8
        %s244 = scalar_lea.vmem %s3, %s243
        %s245 = smul.u32 2, %s23
        %s246 = smul.u32 2, %s23
        %s248 = smul.u32 %s23, 16
        %s249 = sshra.s32 %s248, 3
        %s250 = sand.u32 %s248, 7
        %s251 = smul.u32 %s249, 3
        %s252 = smul.addr %s251, 4
        %s253 = scalar_lea.vmem %s235, %s252
        %v254 = vld [vmem:[%s253] sm:$0xff]
        %v255 = vld [vmem:[%s253 + $0x8] sm:$0xf]
        %v256 = vld [vmem:[%s253 + $0xc] sm:$0xff]
        %v257 = vld [vmem:[%s253 + $0x14] sm:$0xf]
        %s258 = ssub.s32 %s248, 8
        %p259 = scmp.gt.s32.totalorder %s258, 0
        %s260 = scalar_select %p259, %s258, 0
        %s261 = sshra.s32 %s260, 3
        %s262 = sand.u32 %s260, 7
        %s263 = smul.u32 %s261, 3
        %s264 = smul.addr %s263, 4
        %s265 = scalar_lea.vmem %s235, %s264
        %v266 = vld [vmem:[%s265] sm:$0xff]
        %v267 = vld [vmem:[%s265 + $0x8] sm:$0xf]
        %p268 = scmp.gt.s32.totalorder %s23, 0
        %s269 = scalar_select %p268, 1, 0
        %v270 = vstv %s269
        %vm271 = vcmp.eq.s32.totalorder %v270, 1
        %v272 = vsel %vm271, %v266, 0
        %v273 = vsel %vm271, %v267, 0
        %s274 = sadd.s32 %s248, 16
        %p275 = scmp.lt.s32.totalorder %s274, 8
        %s276 = scalar_select %p275, %s274, 8
        %s277 = sshra.s32 %s276, 3
        %s278 = sand.u32 %s276, 7
        %s279 = smul.u32 %s277, 3
        %s280 = smul.addr %s279, 4
        %s281 = scalar_lea.vmem %s235, %s280
        %v282 = vld [vmem:[%s281] sm:$0xff]
        %v283 = vld [vmem:[%s281 + $0x8] sm:$0xf]
        %p284 = scmp.lt.s32.totalorder %s23, 0
        %s285 = scalar_select %p284, 1, 0
        %v286 = vstv %s285
        %vm287 = vcmp.eq.s32.totalorder %v286, 1
        %v288 = vsel %vm287, %v282, 0
        %v289 = vsel %vm287, %v283, 0
        %290 = vst [vmem:[#allocation2] sm:$0xff] %v272
        %291 = vst [vmem:[#allocation2 + $0x8] sm:$0xf] %v273
        %292 = vst [vmem:[#allocation2 + $0xc] sm:$0xff] %v254
        %293 = vst [vmem:[#allocation2 + $0x14] sm:$0xf] %v255
        %294 = vst [vmem:[#allocation2 + $0x18] sm:$0xff] %v256
        %295 = vst [vmem:[#allocation2 + $0x20] sm:$0xf] %v257
        %296 = vst [vmem:[#allocation2 + $0x24] sm:$0xff] %v288
        %297 = vst [vmem:[#allocation2 + $0x2c] sm:$0xf] %v289
        %v298 = vld [vmem:[%s2] sm:$0x1]
        %v300 = vperm.slane %v298, 0
        %v302 = vld [vmem:[#allocation2] sm:$0xcc]
        %v303 = vld [vmem:[#allocation2 + $0x8] sm:$0xc]
        %v304 = vld [vmem:[#allocation2 + $0xc] sm:$0xff]
        %v305 = vld [vmem:[#allocation2 + $0x14] sm:$0xf]
        %v306 = vld [vmem:[#allocation2 + $0x18] sm:$0x77]
        %v307 = vld [vmem:[#allocation2 + $0x20] sm:$0x7]
        %v308 = vld [vmem:[%s1] sm:$0xf]
        %v309 = vld [vmem:[%s1 + $0x4] sm:$0xf]
        %v310 = vld [vmem:[%s1 + $0x8] sm:$0xf]
        %v311 = vld [vmem:[%s1 + $0xc] sm:$0xf]
        %v312 = vld [vmem:[%s1 + $0x10] sm:$0xf]
        %v313 = vld [vmem:[%s1 + $0x14] sm:$0xf]
        %v314 = vld [vmem:[%s1 + $0x18] sm:$0xf]
        %v315 = vld [vmem:[%s1 + $0x1c] sm:$0xf]
        %v316 = vld [vmem:[%s1 + $0x20] sm:$0xf]
        %v317 = vld [vmem:[%s1 + $0x24] sm:$0xf]
        %v318 = vld [vmem:[%s1 + $0x28] sm:$0xf]
        %v319 = vld [vmem:[%s1 + $0x2c] sm:$0xf]
        %v320 = vld [vmem:[%s1 + $0x30] sm:$0xf]
        %v321 = vld [vmem:[%s1 + $0x34] sm:$0xf]
        %v322 = vld [vmem:[%s1 + $0x38] sm:$0xf]
        %v323 = vld [vmem:[%s1 + $0x3c] sm:$0xf]
        %v324 = vld [vmem:[%s1 + $0x40] sm:$0xf]
        %v325 = vld [vmem:[%s1 + $0x44] sm:$0xf]
        %v326 = vld [vmem:[%s1 + $0x48] sm:$0xf]
        %v327 = vld [vmem:[%s1 + $0x4c] sm:$0xf]
        %v328 = vld [vmem:[%s1 + $0x50] sm:$0xf]
        %v329 = vld [vmem:[%s1 + $0x54] sm:$0xf]
        %v330 = vld [vmem:[%s1 + $0x58] sm:$0xf]
        %v331 = vld [vmem:[%s1 + $0x5c] sm:$0xf]
        %v332 = vld [vmem:[%s1 + $0x60] sm:$0xf]
        %v333 = vld [vmem:[%s1 + $0x64] sm:$0xf]
        %v334 = vld [vmem:[%s1 + $0x68] sm:$0xf]
        %v335 = vld [vmem:[%s1 + $0x6c] sm:$0xf]
        %v336 = vld [vmem:[%s1 + $0x70] sm:$0xf]
        %v337 = vld [vmem:[%s1 + $0x74] sm:$0xf]
        %v338 = vld [vmem:[%s1 + $0x78] sm:$0xf]
        %v339 = vld [vmem:[%s1 + $0x7c] sm:$0xf]
        %v340 = vld [vmem:[%s1 + $0x80] sm:$0xf]
        %v341 = vld [vmem:[%s1 + $0x84] sm:$0xf]
        %v342 = vld [vmem:[%s1 + $0x88] sm:$0xf]
        %v343 = vld [vmem:[%s1 + $0x8c] sm:$0xf]
        %v344 = vld [vmem:[%s1 + $0x90] sm:$0xf]
        %v345 = vld [vmem:[%s1 + $0x94] sm:$0xf]
        %v346 = vld [vmem:[%s1 + $0x98] sm:$0xf]
        %v347 = vld [vmem:[%s1 + $0x9c] sm:$0xf]
        %v348 = vld [vmem:[%s1 + $0xa0] sm:$0xf]
        %v349 = vld [vmem:[%s1 + $0xa4] sm:$0xf]
        %v350 = vld [vmem:[%s1 + $0xa8] sm:$0xf]
        %v351 = vld [vmem:[%s1 + $0xac] sm:$0xf]
        %v352 = vld [vmem:[%s1 + $0xb0] sm:$0xf]
        %v353 = vld [vmem:[%s1 + $0xb4] sm:$0xf]
        %v354 = vld [vmem:[%s1 + $0xb8] sm:$0xf]
        %v355 = vld [vmem:[%s1 + $0xbc] sm:$0xf]
        %v362 = vunpack.c.l.b16 %v302
        %v363 = vunpack.c.h.b16 %v302
        %v364 = vunpack.c.l.b16 %v303
        %v365 = vunpack.c.l.b16 %v304
        %v366 = vunpack.c.h.b16 %v304
        %v367 = vunpack.c.l.b16 %v305
        %v368 = vunpack.c.l.b16 %v306
        %v369 = vunpack.c.h.b16 %v306
        %v370 = vunpack.c.l.b16 %v307
        %v371 = vpack.c.b16 %v365, %v362
        %v372 = vpack.c.b16 %v366, %v363
        %v373 = vpack.c.b16 %v367, %v364
        %v374 = vpack.c.b16 %v368, %v368
        %v375 = vpack.c.b16 %v369, %v369
        %v376 = vpack.c.b16 %v370, %v370
        %vm377 = vsmask.f32 5376
        %v379 = vshrl.u32 %v371, 16
        %v381 = vrot.slane %v379, 2
        %v382 = vshll.u32 %v371, 16
        %v384 = vrot.slane %v382, 3
        %v385 = vor.u32 %v381, %v384
        %v387 = vshrl.u32 %v374, 16
        %v389 = vrot.slane %v387, 2
        %v390 = vshll.u32 %v374, 16
        %v392 = vrot.slane %v390, 3
        %v393 = vor.u32 %v389, %v392
        %v394 = vsel %vm377, %v385, %v393
        %v396 = vshrl.u32 %v372, 16
        %v398 = vrot.slane %v396, 2
        %v399 = vshll.u32 %v372, 16
        %v401 = vrot.slane %v399, 3
        %v402 = vor.u32 %v398, %v401
        %v404 = vshrl.u32 %v375, 16
        %v406 = vrot.slane %v404, 2
        %v407 = vshll.u32 %v375, 16
        %v409 = vrot.slane %v407, 3
        %v410 = vor.u32 %v406, %v409
        %v411 = vsel %vm377, %v402, %v410
        %v413 = vshrl.u32 %v373, 16
        %v415 = vrot.slane %v413, 2
        %v416 = vshll.u32 %v373, 16
        %v418 = vrot.slane %v416, 3
        %v419 = vor.u32 %v415, %v418
        %v421 = vshrl.u32 %v376, 16
        %v423 = vrot.slane %v421, 2
        %v424 = vshll.u32 %v376, 16
        %v426 = vrot.slane %v424, 3
        %v427 = vor.u32 %v423, %v426
        %v428 = vsel %vm377, %v419, %v427
        %v480 = vunpack.c.l.b16 %v308
        %v481 = vunpack.c.l.b16 %v309
        %v482 = vunpack.c.l.b16 %v310
        %v483 = vunpack.c.l.b16 %v311
        %v484 = vunpack.c.l.b16 %v312
        %v485 = vunpack.c.l.b16 %v313
        %v486 = vunpack.c.l.b16 %v314
        %v487 = vunpack.c.l.b16 %v315
        %v488 = vunpack.c.l.b16 %v316
        %v489 = vunpack.c.l.b16 %v317
        %v490 = vunpack.c.l.b16 %v318
        %v491 = vunpack.c.l.b16 %v319
        %v492 = vunpack.c.l.b16 %v320
        %v493 = vunpack.c.l.b16 %v321
        %v494 = vunpack.c.l.b16 %v322
        %v495 = vunpack.c.l.b16 %v323
        %v496 = vunpack.c.l.b16 %v324
        %v497 = vunpack.c.l.b16 %v325
        %v498 = vunpack.c.l.b16 %v326
        %v499 = vunpack.c.l.b16 %v327
        %v500 = vunpack.c.l.b16 %v328
        %v501 = vunpack.c.l.b16 %v329
        %v502 = vunpack.c.l.b16 %v330
        %v503 = vunpack.c.l.b16 %v331
        %v504 = vunpack.c.l.b16 %v332
        %v505 = vunpack.c.l.b16 %v333
        %v506 = vunpack.c.l.b16 %v334
        %v507 = vunpack.c.l.b16 %v335
        %v508 = vunpack.c.l.b16 %v336
        %v509 = vunpack.c.l.b16 %v337
        %v510 = vunpack.c.l.b16 %v338
        %v511 = vunpack.c.l.b16 %v339
        %v512 = vunpack.c.l.b16 %v340
        %v513 = vunpack.c.l.b16 %v341
        %v514 = vunpack.c.l.b16 %v342
        %v515 = vunpack.c.l.b16 %v343
        %v516 = vunpack.c.l.b16 %v344
        %v517 = vunpack.c.l.b16 %v345
        %v518 = vunpack.c.l.b16 %v346
        %v519 = vunpack.c.l.b16 %v347
        %v520 = vunpack.c.l.b16 %v348
        %v521 = vunpack.c.l.b16 %v349
        %v522 = vunpack.c.l.b16 %v350
        %v523 = vunpack.c.l.b16 %v351
        %v524 = vunpack.c.l.b16 %v352
        %v525 = vunpack.c.l.b16 %v353
        %v526 = vunpack.c.l.b16 %v354
        %v527 = vunpack.c.l.b16 %v355
        %v528 = vpack.c.b16 %v481, %v480
        %v529 = vpack.c.b16 %v483, %v482
        %v530 = vpack.c.b16 %v485, %v484
        %v531 = vpack.c.b16 %v487, %v486
        %v532 = vpack.c.b16 %v489, %v488
        %v533 = vpack.c.b16 %v491, %v490
        %v534 = vpack.c.b16 %v493, %v492
        %v535 = vpack.c.b16 %v495, %v494
        %v536 = vpack.c.b16 %v497, %v496
        %v537 = vpack.c.b16 %v499, %v498
        %v538 = vpack.c.b16 %v501, %v500
        %v539 = vpack.c.b16 %v503, %v502
        %v540 = vpack.c.b16 %v505, %v504
        %v541 = vpack.c.b16 %v507, %v506
        %v542 = vpack.c.b16 %v509, %v508
        %v543 = vpack.c.b16 %v511, %v510
        %v544 = vpack.c.b16 %v513, %v512
        %v545 = vpack.c.b16 %v515, %v514
        %v546 = vpack.c.b16 %v517, %v516
        %v547 = vpack.c.b16 %v519, %v518
        %v548 = vpack.c.b16 %v521, %v520
        %v549 = vpack.c.b16 %v523, %v522
        %v550 = vpack.c.b16 %v525, %v524
        %v551 = vpack.c.b16 %v527, %v526
        %576 = vmatpush.bf16.msra.mxu0 %v535
        %577 = vmatpush.bf16.msra.mxu0 %v534
        %578 = vmatpush.bf16.msra.mxu0 %v533
        %579 = vmatpush.bf16.msra.mxu0 %v532
        %580 = vmatpush.bf16.msra.mxu0 %v531
        %581 = vmatpush.bf16.msra.mxu0 %v530
        %582 = vmatpush.bf16.msra.mxu0 %v529
        %583 = vmatpush.bf16.msra.mxu0 %v528
        %584 = vmatmul.bf16.gmra.mxu0 %v394
        %v585 = vpop.f32.mrf.mxu0
        %v586 = vadd.f32 0.0, %v585
        %v587 = vpop.f32.mrf.mxu0
        %v588 = vadd.f32 0.0, %v587
        %589 = vdwg.mxu0
        %590 = vmatpush.bf16.msra.mxu0 %v543
        %591 = vmatpush.bf16.msra.mxu0 %v542
        %592 = vmatpush.bf16.msra.mxu0 %v541
        %593 = vmatpush.bf16.msra.mxu0 %v540
        %594 = vmatpush.bf16.msra.mxu0 %v539
        %595 = vmatpush.bf16.msra.mxu0 %v538
        %596 = vmatpush.bf16.msra.mxu0 %v537
        %597 = vmatpush.bf16.msra.mxu0 %v536
        %598 = vmatmul.bf16.gmra.mxu0 %v411
        %v599 = vpop.f32.mrf.mxu0
        %v600 = vadd.f32 %v586, %v599
        %v601 = vpop.f32.mrf.mxu0
        %v602 = vadd.f32 %v588, %v601
        %603 = vdwg.mxu0
        %604 = vmatpush.bf16.msra.mxu0 %v551
        %605 = vmatpush.bf16.msra.mxu0 %v550
        %606 = vmatpush.bf16.msra.mxu0 %v549
        %607 = vmatpush.bf16.msra.mxu0 %v548
        %608 = vmatpush.bf16.msra.mxu0 %v547
        %609 = vmatpush.bf16.msra.mxu0 %v546
        %610 = vmatpush.bf16.msra.mxu0 %v545
        %611 = vmatpush.bf16.msra.mxu0 %v544
        %612 = vmatmul.bf16.gmra.mxu0 %v428
        %v613 = vpop.f32.mrf.mxu0
        %v614 = vadd.f32 %v600, %v613
        %v615 = vpop.f32.mrf.mxu0
        %v616 = vadd.f32 %v602, %v615
        %617 = vdwg.mxu0
        %v618 = vadd.f32 %v300, %v614
        %v619 = vadd.f32 %v300, %v616
        %v620 = vld [vmem:[#allocation2] sm:$0x88]
        %v621 = vld [vmem:[#allocation2 + $0x8] sm:$0x8]
        %s622 = scalar_lea.vmem %s1, 192
        %v623 = vld [vmem:[%s622] sm:$0xf]
        %v624 = vld [vmem:[%s622 + $0x4] sm:$0xf]
        %v625 = vld [vmem:[%s622 + $0x8] sm:$0xf]
        %v626 = vld [vmem:[%s622 + $0xc] sm:$0xf]
        %v627 = vld [vmem:[%s622 + $0x10] sm:$0xf]
        %v628 = vld [vmem:[%s622 + $0x14] sm:$0xf]
        %v629 = vld [vmem:[%s622 + $0x18] sm:$0xf]
        %v630 = vld [vmem:[%s622 + $0x1c] sm:$0xf]
        %v631 = vld [vmem:[%s622 + $0x20] sm:$0xf]
        %v632 = vld [vmem:[%s622 + $0x24] sm:$0xf]
        %v633 = vld [vmem:[%s622 + $0x28] sm:$0xf]
        %v634 = vld [vmem:[%s622 + $0x2c] sm:$0xf]
        %v635 = vld [vmem:[%s622 + $0x30] sm:$0xf]
        %v636 = vld [vmem:[%s622 + $0x34] sm:$0xf]
        %v637 = vld [vmem:[%s622 + $0x38] sm:$0xf]
        %v638 = vld [vmem:[%s622 + $0x3c] sm:$0xf]
        %v639 = vld [vmem:[%s622 + $0x40] sm:$0xf]
        %v640 = vld [vmem:[%s622 + $0x44] sm:$0xf]
        %v641 = vld [vmem:[%s622 + $0x48] sm:$0xf]
        %v642 = vld [vmem:[%s622 + $0x4c] sm:$0xf]
        %v643 = vld [vmem:[%s622 + $0x50] sm:$0xf]
        %v644 = vld [vmem:[%s622 + $0x54] sm:$0xf]
        %v645 = vld [vmem:[%s622 + $0x58] sm:$0xf]
        %v646 = vld [vmem:[%s622 + $0x5c] sm:$0xf]
        %v647 = vld [vmem:[%s622 + $0x60] sm:$0xf]
        %v648 = vld [vmem:[%s622 + $0x64] sm:$0xf]
        %v649 = vld [vmem:[%s622 + $0x68] sm:$0xf]
        %v650 = vld [vmem:[%s622 + $0x6c] sm:$0xf]
        %v651 = vld [vmem:[%s622 + $0x70] sm:$0xf]
        %v652 = vld [vmem:[%s622 + $0x74] sm:$0xf]
        %v653 = vld [vmem:[%s622 + $0x78] sm:$0xf]
        %v654 = vld [vmem:[%s622 + $0x7c] sm:$0xf]
        %v655 = vld [vmem:[%s622 + $0x80] sm:$0xf]
        %v656 = vld [vmem:[%s622 + $0x84] sm:$0xf]
        %v657 = vld [vmem:[%s622 + $0x88] sm:$0xf]
        %v658 = vld [vmem:[%s622 + $0x8c] sm:$0xf]
        %v659 = vld [vmem:[%s622 + $0x90] sm:$0xf]
        %v660 = vld [vmem:[%s622 + $0x94] sm:$0xf]
        %v661 = vld [vmem:[%s622 + $0x98] sm:$0xf]
        %v662 = vld [vmem:[%s622 + $0x9c] sm:$0xf]
        %v663 = vld [vmem:[%s622 + $0xa0] sm:$0xf]
        %v664 = vld [vmem:[%s622 + $0xa4] sm:$0xf]
        %v665 = vld [vmem:[%s622 + $0xa8] sm:$0xf]
        %v666 = vld [vmem:[%s622 + $0xac] sm:$0xf]
        %v667 = vld [vmem:[%s622 + $0xb0] sm:$0xf]
        %v668 = vld [vmem:[%s622 + $0xb4] sm:$0xf]
        %v669 = vld [vmem:[%s622 + $0xb8] sm:$0xf]
        %v670 = vld [vmem:[%s622 + $0xbc] sm:$0xf]
        %v673 = vunpack.c.l.b16 %v620
        %v674 = vunpack.c.h.b16 %v620
        %v675 = vunpack.c.l.b16 %v621
        %v676 = vpack.c.b16 %v365, %v673
        %v677 = vpack.c.b16 %v366, %v674
        %v678 = vpack.c.b16 %v367, %v675
        %vm679 = vcmask 1044480
        %v680 = vrot.slane %v676, 3
        %v681 = vrot.slane %v374, 3
        %v682 = vsel %vm679, %v680, %v681
        %v683 = vrot.slane %v677, 3
        %v684 = vrot.slane %v375, 3
        %v685 = vsel %vm679, %v683, %v684
        %v686 = vrot.slane %v678, 3
        %v687 = vrot.slane %v376, 3
        %v688 = vsel %vm679, %v686, %v687
        %v740 = vunpack.c.l.b16 %v623
        %v741 = vunpack.c.l.b16 %v624
        %v742 = vunpack.c.l.b16 %v625
        %v743 = vunpack.c.l.b16 %v626
        %v744 = vunpack.c.l.b16 %v627
        %v745 = vunpack.c.l.b16 %v628
        %v746 = vunpack.c.l.b16 %v629
        %v747 = vunpack.c.l.b16 %v630
        %v748 = vunpack.c.l.b16 %v631
        %v749 = vunpack.c.l.b16 %v632
        %v750 = vunpack.c.l.b16 %v633
        %v751 = vunpack.c.l.b16 %v634
        %v752 = vunpack.c.l.b16 %v635
        %v753 = vunpack.c.l.b16 %v636
        %v754 = vunpack.c.l.b16 %v637
        %v755 = vunpack.c.l.b16 %v638
        %v756 = vunpack.c.l.b16 %v639
        %v757 = vunpack.c.l.b16 %v640
        %v758 = vunpack.c.l.b16 %v641
        %v759 = vunpack.c.l.b16 %v642
        %v760 = vunpack.c.l.b16 %v643
        %v761 = vunpack.c.l.b16 %v644
        %v762 = vunpack.c.l.b16 %v645
        %v763 = vunpack.c.l.b16 %v646
        %v764 = vunpack.c.l.b16 %v647
        %v765 = vunpack.c.l.b16 %v648
        %v766 = vunpack.c.l.b16 %v649
        %v767 = vunpack.c.l.b16 %v650
        %v768 = vunpack.c.l.b16 %v651
        %v769 = vunpack.c.l.b16 %v652
        %v770 = vunpack.c.l.b16 %v653
        %v771 = vunpack.c.l.b16 %v654
        %v772 = vunpack.c.l.b16 %v655
        %v773 = vunpack.c.l.b16 %v656
        %v774 = vunpack.c.l.b16 %v657
        %v775 = vunpack.c.l.b16 %v658
        %v776 = vunpack.c.l.b16 %v659
        %v777 = vunpack.c.l.b16 %v660
        %v778 = vunpack.c.l.b16 %v661
        %v779 = vunpack.c.l.b16 %v662
        %v780 = vunpack.c.l.b16 %v663
        %v781 = vunpack.c.l.b16 %v664
        %v782 = vunpack.c.l.b16 %v665
        %v783 = vunpack.c.l.b16 %v666
        %v784 = vunpack.c.l.b16 %v667
        %v785 = vunpack.c.l.b16 %v668
        %v786 = vunpack.c.l.b16 %v669
        %v787 = vunpack.c.l.b16 %v670
        %v788 = vpack.c.b16 %v741, %v740
        %v789 = vpack.c.b16 %v743, %v742
        %v790 = vpack.c.b16 %v745, %v744
        %v791 = vpack.c.b16 %v747, %v746
        %v792 = vpack.c.b16 %v749, %v748
        %v793 = vpack.c.b16 %v751, %v750
        %v794 = vpack.c.b16 %v753, %v752
        %v795 = vpack.c.b16 %v755, %v754
        %v796 = vpack.c.b16 %v757, %v756
        %v797 = vpack.c.b16 %v759, %v758
        %v798 = vpack.c.b16 %v761, %v760
        %v799 = vpack.c.b16 %v763, %v762
        %v800 = vpack.c.b16 %v765, %v764
        %v801 = vpack.c.b16 %v767, %v766
        %v802 = vpack.c.b16 %v769, %v768
        %v803 = vpack.c.b16 %v771, %v770
        %v804 = vpack.c.b16 %v773, %v772
        %v805 = vpack.c.b16 %v775, %v774
        %v806 = vpack.c.b16 %v777, %v776
        %v807 = vpack.c.b16 %v779, %v778
        %v808 = vpack.c.b16 %v781, %v780
        %v809 = vpack.c.b16 %v783, %v782
        %v810 = vpack.c.b16 %v785, %v784
        %v811 = vpack.c.b16 %v787, %v786
        %836 = vmatpush.bf16.msra.mxu0 %v795
        %837 = vmatpush.bf16.msra.mxu0 %v794
        %838 = vmatpush.bf16.msra.mxu0 %v793
        %839 = vmatpush.bf16.msra.mxu0 %v792
        %840 = vmatpush.bf16.msra.mxu0 %v791
        %841 = vmatpush.bf16.msra.mxu0 %v790
        %842 = vmatpush.bf16.msra.mxu0 %v789
        %843 = vmatpush.bf16.msra.mxu0 %v788
        %844 = vmatmul.bf16.gmra.mxu0 %v682
        %v845 = vpop.f32.mrf.mxu0
        %v846 = vadd.f32 0.0, %v845
        %v847 = vpop.f32.mrf.mxu0
        %v848 = vadd.f32 0.0, %v847
        %849 = vdwg.mxu0
        %850 = vmatpush.bf16.msra.mxu0 %v803
        %851 = vmatpush.bf16.msra.mxu0 %v802
        %852 = vmatpush.bf16.msra.mxu0 %v801
        %853 = vmatpush.bf16.msra.mxu0 %v800
        %854 = vmatpush.bf16.msra.mxu0 %v799
        %855 = vmatpush.bf16.msra.mxu0 %v798
        %856 = vmatpush.bf16.msra.mxu0 %v797
        %857 = vmatpush.bf16.msra.mxu0 %v796
        %858 = vmatmul.bf16.gmra.mxu0 %v685
        %v859 = vpop.f32.mrf.mxu0
        %v860 = vadd.f32 %v846, %v859
        %v861 = vpop.f32.mrf.mxu0
        %v862 = vadd.f32 %v848, %v861
        %863 = vdwg.mxu0
        %864 = vmatpush.bf16.msra.mxu0 %v811
        %865 = vmatpush.bf16.msra.mxu0 %v810
        %866 = vmatpush.bf16.msra.mxu0 %v809
        %867 = vmatpush.bf16.msra.mxu0 %v808
        %868 = vmatpush.bf16.msra.mxu0 %v807
        %869 = vmatpush.bf16.msra.mxu0 %v806
        %870 = vmatpush.bf16.msra.mxu0 %v805
        %871 = vmatpush.bf16.msra.mxu0 %v804
        %872 = vmatmul.bf16.gmra.mxu0 %v688
        %v873 = vpop.f32.mrf.mxu0
        %v874 = vadd.f32 %v860, %v873
        %v875 = vpop.f32.mrf.mxu0
        %v876 = vadd.f32 %v862, %v875
        %877 = vdwg.mxu0
        %v878 = vadd.f32 %v618, %v874
        %v879 = vadd.f32 %v619, %v876
        %v880 = vld [vmem:[#allocation2 + $0x18] sm:$0xff]
        %v881 = vld [vmem:[#allocation2 + $0x20] sm:$0xf]
        %s882 = scalar_lea.vmem %s1, 384
        %v883 = vld [vmem:[%s882] sm:$0xf]
        %v884 = vld [vmem:[%s882 + $0x4] sm:$0xf]
        %v885 = vld [vmem:[%s882 + $0x8] sm:$0xf]
        %v886 = vld [vmem:[%s882 + $0xc] sm:$0xf]
        %v887 = vld [vmem:[%s882 + $0x10] sm:$0xf]
        %v888 = vld [vmem:[%s882 + $0x14] sm:$0xf]
        %v889 = vld [vmem:[%s882 + $0x18] sm:$0xf]
        %v890 = vld [vmem:[%s882 + $0x1c] sm:$0xf]
        %v891 = vld [vmem:[%s882 + $0x20] sm:$0xf]
        %v892 = vld [vmem:[%s882 + $0x24] sm:$0xf]
        %v893 = vld [vmem:[%s882 + $0x28] sm:$0xf]
        %v894 = vld [vmem:[%s882 + $0x2c] sm:$0xf]
        %v895 = vld [vmem:[%s882 + $0x30] sm:$0xf]
        %v896 = vld [vmem:[%s882 + $0x34] sm:$0xf]
        %v897 = vld [vmem:[%s882 + $0x38] sm:$0xf]
        %v898 = vld [vmem:[%s882 + $0x3c] sm:$0xf]
        %v899 = vld [vmem:[%s882 + $0x40] sm:$0xf]
        %v900 = vld [vmem:[%s882 + $0x44] sm:$0xf]
        %v901 = vld [vmem:[%s882 + $0x48] sm:$0xf]
        %v902 = vld [vmem:[%s882 + $0x4c] sm:$0xf]
        %v903 = vld [vmem:[%s882 + $0x50] sm:$0xf]
        %v904 = vld [vmem:[%s882 + $0x54] sm:$0xf]
        %v905 = vld [vmem:[%s882 + $0x58] sm:$0xf]
        %v906 = vld [vmem:[%s882 + $0x5c] sm:$0xf]
        %v907 = vld [vmem:[%s882 + $0x60] sm:$0xf]
        %v908 = vld [vmem:[%s882 + $0x64] sm:$0xf]
        %v909 = vld [vmem:[%s882 + $0x68] sm:$0xf]
        %v910 = vld [vmem:[%s882 + $0x6c] sm:$0xf]
        %v911 = vld [vmem:[%s882 + $0x70] sm:$0xf]
        %v912 = vld [vmem:[%s882 + $0x74] sm:$0xf]
        %v913 = vld [vmem:[%s882 + $0x78] sm:$0xf]
        %v914 = vld [vmem:[%s882 + $0x7c] sm:$0xf]
        %v915 = vld [vmem:[%s882 + $0x80] sm:$0xf]
        %v916 = vld [vmem:[%s882 + $0x84] sm:$0xf]
        %v917 = vld [vmem:[%s882 + $0x88] sm:$0xf]
        %v918 = vld [vmem:[%s882 + $0x8c] sm:$0xf]
        %v919 = vld [vmem:[%s882 + $0x90] sm:$0xf]
        %v920 = vld [vmem:[%s882 + $0x94] sm:$0xf]
        %v921 = vld [vmem:[%s882 + $0x98] sm:$0xf]
        %v922 = vld [vmem:[%s882 + $0x9c] sm:$0xf]
        %v923 = vld [vmem:[%s882 + $0xa0] sm:$0xf]
        %v924 = vld [vmem:[%s882 + $0xa4] sm:$0xf]
        %v925 = vld [vmem:[%s882 + $0xa8] sm:$0xf]
        %v926 = vld [vmem:[%s882 + $0xac] sm:$0xf]
        %v927 = vld [vmem:[%s882 + $0xb0] sm:$0xf]
        %v928 = vld [vmem:[%s882 + $0xb4] sm:$0xf]
        %v929 = vld [vmem:[%s882 + $0xb8] sm:$0xf]
        %v930 = vld [vmem:[%s882 + $0xbc] sm:$0xf]
        %v933 = vunpack.c.l.b16 %v880
        %v934 = vunpack.c.h.b16 %v880
        %v935 = vunpack.c.l.b16 %v881
        %v936 = vpack.c.b16 %v933, %v933
        %v937 = vpack.c.b16 %v934, %v934
        %v938 = vpack.c.b16 %v935, %v935
        %vm939 = vsmask.f32 4352
        %v941 = vshrl.u32 %v676, 16
        %v943 = vrot.slane %v941, 3
        %v944 = vshll.u32 %v676, 16
        %v946 = vrot.slane %v944, 4
        %v947 = vor.u32 %v943, %v946
        %v949 = vshrl.u32 %v936, 16
        %v951 = vrot.slane %v949, 3
        %v952 = vshll.u32 %v936, 16
        %v954 = vrot.slane %v952, 4
        %v955 = vor.u32 %v951, %v954
        %v956 = vsel %vm939, %v947, %v955
        %v958 = vshrl.u32 %v677, 16
        %v960 = vrot.slane %v958, 3
        %v961 = vshll.u32 %v677, 16
        %v963 = vrot.slane %v961, 4
        %v964 = vor.u32 %v960, %v963
        %v966 = vshrl.u32 %v937, 16
        %v968 = vrot.slane %v966, 3
        %v969 = vshll.u32 %v937, 16
        %v971 = vrot.slane %v969, 4
        %v972 = vor.u32 %v968, %v971
        %v973 = vsel %vm939, %v964, %v972
        %v975 = vshrl.u32 %v678, 16
        %v977 = vrot.slane %v975, 3
        %v978 = vshll.u32 %v678, 16
        %v980 = vrot.slane %v978, 4
        %v981 = vor.u32 %v977, %v980
        %v983 = vshrl.u32 %v938, 16
        %v985 = vrot.slane %v983, 3
        %v986 = vshll.u32 %v938, 16
        %v988 = vrot.slane %v986, 4
        %v989 = vor.u32 %v985, %v988
        %v990 = vsel %vm939, %v981, %v989
        %v1042 = vunpack.c.l.b16 %v883
        %v1043 = vunpack.c.l.b16 %v884
        %v1044 = vunpack.c.l.b16 %v885
        %v1045 = vunpack.c.l.b16 %v886
        %v1046 = vunpack.c.l.b16 %v887
        %v1047 = vunpack.c.l.b16 %v888
        %v1048 = vunpack.c.l.b16 %v889
        %v1049 = vunpack.c.l.b16 %v890
        %v1050 = vunpack.c.l.b16 %v891
        %v1051 = vunpack.c.l.b16 %v892
        %v1052 = vunpack.c.l.b16 %v893
        %v1053 = vunpack.c.l.b16 %v894
        %v1054 = vunpack.c.l.b16 %v895
        %v1055 = vunpack.c.l.b16 %v896
        %v1056 = vunpack.c.l.b16 %v897
        %v1057 = vunpack.c.l.b16 %v898
        %v1058 = vunpack.c.l.b16 %v899
        %v1059 = vunpack.c.l.b16 %v900
        %v1060 = vunpack.c.l.b16 %v901
        %v1061 = vunpack.c.l.b16 %v902
        %v1062 = vunpack.c.l.b16 %v903
        %v1063 = vunpack.c.l.b16 %v904
        %v1064 = vunpack.c.l.b16 %v905
        %v1065 = vunpack.c.l.b16 %v906
        %v1066 = vunpack.c.l.b16 %v907
        %v1067 = vunpack.c.l.b16 %v908
        %v1068 = vunpack.c.l.b16 %v909
        %v1069 = vunpack.c.l.b16 %v910
        %v1070 = vunpack.c.l.b16 %v911
        %v1071 = vunpack.c.l.b16 %v912
        %v1072 = vunpack.c.l.b16 %v913
        %v1073 = vunpack.c.l.b16 %v914
        %v1074 = vunpack.c.l.b16 %v915
        %v1075 = vunpack.c.l.b16 %v916
        %v1076 = vunpack.c.l.b16 %v917
        %v1077 = vunpack.c.l.b16 %v918
        %v1078 = vunpack.c.l.b16 %v919
        %v1079 = vunpack.c.l.b16 %v920
        %v1080 = vunpack.c.l.b16 %v921
        %v1081 = vunpack.c.l.b16 %v922
        %v1082 = vunpack.c.l.b16 %v923
        %v1083 = vunpack.c.l.b16 %v924
        %v1084 = vunpack.c.l.b16 %v925
        %v1085 = vunpack.c.l.b16 %v926
        %v1086 = vunpack.c.l.b16 %v927
        %v1087 = vunpack.c.l.b16 %v928
        %v1088 = vunpack.c.l.b16 %v929
        %v1089 = vunpack.c.l.b16 %v930
        %v1090 = vpack.c.b16 %v1043, %v1042
        %v1091 = vpack.c.b16 %v1045, %v1044
        %v1092 = vpack.c.b16 %v1047, %v1046
        %v1093 = vpack.c.b16 %v1049, %v1048
        %v1094 = vpack.c.b16 %v1051, %v1050
        %v1095 = vpack.c.b16 %v1053, %v1052
        %v1096 = vpack.c.b16 %v1055, %v1054
        %v1097 = vpack.c.b16 %v1057, %v1056
        %v1098 = vpack.c.b16 %v1059, %v1058
        %v1099 = vpack.c.b16 %v1061, %v1060
        %v1100 = vpack.c.b16 %v1063, %v1062
        %v1101 = vpack.c.b16 %v1065, %v1064
        %v1102 = vpack.c.b16 %v1067, %v1066
        %v1103 = vpack.c.b16 %v1069, %v1068
        %v1104 = vpack.c.b16 %v1071, %v1070
        %v1105 = vpack.c.b16 %v1073, %v1072
        %v1106 = vpack.c.b16 %v1075, %v1074
        %v1107 = vpack.c.b16 %v1077, %v1076
        %v1108 = vpack.c.b16 %v1079, %v1078
        %v1109 = vpack.c.b16 %v1081, %v1080
        %v1110 = vpack.c.b16 %v1083, %v1082
        %v1111 = vpack.c.b16 %v1085, %v1084
        %v1112 = vpack.c.b16 %v1087, %v1086
        %v1113 = vpack.c.b16 %v1089, %v1088
        %1138 = vmatpush.bf16.msra.mxu0 %v1097
        %1139 = vmatpush.bf16.msra.mxu0 %v1096
        %1140 = vmatpush.bf16.msra.mxu0 %v1095
        %1141 = vmatpush.bf16.msra.mxu0 %v1094
        %1142 = vmatpush.bf16.msra.mxu0 %v1093
        %1143 = vmatpush.bf16.msra.mxu0 %v1092
        %1144 = vmatpush.bf16.msra.mxu0 %v1091
        %1145 = vmatpush.bf16.msra.mxu0 %v1090
        %1146 = vmatmul.bf16.gmra.mxu0 %v956
        %v1147 = vpop.f32.mrf.mxu0
        %v1148 = vadd.f32 0.0, %v1147
        %v1149 = vpop.f32.mrf.mxu0
        %v1150 = vadd.f32 0.0, %v1149
        %1151 = vdwg.mxu0
        %1152 = vmatpush.bf16.msra.mxu0 %v1105
        %1153 = vmatpush.bf16.msra.mxu0 %v1104
        %1154 = vmatpush.bf16.msra.mxu0 %v1103
        %1155 = vmatpush.bf16.msra.mxu0 %v1102
        %1156 = vmatpush.bf16.msra.mxu0 %v1101
        %1157 = vmatpush.bf16.msra.mxu0 %v1100
        %1158 = vmatpush.bf16.msra.mxu0 %v1099
        %1159 = vmatpush.bf16.msra.mxu0 %v1098
        %1160 = vmatmul.bf16.gmra.mxu0 %v973
        %v1161 = vpop.f32.mrf.mxu0
        %v1162 = vadd.f32 %v1148, %v1161
        %v1163 = vpop.f32.mrf.mxu0
        %v1164 = vadd.f32 %v1150, %v1163
        %1165 = vdwg.mxu0
        %1166 = vmatpush.bf16.msra.mxu0 %v1113
        %1167 = vmatpush.bf16.msra.mxu0 %v1112
        %1168 = vmatpush.bf16.msra.mxu0 %v1111
        %1169 = vmatpush.bf16.msra.mxu0 %v1110
        %1170 = vmatpush.bf16.msra.mxu0 %v1109
        %1171 = vmatpush.bf16.msra.mxu0 %v1108
        %1172 = vmatpush.bf16.msra.mxu0 %v1107
        %1173 = vmatpush.bf16.msra.mxu0 %v1106
        %1174 = vmatmul.bf16.gmra.mxu0 %v990
        %v1175 = vpop.f32.mrf.mxu0
        %v1176 = vadd.f32 %v1162, %v1175
        %v1177 = vpop.f32.mrf.mxu0
        %v1178 = vadd.f32 %v1164, %v1177
        %1179 = vdwg.mxu0
        %v1180 = vadd.f32 %v878, %v1176
        %v1181 = vadd.f32 %v879, %v1178
        %s1182 = scalar_lea.vmem %s1, 576
        %v1183 = vld [vmem:[%s1182] sm:$0xf]
        %v1184 = vld [vmem:[%s1182 + $0x4] sm:$0xf]
        %v1185 = vld [vmem:[%s1182 + $0x8] sm:$0xf]
        %v1186 = vld [vmem:[%s1182 + $0xc] sm:$0xf]
        %v1187 = vld [vmem:[%s1182 + $0x10] sm:$0xf]
        %v1188 = vld [vmem:[%s1182 + $0x14] sm:$0xf]
        %v1189 = vld [vmem:[%s1182 + $0x18] sm:$0xf]
        %v1190 = vld [vmem:[%s1182 + $0x1c] sm:$0xf]
        %v1191 = vld [vmem:[%s1182 + $0x20] sm:$0xf]
        %v1192 = vld [vmem:[%s1182 + $0x24] sm:$0xf]
        %v1193 = vld [vmem:[%s1182 + $0x28] sm:$0xf]
        %v1194 = vld [vmem:[%s1182 + $0x2c] sm:$0xf]
        %v1195 = vld [vmem:[%s1182 + $0x30] sm:$0xf]
        %v1196 = vld [vmem:[%s1182 + $0x34] sm:$0xf]
        %v1197 = vld [vmem:[%s1182 + $0x38] sm:$0xf]
        %v1198 = vld [vmem:[%s1182 + $0x3c] sm:$0xf]
        %v1199 = vld [vmem:[%s1182 + $0x40] sm:$0xf]
        %v1200 = vld [vmem:[%s1182 + $0x44] sm:$0xf]
        %v1201 = vld [vmem:[%s1182 + $0x48] sm:$0xf]
        %v1202 = vld [vmem:[%s1182 + $0x4c] sm:$0xf]
        %v1203 = vld [vmem:[%s1182 + $0x50] sm:$0xf]
        %v1204 = vld [vmem:[%s1182 + $0x54] sm:$0xf]
        %v1205 = vld [vmem:[%s1182 + $0x58] sm:$0xf]
        %v1206 = vld [vmem:[%s1182 + $0x5c] sm:$0xf]
        %v1207 = vld [vmem:[%s1182 + $0x60] sm:$0xf]
        %v1208 = vld [vmem:[%s1182 + $0x64] sm:$0xf]
        %v1209 = vld [vmem:[%s1182 + $0x68] sm:$0xf]
        %v1210 = vld [vmem:[%s1182 + $0x6c] sm:$0xf]
        %v1211 = vld [vmem:[%s1182 + $0x70] sm:$0xf]
        %v1212 = vld [vmem:[%s1182 + $0x74] sm:$0xf]
        %v1213 = vld [vmem:[%s1182 + $0x78] sm:$0xf]
        %v1214 = vld [vmem:[%s1182 + $0x7c] sm:$0xf]
        %v1215 = vld [vmem:[%s1182 + $0x80] sm:$0xf]
        %v1216 = vld [vmem:[%s1182 + $0x84] sm:$0xf]
        %v1217 = vld [vmem:[%s1182 + $0x88] sm:$0xf]
        %v1218 = vld [vmem:[%s1182 + $0x8c] sm:$0xf]
        %v1219 = vld [vmem:[%s1182 + $0x90] sm:$0xf]
        %v1220 = vld [vmem:[%s1182 + $0x94] sm:$0xf]
        %v1221 = vld [vmem:[%s1182 + $0x98] sm:$0xf]
        %v1222 = vld [vmem:[%s1182 + $0x9c] sm:$0xf]
        %v1223 = vld [vmem:[%s1182 + $0xa0] sm:$0xf]
        %v1224 = vld [vmem:[%s1182 + $0xa4] sm:$0xf]
        %v1225 = vld [vmem:[%s1182 + $0xa8] sm:$0xf]
        %v1226 = vld [vmem:[%s1182 + $0xac] sm:$0xf]
        %v1227 = vld [vmem:[%s1182 + $0xb0] sm:$0xf]
        %v1228 = vld [vmem:[%s1182 + $0xb4] sm:$0xf]
        %v1229 = vld [vmem:[%s1182 + $0xb8] sm:$0xf]
        %v1230 = vld [vmem:[%s1182 + $0xbc] sm:$0xf]
        %v1231 = vpack.c.b16 %v933, %v365
        %v1232 = vpack.c.b16 %v934, %v366
        %v1233 = vpack.c.b16 %v935, %v367
        %v1285 = vunpack.c.l.b16 %v1183
        %v1286 = vunpack.c.l.b16 %v1184
        %v1287 = vunpack.c.l.b16 %v1185
        %v1288 = vunpack.c.l.b16 %v1186
        %v1289 = vunpack.c.l.b16 %v1187
        %v1290 = vunpack.c.l.b16 %v1188
        %v1291 = vunpack.c.l.b16 %v1189
        %v1292 = vunpack.c.l.b16 %v1190
        %v1293 = vunpack.c.l.b16 %v1191
        %v1294 = vunpack.c.l.b16 %v1192
        %v1295 = vunpack.c.l.b16 %v1193
        %v1296 = vunpack.c.l.b16 %v1194
        %v1297 = vunpack.c.l.b16 %v1195
        %v1298 = vunpack.c.l.b16 %v1196
        %v1299 = vunpack.c.l.b16 %v1197
        %v1300 = vunpack.c.l.b16 %v1198
        %v1301 = vunpack.c.l.b16 %v1199
        %v1302 = vunpack.c.l.b16 %v1200
        %v1303 = vunpack.c.l.b16 %v1201
        %v1304 = vunpack.c.l.b16 %v1202
        %v1305 = vunpack.c.l.b16 %v1203
        %v1306 = vunpack.c.l.b16 %v1204
        %v1307 = vunpack.c.l.b16 %v1205
        %v1308 = vunpack.c.l.b16 %v1206
        %v1309 = vunpack.c.l.b16 %v1207
        %v1310 = vunpack.c.l.b16 %v1208
        %v1311 = vunpack.c.l.b16 %v1209
        %v1312 = vunpack.c.l.b16 %v1210
        %v1313 = vunpack.c.l.b16 %v1211
        %v1314 = vunpack.c.l.b16 %v1212
        %v1315 = vunpack.c.l.b16 %v1213
        %v1316 = vunpack.c.l.b16 %v1214
        %v1317 = vunpack.c.l.b16 %v1215
        %v1318 = vunpack.c.l.b16 %v1216
        %v1319 = vunpack.c.l.b16 %v1217
        %v1320 = vunpack.c.l.b16 %v1218
        %v1321 = vunpack.c.l.b16 %v1219
        %v1322 = vunpack.c.l.b16 %v1220
        %v1323 = vunpack.c.l.b16 %v1221
        %v1324 = vunpack.c.l.b16 %v1222
        %v1325 = vunpack.c.l.b16 %v1223
        %v1326 = vunpack.c.l.b16 %v1224
        %v1327 = vunpack.c.l.b16 %v1225
        %v1328 = vunpack.c.l.b16 %v1226
        %v1329 = vunpack.c.l.b16 %v1227
        %v1330 = vunpack.c.l.b16 %v1228
        %v1331 = vunpack.c.l.b16 %v1229
        %v1332 = vunpack.c.l.b16 %v1230
        %v1333 = vpack.c.b16 %v1286, %v1285
        %v1334 = vpack.c.b16 %v1288, %v1287
        %v1335 = vpack.c.b16 %v1290, %v1289
        %v1336 = vpack.c.b16 %v1292, %v1291
        %v1337 = vpack.c.b16 %v1294, %v1293
        %v1338 = vpack.c.b16 %v1296, %v1295
        %v1339 = vpack.c.b16 %v1298, %v1297
        %v1340 = vpack.c.b16 %v1300, %v1299
        %v1341 = vpack.c.b16 %v1302, %v1301
        %v1342 = vpack.c.b16 %v1304, %v1303
        %v1343 = vpack.c.b16 %v1306, %v1305
        %v1344 = vpack.c.b16 %v1308, %v1307
        %v1345 = vpack.c.b16 %v1310, %v1309
        %v1346 = vpack.c.b16 %v1312, %v1311
        %v1347 = vpack.c.b16 %v1314, %v1313
        %v1348 = vpack.c.b16 %v1316, %v1315
        %v1349 = vpack.c.b16 %v1318, %v1317
        %v1350 = vpack.c.b16 %v1320, %v1319
        %v1351 = vpack.c.b16 %v1322, %v1321
        %v1352 = vpack.c.b16 %v1324, %v1323
        %v1353 = vpack.c.b16 %v1326, %v1325
        %v1354 = vpack.c.b16 %v1328, %v1327
        %v1355 = vpack.c.b16 %v1330, %v1329
        %v1356 = vpack.c.b16 %v1332, %v1331
        %1381 = vmatpush.bf16.msra.mxu0 %v1340
        %1382 = vmatpush.bf16.msra.mxu0 %v1339
        %1383 = vmatpush.bf16.msra.mxu0 %v1338
        %1384 = vmatpush.bf16.msra.mxu0 %v1337
        %1385 = vmatpush.bf16.msra.mxu0 %v1336
        %1386 = vmatpush.bf16.msra.mxu0 %v1335
        %1387 = vmatpush.bf16.msra.mxu0 %v1334
        %1388 = vmatpush.bf16.msra.mxu0 %v1333
        %1389 = vmatmul.bf16.gmra.mxu0 %v1231
        %v1390 = vpop.f32.mrf.mxu0
        %v1391 = vadd.f32 0.0, %v1390
        %v1392 = vpop.f32.mrf.mxu0
        %v1393 = vadd.f32 0.0, %v1392
        %1394 = vdwg.mxu0
        %1395 = vmatpush.bf16.msra.mxu0 %v1348
        %1396 = vmatpush.bf16.msra.mxu0 %v1347
        %1397 = vmatpush.bf16.msra.mxu0 %v1346
        %1398 = vmatpush.bf16.msra.mxu0 %v1345
        %1399 = vmatpush.bf16.msra.mxu0 %v1344
        %1400 = vmatpush.bf16.msra.mxu0 %v1343
        %1401 = vmatpush.bf16.msra.mxu0 %v1342
        %1402 = vmatpush.bf16.msra.mxu0 %v1341
        %1403 = vmatmul.bf16.gmra.mxu0 %v1232
        %v1404 = vpop.f32.mrf.mxu0
        %v1405 = vadd.f32 %v1391, %v1404
        %v1406 = vpop.f32.mrf.mxu0
        %v1407 = vadd.f32 %v1393, %v1406
        %1408 = vdwg.mxu0
        %1409 = vmatpush.bf16.msra.mxu0 %v1356
        %1410 = vmatpush.bf16.msra.mxu0 %v1355
        %1411 = vmatpush.bf16.msra.mxu0 %v1354
        %1412 = vmatpush.bf16.msra.mxu0 %v1353
        %1413 = vmatpush.bf16.msra.mxu0 %v1352
        %1414 = vmatpush.bf16.msra.mxu0 %v1351
        %1415 = vmatpush.bf16.msra.mxu0 %v1350
        %1416 = vmatpush.bf16.msra.mxu0 %v1349
        %1417 = vmatmul.bf16.gmra.mxu0 %v1233
        %v1418 = vpop.f32.mrf.mxu0
        %v1419 = vadd.f32 %v1405, %v1418
        %v1420 = vpop.f32.mrf.mxu0
        %v1421 = vadd.f32 %v1407, %v1420
        %1422 = vdwg.mxu0
        %v1423 = vadd.f32 %v1180, %v1419
        %v1424 = vadd.f32 %v1181, %v1421
        %v1425 = vld [vmem:[#allocation2 + $0xc] sm:$0xff]
        %v1426 = vld [vmem:[#allocation2 + $0x14] sm:$0xf]
        %v1427 = vld [vmem:[#allocation2 + $0x18] sm:$0xff]
        %v1428 = vld [vmem:[#allocation2 + $0x20] sm:$0xf]
        %v1429 = vld [vmem:[#allocation2 + $0x24] sm:$0x11]
        %v1430 = vld [vmem:[#allocation2 + $0x2c] sm:$0x1]
        %s1431 = scalar_lea.vmem %s1, 768
        %v1432 = vld [vmem:[%s1431] sm:$0xf]
        %v1433 = vld [vmem:[%s1431 + $0x4] sm:$0xf]
        %v1434 = vld [vmem:[%s1431 + $0x8] sm:$0xf]
        %v1435 = vld [vmem:[%s1431 + $0xc] sm:$0xf]
        %v1436 = vld [vmem:[%s1431 + $0x10] sm:$0xf]
        %v1437 = vld [vmem:[%s1431 + $0x14] sm:$0xf]
        %v1438 = vld [vmem:[%s1431 + $0x18] sm:$0xf]
        %v1439 = vld [vmem:[%s1431 + $0x1c] sm:$0xf]
        %v1440 = vld [vmem:[%s1431 + $0x20] sm:$0xf]
        %v1441 = vld [vmem:[%s1431 + $0x24] sm:$0xf]
        %v1442 = vld [vmem:[%s1431 + $0x28] sm:$0xf]
        %v1443 = vld [vmem:[%s1431 + $0x2c] sm:$0xf]
        %v1444 = vld [vmem:[%s1431 + $0x30] sm:$0xf]
        %v1445 = vld [vmem:[%s1431 + $0x34] sm:$0xf]
        %v1446 = vld [vmem:[%s1431 + $0x38] sm:$0xf]
        %v1447 = vld [vmem:[%s1431 + $0x3c] sm:$0xf]
        %v1448 = vld [vmem:[%s1431 + $0x40] sm:$0xf]
        %v1449 = vld [vmem:[%s1431 + $0x44] sm:$0xf]
        %v1450 = vld [vmem:[%s1431 + $0x48] sm:$0xf]
        %v1451 = vld [vmem:[%s1431 + $0x4c] sm:$0xf]
        %v1452 = vld [vmem:[%s1431 + $0x50] sm:$0xf]
        %v1453 = vld [vmem:[%s1431 + $0x54] sm:$0xf]
        %v1454 = vld [vmem:[%s1431 + $0x58] sm:$0xf]
        %v1455 = vld [vmem:[%s1431 + $0x5c] sm:$0xf]
        %v1456 = vld [vmem:[%s1431 + $0x60] sm:$0xf]
        %v1457 = vld [vmem:[%s1431 + $0x64] sm:$0xf]
        %v1458 = vld [vmem:[%s1431 + $0x68] sm:$0xf]
        %v1459 = vld [vmem:[%s1431 + $0x6c] sm:$0xf]
        %v1460 = vld [vmem:[%s1431 + $0x70] sm:$0xf]
        %v1461 = vld [vmem:[%s1431 + $0x74] sm:$0xf]
        %v1462 = vld [vmem:[%s1431 + $0x78] sm:$0xf]
        %v1463 = vld [vmem:[%s1431 + $0x7c] sm:$0xf]
        %v1464 = vld [vmem:[%s1431 + $0x80] sm:$0xf]
        %v1465 = vld [vmem:[%s1431 + $0x84] sm:$0xf]
        %v1466 = vld [vmem:[%s1431 + $0x88] sm:$0xf]
        %v1467 = vld [vmem:[%s1431 + $0x8c] sm:$0xf]
        %v1468 = vld [vmem:[%s1431 + $0x90] sm:$0xf]
        %v1469 = vld [vmem:[%s1431 + $0x94] sm:$0xf]
        %v1470 = vld [vmem:[%s1431 + $0x98] sm:$0xf]
        %v1471 = vld [vmem:[%s1431 + $0x9c] sm:$0xf]
        %v1472 = vld [vmem:[%s1431 + $0xa0] sm:$0xf]
        %v1473 = vld [vmem:[%s1431 + $0xa4] sm:$0xf]
        %v1474 = vld [vmem:[%s1431 + $0xa8] sm:$0xf]
        %v1475 = vld [vmem:[%s1431 + $0xac] sm:$0xf]
        %v1476 = vld [vmem:[%s1431 + $0xb0] sm:$0xf]
        %v1477 = vld [vmem:[%s1431 + $0xb4] sm:$0xf]
        %v1478 = vld [vmem:[%s1431 + $0xb8] sm:$0xf]
        %v1479 = vld [vmem:[%s1431 + $0xbc] sm:$0xf]
        %v1486 = vunpack.c.l.b16 %v1425
        %v1487 = vunpack.c.h.b16 %v1425
        %v1488 = vunpack.c.l.b16 %v1426
        %v1489 = vunpack.c.l.b16 %v1427
        %v1490 = vunpack.c.h.b16 %v1427
        %v1491 = vunpack.c.l.b16 %v1428
        %v1492 = vunpack.c.l.b16 %v1429
        %v1493 = vunpack.c.h.b16 %v1429
        %v1494 = vunpack.c.l.b16 %v1430
        %v1495 = vpack.c.b16 %v1489, %v1486
        %v1496 = vpack.c.b16 %v1490, %v1487
        %v1497 = vpack.c.b16 %v1491, %v1488
        %v1498 = vpack.c.b16 %v1492, %v1492
        %v1499 = vpack.c.b16 %v1493, %v1493
        %v1500 = vpack.c.b16 %v1494, %v1494
        %vm1501 = vsmask.f32 7424
        %v1503 = vshrl.u32 %v1495, 16
        %v1505 = vshll.u32 %v1495, 16
        %v1507 = vrot.slane %v1505, 1
        %v1508 = vor.u32 %v1503, %v1507
        %v1510 = vshll.u32 %v1498, 16
        %v1512 = vrot.slane %v1510, 1
        %v1513 = vsel %vm1501, %v1508, %v1512
        %v1515 = vshrl.u32 %v1496, 16
        %v1517 = vshll.u32 %v1496, 16
        %v1519 = vrot.slane %v1517, 1
        %v1520 = vor.u32 %v1515, %v1519
        %v1522 = vshll.u32 %v1499, 16
        %v1524 = vrot.slane %v1522, 1
        %v1525 = vsel %vm1501, %v1520, %v1524
        %v1527 = vshrl.u32 %v1497, 16
        %v1529 = vshll.u32 %v1497, 16
        %v1531 = vrot.slane %v1529, 1
        %v1532 = vor.u32 %v1527, %v1531
        %v1534 = vshll.u32 %v1500, 16
        %v1536 = vrot.slane %v1534, 1
        %v1537 = vsel %vm1501, %v1532, %v1536
        %v1589 = vunpack.c.l.b16 %v1432
        %v1590 = vunpack.c.l.b16 %v1433
        %v1591 = vunpack.c.l.b16 %v1434
        %v1592 = vunpack.c.l.b16 %v1435
        %v1593 = vunpack.c.l.b16 %v1436
        %v1594 = vunpack.c.l.b16 %v1437
        %v1595 = vunpack.c.l.b16 %v1438
        %v1596 = vunpack.c.l.b16 %v1439
        %v1597 = vunpack.c.l.b16 %v1440
        %v1598 = vunpack.c.l.b16 %v1441
        %v1599 = vunpack.c.l.b16 %v1442
        %v1600 = vunpack.c.l.b16 %v1443
        %v1601 = vunpack.c.l.b16 %v1444
        %v1602 = vunpack.c.l.b16 %v1445
        %v1603 = vunpack.c.l.b16 %v1446
        %v1604 = vunpack.c.l.b16 %v1447
        %v1605 = vunpack.c.l.b16 %v1448
        %v1606 = vunpack.c.l.b16 %v1449
        %v1607 = vunpack.c.l.b16 %v1450
        %v1608 = vunpack.c.l.b16 %v1451
        %v1609 = vunpack.c.l.b16 %v1452
        %v1610 = vunpack.c.l.b16 %v1453
        %v1611 = vunpack.c.l.b16 %v1454
        %v1612 = vunpack.c.l.b16 %v1455
        %v1613 = vunpack.c.l.b16 %v1456
        %v1614 = vunpack.c.l.b16 %v1457
        %v1615 = vunpack.c.l.b16 %v1458
        %v1616 = vunpack.c.l.b16 %v1459
        %v1617 = vunpack.c.l.b16 %v1460
        %v1618 = vunpack.c.l.b16 %v1461
        %v1619 = vunpack.c.l.b16 %v1462
        %v1620 = vunpack.c.l.b16 %v1463
        %v1621 = vunpack.c.l.b16 %v1464
        %v1622 = vunpack.c.l.b16 %v1465
        %v1623 = vunpack.c.l.b16 %v1466
        %v1624 = vunpack.c.l.b16 %v1467
        %v1625 = vunpack.c.l.b16 %v1468
        %v1626 = vunpack.c.l.b16 %v1469
        %v1627 = vunpack.c.l.b16 %v1470
        %v1628 = vunpack.c.l.b16 %v1471
        %v1629 = vunpack.c.l.b16 %v1472
        %v1630 = vunpack.c.l.b16 %v1473
        %v1631 = vunpack.c.l.b16 %v1474
        %v1632 = vunpack.c.l.b16 %v1475
        %v1633 = vunpack.c.l.b16 %v1476
        %v1634 = vunpack.c.l.b16 %v1477
        %v1635 = vunpack.c.l.b16 %v1478
        %v1636 = vunpack.c.l.b16 %v1479
        %v1637 = vpack.c.b16 %v1590, %v1589
        %v1638 = vpack.c.b16 %v1592, %v1591
        %v1639 = vpack.c.b16 %v1594, %v1593
        %v1640 = vpack.c.b16 %v1596, %v1595
        %v1641 = vpack.c.b16 %v1598, %v1597
        %v1642 = vpack.c.b16 %v1600, %v1599
        %v1643 = vpack.c.b16 %v1602, %v1601
        %v1644 = vpack.c.b16 %v1604, %v1603
        %v1645 = vpack.c.b16 %v1606, %v1605
        %v1646 = vpack.c.b16 %v1608, %v1607
        %v1647 = vpack.c.b16 %v1610, %v1609
        %v1648 = vpack.c.b16 %v1612, %v1611
        %v1649 = vpack.c.b16 %v1614, %v1613
        %v1650 = vpack.c.b16 %v1616, %v1615
        %v1651 = vpack.c.b16 %v1618, %v1617
        %v1652 = vpack.c.b16 %v1620, %v1619
        %v1653 = vpack.c.b16 %v1622, %v1621
        %v1654 = vpack.c.b16 %v1624, %v1623
        %v1655 = vpack.c.b16 %v1626, %v1625
        %v1656 = vpack.c.b16 %v1628, %v1627
        %v1657 = vpack.c.b16 %v1630, %v1629
        %v1658 = vpack.c.b16 %v1632, %v1631
        %v1659 = vpack.c.b16 %v1634, %v1633
        %v1660 = vpack.c.b16 %v1636, %v1635
        %1685 = vmatpush.bf16.msra.mxu0 %v1644
        %1686 = vmatpush.bf16.msra.mxu0 %v1643
        %1687 = vmatpush.bf16.msra.mxu0 %v1642
        %1688 = vmatpush.bf16.msra.mxu0 %v1641
        %1689 = vmatpush.bf16.msra.mxu0 %v1640
        %1690 = vmatpush.bf16.msra.mxu0 %v1639
        %1691 = vmatpush.bf16.msra.mxu0 %v1638
        %1692 = vmatpush.bf16.msra.mxu0 %v1637
        %1693 = vmatmul.bf16.gmra.mxu0 %v1513
        %v1694 = vpop.f32.mrf.mxu0
        %v1695 = vadd.f32 0.0, %v1694
        %v1696 = vpop.f32.mrf.mxu0
        %v1697 = vadd.f32 0.0, %v1696
        %1698 = vdwg.mxu0
        %1699 = vmatpush.bf16.msra.mxu0 %v1652
        %1700 = vmatpush.bf16.msra.mxu0 %v1651
        %1701 = vmatpush.bf16.msra.mxu0 %v1650
        %1702 = vmatpush.bf16.msra.mxu0 %v1649
        %1703 = vmatpush.bf16.msra.mxu0 %v1648
        %1704 = vmatpush.bf16.msra.mxu0 %v1647
        %1705 = vmatpush.bf16.msra.mxu0 %v1646
        %1706 = vmatpush.bf16.msra.mxu0 %v1645
        %1707 = vmatmul.bf16.gmra.mxu0 %v1525
        %v1708 = vpop.f32.mrf.mxu0
        %v1709 = vadd.f32 %v1695, %v1708
        %v1710 = vpop.f32.mrf.mxu0
        %v1711 = vadd.f32 %v1697, %v1710
        %1712 = vdwg.mxu0
        %1713 = vmatpush.bf16.msra.mxu0 %v1660
        %1714 = vmatpush.bf16.msra.mxu0 %v1659
        %1715 = vmatpush.bf16.msra.mxu0 %v1658
        %1716 = vmatpush.bf16.msra.mxu0 %v1657
        %1717 = vmatpush.bf16.msra.mxu0 %v1656
        %1718 = vmatpush.bf16.msra.mxu0 %v1655
        %1719 = vmatpush.bf16.msra.mxu0 %v1654
        %1720 = vmatpush.bf16.msra.mxu0 %v1653
        %1721 = vmatmul.bf16.gmra.mxu0 %v1537
        %v1722 = vpop.f32.mrf.mxu0
        %v1723 = vadd.f32 %v1709, %v1722
        %v1724 = vpop.f32.mrf.mxu0
        %v1725 = vadd.f32 %v1711, %v1724
        %1726 = vdwg.mxu0
        %v1727 = vadd.f32 %v1423, %v1723
        %v1728 = vadd.f32 %v1424, %v1725
        %v1729 = vld [vmem:[#allocation2 + $0xc] sm:$0xee]
        %v1730 = vld [vmem:[#allocation2 + $0x14] sm:$0xe]
        %s1731 = scalar_lea.vmem %s1, 960
        %v1732 = vld [vmem:[%s1731] sm:$0xf]
        %v1733 = vld [vmem:[%s1731 + $0x4] sm:$0xf]
        %v1734 = vld [vmem:[%s1731 + $0x8] sm:$0xf]
        %v1735 = vld [vmem:[%s1731 + $0xc] sm:$0xf]
        %v1736 = vld [vmem:[%s1731 + $0x10] sm:$0xf]
        %v1737 = vld [vmem:[%s1731 + $0x14] sm:$0xf]
        %v1738 = vld [vmem:[%s1731 + $0x18] sm:$0xf]
        %v1739 = vld [vmem:[%s1731 + $0x1c] sm:$0xf]
        %v1740 = vld [vmem:[%s1731 + $0x20] sm:$0xf]
        %v1741 = vld [vmem:[%s1731 + $0x24] sm:$0xf]
        %v1742 = vld [vmem:[%s1731 + $0x28] sm:$0xf]
        %v1743 = vld [vmem:[%s1731 + $0x2c] sm:$0xf]
        %v1744 = vld [vmem:[%s1731 + $0x30] sm:$0xf]
        %v1745 = vld [vmem:[%s1731 + $0x34] sm:$0xf]
        %v1746 = vld [vmem:[%s1731 + $0x38] sm:$0xf]
        %v1747 = vld [vmem:[%s1731 + $0x3c] sm:$0xf]
        %v1748 = vld [vmem:[%s1731 + $0x40] sm:$0xf]
        %v1749 = vld [vmem:[%s1731 + $0x44] sm:$0xf]
        %v1750 = vld [vmem:[%s1731 + $0x48] sm:$0xf]
        %v1751 = vld [vmem:[%s1731 + $0x4c] sm:$0xf]
        %v1752 = vld [vmem:[%s1731 + $0x50] sm:$0xf]
        %v1753 = vld [vmem:[%s1731 + $0x54] sm:$0xf]
        %v1754 = vld [vmem:[%s1731 + $0x58] sm:$0xf]
        %v1755 = vld [vmem:[%s1731 + $0x5c] sm:$0xf]
        %v1756 = vld [vmem:[%s1731 + $0x60] sm:$0xf]
        %v1757 = vld [vmem:[%s1731 + $0x64] sm:$0xf]
        %v1758 = vld [vmem:[%s1731 + $0x68] sm:$0xf]
        %v1759 = vld [vmem:[%s1731 + $0x6c] sm:$0xf]
        %v1760 = vld [vmem:[%s1731 + $0x70] sm:$0xf]
        %v1761 = vld [vmem:[%s1731 + $0x74] sm:$0xf]
        %v1762 = vld [vmem:[%s1731 + $0x78] sm:$0xf]
        %v1763 = vld [vmem:[%s1731 + $0x7c] sm:$0xf]
        %v1764 = vld [vmem:[%s1731 + $0x80] sm:$0xf]
        %v1765 = vld [vmem:[%s1731 + $0x84] sm:$0xf]
        %v1766 = vld [vmem:[%s1731 + $0x88] sm:$0xf]
        %v1767 = vld [vmem:[%s1731 + $0x8c] sm:$0xf]
        %v1768 = vld [vmem:[%s1731 + $0x90] sm:$0xf]
        %v1769 = vld [vmem:[%s1731 + $0x94] sm:$0xf]
        %v1770 = vld [vmem:[%s1731 + $0x98] sm:$0xf]
        %v1771 = vld [vmem:[%s1731 + $0x9c] sm:$0xf]
        %v1772 = vld [vmem:[%s1731 + $0xa0] sm:$0xf]
        %v1773 = vld [vmem:[%s1731 + $0xa4] sm:$0xf]
        %v1774 = vld [vmem:[%s1731 + $0xa8] sm:$0xf]
        %v1775 = vld [vmem:[%s1731 + $0xac] sm:$0xf]
        %v1776 = vld [vmem:[%s1731 + $0xb0] sm:$0xf]
        %v1777 = vld [vmem:[%s1731 + $0xb4] sm:$0xf]
        %v1778 = vld [vmem:[%s1731 + $0xb8] sm:$0xf]
        %v1779 = vld [vmem:[%s1731 + $0xbc] sm:$0xf]
        %v1782 = vunpack.c.l.b16 %v1729
        %v1783 = vunpack.c.h.b16 %v1729
        %v1784 = vunpack.c.l.b16 %v1730
        %v1785 = vpack.c.b16 %v1489, %v1782
        %v1786 = vpack.c.b16 %v1490, %v1783
        %v1787 = vpack.c.b16 %v1491, %v1784
        %vm1788 = vcmask 1046528
        %v1789 = vrot.slane %v1785, 1
        %v1790 = vrot.slane %v1498, 1
        %v1791 = vsel %vm1788, %v1789, %v1790
        %v1792 = vrot.slane %v1786, 1
        %v1793 = vrot.slane %v1499, 1
        %v1794 = vsel %vm1788, %v1792, %v1793
        %v1795 = vrot.slane %v1787, 1
        %v1796 = vrot.slane %v1500, 1
        %v1797 = vsel %vm1788, %v1795, %v1796
        %v1849 = vunpack.c.l.b16 %v1732
        %v1850 = vunpack.c.l.b16 %v1733
        %v1851 = vunpack.c.l.b16 %v1734
        %v1852 = vunpack.c.l.b16 %v1735
        %v1853 = vunpack.c.l.b16 %v1736
        %v1854 = vunpack.c.l.b16 %v1737
        %v1855 = vunpack.c.l.b16 %v1738
        %v1856 = vunpack.c.l.b16 %v1739
        %v1857 = vunpack.c.l.b16 %v1740
        %v1858 = vunpack.c.l.b16 %v1741
        %v1859 = vunpack.c.l.b16 %v1742
        %v1860 = vunpack.c.l.b16 %v1743
        %v1861 = vunpack.c.l.b16 %v1744
        %v1862 = vunpack.c.l.b16 %v1745
        %v1863 = vunpack.c.l.b16 %v1746
        %v1864 = vunpack.c.l.b16 %v1747
        %v1865 = vunpack.c.l.b16 %v1748
        %v1866 = vunpack.c.l.b16 %v1749
        %v1867 = vunpack.c.l.b16 %v1750
        %v1868 = vunpack.c.l.b16 %v1751
        %v1869 = vunpack.c.l.b16 %v1752
        %v1870 = vunpack.c.l.b16 %v1753
        %v1871 = vunpack.c.l.b16 %v1754
        %v1872 = vunpack.c.l.b16 %v1755
        %v1873 = vunpack.c.l.b16 %v1756
        %v1874 = vunpack.c.l.b16 %v1757
        %v1875 = vunpack.c.l.b16 %v1758
        %v1876 = vunpack.c.l.b16 %v1759
        %v1877 = vunpack.c.l.b16 %v1760
        %v1878 = vunpack.c.l.b16 %v1761
        %v1879 = vunpack.c.l.b16 %v1762
        %v1880 = vunpack.c.l.b16 %v1763
        %v1881 = vunpack.c.l.b16 %v1764
        %v1882 = vunpack.c.l.b16 %v1765
        %v1883 = vunpack.c.l.b16 %v1766
        %v1884 = vunpack.c.l.b16 %v1767
        %v1885 = vunpack.c.l.b16 %v1768
        %v1886 = vunpack.c.l.b16 %v1769
        %v1887 = vunpack.c.l.b16 %v1770
        %v1888 = vunpack.c.l.b16 %v1771
        %v1889 = vunpack.c.l.b16 %v1772
        %v1890 = vunpack.c.l.b16 %v1773
        %v1891 = vunpack.c.l.b16 %v1774
        %v1892 = vunpack.c.l.b16 %v1775
        %v1893 = vunpack.c.l.b16 %v1776
        %v1894 = vunpack.c.l.b16 %v1777
        %v1895 = vunpack.c.l.b16 %v1778
        %v1896 = vunpack.c.l.b16 %v1779
        %v1897 = vpack.c.b16 %v1850, %v1849
        %v1898 = vpack.c.b16 %v1852, %v1851
        %v1899 = vpack.c.b16 %v1854, %v1853
        %v1900 = vpack.c.b16 %v1856, %v1855
        %v1901 = vpack.c.b16 %v1858, %v1857
        %v1902 = vpack.c.b16 %v1860, %v1859
        %v1903 = vpack.c.b16 %v1862, %v1861
        %v1904 = vpack.c.b16 %v1864, %v1863
        %v1905 = vpack.c.b16 %v1866, %v1865
        %v1906 = vpack.c.b16 %v1868, %v1867
        %v1907 = vpack.c.b16 %v1870, %v1869
        %v1908 = vpack.c.b16 %v1872, %v1871
        %v1909 = vpack.c.b16 %v1874, %v1873
        %v1910 = vpack.c.b16 %v1876, %v1875
        %v1911 = vpack.c.b16 %v1878, %v1877
        %v1912 = vpack.c.b16 %v1880, %v1879
        %v1913 = vpack.c.b16 %v1882, %v1881
        %v1914 = vpack.c.b16 %v1884, %v1883
        %v1915 = vpack.c.b16 %v1886, %v1885
        %v1916 = vpack.c.b16 %v1888, %v1887
        %v1917 = vpack.c.b16 %v1890, %v1889
        %v1918 = vpack.c.b16 %v1892, %v1891
        %v1919 = vpack.c.b16 %v1894, %v1893
        %v1920 = vpack.c.b16 %v1896, %v1895
        %1945 = vmatpush.bf16.msra.mxu0 %v1904
        %1946 = vmatpush.bf16.msra.mxu0 %v1903
        %1947 = vmatpush.bf16.msra.mxu0 %v1902
        %1948 = vmatpush.bf16.msra.mxu0 %v1901
        %1949 = vmatpush.bf16.msra.mxu0 %v1900
        %1950 = vmatpush.bf16.msra.mxu0 %v1899
        %1951 = vmatpush.bf16.msra.mxu0 %v1898
        %1952 = vmatpush.bf16.msra.mxu0 %v1897
        %1953 = vmatmul.bf16.gmra.mxu0 %v1791
        %v1954 = vpop.f32.mrf.mxu0
        %v1955 = vadd.f32 0.0, %v1954
        %v1956 = vpop.f32.mrf.mxu0
        %v1957 = vadd.f32 0.0, %v1956
        %1958 = vdwg.mxu0
        %1959 = vmatpush.bf16.msra.mxu0 %v1912
        %1960 = vmatpush.bf16.msra.mxu0 %v1911
        %1961 = vmatpush.bf16.msra.mxu0 %v1910
        %1962 = vmatpush.bf16.msra.mxu0 %v1909
        %1963 = vmatpush.bf16.msra.mxu0 %v1908
        %1964 = vmatpush.bf16.msra.mxu0 %v1907
        %1965 = vmatpush.bf16.msra.mxu0 %v1906
        %1966 = vmatpush.bf16.msra.mxu0 %v1905
        %1967 = vmatmul.bf16.gmra.mxu0 %v1794
        %v1968 = vpop.f32.mrf.mxu0
        %v1969 = vadd.f32 %v1955, %v1968
        %v1970 = vpop.f32.mrf.mxu0
        %v1971 = vadd.f32 %v1957, %v1970
        %1972 = vdwg.mxu0
        %1973 = vmatpush.bf16.msra.mxu0 %v1920
        %1974 = vmatpush.bf16.msra.mxu0 %v1919
        %1975 = vmatpush.bf16.msra.mxu0 %v1918
        %1976 = vmatpush.bf16.msra.mxu0 %v1917
        %1977 = vmatpush.bf16.msra.mxu0 %v1916
        %1978 = vmatpush.bf16.msra.mxu0 %v1915
        %1979 = vmatpush.bf16.msra.mxu0 %v1914
        %1980 = vmatpush.bf16.msra.mxu0 %v1913
        %1981 = vmatmul.bf16.gmra.mxu0 %v1797
        %v1982 = vpop.f32.mrf.mxu0
        %v1983 = vadd.f32 %v1969, %v1982
        %v1984 = vpop.f32.mrf.mxu0
        %v1985 = vadd.f32 %v1971, %v1984
        %1986 = vdwg.mxu0
        %v1987 = vadd.f32 %v1727, %v1983
        %v1988 = vadd.f32 %v1728, %v1985
        %v1989 = vld [vmem:[#allocation2 + $0x24] sm:$0x33]
        %v1990 = vld [vmem:[#allocation2 + $0x2c] sm:$0x3]
        %s1991 = scalar_lea.vmem %s1, 1152
        %v1992 = vld [vmem:[%s1991] sm:$0xf]
        %v1993 = vld [vmem:[%s1991 + $0x4] sm:$0xf]
        %v1994 = vld [vmem:[%s1991 + $0x8] sm:$0xf]
        %v1995 = vld [vmem:[%s1991 + $0xc] sm:$0xf]
        %v1996 = vld [vmem:[%s1991 + $0x10] sm:$0xf]
        %v1997 = vld [vmem:[%s1991 + $0x14] sm:$0xf]
        %v1998 = vld [vmem:[%s1991 + $0x18] sm:$0xf]
        %v1999 = vld [vmem:[%s1991 + $0x1c] sm:$0xf]
        %v2000 = vld [vmem:[%s1991 + $0x20] sm:$0xf]
        %v2001 = vld [vmem:[%s1991 + $0x24] sm:$0xf]
        %v2002 = vld [vmem:[%s1991 + $0x28] sm:$0xf]
        %v2003 = vld [vmem:[%s1991 + $0x2c] sm:$0xf]
        %v2004 = vld [vmem:[%s1991 + $0x30] sm:$0xf]
        %v2005 = vld [vmem:[%s1991 + $0x34] sm:$0xf]
        %v2006 = vld [vmem:[%s1991 + $0x38] sm:$0xf]
        %v2007 = vld [vmem:[%s1991 + $0x3c] sm:$0xf]
        %v2008 = vld [vmem:[%s1991 + $0x40] sm:$0xf]
        %v2009 = vld [vmem:[%s1991 + $0x44] sm:$0xf]
        %v2010 = vld [vmem:[%s1991 + $0x48] sm:$0xf]
        %v2011 = vld [vmem:[%s1991 + $0x4c] sm:$0xf]
        %v2012 = vld [vmem:[%s1991 + $0x50] sm:$0xf]
        %v2013 = vld [vmem:[%s1991 + $0x54] sm:$0xf]
        %v2014 = vld [vmem:[%s1991 + $0x58] sm:$0xf]
        %v2015 = vld [vmem:[%s1991 + $0x5c] sm:$0xf]
        %v2016 = vld [vmem:[%s1991 + $0x60] sm:$0xf]
        %v2017 = vld [vmem:[%s1991 + $0x64] sm:$0xf]
        %v2018 = vld [vmem:[%s1991 + $0x68] sm:$0xf]
        %v2019 = vld [vmem:[%s1991 + $0x6c] sm:$0xf]
        %v2020 = vld [vmem:[%s1991 + $0x70] sm:$0xf]
        %v2021 = vld [vmem:[%s1991 + $0x74] sm:$0xf]
        %v2022 = vld [vmem:[%s1991 + $0x78] sm:$0xf]
        %v2023 = vld [vmem:[%s1991 + $0x7c] sm:$0xf]
        %v2024 = vld [vmem:[%s1991 + $0x80] sm:$0xf]
        %v2025 = vld [vmem:[%s1991 + $0x84] sm:$0xf]
        %v2026 = vld [vmem:[%s1991 + $0x88] sm:$0xf]
        %v2027 = vld [vmem:[%s1991 + $0x8c] sm:$0xf]
        %v2028 = vld [vmem:[%s1991 + $0x90] sm:$0xf]
        %v2029 = vld [vmem:[%s1991 + $0x94] sm:$0xf]
        %v2030 = vld [vmem:[%s1991 + $0x98] sm:$0xf]
        %v2031 = vld [vmem:[%s1991 + $0x9c] sm:$0xf]
        %v2032 = vld [vmem:[%s1991 + $0xa0] sm:$0xf]
        %v2033 = vld [vmem:[%s1991 + $0xa4] sm:$0xf]
        %v2034 = vld [vmem:[%s1991 + $0xa8] sm:$0xf]
        %v2035 = vld [vmem:[%s1991 + $0xac] sm:$0xf]
        %v2036 = vld [vmem:[%s1991 + $0xb0] sm:$0xf]
        %v2037 = vld [vmem:[%s1991 + $0xb4] sm:$0xf]
        %v2038 = vld [vmem:[%s1991 + $0xb8] sm:$0xf]
        %v2039 = vld [vmem:[%s1991 + $0xbc] sm:$0xf]
        %v2042 = vunpack.c.l.b16 %v1989
        %v2043 = vunpack.c.h.b16 %v1989
        %v2044 = vunpack.c.l.b16 %v1990
        %v2045 = vpack.c.b16 %v2042, %v2042
        %v2046 = vpack.c.b16 %v2043, %v2043
        %v2047 = vpack.c.b16 %v2044, %v2044
        %vm2048 = vsmask.f32 6400
        %v2050 = vshrl.u32 %v1785, 16
        %v2052 = vrot.slane %v2050, 1
        %v2053 = vshll.u32 %v1785, 16
        %v2055 = vrot.slane %v2053, 2
        %v2056 = vor.u32 %v2052, %v2055
        %v2058 = vshrl.u32 %v2045, 16
        %v2060 = vrot.slane %v2058, 1
        %v2061 = vshll.u32 %v2045, 16
        %v2063 = vrot.slane %v2061, 2
        %v2064 = vor.u32 %v2060, %v2063
        %v2065 = vsel %vm2048, %v2056, %v2064
        %v2067 = vshrl.u32 %v1786, 16
        %v2069 = vrot.slane %v2067, 1
        %v2070 = vshll.u32 %v1786, 16
        %v2072 = vrot.slane %v2070, 2
        %v2073 = vor.u32 %v2069, %v2072
        %v2075 = vshrl.u32 %v2046, 16
        %v2077 = vrot.slane %v2075, 1
        %v2078 = vshll.u32 %v2046, 16
        %v2080 = vrot.slane %v2078, 2
        %v2081 = vor.u32 %v2077, %v2080
        %v2082 = vsel %vm2048, %v2073, %v2081
        %v2084 = vshrl.u32 %v1787, 16
        %v2086 = vrot.slane %v2084, 1
        %v2087 = vshll.u32 %v1787, 16
        %v2089 = vrot.slane %v2087, 2
        %v2090 = vor.u32 %v2086, %v2089
        %v2092 = vshrl.u32 %v2047, 16
        %v2094 = vrot.slane %v2092, 1
        %v2095 = vshll.u32 %v2047, 16
        %v2097 = vrot.slane %v2095, 2
        %v2098 = vor.u32 %v2094, %v2097
        %v2099 = vsel %vm2048, %v2090, %v2098
        %v2151 = vunpack.c.l.b16 %v1992
        %v2152 = vunpack.c.l.b16 %v1993
        %v2153 = vunpack.c.l.b16 %v1994
        %v2154 = vunpack.c.l.b16 %v1995
        %v2155 = vunpack.c.l.b16 %v1996
        %v2156 = vunpack.c.l.b16 %v1997
        %v2157 = vunpack.c.l.b16 %v1998
        %v2158 = vunpack.c.l.b16 %v1999
        %v2159 = vunpack.c.l.b16 %v2000
        %v2160 = vunpack.c.l.b16 %v2001
        %v2161 = vunpack.c.l.b16 %v2002
        %v2162 = vunpack.c.l.b16 %v2003
        %v2163 = vunpack.c.l.b16 %v2004
        %v2164 = vunpack.c.l.b16 %v2005
        %v2165 = vunpack.c.l.b16 %v2006
        %v2166 = vunpack.c.l.b16 %v2007
        %v2167 = vunpack.c.l.b16 %v2008
        %v2168 = vunpack.c.l.b16 %v2009
        %v2169 = vunpack.c.l.b16 %v2010
        %v2170 = vunpack.c.l.b16 %v2011
        %v2171 = vunpack.c.l.b16 %v2012
        %v2172 = vunpack.c.l.b16 %v2013
        %v2173 = vunpack.c.l.b16 %v2014
        %v2174 = vunpack.c.l.b16 %v2015
        %v2175 = vunpack.c.l.b16 %v2016
        %v2176 = vunpack.c.l.b16 %v2017
        %v2177 = vunpack.c.l.b16 %v2018
        %v2178 = vunpack.c.l.b16 %v2019
        %v2179 = vunpack.c.l.b16 %v2020
        %v2180 = vunpack.c.l.b16 %v2021
        %v2181 = vunpack.c.l.b16 %v2022
        %v2182 = vunpack.c.l.b16 %v2023
        %v2183 = vunpack.c.l.b16 %v2024
        %v2184 = vunpack.c.l.b16 %v2025
        %v2185 = vunpack.c.l.b16 %v2026
        %v2186 = vunpack.c.l.b16 %v2027
        %v2187 = vunpack.c.l.b16 %v2028
        %v2188 = vunpack.c.l.b16 %v2029
        %v2189 = vunpack.c.l.b16 %v2030
        %v2190 = vunpack.c.l.b16 %v2031
        %v2191 = vunpack.c.l.b16 %v2032
        %v2192 = vunpack.c.l.b16 %v2033
        %v2193 = vunpack.c.l.b16 %v2034
        %v2194 = vunpack.c.l.b16 %v2035
        %v2195 = vunpack.c.l.b16 %v2036
        %v2196 = vunpack.c.l.b16 %v2037
        %v2197 = vunpack.c.l.b16 %v2038
        %v2198 = vunpack.c.l.b16 %v2039
        %v2199 = vpack.c.b16 %v2152, %v2151
        %v2200 = vpack.c.b16 %v2154, %v2153
        %v2201 = vpack.c.b16 %v2156, %v2155
        %v2202 = vpack.c.b16 %v2158, %v2157
        %v2203 = vpack.c.b16 %v2160, %v2159
        %v2204 = vpack.c.b16 %v2162, %v2161
        %v2205 = vpack.c.b16 %v2164, %v2163
        %v2206 = vpack.c.b16 %v2166, %v2165
        %v2207 = vpack.c.b16 %v2168, %v2167
        %v2208 = vpack.c.b16 %v2170, %v2169
        %v2209 = vpack.c.b16 %v2172, %v2171
        %v2210 = vpack.c.b16 %v2174, %v2173
        %v2211 = vpack.c.b16 %v2176, %v2175
        %v2212 = vpack.c.b16 %v2178, %v2177
        %v2213 = vpack.c.b16 %v2180, %v2179
        %v2214 = vpack.c.b16 %v2182, %v2181
        %v2215 = vpack.c.b16 %v2184, %v2183
        %v2216 = vpack.c.b16 %v2186, %v2185
        %v2217 = vpack.c.b16 %v2188, %v2187
        %v2218 = vpack.c.b16 %v2190, %v2189
        %v2219 = vpack.c.b16 %v2192, %v2191
        %v2220 = vpack.c.b16 %v2194, %v2193
        %v2221 = vpack.c.b16 %v2196, %v2195
        %v2222 = vpack.c.b16 %v2198, %v2197
        %2247 = vmatpush.bf16.msra.mxu0 %v2206
        %2248 = vmatpush.bf16.msra.mxu0 %v2205
        %2249 = vmatpush.bf16.msra.mxu0 %v2204
        %2250 = vmatpush.bf16.msra.mxu0 %v2203
        %2251 = vmatpush.bf16.msra.mxu0 %v2202
        %2252 = vmatpush.bf16.msra.mxu0 %v2201
        %2253 = vmatpush.bf16.msra.mxu0 %v2200
        %2254 = vmatpush.bf16.msra.mxu0 %v2199
        %2255 = vmatmul.bf16.gmra.mxu0 %v2065
        %v2256 = vpop.f32.mrf.mxu0
        %v2257 = vadd.f32 0.0, %v2256
        %v2258 = vpop.f32.mrf.mxu0
        %v2259 = vadd.f32 0.0, %v2258
        %2260 = vdwg.mxu0
        %2261 = vmatpush.bf16.msra.mxu0 %v2214
        %2262 = vmatpush.bf16.msra.mxu0 %v2213
        %2263 = vmatpush.bf16.msra.mxu0 %v2212
        %2264 = vmatpush.bf16.msra.mxu0 %v2211
        %2265 = vmatpush.bf16.msra.mxu0 %v2210
        %2266 = vmatpush.bf16.msra.mxu0 %v2209
        %2267 = vmatpush.bf16.msra.mxu0 %v2208
        %2268 = vmatpush.bf16.msra.mxu0 %v2207
        %2269 = vmatmul.bf16.gmra.mxu0 %v2082
        %v2270 = vpop.f32.mrf.mxu0
        %v2271 = vadd.f32 %v2257, %v2270
        %v2272 = vpop.f32.mrf.mxu0
        %v2273 = vadd.f32 %v2259, %v2272
        %2274 = vdwg.mxu0
        %2275 = vmatpush.bf16.msra.mxu0 %v2222
        %2276 = vmatpush.bf16.msra.mxu0 %v2221
        %2277 = vmatpush.bf16.msra.mxu0 %v2220
        %2278 = vmatpush.bf16.msra.mxu0 %v2219
        %2279 = vmatpush.bf16.msra.mxu0 %v2218
        %2280 = vmatpush.bf16.msra.mxu0 %v2217
        %2281 = vmatpush.bf16.msra.mxu0 %v2216
        %2282 = vmatpush.bf16.msra.mxu0 %v2215
        %2283 = vmatmul.bf16.gmra.mxu0 %v2099
        %v2284 = vpop.f32.mrf.mxu0
        %v2285 = vadd.f32 %v2271, %v2284
        %v2286 = vpop.f32.mrf.mxu0
        %v2287 = vadd.f32 %v2273, %v2286
        %2288 = vdwg.mxu0
        %v2289 = vadd.f32 %v1987, %v2285
        %v2290 = vadd.f32 %v1988, %v2287
        %v2291 = vld [vmem:[%s244] sm:$0xff]
        %v2292 = vld [vmem:[%s244 + $0x8] sm:$0xff]
        %2294 = vset.pattern.permute.xlu0 0
        %2295 = vperm.xlu0 %2294, %v2291
        %v2296 = vpop.permute.xlu0 %2295
        %2299 = vset.pattern.permute.xlu0 0
        %2300 = vperm.xlu0 %2299, %v2292
        %v2301 = vpop.permute.xlu0 %2300
        %v2303 = vmul.f32 %v2289, %v2296
        %v2304 = vmul.f32 %v2290, %v2301
        %2305 = vst [vmem:[%s230] sm:$0xff] %v2303
        %2306 = vst [vmem:[%s230 + $0x8] sm:$0xff] %v2304
        %s2307 = sand.u32 %s136, 1
        %s2308 = scalar_lea.sflag [#allocation4], %s2307
        %s2309 = sand.u32 %s136, 1
        %s2310 = smul.addr %s2309, 16
        %s2311 = scalar_lea.vmem [#allocation3], %s2310
        // Predicated region
        $region37: #{ssvm_forward_svc_infer.15} parent=35 // pred_check
          %p2312 = pneg %p146
        $region38: #{ssvm_forward_svc_infer.15} parent=35 // pred_check_branch
          %2314 = sbr.rel (%p2312) target = $region40
        $region39: #{ssvm_forward_svc_infer.15} parent=35 // pred_region
          %s2315 = smul.u32 2, %s23
          %2317 = vsyncadd %s2308, 0
          %s2318 = smul.addr %s22, 2
          %s2319 = sadd.s32 %s2315, %s2318
          %s2320 = smul.addr %s2319, 8
          %s2321 = scalar_lea.hbm %s4, %s2320
          %s2322 = sshll.u32 %s2311, 4
          %s2323 = int_to_ptr.vmem [resolvable:$true] %s2322
          %s2324 = sshll.u32 %s2321, 4
          %s2325 = int_to_ptr.hbm [resolvable:$true] %s2324
          %2330 = dma.vmem_to_hbm [thread:$0]  %s2323, 256, %s2325, %s2308, 128, 128, 8
        $region40: #{ssvm_forward_svc_infer.15} parent=35 // pred_fallthru
          _
      $region36: #{ssvm_forward_svc_infer.15} parent=5 // pred_fallthru
        _
      %p2331 = scmp.le.s32.totalorder 2, %s13
      // Predicated region
      $region41: #{ssvm_forward_svc_infer.15} parent=5 // pred_check
        %p2332 = pneg %p2331
      $region42: #{ssvm_forward_svc_infer.15} parent=5 // pred_check_branch
        %2334 = sbr.rel (%p2332) target = $region44
      $region43: #{ssvm_forward_svc_infer.15} parent=5 // pred_region
        %s2335 = ssub.s32 %s13, 2
        // Predicated region
        $region45: #{ssvm_forward_svc_infer.15} parent=43 // pred_check
          %p2336 = pneg %p152
        $region46: #{ssvm_forward_svc_infer.15} parent=43 // pred_check_branch
          %2338 = sbr.rel (%p2336) target = $region48
        $region47: #{ssvm_forward_svc_infer.15} parent=43 // pred_region
          %s2339 = sand.u32 %s137, 1
          %s2340 = scalar_lea.sflag [#allocation4], %s2339
          %s2341 = sand.u32 %s137, 1
          %s2342 = smul.addr %s2341, 16
          %s2343 = scalar_lea.vmem [#allocation3], %s2342
          %2345 = dma.done %s2340, 256
        $region48: #{ssvm_forward_svc_infer.15} parent=43 // pred_fallthru
          _
      $region44: #{ssvm_forward_svc_infer.15} parent=5 // pred_fallthru
        _
    $region6: #{ssvm_forward_svc_infer.15} parent=1 // loop_footer
      %s17 = sadd.s32 1, %s13
    $region7: #{ssvm_forward_svc_infer.15} parent=1 // loop_footer_branch
      %12 = sbr.rel target = $region3
    $region8: #{ssvm_forward_svc_infer.15} parent=1 // loop_exit
      _
    %2346 = vsyncpa [#allocation4], 1
    %s2347 = scalar_lea.sflag [#allocation4], 1
    %2348 = vsyncpa %s2347, 1

</llo_original>
